<compile_context>
chip_gen: v7x
topology: tpu7x:2x2x1
jax: 0.10.0
libtpu: 0.0.40
codegen_flags: <defaults>
</compile_context>

<pallas_src>
import functools

import jax
import jax.numpy as jnp
from jax.experimental import pallas as pl
from jax.experimental.pallas import tpu as pltpu

K_NEIGHBORS = 16       # DGCNN default k
SHAPECODE_DIM = 512    # mlp_1 expects 512 + 64 input channels

_WEIGHT_ORDER = ("w_e1c", "b_e1c", "w_e2c", "b_e2c", "w1a_dgc",
                 "w1bc", "b1bc", "w_fused", "b2a_t", "w_fin", "b_fin")


# ----------------------------- Pallas kernel ---------------------------------

def _point_decoder_kernel(e_ref, pos_ref, sc_ref,
                          we1_ref, be1_ref, we2_ref, be2_ref,
                          w1a_ref, w1b_ref, b1b_ref,
                          wf_ref, b2a_ref, wfin_ref, bfin_ref,
                          o_ref, *, k, upscale):
    """Fused DGCNN edgeconv + mlp_1 + (ConvTranspose taps ⊗ mlp_2) for one (batch, N-tile)."""
    # ---- DynamicEdgeConv: MLP([6,32,64]) per edge, max aggregation over k neighbors ----
    dg = None
    for kk in range(k):                                   # static unroll over neighbor slots
        ek = e_ref[0, kk]                                 # (8, TN): [x_i(3), x_j-x_i(3), pad(2)]
        h1 = jnp.maximum(
            jnp.dot(we1_ref[...], ek, preferred_element_type=jnp.float32) + be1_ref[...],
            0.0)                                          # (32, TN)
        h2 = jnp.maximum(
            jnp.dot(we2_ref[...], h1, preferred_element_type=jnp.float32) + be2_ref[...],
            0.0)                                          # (64, TN)
        dg = h2 if dg is None else jnp.maximum(dg, h2)    # running max over neighbors
    # DGCNN.activ ReLU is a no-op here (dg >= 0 after the inner ReLUs).

    # ---- mlp_1: shapecode contribution pre-folded into sc_ref (per-batch (256,1) column) ----
    h = jnp.maximum(
        jnp.dot(w1a_ref[...], dg, preferred_element_type=jnp.float32) + sc_ref[0],
        0.0)                                              # (256, TN)
    x1 = jnp.dot(w1b_ref[...], h, preferred_element_type=jnp.float32) + b1b_ref[...]  # (128, TN)

    # ---- ConvTranspose1d taps fused with mlp_2 layer 1: single (U*64, 128) matmul ----
    hexp = jnp.maximum(
        jnp.dot(wf_ref[...], x1, preferred_element_type=jnp.float32) + b2a_ref[...],
        0.0)                                              # (U*64, TN)

    # ---- block-diagonal final 64->3 projection per tap + residual (repeat_interleave) ----
    z = jnp.dot(wfin_ref[...], hexp, preferred_element_type=jnp.float32) + bfin_ref[...]  # (U*3, TN)
    pos_tiled = jnp.concatenate([pos_ref[0]] * upscale, axis=0)                           # (U*3, TN)
    o_ref[0] = z + pos_tiled


# ----------------------------- kernel wrapper ---------------------------------

def _choose_n_tile(n):
    if n % 128 != 0:
        return n                       # small / unaligned point count: single full-N tile
    for t in (512, 256, 128):
        if n % t == 0:
            return t
    return n


def point_decoder_pallas(e_cf, pt, sc_h, kp, *, n_tile, upscale):
    B, K, C8, N = e_cf.shape
    grid = (B, N // n_tile)

    in_specs = [
        pl.BlockSpec((1, K, C8, n_tile), lambda b, t: (b, 0, 0, t)),   # edge features
        pl.BlockSpec((1, 3, n_tile), lambda b, t: (b, 0, t)),          # pt (channels-first pos)
        pl.BlockSpec((1,) + sc_h.shape[1:], lambda b, t: (b, 0, 0)),   # per-batch shapecode term
    ] + [pl.BlockSpec(kp[name].shape, lambda b, t: (0, 0))             # weights (fetched once)
         for name in _WEIGHT_ORDER]

    return pl.pallas_call(
        functools.partial(_point_decoder_kernel, k=K, upscale=upscale),
        out_shape=jax.ShapeDtypeStruct((B, upscale * 3, N), jnp.float32),
        grid=grid,
        in_specs=in_specs,
        out_specs=pl.BlockSpec((1, upscale * 3, n_tile), lambda b, t: (b, 0, t)),
        compiler_params=pltpu.CompilerParams(
            dimension_semantics=("parallel", "parallel")),
    )(e_cf, pt, sc_h, *[kp[name] for name in _WEIGHT_ORDER])


# ----------------------------- plain-JAX glue ----------------------------------

def knn_indices(pos, k):
    # TODO(synk): kNN graph construction (data-dependent top_k + gather) stays in plain JAX.
    d2 = jnp.sum((pos[:, :, None, :] - pos[:, None, :, :]) ** 2, axis=-1)    # (B, N, N)
    N = pos.shape[1]
    d2 = d2 + jnp.eye(N, dtype=pos.dtype) * 1e10                             # loop=False (no self edges)
    _, idx = jax.lax.top_k(-d2, k)                                           # (B, N, k)
    return idx


def prepare_kernel_params(p, upscale):
    """Re-layout native (PyTorch-equivalent) params for the channels-first fused kernel."""
    w_e1c = jnp.pad(p["w_e1"], ((0, 2), (0, 0))).T               # (32, 8): 6 -> 8 zero pad
    w_e2c = p["w_e2"].T                                          # (64, 32)
    w1a_sc = p["w1a"][:SHAPECODE_DIM]                            # (512, 256)  (wrapper-side)
    w1a_dgc = p["w1a"][SHAPECODE_DIM:].T                         # (256, 64)
    w1bc = p["w1b"].T                                            # (128, 256)
    # fold ConvTranspose taps into mlp_2 layer 1: row u*64+h contracts x1 channels (128)
    w_fused = jnp.einsum("uio,oh->uhi", p["wps"], p["w2a"]).reshape(upscale * 64, 128)
    # block-diagonal final projection: [u*3+c, u*64+h] = w2b[h, c]
    w_fin = jnp.kron(jnp.eye(upscale, dtype=p["w2b"].dtype), p["w2b"].T)     # (U*3, U*64)
    return dict(
        w_e1c=w_e1c, b_e1c=p["b_e1"].reshape(-1, 1),
        w_e2c=w_e2c, b_e2c=p["b_e2"].reshape(-1, 1),
        w1a_sc=w1a_sc, w1a_dgc=w1a_dgc,
        w1bc=w1bc, b1bc=p["b1b"].reshape(-1, 1),
        w_fused=w_fused, b2a_t=jnp.tile(p["b2a"], upscale).reshape(-1, 1),
        w_fin=w_fin, b_fin=jnp.tile(p["b2b"], upscale).reshape(-1, 1),
    )


def point_decoder_forward(pt, shapecode, params, *, upscale):
    B, _, N = pt.shape
    kp = prepare_kernel_params(params, upscale)

    # --- kNN + neighbor gather + edge-feature assembly (channels-first, 6->8 pad) ---
    pos = jnp.transpose(pt, (0, 2, 1))                                       # (B, N, 3)
    idx = knn_indices(pos, K_NEIGHBORS)                                      # (B, N, K)
    idx_t = jnp.transpose(idx, (0, 2, 1))                                    # (B, K, N)
    nbr = jax.vmap(lambda p, ix: p[:, ix])(pt, idx_t)                        # (B, 3, K, N)
    ctr = jnp.broadcast_to(pt[:, :, None, :], nbr.shape)                     # (B, 3, K, N)
    pad = jnp.zeros((B, 2, K_NEIGHBORS, N), pt.dtype)
    e_cf = jnp.transpose(jnp.concatenate([ctr, nbr - ctr, pad], axis=1),
                         (0, 2, 1, 3))                                       # (B, K, 8, N)

    # per-batch shapecode contribution to mlp_1 layer 1 (computed once, never broadcast to N)
    sc_h = (shapecode @ kp["w1a_sc"] + params["b1a"]).reshape(B, -1, 1)      # (B, 256, 1)

    n_tile = _choose_n_tile(N)
    out_cf = point_decoder_pallas(e_cf, pt, sc_h, kp,
                                  n_tile=n_tile, upscale=upscale)            # (B, U*3, N)

    # -> PyTorch layout (B, 3, N*upscale), output column n*upscale + u
    out = out_cf.reshape(B, upscale, 3, N)
    return jnp.transpose(out, (0, 2, 3, 1)).reshape(B, 3, N * upscale)


# ----------------------------- reference & params ------------------------------

def reference_forward(pt, shapecode, p, upscale):
    B, _, N = pt.shape
    pos = jnp.transpose(pt, (0, 2, 1))
    idx = knn_indices(pos, K_NEIGHBORS)
    nbr = jax.vmap(lambda x, ix: x[ix])(pos, idx)                            # (B, N, K, 3)
    center = jnp.broadcast_to(pos[:, :, None, :], nbr.shape)
    e = jnp.concatenate([center, nbr - center], axis=-1)                     # (B, N, K, 6)
    h = jax.nn.relu(e @ p["w_e1"] + p["b_e1"])
    h = jax.nn.relu(h @ p["w_e2"] + p["b_e2"])
    dg = jax.nn.relu(jnp.max(h, axis=2))                                     # (B, N, 64)
    sc = jnp.broadcast_to(shapecode[:, None, :], (B, N, SHAPECODE_DIM))
    pf = jnp.concatenate([sc, dg], axis=-1)
    h = jax.nn.relu(pf @ p["w1a"] + p["b1a"])
    x1 = h @ p["w1b"] + p["b1b"]
    outs = []
    for u in range(upscale):
        y = x1 @ p["wps"][u]
        h2 = jax.nn.relu(y @ p["w2a"] + p["b2a"])
        outs.append(h2 @ p["w2b"] + p["b2b"] + pos)
    out = jnp.stack(outs, axis=1)                                            # (B, U, N, 3)
    return jnp.transpose(out, (0, 3, 2, 1)).reshape(B, 3, N * upscale)


def init_params(key, upscale):
    ks = jax.random.split(key, 13)

    def w(k, shape, scale=0.05):
        return scale * jax.random.normal(k, shape, jnp.float32)

    return dict(
        # DGCNN edge MLP: Linear(6,32)+ReLU, Linear(32,64)+ReLU
        w_e1=w(ks[0], (6, 32)),   b_e1=w(ks[1], (32,), 0.01),
        w_e2=w(ks[2], (32, 64)),  b_e2=w(ks[3], (64,), 0.01),
        # mlp_1: Conv1d(576,256,1)+ReLU, Conv1d(256,128,1)
        w1a=w(ks[4], (SHAPECODE_DIM + 64, 256)), b1a=w(ks[5], (256,), 0.01),
        w1b=w(ks[6], (256, 128)),                b1b=w(ks[7], (128,), 0.01),
        # ConvTranspose1d(128,128,upscale,upscale,bias=False), taps-major: wps[u, in, out]
        wps=w(ks[8], (upscale, 128, 128)),
        # mlp_2: Conv1d(128,64,1)+ReLU, Conv1d(64,3,1)
        w2a=w(ks[9], (128, 64)),  b2a=w(ks[10], (64,), 0.01),
        w2b=w(ks[11], (64, 3)),   b2b=w(ks[12], (3,), 0.01),
    )


# ----------------------------- main --------------------------------------------

if __name__ == "__main__":
    B, N, UPSCALE = 2, 128, 4
    key = jax.random.PRNGKey(0)
    k_pt, k_sc, k_p = jax.random.split(key, 3)
    pt = jax.random.normal(k_pt, (B, 3, N), jnp.float32)                     # (B, C=3, N)
    shapecode = jax.random.normal(k_sc, (B, SHAPECODE_DIM), jnp.float32)     # (B, 512)
    params = init_params(k_p, UPSCALE)

    fwd = jax.jit(functools.partial(point_decoder_forward, upscale=UPSCALE))
    out = jax.block_until_ready(fwd(pt, shapecode, params))

    ref = reference_forward(pt, shapecode, params, UPSCALE)
    assert out.shape == (B, 3, N * UPSCALE), out.shape
    err = float(jnp.max(jnp.abs(out - ref)))
    tol = 5e-2 * (1.0 + float(jnp.max(jnp.abs(ref))))
    assert err <= tol, f"max abs diff {err} > tol {tol}"
    print("KERNEL_OK")
</pallas_src>

<mosaic_0001>
module attributes {stable_mosaic.version = 11 : i64} {
  func.func @_point_decoder_kernel(%arg0: i32, %arg1: i32, %arg2: memref<1x16x8x128xf32, #tpu.memory_space<vmem>>, %arg3: memref<1x3x128xf32, #tpu.memory_space<vmem>>, %arg4: memref<1x256x1xf32, #tpu.memory_space<vmem>>, %arg5: memref<32x8xf32, #tpu.memory_space<vmem>>, %arg6: memref<32x1xf32, #tpu.memory_space<vmem>>, %arg7: memref<64x32xf32, #tpu.memory_space<vmem>>, %arg8: memref<64x1xf32, #tpu.memory_space<vmem>>, %arg9: memref<256x64xf32, #tpu.memory_space<vmem>>, %arg10: memref<128x256xf32, #tpu.memory_space<vmem>>, %arg11: memref<128x1xf32, #tpu.memory_space<vmem>>, %arg12: memref<256x128xf32, #tpu.memory_space<vmem>>, %arg13: memref<256x1xf32, #tpu.memory_space<vmem>>, %arg14: memref<12x256xf32, #tpu.memory_space<vmem>>, %arg15: memref<12x1xf32, #tpu.memory_space<vmem>>, %arg16: memref<1x12x128xf32, #tpu.memory_space<vmem>>) attributes {dimension_semantics = [#tpu.dimension_semantics<parallel>, #tpu.dimension_semantics<parallel>], iteration_bounds = array<i64: 2, 1>, scalar_prefetch = 0 : i64, scratch_operands = 0 : i64, tpu.core_type = #tpu.core_type<tc>, window_params = [{transform_indices = @transform_0, window_bounds = array<i64: 1, 16, 8, 128>}, {transform_indices = @transform_1, window_bounds = array<i64: 1, 3, 128>}, {transform_indices = @transform_2, window_bounds = array<i64: 1, 256, 1>}, {pipeline_mode = #tpu.pipeline_mode<synchronous>, transform_indices = @transform_3, window_bounds = array<i64: 32, 8>}, {pipeline_mode = #tpu.pipeline_mode<synchronous>, transform_indices = @transform_4, window_bounds = array<i64: 32, 1>}, {pipeline_mode = #tpu.pipeline_mode<synchronous>, transform_indices = @transform_5, window_bounds = array<i64: 64, 32>}, {pipeline_mode = #tpu.pipeline_mode<synchronous>, transform_indices = @transform_6, window_bounds = array<i64: 64, 1>}, {pipeline_mode = #tpu.pipeline_mode<synchronous>, transform_indices = @transform_7, window_bounds = array<i64: 256, 64>}, {pipeline_mode = #tpu.pipeline_mode<synchronous>, transform_indices = @transform_8, window_bounds = array<i64: 128, 256>}, {pipeline_mode = #tpu.pipeline_mode<synchronous>, transform_indices = @transform_9, window_bounds = array<i64: 128, 1>}, {pipeline_mode = #tpu.pipeline_mode<synchronous>, transform_indices = @transform_10, window_bounds = array<i64: 256, 128>}, {pipeline_mode = #tpu.pipeline_mode<synchronous>, transform_indices = @transform_11, window_bounds = array<i64: 256, 1>}, {pipeline_mode = #tpu.pipeline_mode<synchronous>, transform_indices = @transform_12, window_bounds = array<i64: 12, 256>}, {pipeline_mode = #tpu.pipeline_mode<synchronous>, transform_indices = @transform_13, window_bounds = array<i64: 12, 1>}, {transform_indices = @transform_14, window_bounds = array<i64: 1, 12, 128>}]} {
    %c0 = arith.constant 0 : index
    %c0_0 = arith.constant 0 : index
    %c0_1 = arith.constant 0 : index
    %c0_2 = arith.constant 0 : index
    %0 = vector.load %arg2[%c0, %c0_0, %c0_1, %c0_2] : memref<1x16x8x128xf32, #tpu.memory_space<vmem>>, vector<1x1x8x128xf32>
    %1 = vector.shape_cast %0 : vector<1x1x8x128xf32> to vector<8x128xf32>
    %c0_3 = arith.constant 0 : index
    %c0_4 = arith.constant 0 : index
    %2 = vector.load %arg5[%c0_3, %c0_4] : memref<32x8xf32, #tpu.memory_space<vmem>>, vector<32x8xf32>
    %cst = arith.constant dense<0.000000e+00> : vector<32x128xf32>
    %3 = tpu.matmul %2, %1, %cst {dimension_numbers = #tpu.dot_dimension_numbers<[1], [0], [0], [1], [0, 0, 1, 1], [], []>} : vector<32x8xf32>, vector<8x128xf32>, vector<32x128xf32> -> vector<32x128xf32>
    %c0_5 = arith.constant 0 : index
    %c0_6 = arith.constant 0 : index
    %4 = vector.load %arg6[%c0_5, %c0_6] : memref<32x1xf32, #tpu.memory_space<vmem>>, vector<32x1xf32>
    %5 = vector.broadcast %4 : vector<32x1xf32> to vector<32x128xf32>
    %6 = arith.addf %3, %5 : vector<32x128xf32>
    %cst_7 = arith.constant 0.000000e+00 : f32
    %7 = vector.broadcast %cst_7 : f32 to vector<32x128xf32>
    %8 = arith.maximumf %6, %7 : vector<32x128xf32>
    %c0_8 = arith.constant 0 : index
    %c0_9 = arith.constant 0 : index
    %9 = vector.load %arg7[%c0_8, %c0_9] : memref<64x32xf32, #tpu.memory_space<vmem>>, vector<64x32xf32>
    %cst_10 = arith.constant dense<0.000000e+00> : vector<64x128xf32>
    %10 = tpu.matmul %9, %8, %cst_10 {dimension_numbers = #tpu.dot_dimension_numbers<[1], [0], [0], [1], [0, 0, 1, 1], [], []>} : vector<64x32xf32>, vector<32x128xf32>, vector<64x128xf32> -> vector<64x128xf32>
    %c0_11 = arith.constant 0 : index
    %c0_12 = arith.constant 0 : index
    %11 = vector.load %arg8[%c0_11, %c0_12] : memref<64x1xf32, #tpu.memory_space<vmem>>, vector<64x1xf32>
    %12 = vector.broadcast %11 : vector<64x1xf32> to vector<64x128xf32>
    %13 = arith.addf %10, %12 : vector<64x128xf32>
    %cst_13 = arith.constant 0.000000e+00 : f32
    %14 = vector.broadcast %cst_13 : f32 to vector<64x128xf32>
    %15 = arith.maximumf %13, %14 : vector<64x128xf32>
    %c0_14 = arith.constant 0 : index
    %c1 = arith.constant 1 : index
    %c0_15 = arith.constant 0 : index
    %c0_16 = arith.constant 0 : index
    %16 = vector.load %arg2[%c0_14, %c1, %c0_15, %c0_16] : memref<1x16x8x128xf32, #tpu.memory_space<vmem>>, vector<1x1x8x128xf32>
    %17 = vector.shape_cast %16 : vector<1x1x8x128xf32> to vector<8x128xf32>
    %c0_17 = arith.constant 0 : index
    %c0_18 = arith.constant 0 : index
    %18 = vector.load %arg5[%c0_17, %c0_18] : memref<32x8xf32, #tpu.memory_space<vmem>>, vector<32x8xf32>
    %cst_19 = arith.constant dense<0.000000e+00> : vector<32x128xf32>
    %19 = tpu.matmul %18, %17, %cst_19 {dimension_numbers = #tpu.dot_dimension_numbers<[1], [0], [0], [1], [0, 0, 1, 1], [], []>} : vector<32x8xf32>, vector<8x128xf32>, vector<32x128xf32> -> vector<32x128xf32>
    %c0_20 = arith.constant 0 : index
    %c0_21 = arith.constant 0 : index
    %20 = vector.load %arg6[%c0_20, %c0_21] : memref<32x1xf32, #tpu.memory_space<vmem>>, vector<32x1xf32>
    %21 = vector.broadcast %20 : vector<32x1xf32> to vector<32x128xf32>
    %22 = arith.addf %19, %21 : vector<32x128xf32>
    %cst_22 = arith.constant 0.000000e+00 : f32
    %23 = vector.broadcast %cst_22 : f32 to vector<32x128xf32>
    %24 = arith.maximumf %22, %23 : vector<32x128xf32>
    %c0_23 = arith.constant 0 : index
    %c0_24 = arith.constant 0 : index
    %25 = vector.load %arg7[%c0_23, %c0_24] : memref<64x32xf32, #tpu.memory_space<vmem>>, vector<64x32xf32>
    %cst_25 = arith.constant dense<0.000000e+00> : vector<64x128xf32>
    %26 = tpu.matmul %25, %24, %cst_25 {dimension_numbers = #tpu.dot_dimension_numbers<[1], [0], [0], [1], [0, 0, 1, 1], [], []>} : vector<64x32xf32>, vector<32x128xf32>, vector<64x128xf32> -> vector<64x128xf32>
    %c0_26 = arith.constant 0 : index
    %c0_27 = arith.constant 0 : index
    %27 = vector.load %arg8[%c0_26, %c0_27] : memref<64x1xf32, #tpu.memory_space<vmem>>, vector<64x1xf32>
    %28 = vector.broadcast %27 : vector<64x1xf32> to vector<64x128xf32>
    %29 = arith.addf %26, %28 : vector<64x128xf32>
    %cst_28 = arith.constant 0.000000e+00 : f32
    %30 = vector.broadcast %cst_28 : f32 to vector<64x128xf32>
    %31 = arith.maximumf %29, %30 : vector<64x128xf32>
    %32 = arith.maximumf %15, %31 : vector<64x128xf32>
    %c0_29 = arith.constant 0 : index
    %c2 = arith.constant 2 : index
    %c0_30 = arith.constant 0 : index
    %c0_31 = arith.constant 0 : index
    %33 = vector.load %arg2[%c0_29, %c2, %c0_30, %c0_31] : memref<1x16x8x128xf32, #tpu.memory_space<vmem>>, vector<1x1x8x128xf32>
    %34 = vector.shape_cast %33 : vector<1x1x8x128xf32> to vector<8x128xf32>
    %c0_32 = arith.constant 0 : index
    %c0_33 = arith.constant 0 : index
    %35 = vector.load %arg5[%c0_32, %c0_33] : memref<32x8xf32, #tpu.memory_space<vmem>>, vector<32x8xf32>
    %cst_34 = arith.constant dense<0.000000e+00> : vector<32x128xf32>
    %36 = tpu.matmul %35, %34, %cst_34 {dimension_numbers = #tpu.dot_dimension_numbers<[1], [0], [0], [1], [0, 0, 1, 1], [], []>} : vector<32x8xf32>, vector<8x128xf32>, vector<32x128xf32> -> vector<32x128xf32>
    %c0_35 = arith.constant 0 : index
    %c0_36 = arith.constant 0 : index
    %37 = vector.load %arg6[%c0_35, %c0_36] : memref<32x1xf32, #tpu.memory_space<vmem>>, vector<32x1xf32>
    %38 = vector.broadcast %37 : vector<32x1xf32> to vector<32x128xf32>
    %39 = arith.addf %36, %38 : vector<32x128xf32>
    %cst_37 = arith.constant 0.000000e+00 : f32
    %40 = vector.broadcast %cst_37 : f32 to vector<32x128xf32>
    %41 = arith.maximumf %39, %40 : vector<32x128xf32>
    %c0_38 = arith.constant 0 : index
    %c0_39 = arith.constant 0 : index
    %42 = vector.load %arg7[%c0_38, %c0_39] : memref<64x32xf32, #tpu.memory_space<vmem>>, vector<64x32xf32>
    %cst_40 = arith.constant dense<0.000000e+00> : vector<64x128xf32>
    %43 = tpu.matmul %42, %41, %cst_40 {dimension_numbers = #tpu.dot_dimension_numbers<[1], [0], [0], [1], [0, 0, 1, 1], [], []>} : vector<64x32xf32>, vector<32x128xf32>, vector<64x128xf32> -> vector<64x128xf32>
    %c0_41 = arith.constant 0 : index
    %c0_42 = arith.constant 0 : index
    %44 = vector.load %arg8[%c0_41, %c0_42] : memref<64x1xf32, #tpu.memory_space<vmem>>, vector<64x1xf32>
    %45 = vector.broadcast %44 : vector<64x1xf32> to vector<64x128xf32>
    %46 = arith.addf %43, %45 : vector<64x128xf32>
    %cst_43 = arith.constant 0.000000e+00 : f32
    %47 = vector.broadcast %cst_43 : f32 to vector<64x128xf32>
    %48 = arith.maximumf %46, %47 : vector<64x128xf32>
    %49 = arith.maximumf %32, %48 : vector<64x128xf32>
    %c0_44 = arith.constant 0 : index
    %c3 = arith.constant 3 : index
    %c0_45 = arith.constant 0 : index
    %c0_46 = arith.constant 0 : index
    %50 = vector.load %arg2[%c0_44, %c3, %c0_45, %c0_46] : memref<1x16x8x128xf32, #tpu.memory_space<vmem>>, vector<1x1x8x128xf32>
    %51 = vector.shape_cast %50 : vector<1x1x8x128xf32> to vector<8x128xf32>
    %c0_47 = arith.constant 0 : index
    %c0_48 = arith.constant 0 : index
    %52 = vector.load %arg5[%c0_47, %c0_48] : memref<32x8xf32, #tpu.memory_space<vmem>>, vector<32x8xf32>
    %cst_49 = arith.constant dense<0.000000e+00> : vector<32x128xf32>
    %53 = tpu.matmul %52, %51, %cst_49 {dimension_numbers = #tpu.dot_dimension_numbers<[1], [0], [0], [1], [0, 0, 1, 1], [], []>} : vector<32x8xf32>, vector<8x128xf32>, vector<32x128xf32> -> vector<32x128xf32>
    %c0_50 = arith.constant 0 : index
    %c0_51 = arith.constant 0 : index
    %54 = vector.load %arg6[%c0_50, %c0_51] : memref<32x1xf32, #tpu.memory_space<vmem>>, vector<32x1xf32>
    %55 = vector.broadcast %54 : vector<32x1xf32> to vector<32x128xf32>
    %56 = arith.addf %53, %55 : vector<32x128xf32>
    %cst_52 = arith.constant 0.000000e+00 : f32
    %57 = vector.broadcast %cst_52 : f32 to vector<32x128xf32>
    %58 = arith.maximumf %56, %57 : vector<32x128xf32>
    %c0_53 = arith.constant 0 : index
    %c0_54 = arith.constant 0 : index
    %59 = vector.load %arg7[%c0_53, %c0_54] : memref<64x32xf32, #tpu.memory_space<vmem>>, vector<64x32xf32>
    %cst_55 = arith.constant dense<0.000000e+00> : vector<64x128xf32>
    %60 = tpu.matmul %59, %58, %cst_55 {dimension_numbers = #tpu.dot_dimension_numbers<[1], [0], [0], [1], [0, 0, 1, 1], [], []>} : vector<64x32xf32>, vector<32x128xf32>, vector<64x128xf32> -> vector<64x128xf32>
    %c0_56 = arith.constant 0 : index
    %c0_57 = arith.constant 0 : index
    %61 = vector.load %arg8[%c0_56, %c0_57] : memref<64x1xf32, #tpu.memory_space<vmem>>, vector<64x1xf32>
    %62 = vector.broadcast %61 : vector<64x1xf32> to vector<64x128xf32>
    %63 = arith.addf %60, %62 : vector<64x128xf32>
    %cst_58 = arith.constant 0.000000e+00 : f32
    %64 = vector.broadcast %cst_58 : f32 to vector<64x128xf32>
    %65 = arith.maximumf %63, %64 : vector<64x128xf32>
    %66 = arith.maximumf %49, %65 : vector<64x128xf32>
    %c0_59 = arith.constant 0 : index
    %c4 = arith.constant 4 : index
    %c0_60 = arith.constant 0 : index
    %c0_61 = arith.constant 0 : index
    %67 = vector.load %arg2[%c0_59, %c4, %c0_60, %c0_61] : memref<1x16x8x128xf32, #tpu.memory_space<vmem>>, vector<1x1x8x128xf32>
    %68 = vector.shape_cast %67 : vector<1x1x8x128xf32> to vector<8x128xf32>
    %c0_62 = arith.constant 0 : index
    %c0_63 = arith.constant 0 : index
    %69 = vector.load %arg5[%c0_62, %c0_63] : memref<32x8xf32, #tpu.memory_space<vmem>>, vector<32x8xf32>
    %cst_64 = arith.constant dense<0.000000e+00> : vector<32x128xf32>
    %70 = tpu.matmul %69, %68, %cst_64 {dimension_numbers = #tpu.dot_dimension_numbers<[1], [0], [0], [1], [0, 0, 1, 1], [], []>} : vector<32x8xf32>, vector<8x128xf32>, vector<32x128xf32> -> vector<32x128xf32>
    %c0_65 = arith.constant 0 : index
    %c0_66 = arith.constant 0 : index
    %71 = vector.load %arg6[%c0_65, %c0_66] : memref<32x1xf32, #tpu.memory_space<vmem>>, vector<32x1xf32>
    %72 = vector.broadcast %71 : vector<32x1xf32> to vector<32x128xf32>
    %73 = arith.addf %70, %72 : vector<32x128xf32>
    %cst_67 = arith.constant 0.000000e+00 : f32
    %74 = vector.broadcast %cst_67 : f32 to vector<32x128xf32>
    %75 = arith.maximumf %73, %74 : vector<32x128xf32>
    %c0_68 = arith.constant 0 : index
    %c0_69 = arith.constant 0 : index
    %76 = vector.load %arg7[%c0_68, %c0_69] : memref<64x32xf32, #tpu.memory_space<vmem>>, vector<64x32xf32>
    %cst_70 = arith.constant dense<0.000000e+00> : vector<64x128xf32>
    %77 = tpu.matmul %76, %75, %cst_70 {dimension_numbers = #tpu.dot_dimension_numbers<[1], [0], [0], [1], [0, 0, 1, 1], [], []>} : vector<64x32xf32>, vector<32x128xf32>, vector<64x128xf32> -> vector<64x128xf32>
    %c0_71 = arith.constant 0 : index
    %c0_72 = arith.constant 0 : index
    %78 = vector.load %arg8[%c0_71, %c0_72] : memref<64x1xf32, #tpu.memory_space<vmem>>, vector<64x1xf32>
    %79 = vector.broadcast %78 : vector<64x1xf32> to vector<64x128xf32>
    %80 = arith.addf %77, %79 : vector<64x128xf32>
    %cst_73 = arith.constant 0.000000e+00 : f32
    %81 = vector.broadcast %cst_73 : f32 to vector<64x128xf32>
    %82 = arith.maximumf %80, %81 : vector<64x128xf32>
    %83 = arith.maximumf %66, %82 : vector<64x128xf32>
    %c0_74 = arith.constant 0 : index
    %c5 = arith.constant 5 : index
    %c0_75 = arith.constant 0 : index
    %c0_76 = arith.constant 0 : index
    %84 = vector.load %arg2[%c0_74, %c5, %c0_75, %c0_76] : memref<1x16x8x128xf32, #tpu.memory_space<vmem>>, vector<1x1x8x128xf32>
    %85 = vector.shape_cast %84 : vector<1x1x8x128xf32> to vector<8x128xf32>
    %c0_77 = arith.constant 0 : index
    %c0_78 = arith.constant 0 : index
    %86 = vector.load %arg5[%c0_77, %c0_78] : memref<32x8xf32, #tpu.memory_space<vmem>>, vector<32x8xf32>
    %cst_79 = arith.constant dense<0.000000e+00> : vector<32x128xf32>
    %87 = tpu.matmul %86, %85, %cst_79 {dimension_numbers = #tpu.dot_dimension_numbers<[1], [0], [0], [1], [0, 0, 1, 1], [], []>} : vector<32x8xf32>, vector<8x128xf32>, vector<32x128xf32> -> vector<32x128xf32>
    %c0_80 = arith.constant 0 : index
    %c0_81 = arith.constant 0 : index
    %88 = vector.load %arg6[%c0_80, %c0_81] : memref<32x1xf32, #tpu.memory_space<vmem>>, vector<32x1xf32>
    %89 = vector.broadcast %88 : vector<32x1xf32> to vector<32x128xf32>
    %90 = arith.addf %87, %89 : vector<32x128xf32>
    %cst_82 = arith.constant 0.000000e+00 : f32
    %91 = vector.broadcast %cst_82 : f32 to vector<32x128xf32>
    %92 = arith.maximumf %90, %91 : vector<32x128xf32>
    %c0_83 = arith.constant 0 : index
    %c0_84 = arith.constant 0 : index
    %93 = vector.load %arg7[%c0_83, %c0_84] : memref<64x32xf32, #tpu.memory_space<vmem>>, vector<64x32xf32>
    %cst_85 = arith.constant dense<0.000000e+00> : vector<64x128xf32>
    %94 = tpu.matmul %93, %92, %cst_85 {dimension_numbers = #tpu.dot_dimension_numbers<[1], [0], [0], [1], [0, 0, 1, 1], [], []>} : vector<64x32xf32>, vector<32x128xf32>, vector<64x128xf32> -> vector<64x128xf32>
    %c0_86 = arith.constant 0 : index
    %c0_87 = arith.constant 0 : index
    %95 = vector.load %arg8[%c0_86, %c0_87] : memref<64x1xf32, #tpu.memory_space<vmem>>, vector<64x1xf32>
    %96 = vector.broadcast %95 : vector<64x1xf32> to vector<64x128xf32>
    %97 = arith.addf %94, %96 : vector<64x128xf32>
    %cst_88 = arith.constant 0.000000e+00 : f32
    %98 = vector.broadcast %cst_88 : f32 to vector<64x128xf32>
    %99 = arith.maximumf %97, %98 : vector<64x128xf32>
    %100 = arith.maximumf %83, %99 : vector<64x128xf32>
    %c0_89 = arith.constant 0 : index
    %c6 = arith.constant 6 : index
    %c0_90 = arith.constant 0 : index
    %c0_91 = arith.constant 0 : index
    %101 = vector.load %arg2[%c0_89, %c6, %c0_90, %c0_91] : memref<1x16x8x128xf32, #tpu.memory_space<vmem>>, vector<1x1x8x128xf32>
    %102 = vector.shape_cast %101 : vector<1x1x8x128xf32> to vector<8x128xf32>
    %c0_92 = arith.constant 0 : index
    %c0_93 = arith.constant 0 : index
    %103 = vector.load %arg5[%c0_92, %c0_93] : memref<32x8xf32, #tpu.memory_space<vmem>>, vector<32x8xf32>
    %cst_94 = arith.constant dense<0.000000e+00> : vector<32x128xf32>
    %104 = tpu.matmul %103, %102, %cst_94 {dimension_numbers = #tpu.dot_dimension_numbers<[1], [0], [0], [1], [0, 0, 1, 1], [], []>} : vector<32x8xf32>, vector<8x128xf32>, vector<32x128xf32> -> vector<32x128xf32>
    %c0_95 = arith.constant 0 : index
    %c0_96 = arith.constant 0 : index
    %105 = vector.load %arg6[%c0_95, %c0_96] : memref<32x1xf32, #tpu.memory_space<vmem>>, vector<32x1xf32>
    %106 = vector.broadcast %105 : vector<32x1xf32> to vector<32x128xf32>
    %107 = arith.addf %104, %106 : vector<32x128xf32>
    %cst_97 = arith.constant 0.000000e+00 : f32
    %108 = vector.broadcast %cst_97 : f32 to vector<32x128xf32>
    %109 = arith.maximumf %107, %108 : vector<32x128xf32>
    %c0_98 = arith.constant 0 : index
    %c0_99 = arith.constant 0 : index
    %110 = vector.load %arg7[%c0_98, %c0_99] : memref<64x32xf32, #tpu.memory_space<vmem>>, vector<64x32xf32>
    %cst_100 = arith.constant dense<0.000000e+00> : vector<64x128xf32>
    %111 = tpu.matmul %110, %109, %cst_100 {dimension_numbers = #tpu.dot_dimension_numbers<[1], [0], [0], [1], [0, 0, 1, 1], [], []>} : vector<64x32xf32>, vector<32x128xf32>, vector<64x128xf32> -> vector<64x128xf32>
    %c0_101 = arith.constant 0 : index
    %c0_102 = arith.constant 0 : index
    %112 = vector.load %arg8[%c0_101, %c0_102] : memref<64x1xf32, #tpu.memory_space<vmem>>, vector<64x1xf32>
    %113 = vector.broadcast %112 : vector<64x1xf32> to vector<64x128xf32>
    %114 = arith.addf %111, %113 : vector<64x128xf32>
    %cst_103 = arith.constant 0.000000e+00 : f32
    %115 = vector.broadcast %cst_103 : f32 to vector<64x128xf32>
    %116 = arith.maximumf %114, %115 : vector<64x128xf32>
    %117 = arith.maximumf %100, %116 : vector<64x128xf32>
    %c0_104 = arith.constant 0 : index
    %c7 = arith.constant 7 : index
    %c0_105 = arith.constant 0 : index
    %c0_106 = arith.constant 0 : index
    %118 = vector.load %arg2[%c0_104, %c7, %c0_105, %c0_106] : memref<1x16x8x128xf32, #tpu.memory_space<vmem>>, vector<1x1x8x128xf32>
    %119 = vector.shape_cast %118 : vector<1x1x8x128xf32> to vector<8x128xf32>
    %c0_107 = arith.constant 0 : index
    %c0_108 = arith.constant 0 : index
    %120 = vector.load %arg5[%c0_107, %c0_108] : memref<32x8xf32, #tpu.memory_space<vmem>>, vector<32x8xf32>
    %cst_109 = arith.constant dense<0.000000e+00> : vector<32x128xf32>
    %121 = tpu.matmul %120, %119, %cst_109 {dimension_numbers = #tpu.dot_dimension_numbers<[1], [0], [0], [1], [0, 0, 1, 1], [], []>} : vector<32x8xf32>, vector<8x128xf32>, vector<32x128xf32> -> vector<32x128xf32>
    %c0_110 = arith.constant 0 : index
    %c0_111 = arith.constant 0 : index
    %122 = vector.load %arg6[%c0_110, %c0_111] : memref<32x1xf32, #tpu.memory_space<vmem>>, vector<32x1xf32>
    %123 = vector.broadcast %122 : vector<32x1xf32> to vector<32x128xf32>
    %124 = arith.addf %121, %123 : vector<32x128xf32>
    %cst_112 = arith.constant 0.000000e+00 : f32
    %125 = vector.broadcast %cst_112 : f32 to vector<32x128xf32>
    %126 = arith.maximumf %124, %125 : vector<32x128xf32>
    %c0_113 = arith.constant 0 : index
    %c0_114 = arith.constant 0 : index
    %127 = vector.load %arg7[%c0_113, %c0_114] : memref<64x32xf32, #tpu.memory_space<vmem>>, vector<64x32xf32>
    %cst_115 = arith.constant dense<0.000000e+00> : vector<64x128xf32>
    %128 = tpu.matmul %127, %126, %cst_115 {dimension_numbers = #tpu.dot_dimension_numbers<[1], [0], [0], [1], [0, 0, 1, 1], [], []>} : vector<64x32xf32>, vector<32x128xf32>, vector<64x128xf32> -> vector<64x128xf32>
    %c0_116 = arith.constant 0 : index
    %c0_117 = arith.constant 0 : index
    %129 = vector.load %arg8[%c0_116, %c0_117] : memref<64x1xf32, #tpu.memory_space<vmem>>, vector<64x1xf32>
    %130 = vector.broadcast %129 : vector<64x1xf32> to vector<64x128xf32>
    %131 = arith.addf %128, %130 : vector<64x128xf32>
    %cst_118 = arith.constant 0.000000e+00 : f32
    %132 = vector.broadcast %cst_118 : f32 to vector<64x128xf32>
    %133 = arith.maximumf %131, %132 : vector<64x128xf32>
    %134 = arith.maximumf %117, %133 : vector<64x128xf32>
    %c0_119 = arith.constant 0 : index
    %c8 = arith.constant 8 : index
    %c0_120 = arith.constant 0 : index
    %c0_121 = arith.constant 0 : index
    %135 = vector.load %arg2[%c0_119, %c8, %c0_120, %c0_121] : memref<1x16x8x128xf32, #tpu.memory_space<vmem>>, vector<1x1x8x128xf32>
    %136 = vector.shape_cast %135 : vector<1x1x8x128xf32> to vector<8x128xf32>
    %c0_122 = arith.constant 0 : index
    %c0_123 = arith.constant 0 : index
    %137 = vector.load %arg5[%c0_122, %c0_123] : memref<32x8xf32, #tpu.memory_space<vmem>>, vector<32x8xf32>
    %cst_124 = arith.constant dense<0.000000e+00> : vector<32x128xf32>
    %138 = tpu.matmul %137, %136, %cst_124 {dimension_numbers = #tpu.dot_dimension_numbers<[1], [0], [0], [1], [0, 0, 1, 1], [], []>} : vector<32x8xf32>, vector<8x128xf32>, vector<32x128xf32> -> vector<32x128xf32>
    %c0_125 = arith.constant 0 : index
    %c0_126 = arith.constant 0 : index
    %139 = vector.load %arg6[%c0_125, %c0_126] : memref<32x1xf32, #tpu.memory_space<vmem>>, vector<32x1xf32>
    %140 = vector.broadcast %139 : vector<32x1xf32> to vector<32x128xf32>
    %141 = arith.addf %138, %140 : vector<32x128xf32>
    %cst_127 = arith.constant 0.000000e+00 : f32
    %142 = vector.broadcast %cst_127 : f32 to vector<32x128xf32>
    %143 = arith.maximumf %141, %142 : vector<32x128xf32>
    %c0_128 = arith.constant 0 : index
    %c0_129 = arith.constant 0 : index
    %144 = vector.load %arg7[%c0_128, %c0_129] : memref<64x32xf32, #tpu.memory_space<vmem>>, vector<64x32xf32>
    %cst_130 = arith.constant dense<0.000000e+00> : vector<64x128xf32>
    %145 = tpu.matmul %144, %143, %cst_130 {dimension_numbers = #tpu.dot_dimension_numbers<[1], [0], [0], [1], [0, 0, 1, 1], [], []>} : vector<64x32xf32>, vector<32x128xf32>, vector<64x128xf32> -> vector<64x128xf32>
    %c0_131 = arith.constant 0 : index
    %c0_132 = arith.constant 0 : index
    %146 = vector.load %arg8[%c0_131, %c0_132] : memref<64x1xf32, #tpu.memory_space<vmem>>, vector<64x1xf32>
    %147 = vector.broadcast %146 : vector<64x1xf32> to vector<64x128xf32>
    %148 = arith.addf %145, %147 : vector<64x128xf32>
    %cst_133 = arith.constant 0.000000e+00 : f32
    %149 = vector.broadcast %cst_133 : f32 to vector<64x128xf32>
    %150 = arith.maximumf %148, %149 : vector<64x128xf32>
    %151 = arith.maximumf %134, %150 : vector<64x128xf32>
    %c0_134 = arith.constant 0 : index
    %c9 = arith.constant 9 : index
    %c0_135 = arith.constant 0 : index
    %c0_136 = arith.constant 0 : index
    %152 = vector.load %arg2[%c0_134, %c9, %c0_135, %c0_136] : memref<1x16x8x128xf32, #tpu.memory_space<vmem>>, vector<1x1x8x128xf32>
    %153 = vector.shape_cast %152 : vector<1x1x8x128xf32> to vector<8x128xf32>
    %c0_137 = arith.constant 0 : index
    %c0_138 = arith.constant 0 : index
    %154 = vector.load %arg5[%c0_137, %c0_138] : memref<32x8xf32, #tpu.memory_space<vmem>>, vector<32x8xf32>
    %cst_139 = arith.constant dense<0.000000e+00> : vector<32x128xf32>
    %155 = tpu.matmul %154, %153, %cst_139 {dimension_numbers = #tpu.dot_dimension_numbers<[1], [0], [0], [1], [0, 0, 1, 1], [], []>} : vector<32x8xf32>, vector<8x128xf32>, vector<32x128xf32> -> vector<32x128xf32>
    %c0_140 = arith.constant 0 : index
    %c0_141 = arith.constant 0 : index
    %156 = vector.load %arg6[%c0_140, %c0_141] : memref<32x1xf32, #tpu.memory_space<vmem>>, vector<32x1xf32>
    %157 = vector.broadcast %156 : vector<32x1xf32> to vector<32x128xf32>
    %158 = arith.addf %155, %157 : vector<32x128xf32>
    %cst_142 = arith.constant 0.000000e+00 : f32
    %159 = vector.broadcast %cst_142 : f32 to vector<32x128xf32>
    %160 = arith.maximumf %158, %159 : vector<32x128xf32>
    %c0_143 = arith.constant 0 : index
    %c0_144 = arith.constant 0 : index
    %161 = vector.load %arg7[%c0_143, %c0_144] : memref<64x32xf32, #tpu.memory_space<vmem>>, vector<64x32xf32>
    %cst_145 = arith.constant dense<0.000000e+00> : vector<64x128xf32>
    %162 = tpu.matmul %161, %160, %cst_145 {dimension_numbers = #tpu.dot_dimension_numbers<[1], [0], [0], [1], [0, 0, 1, 1], [], []>} : vector<64x32xf32>, vector<32x128xf32>, vector<64x128xf32> -> vector<64x128xf32>
    %c0_146 = arith.constant 0 : index
    %c0_147 = arith.constant 0 : index
    %163 = vector.load %arg8[%c0_146, %c0_147] : memref<64x1xf32, #tpu.memory_space<vmem>>, vector<64x1xf32>
    %164 = vector.broadcast %163 : vector<64x1xf32> to vector<64x128xf32>
    %165 = arith.addf %162, %164 : vector<64x128xf32>
    %cst_148 = arith.constant 0.000000e+00 : f32
    %166 = vector.broadcast %cst_148 : f32 to vector<64x128xf32>
    %167 = arith.maximumf %165, %166 : vector<64x128xf32>
    %168 = arith.maximumf %151, %167 : vector<64x128xf32>
    %c0_149 = arith.constant 0 : index
    %c10 = arith.constant 10 : index
    %c0_150 = arith.constant 0 : index
    %c0_151 = arith.constant 0 : index
    %169 = vector.load %arg2[%c0_149, %c10, %c0_150, %c0_151] : memref<1x16x8x128xf32, #tpu.memory_space<vmem>>, vector<1x1x8x128xf32>
    %170 = vector.shape_cast %169 : vector<1x1x8x128xf32> to vector<8x128xf32>
    %c0_152 = arith.constant 0 : index
    %c0_153 = arith.constant 0 : index
    %171 = vector.load %arg5[%c0_152, %c0_153] : memref<32x8xf32, #tpu.memory_space<vmem>>, vector<32x8xf32>
    %cst_154 = arith.constant dense<0.000000e+00> : vector<32x128xf32>
    %172 = tpu.matmul %171, %170, %cst_154 {dimension_numbers = #tpu.dot_dimension_numbers<[1], [0], [0], [1], [0, 0, 1, 1], [], []>} : vector<32x8xf32>, vector<8x128xf32>, vector<32x128xf32> -> vector<32x128xf32>
    %c0_155 = arith.constant 0 : index
    %c0_156 = arith.constant 0 : index
    %173 = vector.load %arg6[%c0_155, %c0_156] : memref<32x1xf32, #tpu.memory_space<vmem>>, vector<32x1xf32>
    %174 = vector.broadcast %173 : vector<32x1xf32> to vector<32x128xf32>
    %175 = arith.addf %172, %174 : vector<32x128xf32>
    %cst_157 = arith.constant 0.000000e+00 : f32
    %176 = vector.broadcast %cst_157 : f32 to vector<32x128xf32>
    %177 = arith.maximumf %175, %176 : vector<32x128xf32>
    %c0_158 = arith.constant 0 : index
    %c0_159 = arith.constant 0 : index
    %178 = vector.load %arg7[%c0_158, %c0_159] : memref<64x32xf32, #tpu.memory_space<vmem>>, vector<64x32xf32>
    %cst_160 = arith.constant dense<0.000000e+00> : vector<64x128xf32>
    %179 = tpu.matmul %178, %177, %cst_160 {dimension_numbers = #tpu.dot_dimension_numbers<[1], [0], [0], [1], [0, 0, 1, 1], [], []>} : vector<64x32xf32>, vector<32x128xf32>, vector<64x128xf32> -> vector<64x128xf32>
    %c0_161 = arith.constant 0 : index
    %c0_162 = arith.constant 0 : index
    %180 = vector.load %arg8[%c0_161, %c0_162] : memref<64x1xf32, #tpu.memory_space<vmem>>, vector<64x1xf32>
    %181 = vector.broadcast %180 : vector<64x1xf32> to vector<64x128xf32>
    %182 = arith.addf %179, %181 : vector<64x128xf32>
    %cst_163 = arith.constant 0.000000e+00 : f32
    %183 = vector.broadcast %cst_163 : f32 to vector<64x128xf32>
    %184 = arith.maximumf %182, %183 : vector<64x128xf32>
    %185 = arith.maximumf %168, %184 : vector<64x128xf32>
    %c0_164 = arith.constant 0 : index
    %c11 = arith.constant 11 : index
    %c0_165 = arith.constant 0 : index
    %c0_166 = arith.constant 0 : index
    %186 = vector.load %arg2[%c0_164, %c11, %c0_165, %c0_166] : memref<1x16x8x128xf32, #tpu.memory_space<vmem>>, vector<1x1x8x128xf32>
    %187 = vector.shape_cast %186 : vector<1x1x8x128xf32> to vector<8x128xf32>
    %c0_167 = arith.constant 0 : index
    %c0_168 = arith.constant 0 : index
    %188 = vector.load %arg5[%c0_167, %c0_168] : memref<32x8xf32, #tpu.memory_space<vmem>>, vector<32x8xf32>
    %cst_169 = arith.constant dense<0.000000e+00> : vector<32x128xf32>
    %189 = tpu.matmul %188, %187, %cst_169 {dimension_numbers = #tpu.dot_dimension_numbers<[1], [0], [0], [1], [0, 0, 1, 1], [], []>} : vector<32x8xf32>, vector<8x128xf32>, vector<32x128xf32> -> vector<32x128xf32>
    %c0_170 = arith.constant 0 : index
    %c0_171 = arith.constant 0 : index
    %190 = vector.load %arg6[%c0_170, %c0_171] : memref<32x1xf32, #tpu.memory_space<vmem>>, vector<32x1xf32>
    %191 = vector.broadcast %190 : vector<32x1xf32> to vector<32x128xf32>
    %192 = arith.addf %189, %191 : vector<32x128xf32>
    %cst_172 = arith.constant 0.000000e+00 : f32
    %193 = vector.broadcast %cst_172 : f32 to vector<32x128xf32>
    %194 = arith.maximumf %192, %193 : vector<32x128xf32>
    %c0_173 = arith.constant 0 : index
    %c0_174 = arith.constant 0 : index
    %195 = vector.load %arg7[%c0_173, %c0_174] : memref<64x32xf32, #tpu.memory_space<vmem>>, vector<64x32xf32>
    %cst_175 = arith.constant dense<0.000000e+00> : vector<64x128xf32>
    %196 = tpu.matmul %195, %194, %cst_175 {dimension_numbers = #tpu.dot_dimension_numbers<[1], [0], [0], [1], [0, 0, 1, 1], [], []>} : vector<64x32xf32>, vector<32x128xf32>, vector<64x128xf32> -> vector<64x128xf32>
    %c0_176 = arith.constant 0 : index
    %c0_177 = arith.constant 0 : index
    %197 = vector.load %arg8[%c0_176, %c0_177] : memref<64x1xf32, #tpu.memory_space<vmem>>, vector<64x1xf32>
    %198 = vector.broadcast %197 : vector<64x1xf32> to vector<64x128xf32>
    %199 = arith.addf %196, %198 : vector<64x128xf32>
    %cst_178 = arith.constant 0.000000e+00 : f32
    %200 = vector.broadcast %cst_178 : f32 to vector<64x128xf32>
    %201 = arith.maximumf %199, %200 : vector<64x128xf32>
    %202 = arith.maximumf %185, %201 : vector<64x128xf32>
    %c0_179 = arith.constant 0 : index
    %c12 = arith.constant 12 : index
    %c0_180 = arith.constant 0 : index
    %c0_181 = arith.constant 0 : index
    %203 = vector.load %arg2[%c0_179, %c12, %c0_180, %c0_181] : memref<1x16x8x128xf32, #tpu.memory_space<vmem>>, vector<1x1x8x128xf32>
    %204 = vector.shape_cast %203 : vector<1x1x8x128xf32> to vector<8x128xf32>
    %c0_182 = arith.constant 0 : index
    %c0_183 = arith.constant 0 : index
    %205 = vector.load %arg5[%c0_182, %c0_183] : memref<32x8xf32, #tpu.memory_space<vmem>>, vector<32x8xf32>
    %cst_184 = arith.constant dense<0.000000e+00> : vector<32x128xf32>
    %206 = tpu.matmul %205, %204, %cst_184 {dimension_numbers = #tpu.dot_dimension_numbers<[1], [0], [0], [1], [0, 0, 1, 1], [], []>} : vector<32x8xf32>, vector<8x128xf32>, vector<32x128xf32> -> vector<32x128xf32>
    %c0_185 = arith.constant 0 : index
    %c0_186 = arith.constant 0 : index
    %207 = vector.load %arg6[%c0_185, %c0_186] : memref<32x1xf32, #tpu.memory_space<vmem>>, vector<32x1xf32>
    %208 = vector.broadcast %207 : vector<32x1xf32> to vector<32x128xf32>
    %209 = arith.addf %206, %208 : vector<32x128xf32>
    %cst_187 = arith.constant 0.000000e+00 : f32
    %210 = vector.broadcast %cst_187 : f32 to vector<32x128xf32>
    %211 = arith.maximumf %209, %210 : vector<32x128xf32>
    %c0_188 = arith.constant 0 : index
    %c0_189 = arith.constant 0 : index
    %212 = vector.load %arg7[%c0_188, %c0_189] : memref<64x32xf32, #tpu.memory_space<vmem>>, vector<64x32xf32>
    %cst_190 = arith.constant dense<0.000000e+00> : vector<64x128xf32>
    %213 = tpu.matmul %212, %211, %cst_190 {dimension_numbers = #tpu.dot_dimension_numbers<[1], [0], [0], [1], [0, 0, 1, 1], [], []>} : vector<64x32xf32>, vector<32x128xf32>, vector<64x128xf32> -> vector<64x128xf32>
    %c0_191 = arith.constant 0 : index
    %c0_192 = arith.constant 0 : index
    %214 = vector.load %arg8[%c0_191, %c0_192] : memref<64x1xf32, #tpu.memory_space<vmem>>, vector<64x1xf32>
    %215 = vector.broadcast %214 : vector<64x1xf32> to vector<64x128xf32>
    %216 = arith.addf %213, %215 : vector<64x128xf32>
    %cst_193 = arith.constant 0.000000e+00 : f32
    %217 = vector.broadcast %cst_193 : f32 to vector<64x128xf32>
    %218 = arith.maximumf %216, %217 : vector<64x128xf32>
    %219 = arith.maximumf %202, %218 : vector<64x128xf32>
    %c0_194 = arith.constant 0 : index
    %c13 = arith.constant 13 : index
    %c0_195 = arith.constant 0 : index
    %c0_196 = arith.constant 0 : index
    %220 = vector.load %arg2[%c0_194, %c13, %c0_195, %c0_196] : memref<1x16x8x128xf32, #tpu.memory_space<vmem>>, vector<1x1x8x128xf32>
    %221 = vector.shape_cast %220 : vector<1x1x8x128xf32> to vector<8x128xf32>
    %c0_197 = arith.constant 0 : index
    %c0_198 = arith.constant 0 : index
    %222 = vector.load %arg5[%c0_197, %c0_198] : memref<32x8xf32, #tpu.memory_space<vmem>>, vector<32x8xf32>
    %cst_199 = arith.constant dense<0.000000e+00> : vector<32x128xf32>
    %223 = tpu.matmul %222, %221, %cst_199 {dimension_numbers = #tpu.dot_dimension_numbers<[1], [0], [0], [1], [0, 0, 1, 1], [], []>} : vector<32x8xf32>, vector<8x128xf32>, vector<32x128xf32> -> vector<32x128xf32>
    %c0_200 = arith.constant 0 : index
    %c0_201 = arith.constant 0 : index
    %224 = vector.load %arg6[%c0_200, %c0_201] : memref<32x1xf32, #tpu.memory_space<vmem>>, vector<32x1xf32>
    %225 = vector.broadcast %224 : vector<32x1xf32> to vector<32x128xf32>
    %226 = arith.addf %223, %225 : vector<32x128xf32>
    %cst_202 = arith.constant 0.000000e+00 : f32
    %227 = vector.broadcast %cst_202 : f32 to vector<32x128xf32>
    %228 = arith.maximumf %226, %227 : vector<32x128xf32>
    %c0_203 = arith.constant 0 : index
    %c0_204 = arith.constant 0 : index
    %229 = vector.load %arg7[%c0_203, %c0_204] : memref<64x32xf32, #tpu.memory_space<vmem>>, vector<64x32xf32>
    %cst_205 = arith.constant dense<0.000000e+00> : vector<64x128xf32>
    %230 = tpu.matmul %229, %228, %cst_205 {dimension_numbers = #tpu.dot_dimension_numbers<[1], [0], [0], [1], [0, 0, 1, 1], [], []>} : vector<64x32xf32>, vector<32x128xf32>, vector<64x128xf32> -> vector<64x128xf32>
    %c0_206 = arith.constant 0 : index
    %c0_207 = arith.constant 0 : index
    %231 = vector.load %arg8[%c0_206, %c0_207] : memref<64x1xf32, #tpu.memory_space<vmem>>, vector<64x1xf32>
    %232 = vector.broadcast %231 : vector<64x1xf32> to vector<64x128xf32>
    %233 = arith.addf %230, %232 : vector<64x128xf32>
    %cst_208 = arith.constant 0.000000e+00 : f32
    %234 = vector.broadcast %cst_208 : f32 to vector<64x128xf32>
    %235 = arith.maximumf %233, %234 : vector<64x128xf32>
    %236 = arith.maximumf %219, %235 : vector<64x128xf32>
    %c0_209 = arith.constant 0 : index
    %c14 = arith.constant 14 : index
    %c0_210 = arith.constant 0 : index
    %c0_211 = arith.constant 0 : index
    %237 = vector.load %arg2[%c0_209, %c14, %c0_210, %c0_211] : memref<1x16x8x128xf32, #tpu.memory_space<vmem>>, vector<1x1x8x128xf32>
    %238 = vector.shape_cast %237 : vector<1x1x8x128xf32> to vector<8x128xf32>
    %c0_212 = arith.constant 0 : index
    %c0_213 = arith.constant 0 : index
    %239 = vector.load %arg5[%c0_212, %c0_213] : memref<32x8xf32, #tpu.memory_space<vmem>>, vector<32x8xf32>
    %cst_214 = arith.constant dense<0.000000e+00> : vector<32x128xf32>
    %240 = tpu.matmul %239, %238, %cst_214 {dimension_numbers = #tpu.dot_dimension_numbers<[1], [0], [0], [1], [0, 0, 1, 1], [], []>} : vector<32x8xf32>, vector<8x128xf32>, vector<32x128xf32> -> vector<32x128xf32>
    %c0_215 = arith.constant 0 : index
    %c0_216 = arith.constant 0 : index
    %241 = vector.load %arg6[%c0_215, %c0_216] : memref<32x1xf32, #tpu.memory_space<vmem>>, vector<32x1xf32>
    %242 = vector.broadcast %241 : vector<32x1xf32> to vector<32x128xf32>
    %243 = arith.addf %240, %242 : vector<32x128xf32>
    %cst_217 = arith.constant 0.000000e+00 : f32
    %244 = vector.broadcast %cst_217 : f32 to vector<32x128xf32>
    %245 = arith.maximumf %243, %244 : vector<32x128xf32>
    %c0_218 = arith.constant 0 : index
    %c0_219 = arith.constant 0 : index
    %246 = vector.load %arg7[%c0_218, %c0_219] : memref<64x32xf32, #tpu.memory_space<vmem>>, vector<64x32xf32>
    %cst_220 = arith.constant dense<0.000000e+00> : vector<64x128xf32>
    %247 = tpu.matmul %246, %245, %cst_220 {dimension_numbers = #tpu.dot_dimension_numbers<[1], [0], [0], [1], [0, 0, 1, 1], [], []>} : vector<64x32xf32>, vector<32x128xf32>, vector<64x128xf32> -> vector<64x128xf32>
    %c0_221 = arith.constant 0 : index
    %c0_222 = arith.constant 0 : index
    %248 = vector.load %arg8[%c0_221, %c0_222] : memref<64x1xf32, #tpu.memory_space<vmem>>, vector<64x1xf32>
    %249 = vector.broadcast %248 : vector<64x1xf32> to vector<64x128xf32>
    %250 = arith.addf %247, %249 : vector<64x128xf32>
    %cst_223 = arith.constant 0.000000e+00 : f32
    %251 = vector.broadcast %cst_223 : f32 to vector<64x128xf32>
    %252 = arith.maximumf %250, %251 : vector<64x128xf32>
    %253 = arith.maximumf %236, %252 : vector<64x128xf32>
    %c0_224 = arith.constant 0 : index
    %c15 = arith.constant 15 : index
    %c0_225 = arith.constant 0 : index
    %c0_226 = arith.constant 0 : index
    %254 = vector.load %arg2[%c0_224, %c15, %c0_225, %c0_226] : memref<1x16x8x128xf32, #tpu.memory_space<vmem>>, vector<1x1x8x128xf32>
    %255 = vector.shape_cast %254 : vector<1x1x8x128xf32> to vector<8x128xf32>
    %c0_227 = arith.constant 0 : index
    %c0_228 = arith.constant 0 : index
    %256 = vector.load %arg5[%c0_227, %c0_228] : memref<32x8xf32, #tpu.memory_space<vmem>>, vector<32x8xf32>
    %cst_229 = arith.constant dense<0.000000e+00> : vector<32x128xf32>
    %257 = tpu.matmul %256, %255, %cst_229 {dimension_numbers = #tpu.dot_dimension_numbers<[1], [0], [0], [1], [0, 0, 1, 1], [], []>} : vector<32x8xf32>, vector<8x128xf32>, vector<32x128xf32> -> vector<32x128xf32>
    %c0_230 = arith.constant 0 : index
    %c0_231 = arith.constant 0 : index
    %258 = vector.load %arg6[%c0_230, %c0_231] : memref<32x1xf32, #tpu.memory_space<vmem>>, vector<32x1xf32>
    %259 = vector.broadcast %258 : vector<32x1xf32> to vector<32x128xf32>
    %260 = arith.addf %257, %259 : vector<32x128xf32>
    %cst_232 = arith.constant 0.000000e+00 : f32
    %261 = vector.broadcast %cst_232 : f32 to vector<32x128xf32>
    %262 = arith.maximumf %260, %261 : vector<32x128xf32>
    %c0_233 = arith.constant 0 : index
    %c0_234 = arith.constant 0 : index
    %263 = vector.load %arg7[%c0_233, %c0_234] : memref<64x32xf32, #tpu.memory_space<vmem>>, vector<64x32xf32>
    %cst_235 = arith.constant dense<0.000000e+00> : vector<64x128xf32>
    %264 = tpu.matmul %263, %262, %cst_235 {dimension_numbers = #tpu.dot_dimension_numbers<[1], [0], [0], [1], [0, 0, 1, 1], [], []>} : vector<64x32xf32>, vector<32x128xf32>, vector<64x128xf32> -> vector<64x128xf32>
    %c0_236 = arith.constant 0 : index
    %c0_237 = arith.constant 0 : index
    %265 = vector.load %arg8[%c0_236, %c0_237] : memref<64x1xf32, #tpu.memory_space<vmem>>, vector<64x1xf32>
    %266 = vector.broadcast %265 : vector<64x1xf32> to vector<64x128xf32>
    %267 = arith.addf %264, %266 : vector<64x128xf32>
    %cst_238 = arith.constant 0.000000e+00 : f32
    %268 = vector.broadcast %cst_238 : f32 to vector<64x128xf32>
    %269 = arith.maximumf %267, %268 : vector<64x128xf32>
    %270 = arith.maximumf %253, %269 : vector<64x128xf32>
    %c0_239 = arith.constant 0 : index
    %c0_240 = arith.constant 0 : index
    %271 = vector.load %arg9[%c0_239, %c0_240] : memref<256x64xf32, #tpu.memory_space<vmem>>, vector<256x64xf32>
    %cst_241 = arith.constant dense<0.000000e+00> : vector<256x128xf32>
    %272 = tpu.matmul %271, %270, %cst_241 {dimension_numbers = #tpu.dot_dimension_numbers<[1], [0], [0], [1], [0, 0, 1, 1], [], []>} : vector<256x64xf32>, vector<64x128xf32>, vector<256x128xf32> -> vector<256x128xf32>
    %c0_242 = arith.constant 0 : index
    %c0_243 = arith.constant 0 : index
    %c0_244 = arith.constant 0 : index
    %273 = vector.load %arg4[%c0_242, %c0_243, %c0_244] : memref<1x256x1xf32, #tpu.memory_space<vmem>>, vector<1x256x1xf32>
    %274 = vector.shape_cast %273 : vector<1x256x1xf32> to vector<256x1xf32>
    %275 = vector.broadcast %274 : vector<256x1xf32> to vector<256x128xf32>
    %276 = arith.addf %272, %275 : vector<256x128xf32>
    %cst_245 = arith.constant 0.000000e+00 : f32
    %277 = vector.broadcast %cst_245 : f32 to vector<256x128xf32>
    %278 = arith.maximumf %276, %277 : vector<256x128xf32>
    %c0_246 = arith.constant 0 : index
    %c0_247 = arith.constant 0 : index
    %279 = vector.load %arg10[%c0_246, %c0_247] : memref<128x256xf32, #tpu.memory_space<vmem>>, vector<128x256xf32>
    %cst_248 = arith.constant dense<0.000000e+00> : vector<128x128xf32>
    %280 = tpu.matmul %279, %278, %cst_248 {dimension_numbers = #tpu.dot_dimension_numbers<[1], [0], [0], [1], [0, 0, 1, 1], [], []>} : vector<128x256xf32>, vector<256x128xf32>, vector<128x128xf32> -> vector<128x128xf32>
    %c0_249 = arith.constant 0 : index
    %c0_250 = arith.constant 0 : index
    %281 = vector.load %arg11[%c0_249, %c0_250] : memref<128x1xf32, #tpu.memory_space<vmem>>, vector<128x1xf32>
    %282 = vector.broadcast %281 : vector<128x1xf32> to vector<128x128xf32>
    %283 = arith.addf %280, %282 : vector<128x128xf32>
    %c0_251 = arith.constant 0 : index
    %c0_252 = arith.constant 0 : index
    %284 = vector.load %arg12[%c0_251, %c0_252] : memref<256x128xf32, #tpu.memory_space<vmem>>, vector<256x128xf32>
    %cst_253 = arith.constant dense<0.000000e+00> : vector<256x128xf32>
    %285 = tpu.matmul %284, %283, %cst_253 {dimension_numbers = #tpu.dot_dimension_numbers<[1], [0], [0], [1], [0, 0, 1, 1], [], []>} : vector<256x128xf32>, vector<128x128xf32>, vector<256x128xf32> -> vector<256x128xf32>
    %c0_254 = arith.constant 0 : index
    %c0_255 = arith.constant 0 : index
    %286 = vector.load %arg13[%c0_254, %c0_255] : memref<256x1xf32, #tpu.memory_space<vmem>>, vector<256x1xf32>
    %287 = vector.broadcast %286 : vector<256x1xf32> to vector<256x128xf32>
    %288 = arith.addf %285, %287 : vector<256x128xf32>
    %cst_256 = arith.constant 0.000000e+00 : f32
    %289 = vector.broadcast %cst_256 : f32 to vector<256x128xf32>
    %290 = arith.maximumf %288, %289 : vector<256x128xf32>
    %c0_257 = arith.constant 0 : index
    %c0_258 = arith.constant 0 : index
    %291 = vector.load %arg14[%c0_257, %c0_258] : memref<12x256xf32, #tpu.memory_space<vmem>>, vector<12x256xf32>
    %cst_259 = arith.constant dense<0.000000e+00> : vector<12x128xf32>
    %292 = tpu.matmul %291, %290, %cst_259 {dimension_numbers = #tpu.dot_dimension_numbers<[1], [0], [0], [1], [0, 0, 1, 1], [], []>} : vector<12x256xf32>, vector<256x128xf32>, vector<12x128xf32> -> vector<12x128xf32>
    %c0_260 = arith.constant 0 : index
    %c0_261 = arith.constant 0 : index
    %293 = vector.load %arg15[%c0_260, %c0_261] : memref<12x1xf32, #tpu.memory_space<vmem>>, vector<12x1xf32>
    %294 = vector.broadcast %293 : vector<12x1xf32> to vector<12x128xf32>
    %295 = arith.addf %292, %294 : vector<12x128xf32>
    %c0_262 = arith.constant 0 : index
    %c0_263 = arith.constant 0 : index
    %c0_264 = arith.constant 0 : index
    %296 = vector.load %arg3[%c0_262, %c0_263, %c0_264] : memref<1x3x128xf32, #tpu.memory_space<vmem>>, vector<1x3x128xf32>
    %297 = vector.shape_cast %296 : vector<1x3x128xf32> to vector<3x128xf32>
    %298 = tpu.concatenate %297, %297, %297, %297 in 0 : vector<3x128xf32>, vector<3x128xf32>, vector<3x128xf32>, vector<3x128xf32> -> vector<12x128xf32>
    %299 = arith.addf %295, %298 : vector<12x128xf32>
    %c0_265 = arith.constant 0 : index
    %c0_266 = arith.constant 0 : index
    %c0_267 = arith.constant 0 : index
    %300 = vector.load %arg16[%c0_265, %c0_266, %c0_267] : memref<1x12x128xf32, #tpu.memory_space<vmem>>, vector<1x12x128xf32>
    %301 = vector.shape_cast %300 : vector<1x12x128xf32> to vector<12x128xf32>
    %302 = vector.shape_cast %299 : vector<12x128xf32> to vector<1x12x128xf32>
    tpu.vector_store %arg16[%c0_265, %c0_266, %c0_267], %302 {strides = array<i32>} : memref<1x12x128xf32, #tpu.memory_space<vmem>>, vector<1x12x128xf32>,
    return
  }
  func.func @transform_0(%arg0: i32, %arg1: i32) -> (i32, i32, i32, i32) {
    %c0_i32 = arith.constant 0 : i32
    %c0_i32_0 = arith.constant 0 : i32
    %c0_i32_1 = arith.constant 0 : i32
    return %arg0, %c0_i32, %c0_i32_0, %arg1 : i32, i32, i32, i32
  }
  func.func @transform_1(%arg0: i32, %arg1: i32) -> (i32, i32, i32) {
    %c0_i32 = arith.constant 0 : i32
    %c0_i32_0 = arith.constant 0 : i32
    return %arg0, %c0_i32, %arg1 : i32, i32, i32
  }
  func.func @transform_2(%arg0: i32, %arg1: i32) -> (i32, i32, i32) {
    %c0_i32 = arith.constant 0 : i32
    %c0_i32_0 = arith.constant 0 : i32
    %c0_i32_1 = arith.constant 0 : i32
    return %arg0, %c0_i32, %c0_i32_0 : i32, i32, i32
  }
  func.func @transform_3(%arg0: i32, %arg1: i32) -> (i32, i32) {
    %c0_i32 = arith.constant 0 : i32
    %c0_i32_0 = arith.constant 0 : i32
    %c0_i32_1 = arith.constant 0 : i32
    return %c0_i32, %c0_i32_0 : i32, i32
  }
  func.func @transform_4(%arg0: i32, %arg1: i32) -> (i32, i32) {
    %c0_i32 = arith.constant 0 : i32
    %c0_i32_0 = arith.constant 0 : i32
    %c0_i32_1 = arith.constant 0 : i32
    return %c0_i32, %c0_i32_0 : i32, i32
  }
  func.func @transform_5(%arg0: i32, %arg1: i32) -> (i32, i32) {
    %c0_i32 = arith.constant 0 : i32
    %c0_i32_0 = arith.constant 0 : i32
    %c0_i32_1 = arith.constant 0 : i32
    return %c0_i32, %c0_i32_0 : i32, i32
  }
  func.func @transform_6(%arg0: i32, %arg1: i32) -> (i32, i32) {
    %c0_i32 = arith.constant 0 : i32
    %c0_i32_0 = arith.constant 0 : i32
    %c0_i32_1 = arith.constant 0 : i32
    return %c0_i32, %c0_i32_0 : i32, i32
  }
  func.func @transform_7(%arg0: i32, %arg1: i32) -> (i32, i32) {
    %c0_i32 = arith.constant 0 : i32
    %c0_i32_0 = arith.constant 0 : i32
    %c0_i32_1 = arith.constant 0 : i32
    return %c0_i32, %c0_i32_0 : i32, i32
  }
  func.func @transform_8(%arg0: i32, %arg1: i32) -> (i32, i32) {
    %c0_i32 = arith.constant 0 : i32
    %c0_i32_0 = arith.constant 0 : i32
    %c0_i32_1 = arith.constant 0 : i32
    return %c0_i32, %c0_i32_0 : i32, i32
  }
  func.func @transform_9(%arg0: i32, %arg1: i32) -> (i32, i32) {
    %c0_i32 = arith.constant 0 : i32
    %c0_i32_0 = arith.constant 0 : i32
    %c0_i32_1 = arith.constant 0 : i32
    return %c0_i32, %c0_i32_0 : i32, i32
  }
  func.func @transform_10(%arg0: i32, %arg1: i32) -> (i32, i32) {
    %c0_i32 = arith.constant 0 : i32
    %c0_i32_0 = arith.constant 0 : i32
    %c0_i32_1 = arith.constant 0 : i32
    return %c0_i32, %c0_i32_0 : i32, i32
  }
  func.func @transform_11(%arg0: i32, %arg1: i32) -> (i32, i32) {
    %c0_i32 = arith.constant 0 : i32
    %c0_i32_0 = arith.constant 0 : i32
    %c0_i32_1 = arith.constant 0 : i32
    return %c0_i32, %c0_i32_0 : i32, i32
  }
  func.func @transform_12(%arg0: i32, %arg1: i32) -> (i32, i32) {
    %c0_i32 = arith.constant 0 : i32
    %c0_i32_0 = arith.constant 0 : i32
    %c0_i32_1 = arith.constant 0 : i32
    return %c0_i32, %c0_i32_0 : i32, i32
  }
  func.func @transform_13(%arg0: i32, %arg1: i32) -> (i32, i32) {
    %c0_i32 = arith.constant 0 : i32
    %c0_i32_0 = arith.constant 0 : i32
    %c0_i32_1 = arith.constant 0 : i32
    return %c0_i32, %c0_i32_0 : i32, i32
  }
  func.func @transform_14(%arg0: i32, %arg1: i32) -> (i32, i32, i32) {
    %c0_i32 = arith.constant 0 : i32
    %c0_i32_0 = arith.constant 0 : i32
    return %arg0, %c0_i32, %arg1 : i32, i32, i32
  }
}

</mosaic_0001>

<llo_original>
// kernel: tile.13
$region0: #{tile.13}
  #allocation0 [shape = 's32[1]{0}', space=sflag, size = 0x4, scoped, tag = 'scoped memory for tile.13']
  %s0 = inlined_call_operand.vmem [shape: f32[64], index: 0, kind: input, shape index: {}]
  %s1 = inlined_call_operand.vmem [shape: f32[4,64], index: 1, kind: output, shape index: {}]
  // Predicated region
  $region2: #{tile.13} parent=0 // pred_check
    _
  $region3: #{tile.13} parent=0 // pred_check_branch
    %3 = sbr.rel (0) target = $region5
  $region4: #{tile.13} parent=0 // pred_region
    _
  $region5: #{tile.13} parent=0 // pred_fallthru
    _
  %v4 = vld [vmem:[%s0] ss:$0 sm:$0xff]
  %5 = vst [vmem:[%s1] sm:$0xf] %v4

// kernel: tile.0
$region0: #{tile.0}
  %s0 = inlined_call_operand.vmem [shape: f32[4,64], index: 0, kind: input, shape index: {}]
  %s1 = inlined_call_operand.vmem [shape: f32[256,1], index: 1, kind: output, shape index: {}]
  $region1: #{tile.0} parent=0
    #allocation0 [shape = 'u8[4096]{0}', space=vmem, size = 0x1000, scoped, tag = 'scoped mem for input reshape']
    %s3 = sshllo.u32 0, 4
    %v4 = vld [vmem:[%s0] sm:%s3]
    %5 = vst [vmem:[#allocation0] sm:%s3] %v4
    %v6 = vld [vmem:[#allocation0] sm:$0xf]
    %vm7 = vcmask 7168
    %8 = vst.msk [vmem:[%s1] sm:$0x1] %vm7, %v6
    %s9 = scalar_lea.vmem %s1, 63
    %10 = vst.msk [vmem:[%s9] sm:$0x2] %vm7, %v6
    %s11 = scalar_lea.vmem %s1, 126
    %12 = vst.msk [vmem:[%s11] sm:$0x4] %vm7, %v6
    %s13 = scalar_lea.vmem %s1, 189
    %14 = vst.msk [vmem:[%s13] sm:$0x8] %vm7, %v6
    %v15 = vld [vmem:[#allocation0] sm:$0xf]
    %16 = vrot.lane.b32.xlu0 %v15, 127
    %v17 = vpop.permute.xlu0 %16
    %vm18 = vcmask 7168
    %s19 = scalar_lea.vmem %s1, 1
    %20 = vst.msk [vmem:[%s19] sm:$0x1] %vm18, %v17
    %s21 = scalar_lea.vmem %s1, 64
    %22 = vst.msk [vmem:[%s21] sm:$0x2] %vm18, %v17
    %s23 = scalar_lea.vmem %s1, 127
    %24 = vst.msk [vmem:[%s23] sm:$0x4] %vm18, %v17
    %s25 = scalar_lea.vmem %s1, 190
    %26 = vst.msk [vmem:[%s25] sm:$0x8] %vm18, %v17
    %v27 = vld [vmem:[#allocation0] sm:$0xf]
    %28 = vrot.lane.b32.xlu0 %v27, 126
    %v29 = vpop.permute.xlu0 %28
    %vm30 = vcmask 7168
    %s31 = scalar_lea.vmem %s1, 2
    %32 = vst.msk [vmem:[%s31] sm:$0x1] %vm30, %v29
    %s33 = scalar_lea.vmem %s1, 65
    %34 = vst.msk [vmem:[%s33] sm:$0x2] %vm30, %v29
    %s35 = scalar_lea.vmem %s1, 128
    %36 = vst.msk [vmem:[%s35] sm:$0x4] %vm30, %v29
    %s37 = scalar_lea.vmem %s1, 191
    %38 = vst.msk [vmem:[%s37] sm:$0x8] %vm30, %v29
    %v39 = vld [vmem:[#allocation0] sm:$0xf]
    %40 = vrot.lane.b32.xlu0 %v39, 125
    %v41 = vpop.permute.xlu0 %40
    %vm42 = vcmask 7168
    %s43 = scalar_lea.vmem %s1, 3
    %44 = vst.msk [vmem:[%s43] sm:$0x1] %vm42, %v41
    %s45 = scalar_lea.vmem %s1, 66
    %46 = vst.msk [vmem:[%s45] sm:$0x2] %vm42, %v41
    %s47 = scalar_lea.vmem %s1, 129
    %48 = vst.msk [vmem:[%s47] sm:$0x4] %vm42, %v41
    %s49 = scalar_lea.vmem %s1, 192
    %50 = vst.msk [vmem:[%s49] sm:$0x8] %vm42, %v41
    %v51 = vld [vmem:[#allocation0] sm:$0xf]
    %52 = vrot.lane.b32.xlu0 %v51, 124
    %v53 = vpop.permute.xlu0 %52
    %vm54 = vcmask 7168
    %s55 = scalar_lea.vmem %s1, 4
    %56 = vst.msk [vmem:[%s55] sm:$0x1] %vm54, %v53
    %s57 = scalar_lea.vmem %s1, 67
    %58 = vst.msk [vmem:[%s57] sm:$0x2] %vm54, %v53
    %s59 = scalar_lea.vmem %s1, 130
    %60 = vst.msk [vmem:[%s59] sm:$0x4] %vm54, %v53
    %s61 = scalar_lea.vmem %s1, 193
    %62 = vst.msk [vmem:[%s61] sm:$0x8] %vm54, %v53
    %v63 = vld [vmem:[#allocation0] sm:$0xf]
    %64 = vrot.lane.b32.xlu0 %v63, 123
    %v65 = vpop.permute.xlu0 %64
    %vm66 = vcmask 7168
    %s67 = scalar_lea.vmem %s1, 5
    %68 = vst.msk [vmem:[%s67] sm:$0x1] %vm66, %v65
    %s69 = scalar_lea.vmem %s1, 68
    %70 = vst.msk [vmem:[%s69] sm:$0x2] %vm66, %v65
    %s71 = scalar_lea.vmem %s1, 131
    %72 = vst.msk [vmem:[%s71] sm:$0x4] %vm66, %v65
    %s73 = scalar_lea.vmem %s1, 194
    %74 = vst.msk [vmem:[%s73] sm:$0x8] %vm66, %v65
    %v75 = vld [vmem:[#allocation0] sm:$0xf]
    %76 = vrot.lane.b32.xlu0 %v75, 122
    %v77 = vpop.permute.xlu0 %76
    %vm78 = vcmask 7168
    %s79 = scalar_lea.vmem %s1, 6
    %80 = vst.msk [vmem:[%s79] sm:$0x1] %vm78, %v77
    %s81 = scalar_lea.vmem %s1, 69
    %82 = vst.msk [vmem:[%s81] sm:$0x2] %vm78, %v77
    %s83 = scalar_lea.vmem %s1, 132
    %84 = vst.msk [vmem:[%s83] sm:$0x4] %vm78, %v77
    %s85 = scalar_lea.vmem %s1, 195
    %86 = vst.msk [vmem:[%s85] sm:$0x8] %vm78, %v77
    %v87 = vld [vmem:[#allocation0] sm:$0xf]
    %88 = vrot.lane.b32.xlu0 %v87, 121
    %v89 = vpop.permute.xlu0 %88
    %vm90 = vcmask 7168
    %s91 = scalar_lea.vmem %s1, 7
    %92 = vst.msk [vmem:[%s91] sm:$0x1] %vm90, %v89
    %s93 = scalar_lea.vmem %s1, 70
    %94 = vst.msk [vmem:[%s93] sm:$0x2] %vm90, %v89
    %s95 = scalar_lea.vmem %s1, 133
    %96 = vst.msk [vmem:[%s95] sm:$0x4] %vm90, %v89
    %s97 = scalar_lea.vmem %s1, 196
    %98 = vst.msk [vmem:[%s97] sm:$0x8] %vm90, %v89
    %v99 = vld [vmem:[#allocation0] sm:$0xf]
    %100 = vrot.lane.b32.xlu0 %v99, 120
    %v101 = vpop.permute.xlu0 %100
    %vm102 = vcmask 7168
    %s103 = scalar_lea.vmem %s1, 8
    %104 = vst.msk [vmem:[%s103] sm:$0x1] %vm102, %v101
    %s105 = scalar_lea.vmem %s1, 71
    %106 = vst.msk [vmem:[%s105] sm:$0x2] %vm102, %v101
    %s107 = scalar_lea.vmem %s1, 134
    %108 = vst.msk [vmem:[%s107] sm:$0x4] %vm102, %v101
    %s109 = scalar_lea.vmem %s1, 197
    %110 = vst.msk [vmem:[%s109] sm:$0x8] %vm102, %v101
    %v111 = vld [vmem:[#allocation0] sm:$0xf]
    %112 = vrot.lane.b32.xlu0 %v111, 119
    %v113 = vpop.permute.xlu0 %112
    %vm114 = vcmask 7168
    %s115 = scalar_lea.vmem %s1, 9
    %116 = vst.msk [vmem:[%s115] sm:$0x1] %vm114, %v113
    %s117 = scalar_lea.vmem %s1, 72
    %118 = vst.msk [vmem:[%s117] sm:$0x2] %vm114, %v113
    %s119 = scalar_lea.vmem %s1, 135
    %120 = vst.msk [vmem:[%s119] sm:$0x4] %vm114, %v113
    %s121 = scalar_lea.vmem %s1, 198
    %122 = vst.msk [vmem:[%s121] sm:$0x8] %vm114, %v113
    %v123 = vld [vmem:[#allocation0] sm:$0xf]
    %124 = vrot.lane.b32.xlu0 %v123, 118
    %v125 = vpop.permute.xlu0 %124
    %vm126 = vcmask 7168
    %s127 = scalar_lea.vmem %s1, 10
    %128 = vst.msk [vmem:[%s127] sm:$0x1] %vm126, %v125
    %s129 = scalar_lea.vmem %s1, 73
    %130 = vst.msk [vmem:[%s129] sm:$0x2] %vm126, %v125
    %s131 = scalar_lea.vmem %s1, 136
    %132 = vst.msk [vmem:[%s131] sm:$0x4] %vm126, %v125
    %s133 = scalar_lea.vmem %s1, 199
    %134 = vst.msk [vmem:[%s133] sm:$0x8] %vm126, %v125
    %v135 = vld [vmem:[#allocation0] sm:$0xf]
    %136 = vrot.lane.b32.xlu0 %v135, 117
    %v137 = vpop.permute.xlu0 %136
    %vm138 = vcmask 7168
    %s139 = scalar_lea.vmem %s1, 11
    %140 = vst.msk [vmem:[%s139] sm:$0x1] %vm138, %v137
    %s141 = scalar_lea.vmem %s1, 74
    %142 = vst.msk [vmem:[%s141] sm:$0x2] %vm138, %v137
    %s143 = scalar_lea.vmem %s1, 137
    %144 = vst.msk [vmem:[%s143] sm:$0x4] %vm138, %v137
    %s145 = scalar_lea.vmem %s1, 200
    %146 = vst.msk [vmem:[%s145] sm:$0x8] %vm138, %v137
    %v147 = vld [vmem:[#allocation0] sm:$0xf]
    %148 = vrot.lane.b32.xlu0 %v147, 116
    %v149 = vpop.permute.xlu0 %148
    %vm150 = vcmask 7168
    %s151 = scalar_lea.vmem %s1, 12
    %152 = vst.msk [vmem:[%s151] sm:$0x1] %vm150, %v149
    %s153 = scalar_lea.vmem %s1, 75
    %154 = vst.msk [vmem:[%s153] sm:$0x2] %vm150, %v149
    %s155 = scalar_lea.vmem %s1, 138
    %156 = vst.msk [vmem:[%s155] sm:$0x4] %vm150, %v149
    %s157 = scalar_lea.vmem %s1, 201
    %158 = vst.msk [vmem:[%s157] sm:$0x8] %vm150, %v149
    %v159 = vld [vmem:[#allocation0] sm:$0xf]
    %160 = vrot.lane.b32.xlu0 %v159, 115
    %v161 = vpop.permute.xlu0 %160
    %vm162 = vcmask 7168
    %s163 = scalar_lea.vmem %s1, 13
    %164 = vst.msk [vmem:[%s163] sm:$0x1] %vm162, %v161
    %s165 = scalar_lea.vmem %s1, 76
    %166 = vst.msk [vmem:[%s165] sm:$0x2] %vm162, %v161
    %s167 = scalar_lea.vmem %s1, 139
    %168 = vst.msk [vmem:[%s167] sm:$0x4] %vm162, %v161
    %s169 = scalar_lea.vmem %s1, 202
    %170 = vst.msk [vmem:[%s169] sm:$0x8] %vm162, %v161
    %v171 = vld [vmem:[#allocation0] sm:$0xf]
    %172 = vrot.lane.b32.xlu0 %v171, 114
    %v173 = vpop.permute.xlu0 %172
    %vm174 = vcmask 7168
    %s175 = scalar_lea.vmem %s1, 14
    %176 = vst.msk [vmem:[%s175] sm:$0x1] %vm174, %v173
    %s177 = scalar_lea.vmem %s1, 77
    %178 = vst.msk [vmem:[%s177] sm:$0x2] %vm174, %v173
    %s179 = scalar_lea.vmem %s1, 140
    %180 = vst.msk [vmem:[%s179] sm:$0x4] %vm174, %v173
    %s181 = scalar_lea.vmem %s1, 203
    %182 = vst.msk [vmem:[%s181] sm:$0x8] %vm174, %v173
    %v183 = vld [vmem:[#allocation0] sm:$0xf]
    %184 = vrot.lane.b32.xlu0 %v183, 113
    %v185 = vpop.permute.xlu0 %184
    %vm186 = vcmask 7168
    %s187 = scalar_lea.vmem %s1, 15
    %188 = vst.msk [vmem:[%s187] sm:$0x1] %vm186, %v185
    %s189 = scalar_lea.vmem %s1, 78
    %190 = vst.msk [vmem:[%s189] sm:$0x2] %vm186, %v185
    %s191 = scalar_lea.vmem %s1, 141
    %192 = vst.msk [vmem:[%s191] sm:$0x4] %vm186, %v185
    %s193 = scalar_lea.vmem %s1, 204
    %194 = vst.msk [vmem:[%s193] sm:$0x8] %vm186, %v185
    %v195 = vld [vmem:[#allocation0] sm:$0xf]
    %196 = vrot.lane.b32.xlu0 %v195, 112
    %v197 = vpop.permute.xlu0 %196
    %vm198 = vcmask 7168
    %s199 = scalar_lea.vmem %s1, 16
    %200 = vst.msk [vmem:[%s199] sm:$0x1] %vm198, %v197
    %s201 = scalar_lea.vmem %s1, 79
    %202 = vst.msk [vmem:[%s201] sm:$0x2] %vm198, %v197
    %s203 = scalar_lea.vmem %s1, 142
    %204 = vst.msk [vmem:[%s203] sm:$0x4] %vm198, %v197
    %s205 = scalar_lea.vmem %s1, 205
    %206 = vst.msk [vmem:[%s205] sm:$0x8] %vm198, %v197
    %v207 = vld [vmem:[#allocation0] sm:$0xf]
    %208 = vrot.lane.b32.xlu0 %v207, 111
    %v209 = vpop.permute.xlu0 %208
    %vm210 = vcmask 7168
    %s211 = scalar_lea.vmem %s1, 17
    %212 = vst.msk [vmem:[%s211] sm:$0x1] %vm210, %v209
    %s213 = scalar_lea.vmem %s1, 80
    %214 = vst.msk [vmem:[%s213] sm:$0x2] %vm210, %v209
    %s215 = scalar_lea.vmem %s1, 143
    %216 = vst.msk [vmem:[%s215] sm:$0x4] %vm210, %v209
    %s217 = scalar_lea.vmem %s1, 206
    %218 = vst.msk [vmem:[%s217] sm:$0x8] %vm210, %v209
    %v219 = vld [vmem:[#allocation0] sm:$0xf]
    %220 = vrot.lane.b32.xlu0 %v219, 110
    %v221 = vpop.permute.xlu0 %220
    %vm222 = vcmask 7168
    %s223 = scalar_lea.vmem %s1, 18
    %224 = vst.msk [vmem:[%s223] sm:$0x1] %vm222, %v221
    %s225 = scalar_lea.vmem %s1, 81
    %226 = vst.msk [vmem:[%s225] sm:$0x2] %vm222, %v221
    %s227 = scalar_lea.vmem %s1, 144
    %228 = vst.msk [vmem:[%s227] sm:$0x4] %vm222, %v221
    %s229 = scalar_lea.vmem %s1, 207
    %230 = vst.msk [vmem:[%s229] sm:$0x8] %vm222, %v221
    %v231 = vld [vmem:[#allocation0] sm:$0xf]
    %232 = vrot.lane.b32.xlu0 %v231, 109
    %v233 = vpop.permute.xlu0 %232
    %vm234 = vcmask 7168
    %s235 = scalar_lea.vmem %s1, 19
    %236 = vst.msk [vmem:[%s235] sm:$0x1] %vm234, %v233
    %s237 = scalar_lea.vmem %s1, 82
    %238 = vst.msk [vmem:[%s237] sm:$0x2] %vm234, %v233
    %s239 = scalar_lea.vmem %s1, 145
    %240 = vst.msk [vmem:[%s239] sm:$0x4] %vm234, %v233
    %s241 = scalar_lea.vmem %s1, 208
    %242 = vst.msk [vmem:[%s241] sm:$0x8] %vm234, %v233
    %v243 = vld [vmem:[#allocation0] sm:$0xf]
    %244 = vrot.lane.b32.xlu0 %v243, 108
    %v245 = vpop.permute.xlu0 %244
    %vm246 = vcmask 7168
    %s247 = scalar_lea.vmem %s1, 20
    %248 = vst.msk [vmem:[%s247] sm:$0x1] %vm246, %v245
    %s249 = scalar_lea.vmem %s1, 83
    %250 = vst.msk [vmem:[%s249] sm:$0x2] %vm246, %v245
    %s251 = scalar_lea.vmem %s1, 146
    %252 = vst.msk [vmem:[%s251] sm:$0x4] %vm246, %v245
    %s253 = scalar_lea.vmem %s1, 209
    %254 = vst.msk [vmem:[%s253] sm:$0x8] %vm246, %v245
    %v255 = vld [vmem:[#allocation0] sm:$0xf]
    %256 = vrot.lane.b32.xlu0 %v255, 107
    %v257 = vpop.permute.xlu0 %256
    %vm258 = vcmask 7168
    %s259 = scalar_lea.vmem %s1, 21
    %260 = vst.msk [vmem:[%s259] sm:$0x1] %vm258, %v257
    %s261 = scalar_lea.vmem %s1, 84
    %262 = vst.msk [vmem:[%s261] sm:$0x2] %vm258, %v257
    %s263 = scalar_lea.vmem %s1, 147
    %264 = vst.msk [vmem:[%s263] sm:$0x4] %vm258, %v257
    %s265 = scalar_lea.vmem %s1, 210
    %266 = vst.msk [vmem:[%s265] sm:$0x8] %vm258, %v257
    %v267 = vld [vmem:[#allocation0] sm:$0xf]
    %268 = vrot.lane.b32.xlu0 %v267, 106
    %v269 = vpop.permute.xlu0 %268
    %vm270 = vcmask 7168
    %s271 = scalar_lea.vmem %s1, 22
    %272 = vst.msk [vmem:[%s271] sm:$0x1] %vm270, %v269
    %s273 = scalar_lea.vmem %s1, 85
    %274 = vst.msk [vmem:[%s273] sm:$0x2] %vm270, %v269
    %s275 = scalar_lea.vmem %s1, 148
    %276 = vst.msk [vmem:[%s275] sm:$0x4] %vm270, %v269
    %s277 = scalar_lea.vmem %s1, 211
    %278 = vst.msk [vmem:[%s277] sm:$0x8] %vm270, %v269
    %v279 = vld [vmem:[#allocation0] sm:$0xf]
    %280 = vrot.lane.b32.xlu0 %v279, 105
    %v281 = vpop.permute.xlu0 %280
    %vm282 = vcmask 7168
    %s283 = scalar_lea.vmem %s1, 23
    %284 = vst.msk [vmem:[%s283] sm:$0x1] %vm282, %v281
    %s285 = scalar_lea.vmem %s1, 86
    %286 = vst.msk [vmem:[%s285] sm:$0x2] %vm282, %v281
    %s287 = scalar_lea.vmem %s1, 149
    %288 = vst.msk [vmem:[%s287] sm:$0x4] %vm282, %v281
    %s289 = scalar_lea.vmem %s1, 212
    %290 = vst.msk [vmem:[%s289] sm:$0x8] %vm282, %v281
    %v291 = vld [vmem:[#allocation0] sm:$0xf]
    %292 = vrot.lane.b32.xlu0 %v291, 104
    %v293 = vpop.permute.xlu0 %292
    %vm294 = vcmask 7168
    %s295 = scalar_lea.vmem %s1, 24
    %296 = vst.msk [vmem:[%s295] sm:$0x1] %vm294, %v293
    %s297 = scalar_lea.vmem %s1, 87
    %298 = vst.msk [vmem:[%s297] sm:$0x2] %vm294, %v293
    %s299 = scalar_lea.vmem %s1, 150
    %300 = vst.msk [vmem:[%s299] sm:$0x4] %vm294, %v293
    %s301 = scalar_lea.vmem %s1, 213
    %302 = vst.msk [vmem:[%s301] sm:$0x8] %vm294, %v293
    %v303 = vld [vmem:[#allocation0] sm:$0xf]
    %304 = vrot.lane.b32.xlu0 %v303, 103
    %v305 = vpop.permute.xlu0 %304
    %vm306 = vcmask 7168
    %s307 = scalar_lea.vmem %s1, 25
    %308 = vst.msk [vmem:[%s307] sm:$0x1] %vm306, %v305
    %s309 = scalar_lea.vmem %s1, 88
    %310 = vst.msk [vmem:[%s309] sm:$0x2] %vm306, %v305
    %s311 = scalar_lea.vmem %s1, 151
    %312 = vst.msk [vmem:[%s311] sm:$0x4] %vm306, %v305
    %s313 = scalar_lea.vmem %s1, 214
    %314 = vst.msk [vmem:[%s313] sm:$0x8] %vm306, %v305
    %v315 = vld [vmem:[#allocation0] sm:$0xf]
    %316 = vrot.lane.b32.xlu0 %v315, 102
    %v317 = vpop.permute.xlu0 %316
    %vm318 = vcmask 7168
    %s319 = scalar_lea.vmem %s1, 26
    %320 = vst.msk [vmem:[%s319] sm:$0x1] %vm318, %v317
    %s321 = scalar_lea.vmem %s1, 89
    %322 = vst.msk [vmem:[%s321] sm:$0x2] %vm318, %v317
    %s323 = scalar_lea.vmem %s1, 152
    %324 = vst.msk [vmem:[%s323] sm:$0x4] %vm318, %v317
    %s325 = scalar_lea.vmem %s1, 215
    %326 = vst.msk [vmem:[%s325] sm:$0x8] %vm318, %v317
    %v327 = vld [vmem:[#allocation0] sm:$0xf]
    %328 = vrot.lane.b32.xlu0 %v327, 101
    %v329 = vpop.permute.xlu0 %328
    %vm330 = vcmask 7168
    %s331 = scalar_lea.vmem %s1, 27
    %332 = vst.msk [vmem:[%s331] sm:$0x1] %vm330, %v329
    %s333 = scalar_lea.vmem %s1, 90
    %334 = vst.msk [vmem:[%s333] sm:$0x2] %vm330, %v329
    %s335 = scalar_lea.vmem %s1, 153
    %336 = vst.msk [vmem:[%s335] sm:$0x4] %vm330, %v329
    %s337 = scalar_lea.vmem %s1, 216
    %338 = vst.msk [vmem:[%s337] sm:$0x8] %vm330, %v329
    %v339 = vld [vmem:[#allocation0] sm:$0xf]
    %340 = vrot.lane.b32.xlu0 %v339, 100
    %v341 = vpop.permute.xlu0 %340
    %vm342 = vcmask 7168
    %s343 = scalar_lea.vmem %s1, 28
    %344 = vst.msk [vmem:[%s343] sm:$0x1] %vm342, %v341
    %s345 = scalar_lea.vmem %s1, 91
    %346 = vst.msk [vmem:[%s345] sm:$0x2] %vm342, %v341
    %s347 = scalar_lea.vmem %s1, 154
    %348 = vst.msk [vmem:[%s347] sm:$0x4] %vm342, %v341
    %s349 = scalar_lea.vmem %s1, 217
    %350 = vst.msk [vmem:[%s349] sm:$0x8] %vm342, %v341
    %v351 = vld [vmem:[#allocation0] sm:$0xf]
    %352 = vrot.lane.b32.xlu0 %v351, 99
    %v353 = vpop.permute.xlu0 %352
    %vm354 = vcmask 7168
    %s355 = scalar_lea.vmem %s1, 29
    %356 = vst.msk [vmem:[%s355] sm:$0x1] %vm354, %v353
    %s357 = scalar_lea.vmem %s1, 92
    %358 = vst.msk [vmem:[%s357] sm:$0x2] %vm354, %v353
    %s359 = scalar_lea.vmem %s1, 155
    %360 = vst.msk [vmem:[%s359] sm:$0x4] %vm354, %v353
    %s361 = scalar_lea.vmem %s1, 218
    %362 = vst.msk [vmem:[%s361] sm:$0x8] %vm354, %v353
    %v363 = vld [vmem:[#allocation0] sm:$0xf]
    %364 = vrot.lane.b32.xlu0 %v363, 98
    %v365 = vpop.permute.xlu0 %364
    %vm366 = vcmask 7168
    %s367 = scalar_lea.vmem %s1, 30
    %368 = vst.msk [vmem:[%s367] sm:$0x1] %vm366, %v365
    %s369 = scalar_lea.vmem %s1, 93
    %370 = vst.msk [vmem:[%s369] sm:$0x2] %vm366, %v365
    %s371 = scalar_lea.vmem %s1, 156
    %372 = vst.msk [vmem:[%s371] sm:$0x4] %vm366, %v365
    %s373 = scalar_lea.vmem %s1, 219
    %374 = vst.msk [vmem:[%s373] sm:$0x8] %vm366, %v365
    %v375 = vld [vmem:[#allocation0] sm:$0xf]
    %376 = vrot.lane.b32.xlu0 %v375, 97
    %v377 = vpop.permute.xlu0 %376
    %vm378 = vcmask 7168
    %s379 = scalar_lea.vmem %s1, 31
    %380 = vst.msk [vmem:[%s379] sm:$0x1] %vm378, %v377
    %s381 = scalar_lea.vmem %s1, 94
    %382 = vst.msk [vmem:[%s381] sm:$0x2] %vm378, %v377
    %s383 = scalar_lea.vmem %s1, 157
    %384 = vst.msk [vmem:[%s383] sm:$0x4] %vm378, %v377
    %s385 = scalar_lea.vmem %s1, 220
    %386 = vst.msk [vmem:[%s385] sm:$0x8] %vm378, %v377
    %v387 = vld [vmem:[#allocation0] sm:$0xf]
    %388 = vrot.lane.b32.xlu0 %v387, 96
    %v389 = vpop.permute.xlu0 %388
    %vm390 = vcmask 7168
    %s391 = scalar_lea.vmem %s1, 32
    %392 = vst.msk [vmem:[%s391] sm:$0x1] %vm390, %v389
    %s393 = scalar_lea.vmem %s1, 95
    %394 = vst.msk [vmem:[%s393] sm:$0x2] %vm390, %v389
    %s395 = scalar_lea.vmem %s1, 158
    %396 = vst.msk [vmem:[%s395] sm:$0x4] %vm390, %v389
    %s397 = scalar_lea.vmem %s1, 221
    %398 = vst.msk [vmem:[%s397] sm:$0x8] %vm390, %v389
    %v399 = vld [vmem:[#allocation0] sm:$0xf]
    %400 = vrot.lane.b32.xlu0 %v399, 95
    %v401 = vpop.permute.xlu0 %400
    %vm402 = vcmask 7168
    %s403 = scalar_lea.vmem %s1, 33
    %404 = vst.msk [vmem:[%s403] sm:$0x1] %vm402, %v401
    %s405 = scalar_lea.vmem %s1, 96
    %406 = vst.msk [vmem:[%s405] sm:$0x2] %vm402, %v401
    %s407 = scalar_lea.vmem %s1, 159
    %408 = vst.msk [vmem:[%s407] sm:$0x4] %vm402, %v401
    %s409 = scalar_lea.vmem %s1, 222
    %410 = vst.msk [vmem:[%s409] sm:$0x8] %vm402, %v401
    %v411 = vld [vmem:[#allocation0] sm:$0xf]
    %412 = vrot.lane.b32.xlu0 %v411, 94
    %v413 = vpop.permute.xlu0 %412
    %vm414 = vcmask 7168
    %s415 = scalar_lea.vmem %s1, 34
    %416 = vst.msk [vmem:[%s415] sm:$0x1] %vm414, %v413
    %s417 = scalar_lea.vmem %s1, 97
    %418 = vst.msk [vmem:[%s417] sm:$0x2] %vm414, %v413
    %s419 = scalar_lea.vmem %s1, 160
    %420 = vst.msk [vmem:[%s419] sm:$0x4] %vm414, %v413
    %s421 = scalar_lea.vmem %s1, 223
    %422 = vst.msk [vmem:[%s421] sm:$0x8] %vm414, %v413
    %v423 = vld [vmem:[#allocation0] sm:$0xf]
    %424 = vrot.lane.b32.xlu0 %v423, 93
    %v425 = vpop.permute.xlu0 %424
    %vm426 = vcmask 7168
    %s427 = scalar_lea.vmem %s1, 35
    %428 = vst.msk [vmem:[%s427] sm:$0x1] %vm426, %v425
    %s429 = scalar_lea.vmem %s1, 98
    %430 = vst.msk [vmem:[%s429] sm:$0x2] %vm426, %v425
    %s431 = scalar_lea.vmem %s1, 161
    %432 = vst.msk [vmem:[%s431] sm:$0x4] %vm426, %v425
    %s433 = scalar_lea.vmem %s1, 224
    %434 = vst.msk [vmem:[%s433] sm:$0x8] %vm426, %v425
    %v435 = vld [vmem:[#allocation0] sm:$0xf]
    %436 = vrot.lane.b32.xlu0 %v435, 92
    %v437 = vpop.permute.xlu0 %436
    %vm438 = vcmask 7168
    %s439 = scalar_lea.vmem %s1, 36
    %440 = vst.msk [vmem:[%s439] sm:$0x1] %vm438, %v437
    %s441 = scalar_lea.vmem %s1, 99
    %442 = vst.msk [vmem:[%s441] sm:$0x2] %vm438, %v437
    %s443 = scalar_lea.vmem %s1, 162
    %444 = vst.msk [vmem:[%s443] sm:$0x4] %vm438, %v437
    %s445 = scalar_lea.vmem %s1, 225
    %446 = vst.msk [vmem:[%s445] sm:$0x8] %vm438, %v437
    %v447 = vld [vmem:[#allocation0] sm:$0xf]
    %448 = vrot.lane.b32.xlu0 %v447, 91
    %v449 = vpop.permute.xlu0 %448
    %vm450 = vcmask 7168
    %s451 = scalar_lea.vmem %s1, 37
    %452 = vst.msk [vmem:[%s451] sm:$0x1] %vm450, %v449
    %s453 = scalar_lea.vmem %s1, 100
    %454 = vst.msk [vmem:[%s453] sm:$0x2] %vm450, %v449
    %s455 = scalar_lea.vmem %s1, 163
    %456 = vst.msk [vmem:[%s455] sm:$0x4] %vm450, %v449
    %s457 = scalar_lea.vmem %s1, 226
    %458 = vst.msk [vmem:[%s457] sm:$0x8] %vm450, %v449
    %v459 = vld [vmem:[#allocation0] sm:$0xf]
    %460 = vrot.lane.b32.xlu0 %v459, 90
    %v461 = vpop.permute.xlu0 %460
    %vm462 = vcmask 7168
    %s463 = scalar_lea.vmem %s1, 38
    %464 = vst.msk [vmem:[%s463] sm:$0x1] %vm462, %v461
    %s465 = scalar_lea.vmem %s1, 101
    %466 = vst.msk [vmem:[%s465] sm:$0x2] %vm462, %v461
    %s467 = scalar_lea.vmem %s1, 164
    %468 = vst.msk [vmem:[%s467] sm:$0x4] %vm462, %v461
    %s469 = scalar_lea.vmem %s1, 227
    %470 = vst.msk [vmem:[%s469] sm:$0x8] %vm462, %v461
    %v471 = vld [vmem:[#allocation0] sm:$0xf]
    %472 = vrot.lane.b32.xlu0 %v471, 89
    %v473 = vpop.permute.xlu0 %472
    %vm474 = vcmask 7168
    %s475 = scalar_lea.vmem %s1, 39
    %476 = vst.msk [vmem:[%s475] sm:$0x1] %vm474, %v473
    %s477 = scalar_lea.vmem %s1, 102
    %478 = vst.msk [vmem:[%s477] sm:$0x2] %vm474, %v473
    %s479 = scalar_lea.vmem %s1, 165
    %480 = vst.msk [vmem:[%s479] sm:$0x4] %vm474, %v473
    %s481 = scalar_lea.vmem %s1, 228
    %482 = vst.msk [vmem:[%s481] sm:$0x8] %vm474, %v473
    %v483 = vld [vmem:[#allocation0] sm:$0xf]
    %484 = vrot.lane.b32.xlu0 %v483, 88
    %v485 = vpop.permute.xlu0 %484
    %vm486 = vcmask 7168
    %s487 = scalar_lea.vmem %s1, 40
    %488 = vst.msk [vmem:[%s487] sm:$0x1] %vm486, %v485
    %s489 = scalar_lea.vmem %s1, 103
    %490 = vst.msk [vmem:[%s489] sm:$0x2] %vm486, %v485
    %s491 = scalar_lea.vmem %s1, 166
    %492 = vst.msk [vmem:[%s491] sm:$0x4] %vm486, %v485
    %s493 = scalar_lea.vmem %s1, 229
    %494 = vst.msk [vmem:[%s493] sm:$0x8] %vm486, %v485
    %v495 = vld [vmem:[#allocation0] sm:$0xf]
    %496 = vrot.lane.b32.xlu0 %v495, 87
    %v497 = vpop.permute.xlu0 %496
    %vm498 = vcmask 7168
    %s499 = scalar_lea.vmem %s1, 41
    %500 = vst.msk [vmem:[%s499] sm:$0x1] %vm498, %v497
    %s501 = scalar_lea.vmem %s1, 104
    %502 = vst.msk [vmem:[%s501] sm:$0x2] %vm498, %v497
    %s503 = scalar_lea.vmem %s1, 167
    %504 = vst.msk [vmem:[%s503] sm:$0x4] %vm498, %v497
    %s505 = scalar_lea.vmem %s1, 230
    %506 = vst.msk [vmem:[%s505] sm:$0x8] %vm498, %v497
    %v507 = vld [vmem:[#allocation0] sm:$0xf]
    %508 = vrot.lane.b32.xlu0 %v507, 86
    %v509 = vpop.permute.xlu0 %508
    %vm510 = vcmask 7168
    %s511 = scalar_lea.vmem %s1, 42
    %512 = vst.msk [vmem:[%s511] sm:$0x1] %vm510, %v509
    %s513 = scalar_lea.vmem %s1, 105
    %514 = vst.msk [vmem:[%s513] sm:$0x2] %vm510, %v509
    %s515 = scalar_lea.vmem %s1, 168
    %516 = vst.msk [vmem:[%s515] sm:$0x4] %vm510, %v509
    %s517 = scalar_lea.vmem %s1, 231
    %518 = vst.msk [vmem:[%s517] sm:$0x8] %vm510, %v509
    %v519 = vld [vmem:[#allocation0] sm:$0xf]
    %520 = vrot.lane.b32.xlu0 %v519, 85
    %v521 = vpop.permute.xlu0 %520
    %vm522 = vcmask 7168
    %s523 = scalar_lea.vmem %s1, 43
    %524 = vst.msk [vmem:[%s523] sm:$0x1] %vm522, %v521
    %s525 = scalar_lea.vmem %s1, 106
    %526 = vst.msk [vmem:[%s525] sm:$0x2] %vm522, %v521
    %s527 = scalar_lea.vmem %s1, 169
    %528 = vst.msk [vmem:[%s527] sm:$0x4] %vm522, %v521
    %s529 = scalar_lea.vmem %s1, 232
    %530 = vst.msk [vmem:[%s529] sm:$0x8] %vm522, %v521
    %v531 = vld [vmem:[#allocation0] sm:$0xf]
    %532 = vrot.lane.b32.xlu0 %v531, 84
    %v533 = vpop.permute.xlu0 %532
    %vm534 = vcmask 7168
    %s535 = scalar_lea.vmem %s1, 44
    %536 = vst.msk [vmem:[%s535] sm:$0x1] %vm534, %v533
    %s537 = scalar_lea.vmem %s1, 107
    %538 = vst.msk [vmem:[%s537] sm:$0x2] %vm534, %v533
    %s539 = scalar_lea.vmem %s1, 170
    %540 = vst.msk [vmem:[%s539] sm:$0x4] %vm534, %v533
    %s541 = scalar_lea.vmem %s1, 233
    %542 = vst.msk [vmem:[%s541] sm:$0x8] %vm534, %v533
    %v543 = vld [vmem:[#allocation0] sm:$0xf]
    %544 = vrot.lane.b32.xlu0 %v543, 83
    %v545 = vpop.permute.xlu0 %544
    %vm546 = vcmask 7168
    %s547 = scalar_lea.vmem %s1, 45
    %548 = vst.msk [vmem:[%s547] sm:$0x1] %vm546, %v545
    %s549 = scalar_lea.vmem %s1, 108
    %550 = vst.msk [vmem:[%s549] sm:$0x2] %vm546, %v545
    %s551 = scalar_lea.vmem %s1, 171
    %552 = vst.msk [vmem:[%s551] sm:$0x4] %vm546, %v545
    %s553 = scalar_lea.vmem %s1, 234
    %554 = vst.msk [vmem:[%s553] sm:$0x8] %vm546, %v545
    %v555 = vld [vmem:[#allocation0] sm:$0xf]
    %556 = vrot.lane.b32.xlu0 %v555, 82
    %v557 = vpop.permute.xlu0 %556
    %vm558 = vcmask 7168
    %s559 = scalar_lea.vmem %s1, 46
    %560 = vst.msk [vmem:[%s559] sm:$0x1] %vm558, %v557
    %s561 = scalar_lea.vmem %s1, 109
    %562 = vst.msk [vmem:[%s561] sm:$0x2] %vm558, %v557
    %s563 = scalar_lea.vmem %s1, 172
    %564 = vst.msk [vmem:[%s563] sm:$0x4] %vm558, %v557
    %s565 = scalar_lea.vmem %s1, 235
    %566 = vst.msk [vmem:[%s565] sm:$0x8] %vm558, %v557
    %v567 = vld [vmem:[#allocation0] sm:$0xf]
    %568 = vrot.lane.b32.xlu0 %v567, 81
    %v569 = vpop.permute.xlu0 %568
    %vm570 = vcmask 7168
    %s571 = scalar_lea.vmem %s1, 47
    %572 = vst.msk [vmem:[%s571] sm:$0x1] %vm570, %v569
    %s573 = scalar_lea.vmem %s1, 110
    %574 = vst.msk [vmem:[%s573] sm:$0x2] %vm570, %v569
    %s575 = scalar_lea.vmem %s1, 173
    %576 = vst.msk [vmem:[%s575] sm:$0x4] %vm570, %v569
    %s577 = scalar_lea.vmem %s1, 236
    %578 = vst.msk [vmem:[%s577] sm:$0x8] %vm570, %v569
    %v579 = vld [vmem:[#allocation0] sm:$0xf]
    %580 = vrot.lane.b32.xlu0 %v579, 80
    %v581 = vpop.permute.xlu0 %580
    %vm582 = vcmask 7168
    %s583 = scalar_lea.vmem %s1, 48
    %584 = vst.msk [vmem:[%s583] sm:$0x1] %vm582, %v581
    %s585 = scalar_lea.vmem %s1, 111
    %586 = vst.msk [vmem:[%s585] sm:$0x2] %vm582, %v581
    %s587 = scalar_lea.vmem %s1, 174
    %588 = vst.msk [vmem:[%s587] sm:$0x4] %vm582, %v581
    %s589 = scalar_lea.vmem %s1, 237
    %590 = vst.msk [vmem:[%s589] sm:$0x8] %vm582, %v581
    %v591 = vld [vmem:[#allocation0] sm:$0xf]
    %592 = vrot.lane.b32.xlu0 %v591, 79
    %v593 = vpop.permute.xlu0 %592
    %vm594 = vcmask 7168
    %s595 = scalar_lea.vmem %s1, 49
    %596 = vst.msk [vmem:[%s595] sm:$0x1] %vm594, %v593
    %s597 = scalar_lea.vmem %s1, 112
    %598 = vst.msk [vmem:[%s597] sm:$0x2] %vm594, %v593
    %s599 = scalar_lea.vmem %s1, 175
    %600 = vst.msk [vmem:[%s599] sm:$0x4] %vm594, %v593
    %s601 = scalar_lea.vmem %s1, 238
    %602 = vst.msk [vmem:[%s601] sm:$0x8] %vm594, %v593
    %v603 = vld [vmem:[#allocation0] sm:$0xf]
    %604 = vrot.lane.b32.xlu0 %v603, 78
    %v605 = vpop.permute.xlu0 %604
    %vm606 = vcmask 7168
    %s607 = scalar_lea.vmem %s1, 50
    %608 = vst.msk [vmem:[%s607] sm:$0x1] %vm606, %v605
    %s609 = scalar_lea.vmem %s1, 113
    %610 = vst.msk [vmem:[%s609] sm:$0x2] %vm606, %v605
    %s611 = scalar_lea.vmem %s1, 176
    %612 = vst.msk [vmem:[%s611] sm:$0x4] %vm606, %v605
    %s613 = scalar_lea.vmem %s1, 239
    %614 = vst.msk [vmem:[%s613] sm:$0x8] %vm606, %v605
    %v615 = vld [vmem:[#allocation0] sm:$0xf]
    %616 = vrot.lane.b32.xlu0 %v615, 77
    %v617 = vpop.permute.xlu0 %616
    %vm618 = vcmask 7168
    %s619 = scalar_lea.vmem %s1, 51
    %620 = vst.msk [vmem:[%s619] sm:$0x1] %vm618, %v617
    %s621 = scalar_lea.vmem %s1, 114
    %622 = vst.msk [vmem:[%s621] sm:$0x2] %vm618, %v617
    %s623 = scalar_lea.vmem %s1, 177
    %624 = vst.msk [vmem:[%s623] sm:$0x4] %vm618, %v617
    %s625 = scalar_lea.vmem %s1, 240
    %626 = vst.msk [vmem:[%s625] sm:$0x8] %vm618, %v617
    %v627 = vld [vmem:[#allocation0] sm:$0xf]
    %628 = vrot.lane.b32.xlu0 %v627, 76
    %v629 = vpop.permute.xlu0 %628
    %vm630 = vcmask 7168
    %s631 = scalar_lea.vmem %s1, 52
    %632 = vst.msk [vmem:[%s631] sm:$0x1] %vm630, %v629
    %s633 = scalar_lea.vmem %s1, 115
    %634 = vst.msk [vmem:[%s633] sm:$0x2] %vm630, %v629
    %s635 = scalar_lea.vmem %s1, 178
    %636 = vst.msk [vmem:[%s635] sm:$0x4] %vm630, %v629
    %s637 = scalar_lea.vmem %s1, 241
    %638 = vst.msk [vmem:[%s637] sm:$0x8] %vm630, %v629
    %v639 = vld [vmem:[#allocation0] sm:$0xf]
    %640 = vrot.lane.b32.xlu0 %v639, 75
    %v641 = vpop.permute.xlu0 %640
    %vm642 = vcmask 7168
    %s643 = scalar_lea.vmem %s1, 53
    %644 = vst.msk [vmem:[%s643] sm:$0x1] %vm642, %v641
    %s645 = scalar_lea.vmem %s1, 116
    %646 = vst.msk [vmem:[%s645] sm:$0x2] %vm642, %v641
    %s647 = scalar_lea.vmem %s1, 179
    %648 = vst.msk [vmem:[%s647] sm:$0x4] %vm642, %v641
    %s649 = scalar_lea.vmem %s1, 242
    %650 = vst.msk [vmem:[%s649] sm:$0x8] %vm642, %v641
    %v651 = vld [vmem:[#allocation0] sm:$0xf]
    %652 = vrot.lane.b32.xlu0 %v651, 74
    %v653 = vpop.permute.xlu0 %652
    %vm654 = vcmask 7168
    %s655 = scalar_lea.vmem %s1, 54
    %656 = vst.msk [vmem:[%s655] sm:$0x1] %vm654, %v653
    %s657 = scalar_lea.vmem %s1, 117
    %658 = vst.msk [vmem:[%s657] sm:$0x2] %vm654, %v653
    %s659 = scalar_lea.vmem %s1, 180
    %660 = vst.msk [vmem:[%s659] sm:$0x4] %vm654, %v653
    %s661 = scalar_lea.vmem %s1, 243
    %662 = vst.msk [vmem:[%s661] sm:$0x8] %vm654, %v653
    %v663 = vld [vmem:[#allocation0] sm:$0xf]
    %664 = vrot.lane.b32.xlu0 %v663, 73
    %v665 = vpop.permute.xlu0 %664
    %vm666 = vcmask 7168
    %s667 = scalar_lea.vmem %s1, 55
    %668 = vst.msk [vmem:[%s667] sm:$0x1] %vm666, %v665
    %s669 = scalar_lea.vmem %s1, 118
    %670 = vst.msk [vmem:[%s669] sm:$0x2] %vm666, %v665
    %s671 = scalar_lea.vmem %s1, 181
    %672 = vst.msk [vmem:[%s671] sm:$0x4] %vm666, %v665
    %s673 = scalar_lea.vmem %s1, 244
    %674 = vst.msk [vmem:[%s673] sm:$0x8] %vm666, %v665
    %v675 = vld [vmem:[#allocation0] sm:$0xf]
    %676 = vrot.lane.b32.xlu0 %v675, 72
    %v677 = vpop.permute.xlu0 %676
    %vm678 = vcmask 7168
    %s679 = scalar_lea.vmem %s1, 56
    %680 = vst.msk [vmem:[%s679] sm:$0x1] %vm678, %v677
    %s681 = scalar_lea.vmem %s1, 119
    %682 = vst.msk [vmem:[%s681] sm:$0x2] %vm678, %v677
    %s683 = scalar_lea.vmem %s1, 182
    %684 = vst.msk [vmem:[%s683] sm:$0x4] %vm678, %v677
    %s685 = scalar_lea.vmem %s1, 245
    %686 = vst.msk [vmem:[%s685] sm:$0x8] %vm678, %v677
    %v687 = vld [vmem:[#allocation0] sm:$0xf]
    %688 = vrot.lane.b32.xlu0 %v687, 71
    %v689 = vpop.permute.xlu0 %688
    %vm690 = vcmask 7168
    %s691 = scalar_lea.vmem %s1, 57
    %692 = vst.msk [vmem:[%s691] sm:$0x1] %vm690, %v689
    %s693 = scalar_lea.vmem %s1, 120
    %694 = vst.msk [vmem:[%s693] sm:$0x2] %vm690, %v689
    %s695 = scalar_lea.vmem %s1, 183
    %696 = vst.msk [vmem:[%s695] sm:$0x4] %vm690, %v689
    %s697 = scalar_lea.vmem %s1, 246
    %698 = vst.msk [vmem:[%s697] sm:$0x8] %vm690, %v689
    %v699 = vld [vmem:[#allocation0] sm:$0xf]
    %700 = vrot.lane.b32.xlu0 %v699, 70
    %v701 = vpop.permute.xlu0 %700
    %vm702 = vcmask 7168
    %s703 = scalar_lea.vmem %s1, 58
    %704 = vst.msk [vmem:[%s703] sm:$0x1] %vm702, %v701
    %s705 = scalar_lea.vmem %s1, 121
    %706 = vst.msk [vmem:[%s705] sm:$0x2] %vm702, %v701
    %s707 = scalar_lea.vmem %s1, 184
    %708 = vst.msk [vmem:[%s707] sm:$0x4] %vm702, %v701
    %s709 = scalar_lea.vmem %s1, 247
    %710 = vst.msk [vmem:[%s709] sm:$0x8] %vm702, %v701
    %v711 = vld [vmem:[#allocation0] sm:$0xf]
    %712 = vrot.lane.b32.xlu0 %v711, 69
    %v713 = vpop.permute.xlu0 %712
    %vm714 = vcmask 7168
    %s715 = scalar_lea.vmem %s1, 59
    %716 = vst.msk [vmem:[%s715] sm:$0x1] %vm714, %v713
    %s717 = scalar_lea.vmem %s1, 122
    %718 = vst.msk [vmem:[%s717] sm:$0x2] %vm714, %v713
    %s719 = scalar_lea.vmem %s1, 185
    %720 = vst.msk [vmem:[%s719] sm:$0x4] %vm714, %v713
    %s721 = scalar_lea.vmem %s1, 248
    %722 = vst.msk [vmem:[%s721] sm:$0x8] %vm714, %v713
    %v723 = vld [vmem:[#allocation0] sm:$0xf]
    %724 = vrot.lane.b32.xlu0 %v723, 68
    %v725 = vpop.permute.xlu0 %724
    %vm726 = vcmask 7168
    %s727 = scalar_lea.vmem %s1, 60
    %728 = vst.msk [vmem:[%s727] sm:$0x1] %vm726, %v725
    %s729 = scalar_lea.vmem %s1, 123
    %730 = vst.msk [vmem:[%s729] sm:$0x2] %vm726, %v725
    %s731 = scalar_lea.vmem %s1, 186
    %732 = vst.msk [vmem:[%s731] sm:$0x4] %vm726, %v725
    %s733 = scalar_lea.vmem %s1, 249
    %734 = vst.msk [vmem:[%s733] sm:$0x8] %vm726, %v725
    %v735 = vld [vmem:[#allocation0] sm:$0xf]
    %736 = vrot.lane.b32.xlu0 %v735, 67
    %v737 = vpop.permute.xlu0 %736
    %vm738 = vcmask 7168
    %s739 = scalar_lea.vmem %s1, 61
    %740 = vst.msk [vmem:[%s739] sm:$0x1] %vm738, %v737
    %s741 = scalar_lea.vmem %s1, 124
    %742 = vst.msk [vmem:[%s741] sm:$0x2] %vm738, %v737
    %s743 = scalar_lea.vmem %s1, 187
    %744 = vst.msk [vmem:[%s743] sm:$0x4] %vm738, %v737
    %s745 = scalar_lea.vmem %s1, 250
    %746 = vst.msk [vmem:[%s745] sm:$0x8] %vm738, %v737
    %v747 = vld [vmem:[#allocation0] sm:$0xf]
    %748 = vrot.lane.b32.xlu0 %v747, 66
    %v749 = vpop.permute.xlu0 %748
    %vm750 = vcmask 7168
    %s751 = scalar_lea.vmem %s1, 62
    %752 = vst.msk [vmem:[%s751] sm:$0x1] %vm750, %v749
    %s753 = scalar_lea.vmem %s1, 125
    %754 = vst.msk [vmem:[%s753] sm:$0x2] %vm750, %v749
    %s755 = scalar_lea.vmem %s1, 188
    %756 = vst.msk [vmem:[%s755] sm:$0x4] %vm750, %v749
    %s757 = scalar_lea.vmem %s1, 251
    %758 = vst.msk [vmem:[%s757] sm:$0x8] %vm750, %v749
    %v759 = vld [vmem:[#allocation0] sm:$0xf]
    %760 = vrot.lane.b32.xlu0 %v759, 65
    %v761 = vpop.permute.xlu0 %760
    %vm762 = vcmask 7168
    %s763 = scalar_lea.vmem %s1, 63
    %764 = vst.msk [vmem:[%s763] sm:$0x1] %vm762, %v761
    %s765 = scalar_lea.vmem %s1, 126
    %766 = vst.msk [vmem:[%s765] sm:$0x2] %vm762, %v761
    %s767 = scalar_lea.vmem %s1, 189
    %768 = vst.msk [vmem:[%s767] sm:$0x4] %vm762, %v761
    %s769 = scalar_lea.vmem %s1, 252
    %770 = vst.msk [vmem:[%s769] sm:$0x8] %vm762, %v761

// kernel: tile.18
$region0: #{tile.18}
  #allocation0 [shape = 's32[1]{0}', space=sflag, size = 0x4, scoped, tag = 'scoped memory for tile.18']
  %s0 = inlined_call_operand.vmem [shape: f32[3], index: 0, kind: input, shape index: {}]
  %s1 = inlined_call_operand.vmem [shape: f32[4,3], index: 1, kind: output, shape index: {}]
  // Predicated region
  $region2: #{tile.18} parent=0 // pred_check
    _
  $region3: #{tile.18} parent=0 // pred_check_branch
    %3 = sbr.rel (0) target = $region5
  $region4: #{tile.18} parent=0 // pred_region
    _
  $region5: #{tile.18} parent=0 // pred_fallthru
    _
  %v4 = vld [vmem:[%s0] ss:$0 sm:$0xff]
  %5 = vst [vmem:[%s1] sm:$0xf] %v4

// kernel: tile.1
$region0: #{tile.1}
  %s0 = inlined_call_operand.vmem [shape: f32[4,3], index: 0, kind: input, shape index: {}]
  %s1 = inlined_call_operand.vmem [shape: f32[12,1], index: 1, kind: output, shape index: {}]
  $region1: #{tile.1} parent=0
    #allocation0 [shape = 'u8[4096]{0}', space=vmem, size = 0x1000, scoped, tag = 'scoped mem for input reshape']
    %s3 = sshllo.u32 0, 4
    %v4 = vld [vmem:[%s0] sm:%s3]
    %5 = vst [vmem:[#allocation0] sm:%s3] %v4
    %v6 = vld [vmem:[#allocation0] sm:$0xf]
    %vm7 = vcmask 7168
    %8 = vst.msk [vmem:[%s1] ss:$3 sm:$0xf] %vm7, %v6
    %v9 = vld [vmem:[#allocation0] sm:$0xf]
    %10 = vrot.lane.b32.xlu0 %v9, 127
    %v11 = vpop.permute.xlu0 %10
    %vm12 = vcmask 7168
    %s13 = scalar_lea.vmem %s1, 1
    %14 = vst.msk [vmem:[%s13] ss:$3 sm:$0xf] %vm12, %v11
    %v15 = vld [vmem:[#allocation0] sm:$0xf]
    %16 = vrot.lane.b32.xlu0 %v15, 126
    %v17 = vpop.permute.xlu0 %16
    %vm18 = vcmask 7168
    %s19 = scalar_lea.vmem %s1, 2
    %20 = vst.msk [vmem:[%s19] ss:$3 sm:$0xf] %vm18, %v17

// kernel: point_decoder_forward.1
$region0: #{point_decoder_forward.1}
  #allocation0 [shape = 'u32[]', space=smem, size = 0x4, offset = 0x4, fixed_abs, tag = 'smem constant byte address 0x4 - core index']
  #allocation1 [shape = 'u32[144,128]{1,0:T(1,128)}', space=vmem, size = 0x12000, scoped, tag = 'internal scratch']
  %s0 = inlined_call_operand.vmem [shape: f32[2,16,8,128], index: 0, kind: input, shape index: {}]
  %s1 = inlined_call_operand.vmem [shape: f32[2,3,128], index: 1, kind: input, shape index: {}]
  %s2 = inlined_call_operand.vmem [shape: f32[2,256,1], index: 2, kind: input, shape index: {}]
  %s3 = inlined_call_operand.vmem [shape: f32[32,8], index: 3, kind: input, shape index: {}]
  %s4 = inlined_call_operand.vmem [shape: f32[32,1], index: 4, kind: input, shape index: {}]
  %s5 = inlined_call_operand.vmem [shape: f32[64,32], index: 5, kind: input, shape index: {}]
  %s6 = inlined_call_operand.vmem [shape: f32[64,1], index: 6, kind: input, shape index: {}]
  %s7 = inlined_call_operand.vmem [shape: f32[256,64], index: 7, kind: input, shape index: {}]
  %s8 = inlined_call_operand.vmem [shape: f32[128,256], index: 8, kind: input, shape index: {}]
  %s9 = inlined_call_operand.vmem [shape: f32[128,1], index: 9, kind: input, shape index: {}]
  %s10 = inlined_call_operand.vmem [shape: f32[256,128], index: 10, kind: input, shape index: {}]
  %s11 = inlined_call_operand.vmem [shape: f32[256,1], index: 11, kind: input, shape index: {}]
  %s12 = inlined_call_operand.vmem [shape: f32[12,256], index: 12, kind: input, shape index: {}]
  %s13 = inlined_call_operand.vmem [shape: f32[12,1], index: 13, kind: input, shape index: {}]
  %s14 = inlined_call_operand.vmem [shape: f32[2,12,128], index: 14, kind: output, shape index: {}]
  %s15 = sld [smem:[#allocation0]]
  $region89: #{point_decoder_forward.1} parent=0
    _
  %s17 = ssub.s32 1, %s15
  %s18 = scalar_select 0, %s17, %s15
  loop: start=0, step=1, limit=4
  $region2: #{point_decoder_forward.1} parent=0 // loop_pre_header
    _
  $region3: #{point_decoder_forward.1} parent=0 // loop_header
    %s20 = sphi 0, %s24
    %p21 = scmp.ge.s32.totalorder %s20, 4
    %s27 = sphi 0, %s39
    %s28 = sphi 0, %s35
    %s29 = sphi 0, %s27
    %s30 = sphi 0, %s28
    %s31 = sphi 0, %s29
    %s32 = sphi 0, %s30
    %s44 = sphi 0, %s46
    %s47 = sphi 0, %s44
    %s48 = sphi 0, %s47
    %s64 = sphi 0, %s48
    %s72 = sphi 0, %s74
    %s75 = sphi 0, %s72
    %s76 = sphi 0, %s75
    %s92 = sphi 0, %s76
    %s98 = sphi 0, %s100
    %s101 = sphi 0, %s98
    %s102 = sphi 0, %s101
    %s118 = sphi 0, %s102
    %s122 = sphi 0, %s122
    %s124 = sphi 0, %s122
    %s125 = sphi 0, %s124
    %s139 = sphi 0, %s125
    %s143 = sphi 0, %s143
    %s145 = sphi 0, %s143
    %s146 = sphi 0, %s145
    %s160 = sphi 0, %s146
    %s164 = sphi 0, %s164
    %s166 = sphi 0, %s164
    %s167 = sphi 0, %s166
    %s181 = sphi 0, %s167
    %s185 = sphi 0, %s185
    %s187 = sphi 0, %s185
    %s188 = sphi 0, %s187
    %s202 = sphi 0, %s188
    %s206 = sphi 0, %s206
    %s208 = sphi 0, %s206
    %s209 = sphi 0, %s208
    %s223 = sphi 0, %s209
    %s227 = sphi 0, %s227
    %s229 = sphi 0, %s227
    %s230 = sphi 0, %s229
    %s244 = sphi 0, %s230
    %s248 = sphi 0, %s248
    %s250 = sphi 0, %s248
    %s251 = sphi 0, %s250
    %s265 = sphi 0, %s251
    %s269 = sphi 0, %s269
    %s271 = sphi 0, %s269
    %s272 = sphi 0, %s271
    %s286 = sphi 0, %s272
    %s290 = sphi 0, %s290
    %s292 = sphi 0, %s290
    %s293 = sphi 0, %s292
    %s307 = sphi 0, %s293
    %s311 = sphi 0, %s311
    %s313 = sphi 0, %s311
    %s314 = sphi 0, %s313
    %s328 = sphi 0, %s314
    %s332 = sphi 0, %s332
    %s334 = sphi 0, %s332
    %s335 = sphi 0, %s334
    %s349 = sphi 0, %s335
    %s357 = sphi 0, %s359
    %s360 = sphi 0, %s357
    %s361 = sphi 0, %s360
    %s377 = sphi 0, %s361
  $region4: #{point_decoder_forward.1} parent=0 // loop_header_branch
    %23 = sbr.rel (%p21) target = $region8
  $region5: #{point_decoder_forward.1} parent=0 // loop_body
    %s25 = ssub.s32 %s20, 1
    %s26 = ssub.s32 %s20, 2
    %s33 = sadd.s32 1, %s28
    %p34 = scmp.ge.s32.totalorder %s33, 1
    %s35 = scalar_select %p34, 0, %s33
    %s36 = sadd.s32 1, %s27
    %s37 = scalar_select %p34, %s36, %s27
    %p38 = scmp.ge.s32.totalorder %s37, 2
    %s39 = scalar_select %p38, 0, %s37
    %s40 = ssub.s32 %s27, %s39
    %s41 = ssub.s32 %s28, %s35
    %s42 = sor.u32 %s40, %s41
    %p43 = scmp.eq.s32.totalorder %s42, 0
    %s45 = sadd.s32 %s44, 1
    %s46 = scalar_select %p43, %s44, %s45
    %p49 = pneg %p43
    %p50 = scmp.eq.s32.totalorder %s20, 1
    %p51 = por %p49, %p50
    %p52 = scmp.ne.s32.totalorder %s44, %s47
    %p53 = scmp.eq.s32.totalorder %s20, 0
    %p54 = por %p52, %p53
    %p55 = scmp.ne.s32.totalorder %s44, %s47
    %p56 = scmp.eq.s32.totalorder %s25, 1
    %p57 = por %p55, %p56
    %p58 = scmp.ne.s32.totalorder %s47, %s48
    %p59 = scmp.eq.s32.totalorder %s25, 0
    %p60 = por %p58, %p59
    %p61 = scmp.ne.s32.totalorder %s47, %s48
    %p62 = scmp.eq.s32.totalorder %s26, 1
    %p63 = por %p61, %p62
    %p65 = scmp.ne.s32.totalorder %s48, %s64
    %p66 = scmp.eq.s32.totalorder %s26, 0
    %p67 = por %p65, %p66
    %s68 = ssub.s32 %s27, %s39
    %s69 = ssub.s32 %s28, %s35
    %s70 = sor.u32 %s68, %s69
    %p71 = scmp.eq.s32.totalorder %s70, 0
    %s73 = sadd.s32 %s72, 1
    %s74 = scalar_select %p71, %s72, %s73
    %p77 = pneg %p71
    %p78 = scmp.eq.s32.totalorder %s20, 1
    %p79 = por %p77, %p78
    %p80 = scmp.ne.s32.totalorder %s72, %s75
    %p81 = scmp.eq.s32.totalorder %s20, 0
    %p82 = por %p80, %p81
    %p83 = scmp.ne.s32.totalorder %s72, %s75
    %p84 = scmp.eq.s32.totalorder %s25, 1
    %p85 = por %p83, %p84
    %p86 = scmp.ne.s32.totalorder %s75, %s76
    %p87 = scmp.eq.s32.totalorder %s25, 0
    %p88 = por %p86, %p87
    %p89 = scmp.ne.s32.totalorder %s75, %s76
    %p90 = scmp.eq.s32.totalorder %s26, 1
    %p91 = por %p89, %p90
    %p93 = scmp.ne.s32.totalorder %s76, %s92
    %p94 = scmp.eq.s32.totalorder %s26, 0
    %p95 = por %p93, %p94
    %s96 = ssub.s32 %s27, %s39
    %p97 = scmp.eq.s32.totalorder %s96, 0
    %s99 = sadd.s32 %s98, 1
    %s100 = scalar_select %p97, %s98, %s99
    %p103 = pneg %p97
    %p104 = scmp.eq.s32.totalorder %s20, 1
    %p105 = por %p103, %p104
    %p106 = scmp.ne.s32.totalorder %s98, %s101
    %p107 = scmp.eq.s32.totalorder %s20, 0
    %p108 = por %p106, %p107
    %p109 = scmp.ne.s32.totalorder %s98, %s101
    %p110 = scmp.eq.s32.totalorder %s25, 1
    %p111 = por %p109, %p110
    %p112 = scmp.ne.s32.totalorder %s101, %s102
    %p113 = scmp.eq.s32.totalorder %s25, 0
    %p114 = por %p112, %p113
    %p115 = scmp.ne.s32.totalorder %s101, %s102
    %p116 = scmp.eq.s32.totalorder %s26, 1
    %p117 = por %p115, %p116
    %p119 = scmp.ne.s32.totalorder %s102, %s118
    %p120 = scmp.eq.s32.totalorder %s26, 0
    %p121 = por %p119, %p120
    %s123 = sadd.s32 %s122, 1
    %p126 = scmp.eq.s32.totalorder %s20, 1
    %p127 = scmp.ne.s32.totalorder %s122, %s124
    %p128 = scmp.eq.s32.totalorder %s20, 0
    %p129 = por %p127, %p128
    %p130 = scmp.ne.s32.totalorder %s122, %s124
    %p131 = scmp.eq.s32.totalorder %s25, 1
    %p132 = por %p130, %p131
    %p133 = scmp.ne.s32.totalorder %s124, %s125
    %p134 = scmp.eq.s32.totalorder %s25, 0
    %p135 = por %p133, %p134
    %p136 = scmp.ne.s32.totalorder %s124, %s125
    %p137 = scmp.eq.s32.totalorder %s26, 1
    %p138 = por %p136, %p137
    %p140 = scmp.ne.s32.totalorder %s125, %s139
    %p141 = scmp.eq.s32.totalorder %s26, 0
    %p142 = por %p140, %p141
    %s144 = sadd.s32 %s143, 1
    %p147 = scmp.eq.s32.totalorder %s20, 1
    %p148 = scmp.ne.s32.totalorder %s143, %s145
    %p149 = scmp.eq.s32.totalorder %s20, 0
    %p150 = por %p148, %p149
    %p151 = scmp.ne.s32.totalorder %s143, %s145
    %p152 = scmp.eq.s32.totalorder %s25, 1
    %p153 = por %p151, %p152
    %p154 = scmp.ne.s32.totalorder %s145, %s146
    %p155 = scmp.eq.s32.totalorder %s25, 0
    %p156 = por %p154, %p155
    %p157 = scmp.ne.s32.totalorder %s145, %s146
    %p158 = scmp.eq.s32.totalorder %s26, 1
    %p159 = por %p157, %p158
    %p161 = scmp.ne.s32.totalorder %s146, %s160
    %p162 = scmp.eq.s32.totalorder %s26, 0
    %p163 = por %p161, %p162
    %s165 = sadd.s32 %s164, 1
    %p168 = scmp.eq.s32.totalorder %s20, 1
    %p169 = scmp.ne.s32.totalorder %s164, %s166
    %p170 = scmp.eq.s32.totalorder %s20, 0
    %p171 = por %p169, %p170
    %p172 = scmp.ne.s32.totalorder %s164, %s166
    %p173 = scmp.eq.s32.totalorder %s25, 1
    %p174 = por %p172, %p173
    %p175 = scmp.ne.s32.totalorder %s166, %s167
    %p176 = scmp.eq.s32.totalorder %s25, 0
    %p177 = por %p175, %p176
    %p178 = scmp.ne.s32.totalorder %s166, %s167
    %p179 = scmp.eq.s32.totalorder %s26, 1
    %p180 = por %p178, %p179
    %p182 = scmp.ne.s32.totalorder %s167, %s181
    %p183 = scmp.eq.s32.totalorder %s26, 0
    %p184 = por %p182, %p183
    %s186 = sadd.s32 %s185, 1
    %p189 = scmp.eq.s32.totalorder %s20, 1
    %p190 = scmp.ne.s32.totalorder %s185, %s187
    %p191 = scmp.eq.s32.totalorder %s20, 0
    %p192 = por %p190, %p191
    %p193 = scmp.ne.s32.totalorder %s185, %s187
    %p194 = scmp.eq.s32.totalorder %s25, 1
    %p195 = por %p193, %p194
    %p196 = scmp.ne.s32.totalorder %s187, %s188
    %p197 = scmp.eq.s32.totalorder %s25, 0
    %p198 = por %p196, %p197
    %p199 = scmp.ne.s32.totalorder %s187, %s188
    %p200 = scmp.eq.s32.totalorder %s26, 1
    %p201 = por %p199, %p200
    %p203 = scmp.ne.s32.totalorder %s188, %s202
    %p204 = scmp.eq.s32.totalorder %s26, 0
    %p205 = por %p203, %p204
    %s207 = sadd.s32 %s206, 1
    %p210 = scmp.eq.s32.totalorder %s20, 1
    %p211 = scmp.ne.s32.totalorder %s206, %s208
    %p212 = scmp.eq.s32.totalorder %s20, 0
    %p213 = por %p211, %p212
    %p214 = scmp.ne.s32.totalorder %s206, %s208
    %p215 = scmp.eq.s32.totalorder %s25, 1
    %p216 = por %p214, %p215
    %p217 = scmp.ne.s32.totalorder %s208, %s209
    %p218 = scmp.eq.s32.totalorder %s25, 0
    %p219 = por %p217, %p218
    %p220 = scmp.ne.s32.totalorder %s208, %s209
    %p221 = scmp.eq.s32.totalorder %s26, 1
    %p222 = por %p220, %p221
    %p224 = scmp.ne.s32.totalorder %s209, %s223
    %p225 = scmp.eq.s32.totalorder %s26, 0
    %p226 = por %p224, %p225
    %s228 = sadd.s32 %s227, 1
    %p231 = scmp.eq.s32.totalorder %s20, 1
    %p232 = scmp.ne.s32.totalorder %s227, %s229
    %p233 = scmp.eq.s32.totalorder %s20, 0
    %p234 = por %p232, %p233
    %p235 = scmp.ne.s32.totalorder %s227, %s229
    %p236 = scmp.eq.s32.totalorder %s25, 1
    %p237 = por %p235, %p236
    %p238 = scmp.ne.s32.totalorder %s229, %s230
    %p239 = scmp.eq.s32.totalorder %s25, 0
    %p240 = por %p238, %p239
    %p241 = scmp.ne.s32.totalorder %s229, %s230
    %p242 = scmp.eq.s32.totalorder %s26, 1
    %p243 = por %p241, %p242
    %p245 = scmp.ne.s32.totalorder %s230, %s244
    %p246 = scmp.eq.s32.totalorder %s26, 0
    %p247 = por %p245, %p246
    %s249 = sadd.s32 %s248, 1
    %p252 = scmp.eq.s32.totalorder %s20, 1
    %p253 = scmp.ne.s32.totalorder %s248, %s250
    %p254 = scmp.eq.s32.totalorder %s20, 0
    %p255 = por %p253, %p254
    %p256 = scmp.ne.s32.totalorder %s248, %s250
    %p257 = scmp.eq.s32.totalorder %s25, 1
    %p258 = por %p256, %p257
    %p259 = scmp.ne.s32.totalorder %s250, %s251
    %p260 = scmp.eq.s32.totalorder %s25, 0
    %p261 = por %p259, %p260
    %p262 = scmp.ne.s32.totalorder %s250, %s251
    %p263 = scmp.eq.s32.totalorder %s26, 1
    %p264 = por %p262, %p263
    %p266 = scmp.ne.s32.totalorder %s251, %s265
    %p267 = scmp.eq.s32.totalorder %s26, 0
    %p268 = por %p266, %p267
    %s270 = sadd.s32 %s269, 1
    %p273 = scmp.eq.s32.totalorder %s20, 1
    %p274 = scmp.ne.s32.totalorder %s269, %s271
    %p275 = scmp.eq.s32.totalorder %s20, 0
    %p276 = por %p274, %p275
    %p277 = scmp.ne.s32.totalorder %s269, %s271
    %p278 = scmp.eq.s32.totalorder %s25, 1
    %p279 = por %p277, %p278
    %p280 = scmp.ne.s32.totalorder %s271, %s272
    %p281 = scmp.eq.s32.totalorder %s25, 0
    %p282 = por %p280, %p281
    %p283 = scmp.ne.s32.totalorder %s271, %s272
    %p284 = scmp.eq.s32.totalorder %s26, 1
    %p285 = por %p283, %p284
    %p287 = scmp.ne.s32.totalorder %s272, %s286
    %p288 = scmp.eq.s32.totalorder %s26, 0
    %p289 = por %p287, %p288
    %s291 = sadd.s32 %s290, 1
    %p294 = scmp.eq.s32.totalorder %s20, 1
    %p295 = scmp.ne.s32.totalorder %s290, %s292
    %p296 = scmp.eq.s32.totalorder %s20, 0
    %p297 = por %p295, %p296
    %p298 = scmp.ne.s32.totalorder %s290, %s292
    %p299 = scmp.eq.s32.totalorder %s25, 1
    %p300 = por %p298, %p299
    %p301 = scmp.ne.s32.totalorder %s292, %s293
    %p302 = scmp.eq.s32.totalorder %s25, 0
    %p303 = por %p301, %p302
    %p304 = scmp.ne.s32.totalorder %s292, %s293
    %p305 = scmp.eq.s32.totalorder %s26, 1
    %p306 = por %p304, %p305
    %p308 = scmp.ne.s32.totalorder %s293, %s307
    %p309 = scmp.eq.s32.totalorder %s26, 0
    %p310 = por %p308, %p309
    %s312 = sadd.s32 %s311, 1
    %p315 = scmp.eq.s32.totalorder %s20, 1
    %p316 = scmp.ne.s32.totalorder %s311, %s313
    %p317 = scmp.eq.s32.totalorder %s20, 0
    %p318 = por %p316, %p317
    %p319 = scmp.ne.s32.totalorder %s311, %s313
    %p320 = scmp.eq.s32.totalorder %s25, 1
    %p321 = por %p319, %p320
    %p322 = scmp.ne.s32.totalorder %s313, %s314
    %p323 = scmp.eq.s32.totalorder %s25, 0
    %p324 = por %p322, %p323
    %p325 = scmp.ne.s32.totalorder %s313, %s314
    %p326 = scmp.eq.s32.totalorder %s26, 1
    %p327 = por %p325, %p326
    %p329 = scmp.ne.s32.totalorder %s314, %s328
    %p330 = scmp.eq.s32.totalorder %s26, 0
    %p331 = por %p329, %p330
    %s333 = sadd.s32 %s332, 1
    %p336 = scmp.eq.s32.totalorder %s20, 1
    %p337 = scmp.ne.s32.totalorder %s332, %s334
    %p338 = scmp.eq.s32.totalorder %s20, 0
    %p339 = por %p337, %p338
    %p340 = scmp.ne.s32.totalorder %s332, %s334
    %p341 = scmp.eq.s32.totalorder %s25, 1
    %p342 = por %p340, %p341
    %p343 = scmp.ne.s32.totalorder %s334, %s335
    %p344 = scmp.eq.s32.totalorder %s25, 0
    %p345 = por %p343, %p344
    %p346 = scmp.ne.s32.totalorder %s334, %s335
    %p347 = scmp.eq.s32.totalorder %s26, 1
    %p348 = por %p346, %p347
    %p350 = scmp.ne.s32.totalorder %s335, %s349
    %p351 = scmp.eq.s32.totalorder %s26, 0
    %p352 = por %p350, %p351
    %s353 = ssub.s32 %s27, %s39
    %s354 = ssub.s32 %s28, %s35
    %s355 = sor.u32 %s353, %s354
    %p356 = scmp.eq.s32.totalorder %s355, 0
    %s358 = sadd.s32 %s357, 1
    %s359 = scalar_select %p356, %s357, %s358
    %p362 = pneg %p356
    %p363 = scmp.eq.s32.totalorder %s20, 1
    %p364 = por %p362, %p363
    %p365 = scmp.ne.s32.totalorder %s357, %s360
    %p366 = scmp.eq.s32.totalorder %s20, 0
    %p367 = por %p365, %p366
    %p368 = scmp.ne.s32.totalorder %s357, %s360
    %p369 = scmp.eq.s32.totalorder %s25, 1
    %p370 = por %p368, %p369
    %p371 = scmp.ne.s32.totalorder %s360, %s361
    %p372 = scmp.eq.s32.totalorder %s25, 0
    %p373 = por %p371, %p372
    %p374 = scmp.ne.s32.totalorder %s360, %s361
    %p375 = scmp.eq.s32.totalorder %s26, 1
    %p376 = por %p374, %p375
    %p378 = scmp.ne.s32.totalorder %s361, %s377
    %p379 = scmp.eq.s32.totalorder %s26, 0
    %p380 = por %p378, %p379
    %p381 = scmp.le.s32.totalorder 1, %s20
    %p382 = scmp.lt.s32.totalorder %s20, 3
    %p383 = pnand %p381, %p382
    %p384 = pneg %p383
    // Predicated region
    $region9: #{point_decoder_forward.1} parent=5 // pred_check
      _
    $region10: #{point_decoder_forward.1} parent=5 // pred_check_branch
      %386 = sbr.rel (%p383) target = $region12
    $region11: #{point_decoder_forward.1} parent=5 // pred_region
      %s387 = ssub.s32 %s20, 1
      // Predicated region
      $region13: #{point_decoder_forward.1} parent=11 // pred_check
        %p388 = pneg %p135
      $region14: #{point_decoder_forward.1} parent=11 // pred_check_branch
        %390 = sbr.rel (%p388) target = $region16
      $region15: #{point_decoder_forward.1} parent=11 // pred_region
        _
      $region16: #{point_decoder_forward.1} parent=11 // pred_fallthru
        _
      // Predicated region
      $region17: #{point_decoder_forward.1} parent=11 // pred_check
        %p391 = pneg %p156
      $region18: #{point_decoder_forward.1} parent=11 // pred_check_branch
        %393 = sbr.rel (%p391) target = $region20
      $region19: #{point_decoder_forward.1} parent=11 // pred_region
        _
      $region20: #{point_decoder_forward.1} parent=11 // pred_fallthru
        _
      // Predicated region
      $region21: #{point_decoder_forward.1} parent=11 // pred_check
        %p394 = pneg %p177
      $region22: #{point_decoder_forward.1} parent=11 // pred_check_branch
        %396 = sbr.rel (%p394) target = $region24
      $region23: #{point_decoder_forward.1} parent=11 // pred_region
        _
      $region24: #{point_decoder_forward.1} parent=11 // pred_fallthru
        _
      // Predicated region
      $region25: #{point_decoder_forward.1} parent=11 // pred_check
        %p397 = pneg %p198
      $region26: #{point_decoder_forward.1} parent=11 // pred_check_branch
        %399 = sbr.rel (%p397) target = $region28
      $region27: #{point_decoder_forward.1} parent=11 // pred_region
        _
      $region28: #{point_decoder_forward.1} parent=11 // pred_fallthru
        _
      // Predicated region
      $region29: #{point_decoder_forward.1} parent=11 // pred_check
        %p400 = pneg %p219
      $region30: #{point_decoder_forward.1} parent=11 // pred_check_branch
        %402 = sbr.rel (%p400) target = $region32
      $region31: #{point_decoder_forward.1} parent=11 // pred_region
        _
      $region32: #{point_decoder_forward.1} parent=11 // pred_fallthru
        _
      // Predicated region
      $region33: #{point_decoder_forward.1} parent=11 // pred_check
        %p403 = pneg %p240
      $region34: #{point_decoder_forward.1} parent=11 // pred_check_branch
        %405 = sbr.rel (%p403) target = $region36
      $region35: #{point_decoder_forward.1} parent=11 // pred_region
        _
      $region36: #{point_decoder_forward.1} parent=11 // pred_fallthru
        _
      // Predicated region
      $region37: #{point_decoder_forward.1} parent=11 // pred_check
        %p406 = pneg %p261
      $region38: #{point_decoder_forward.1} parent=11 // pred_check_branch
        %408 = sbr.rel (%p406) target = $region40
      $region39: #{point_decoder_forward.1} parent=11 // pred_region
        _
      $region40: #{point_decoder_forward.1} parent=11 // pred_fallthru
        _
      // Predicated region
      $region41: #{point_decoder_forward.1} parent=11 // pred_check
        %p409 = pneg %p282
      $region42: #{point_decoder_forward.1} parent=11 // pred_check_branch
        %411 = sbr.rel (%p409) target = $region44
      $region43: #{point_decoder_forward.1} parent=11 // pred_region
        _
      $region44: #{point_decoder_forward.1} parent=11 // pred_fallthru
        _
      // Predicated region
      $region45: #{point_decoder_forward.1} parent=11 // pred_check
        %p412 = pneg %p303
      $region46: #{point_decoder_forward.1} parent=11 // pred_check_branch
        %414 = sbr.rel (%p412) target = $region48
      $region47: #{point_decoder_forward.1} parent=11 // pred_region
        _
      $region48: #{point_decoder_forward.1} parent=11 // pred_fallthru
        _
      // Predicated region
      $region49: #{point_decoder_forward.1} parent=11 // pred_check
        %p415 = pneg %p324
      $region50: #{point_decoder_forward.1} parent=11 // pred_check_branch
        %417 = sbr.rel (%p415) target = $region52
      $region51: #{point_decoder_forward.1} parent=11 // pred_region
        _
      $region52: #{point_decoder_forward.1} parent=11 // pred_fallthru
        _
      // Predicated region
      $region53: #{point_decoder_forward.1} parent=11 // pred_check
        %p418 = pneg %p345
      $region54: #{point_decoder_forward.1} parent=11 // pred_check_branch
        %420 = sbr.rel (%p418) target = $region56
      $region55: #{point_decoder_forward.1} parent=11 // pred_region
        _
      $region56: #{point_decoder_forward.1} parent=11 // pred_fallthru
        _
    $region12: #{point_decoder_forward.1} parent=5 // pred_fallthru
      _
    %p421 = scmp.lt.s32.totalorder %s20, 2
    // Predicated region
    $region57: #{point_decoder_forward.1} parent=5 // pred_check
      %p422 = pneg %p421
    $region58: #{point_decoder_forward.1} parent=5 // pred_check_branch
      %424 = sbr.rel (%p422) target = $region60
    $region59: #{point_decoder_forward.1} parent=5 // pred_region
      // Predicated region
      $region61: #{point_decoder_forward.1} parent=59 // pred_check
        %p425 = pneg %p54
      $region62: #{point_decoder_forward.1} parent=59 // pred_check_branch
        %427 = sbr.rel (%p425) target = $region64
      $region63: #{point_decoder_forward.1} parent=59 // pred_region
        %p428 = scmp.lt.s32.totalorder %s27, 1
        %s429 = scalar_select %p428, %s27, 1
        %p430 = scmp.lt.s32.totalorder %s28, 0
        %s431 = scalar_select %p430, %s28, 0
        %s432 = smul.addr %s429, 16
        %s433 = sadd.s32 %s431, %s432
        %s434 = smul.addr %s433, 8
        %s435 = scalar_lea.vmem %s0, %s434
      $region64: #{point_decoder_forward.1} parent=59 // pred_fallthru
        _
      // Predicated region
      $region65: #{point_decoder_forward.1} parent=59 // pred_check
        %p436 = pneg %p82
      $region66: #{point_decoder_forward.1} parent=59 // pred_check_branch
        %438 = sbr.rel (%p436) target = $region68
      $region67: #{point_decoder_forward.1} parent=59 // pred_region
        %p439 = scmp.lt.s32.totalorder %s27, 1
        %s440 = scalar_select %p439, %s27, 1
        %p441 = scmp.lt.s32.totalorder %s28, 0
        %s442 = scalar_select %p441, %s28, 0
        %s443 = sadd.s32 %s442, %s440
        %s444 = smul.addr %s443, 4
        %s445 = scalar_lea.vmem %s1, %s444
      $region68: #{point_decoder_forward.1} parent=59 // pred_fallthru
        _
      // Predicated region
      $region69: #{point_decoder_forward.1} parent=59 // pred_check
        %p446 = pneg %p108
      $region70: #{point_decoder_forward.1} parent=59 // pred_check_branch
        %448 = sbr.rel (%p446) target = $region72
      $region71: #{point_decoder_forward.1} parent=59 // pred_region
        %p449 = scmp.lt.s32.totalorder %s27, 1
        %s450 = scalar_select %p449, %s27, 1
        %s451 = smul.addr %s450, 32
        %s452 = smul.addr %s451, 8
        %s453 = scalar_lea.vmem %s2, %s452
      $region72: #{point_decoder_forward.1} parent=59 // pred_fallthru
        _
    $region60: #{point_decoder_forward.1} parent=5 // pred_fallthru
      _
    %p454 = scmp.le.s32.totalorder 1, %s20
    %p455 = scmp.lt.s32.totalorder %s20, 3
    %p456 = pnand %p454, %p455
    %p457 = pneg %p456
    // Predicated region
    $region73: #{point_decoder_forward.1} parent=5 // pred_check
      _
    $region74: #{point_decoder_forward.1} parent=5 // pred_check_branch
      %459 = sbr.rel (%p456) target = $region76
    $region75: #{point_decoder_forward.1} parent=5 // pred_region
      %s460 = ssub.s32 %s20, 1
      %p461 = scmp.lt.s32.totalorder %s29, 1
      %s462 = scalar_select %p461, %s29, 1
      %p463 = scmp.lt.s32.totalorder %s30, 0
      %s464 = scalar_select %p463, %s30, 0
      %s465 = smul.addr %s462, 16
      %s466 = sadd.s32 %s464, %s465
      %s467 = smul.addr %s466, 8
      %s468 = scalar_lea.vmem %s0, %s467
      %p469 = pneg %p60
      %p470 = pneg %p57
      %p471 = scmp.lt.s32.totalorder %s29, 1
      %s472 = scalar_select %p471, %s29, 1
      %p473 = scmp.lt.s32.totalorder %s30, 0
      %s474 = scalar_select %p473, %s30, 0
      %s475 = sadd.s32 %s474, %s472
      %s476 = smul.addr %s475, 4
      %s477 = scalar_lea.vmem %s1, %s476
      %p478 = pneg %p88
      %p479 = pneg %p85
      %p480 = scmp.lt.s32.totalorder %s29, 1
      %s481 = scalar_select %p480, %s29, 1
      %s482 = smul.addr %s481, 32
      %s483 = smul.addr %s482, 8
      %s484 = scalar_lea.vmem %s2, %s483
      %p485 = pneg %p114
      %p486 = pneg %p111
      %p487 = pneg %p135
      %p488 = pneg %p132
      %p489 = pneg %p156
      %p490 = pneg %p153
      %p491 = pneg %p177
      %p492 = pneg %p174
      %p493 = pneg %p198
      %p494 = pneg %p195
      %p495 = pneg %p219
      %p496 = pneg %p216
      %p497 = pneg %p240
      %p498 = pneg %p237
      %p499 = pneg %p261
      %p500 = pneg %p258
      %p501 = pneg %p282
      %p502 = pneg %p279
      %p503 = pneg %p303
      %p504 = pneg %p300
      %p505 = pneg %p324
      %p506 = pneg %p321
      %p507 = pneg %p345
      %p508 = pneg %p342
      %p509 = pneg %p373
      %p510 = pneg %p370
      %p511 = scmp.lt.s32.totalorder %s29, 1
      %s512 = scalar_select %p511, %s29, 1
      %p513 = scmp.lt.s32.totalorder %s30, 0
      %s514 = scalar_select %p513, %s30, 0
      %s515 = smul.addr %s512, 2
      %s516 = sadd.s32 %s514, %s515
      %s517 = smul.addr %s516, 8
      %s518 = scalar_lea.vmem %s14, %s517
      %p519 = scmp.lt.s32.totalorder %s29, 1
      %s520 = scalar_select %p519, %s29, 1
      %p521 = scmp.lt.s32.totalorder %s30, 0
      %s522 = scalar_select %p521, %s30, 0
      %s523 = smul.addr %s520, 16
      %s524 = sadd.s32 %s522, %s523
      %s525 = smul.addr %s524, 8
      %s526 = scalar_lea.vmem %s0, %s525
      %p527 = scmp.lt.s32.totalorder %s29, 1
      %s528 = scalar_select %p527, %s29, 1
      %p529 = scmp.lt.s32.totalorder %s30, 0
      %s530 = scalar_select %p529, %s30, 0
      %s531 = sadd.s32 %s530, %s528
      %s532 = smul.addr %s531, 4
      %s533 = scalar_lea.vmem %s1, %s532
      %p534 = scmp.lt.s32.totalorder %s29, 1
      %s535 = scalar_select %p534, %s29, 1
      %s536 = smul.addr %s535, 32
      %s537 = smul.addr %s536, 8
      %s538 = scalar_lea.vmem %s2, %s537
      %p539 = scmp.lt.s32.totalorder %s29, 1
      %s540 = scalar_select %p539, %s29, 1
      %p541 = scmp.lt.s32.totalorder %s30, 0
      %s542 = scalar_select %p541, %s30, 0
      %s543 = smul.addr %s540, 2
      %s544 = sadd.s32 %s542, %s543
      %s545 = smul.addr %s544, 8
      %s546 = scalar_lea.vmem %s14, %s545
      %v547 = vld [vmem:[%s526] sm:$0xff]
      %v548 = vld [vmem:[%s3] sm:$0xff]
      %v549 = vld [vmem:[%s3 + $0x8] sm:$0xff]
      %v550 = vld [vmem:[%s3 + $0x10] sm:$0xff]
      %v551 = vld [vmem:[%s3 + $0x18] sm:$0xff]
      %v552 = vld [vmem:[%s4] sm:$0xff]
      %v553 = vld [vmem:[%s4 + $0x8] sm:$0xff]
      %v554 = vld [vmem:[%s4 + $0x10] sm:$0xff]
      %v555 = vld [vmem:[%s4 + $0x18] sm:$0xff]
      %557 = vset.pattern.permute.xlu0 0
      %558 = vperm.xlu0 %557, %v552
      %v559 = vpop.permute.xlu0 %558
      %562 = vset.pattern.permute.xlu0 0
      %563 = vperm.xlu0 %562, %v553
      %v564 = vpop.permute.xlu0 %563
      %567 = vset.pattern.permute.xlu0 0
      %568 = vperm.xlu0 %567, %v554
      %v569 = vpop.permute.xlu0 %568
      %572 = vset.pattern.permute.xlu0 0
      %573 = vperm.xlu0 %572, %v555
      %v574 = vpop.permute.xlu0 %573
      %vm576 = vcmask 64512
      %v578 = vsel %vm576, %v548, 0
      %v581 = vsel %vm576, %v549, 0
      %v584 = vsel %vm576, %v550, 0
      %v587 = vsel %vm576, %v551, 0
      %589 = vmatprep.subr.mxu0 0.0
      %590 = vmatpush1.msra.mxu0 %v547
      %591 = vmatprep.subr.mxu0 0.0
      %592 = vmatpush1.msra.mxu0 0.0
      %593 = vmatprep.subr.mxu0 0.0
      %594 = vmatpush1.msra.mxu0 0.0
      %595 = vmatprep.subr.mxu0 0.0
      %596 = vmatpush1.msra.mxu0 0.0
      %597 = vmatprep.subr.mxu0 0.0
      %598 = vmatpush1.msra.mxu0 0.0
      %599 = vmatprep.subr.mxu0 0.0
      %600 = vmatpush1.msra.mxu0 0.0
      %601 = vmatprep.subr.mxu0 0.0
      %602 = vmatpush1.msra.mxu0 0.0
      %603 = vmatprep.subr.mxu0 0.0
      %604 = vmatpush1.msra.mxu0 0.0
      %605 = vmatprep.subr.mxu0 0.0
      %606 = vmatpush1.msra.mxu0 0.0
      %607 = vmatprep.subr.mxu0 0.0
      %608 = vmatpush1.msra.mxu0 0.0
      %609 = vmatprep.subr.mxu0 0.0
      %610 = vmatpush1.msra.mxu0 0.0
      %611 = vmatprep.subr.mxu0 0.0
      %612 = vmatpush1.msra.mxu0 0.0
      %613 = vmatprep.subr.mxu0 0.0
      %614 = vmatpush1.msra.mxu0 0.0
      %615 = vmatprep.subr.mxu0 0.0
      %616 = vmatpush1.msra.mxu0 0.0
      %617 = vmatprep.subr.mxu0 0.0
      %618 = vmatpush1.msra.mxu0 0.0
      %619 = vmatprep.subr.mxu0 0.0
      %620 = vmatpush1.msra.mxu0 0.0
      %621 = vmatprep.subr.mxu0 0.0
      %622 = vmatpush1.msra.mxu0 0.0
      %623 = vmatprep.subr.mxu0 0.0
      %624 = vmatpush1.msra.mxu0 0.0
      %625 = vmatprep.subr.mxu0 0.0
      %626 = vmatpush1.msra.mxu0 0.0
      %627 = vmatprep.subr.mxu0 0.0
      %628 = vmatpush1.msra.mxu0 0.0
      %629 = vmatprep.subr.mxu0 0.0
      %630 = vmatpush1.msra.mxu0 0.0
      %631 = vmatprep.subr.mxu0 0.0
      %632 = vmatpush1.msra.mxu0 0.0
      %633 = vmatprep.subr.mxu0 0.0
      %634 = vmatpush1.msra.mxu0 0.0
      %635 = vmatprep.subr.mxu0 0.0
      %636 = vmatpush1.msra.mxu0 0.0
      %637 = vmatprep.subr.mxu0 0.0
      %638 = vmatpush1.msra.mxu0 0.0
      %639 = vmatprep.subr.mxu0 0.0
      %640 = vmatpush1.msra.mxu0 0.0
      %641 = vmatprep.subr.mxu0 0.0
      %642 = vmatpush1.msra.mxu0 0.0
      %643 = vmatprep.subr.mxu0 0.0
      %644 = vmatpush1.msra.mxu0 0.0
      %645 = vmatprep.subr.mxu0 0.0
      %646 = vmatpush1.msra.mxu0 0.0
      %647 = vmatprep.subr.mxu0 0.0
      %648 = vmatpush1.msra.mxu0 0.0
      %649 = vmatprep.subr.mxu0 0.0
      %650 = vmatpush1.msra.mxu0 0.0
      %651 = vmatprep.subr.mxu0 0.0
      %652 = vmatpush1.msra.mxu0 0.0
      %653 = vmatprep.mubr.f32.mxu0 0.0
      %654 = vmatmul.mubr.f32.gmra.mrb[0].mxu0 %v578
      %v655 = vpop.f32.mrb[0].mxu0
      %v656 = vadd.f32 %v559, %v655
      %v657 = vpop.f32.mrb[0].mxu0
      %658 = vmatprep.mubr.f32.mxu0 0.0
      %659 = vmatmul.mubr.f32.gmra.mrb[0].mxu0 %v581
      %v660 = vpop.f32.mrb[0].mxu0
      %v661 = vadd.f32 %v564, %v660
      %v662 = vpop.f32.mrb[0].mxu0
      %663 = vmatprep.mubr.f32.mxu0 0.0
      %664 = vmatmul.mubr.f32.gmra.mrb[0].mxu0 %v584
      %v665 = vpop.f32.mrb[0].mxu0
      %v666 = vadd.f32 %v569, %v665
      %v667 = vpop.f32.mrb[0].mxu0
      %668 = vmatprep.mubr.f32.mxu0 0.0
      %669 = vmatmul.mubr.f32.gmra.mrb[0].mxu0 %v587
      %v670 = vpop.f32.mrb[0].mxu0
      %v671 = vadd.f32 %v574, %v670
      %v672 = vpop.f32.mrb[0].mxu0
      %673 = vdwg.mxu0
      %v674 = vmax.f32 %v656, 0.0
      %v675 = vmax.f32 %v661, 0.0
      %v676 = vmax.f32 %v666, 0.0
      %v677 = vmax.f32 %v671, 0.0
      %v678 = vld [vmem:[%s5] sm:$0xff]
      %v679 = vld [vmem:[%s5 + $0x8] sm:$0xff]
      %v680 = vld [vmem:[%s5 + $0x10] sm:$0xff]
      %v681 = vld [vmem:[%s5 + $0x18] sm:$0xff]
      %v682 = vld [vmem:[%s5 + $0x20] sm:$0xff]
      %v683 = vld [vmem:[%s5 + $0x28] sm:$0xff]
      %v684 = vld [vmem:[%s5 + $0x30] sm:$0xff]
      %v685 = vld [vmem:[%s5 + $0x38] sm:$0xff]
      %v686 = vld [vmem:[%s6] sm:$0xff]
      %v687 = vld [vmem:[%s6 + $0x8] sm:$0xff]
      %v688 = vld [vmem:[%s6 + $0x10] sm:$0xff]
      %v689 = vld [vmem:[%s6 + $0x18] sm:$0xff]
      %v690 = vld [vmem:[%s6 + $0x20] sm:$0xff]
      %v691 = vld [vmem:[%s6 + $0x28] sm:$0xff]
      %v692 = vld [vmem:[%s6 + $0x30] sm:$0xff]
      %v693 = vld [vmem:[%s6 + $0x38] sm:$0xff]
      %695 = vset.pattern.permute.xlu0 0
      %696 = vperm.xlu0 %695, %v686
      %v697 = vpop.permute.xlu0 %696
      %700 = vset.pattern.permute.xlu0 0
      %701 = vperm.xlu0 %700, %v687
      %v702 = vpop.permute.xlu0 %701
      %705 = vset.pattern.permute.xlu0 0
      %706 = vperm.xlu0 %705, %v688
      %v707 = vpop.permute.xlu0 %706
      %710 = vset.pattern.permute.xlu0 0
      %711 = vperm.xlu0 %710, %v689
      %v712 = vpop.permute.xlu0 %711
      %715 = vset.pattern.permute.xlu0 0
      %716 = vperm.xlu0 %715, %v690
      %v717 = vpop.permute.xlu0 %716
      %720 = vset.pattern.permute.xlu0 0
      %721 = vperm.xlu0 %720, %v691
      %v722 = vpop.permute.xlu0 %721
      %725 = vset.pattern.permute.xlu0 0
      %726 = vperm.xlu0 %725, %v692
      %v727 = vpop.permute.xlu0 %726
      %730 = vset.pattern.permute.xlu0 0
      %731 = vperm.xlu0 %730, %v693
      %v732 = vpop.permute.xlu0 %731
      %vm734 = vcmask 261120
      %v736 = vsel %vm734, %v678, 0
      %v739 = vsel %vm734, %v679, 0
      %v742 = vsel %vm734, %v680, 0
      %v745 = vsel %vm734, %v681, 0
      %v748 = vsel %vm734, %v682, 0
      %v751 = vsel %vm734, %v683, 0
      %v754 = vsel %vm734, %v684, 0
      %v757 = vsel %vm734, %v685, 0
      %759 = vmatprep.subr.mxu0 0.0
      %760 = vmatpush1.msra.mxu0 %v674
      %761 = vmatprep.subr.mxu0 0.0
      %762 = vmatpush1.msra.mxu0 %v675
      %763 = vmatprep.subr.mxu0 0.0
      %764 = vmatpush1.msra.mxu0 %v676
      %765 = vmatprep.subr.mxu0 0.0
      %766 = vmatpush1.msra.mxu0 %v677
      %767 = vmatprep.subr.mxu0 0.0
      %768 = vmatpush1.msra.mxu0 0.0
      %769 = vmatprep.subr.mxu0 0.0
      %770 = vmatpush1.msra.mxu0 0.0
      %771 = vmatprep.subr.mxu0 0.0
      %772 = vmatpush1.msra.mxu0 0.0
      %773 = vmatprep.subr.mxu0 0.0
      %774 = vmatpush1.msra.mxu0 0.0
      %775 = vmatprep.subr.mxu0 0.0
      %776 = vmatpush1.msra.mxu0 0.0
      %777 = vmatprep.subr.mxu0 0.0
      %778 = vmatpush1.msra.mxu0 0.0
      %779 = vmatprep.subr.mxu0 0.0
      %780 = vmatpush1.msra.mxu0 0.0
      %781 = vmatprep.subr.mxu0 0.0
      %782 = vmatpush1.msra.mxu0 0.0
      %783 = vmatprep.subr.mxu0 0.0
      %784 = vmatpush1.msra.mxu0 0.0
      %785 = vmatprep.subr.mxu0 0.0
      %786 = vmatpush1.msra.mxu0 0.0
      %787 = vmatprep.subr.mxu0 0.0
      %788 = vmatpush1.msra.mxu0 0.0
      %789 = vmatprep.subr.mxu0 0.0
      %790 = vmatpush1.msra.mxu0 0.0
      %791 = vmatprep.subr.mxu0 0.0
      %792 = vmatpush1.msra.mxu0 0.0
      %793 = vmatprep.subr.mxu0 0.0
      %794 = vmatpush1.msra.mxu0 0.0
      %795 = vmatprep.subr.mxu0 0.0
      %796 = vmatpush1.msra.mxu0 0.0
      %797 = vmatprep.subr.mxu0 0.0
      %798 = vmatpush1.msra.mxu0 0.0
      %799 = vmatprep.subr.mxu0 0.0
      %800 = vmatpush1.msra.mxu0 0.0
      %801 = vmatprep.subr.mxu0 0.0
      %802 = vmatpush1.msra.mxu0 0.0
      %803 = vmatprep.subr.mxu0 0.0
      %804 = vmatpush1.msra.mxu0 0.0
      %805 = vmatprep.subr.mxu0 0.0
      %806 = vmatpush1.msra.mxu0 0.0
      %807 = vmatprep.subr.mxu0 0.0
      %808 = vmatpush1.msra.mxu0 0.0
      %809 = vmatprep.subr.mxu0 0.0
      %810 = vmatpush1.msra.mxu0 0.0
      %811 = vmatprep.subr.mxu0 0.0
      %812 = vmatpush1.msra.mxu0 0.0
      %813 = vmatprep.subr.mxu0 0.0
      %814 = vmatpush1.msra.mxu0 0.0
      %815 = vmatprep.subr.mxu0 0.0
      %816 = vmatpush1.msra.mxu0 0.0
      %817 = vmatprep.subr.mxu0 0.0
      %818 = vmatpush1.msra.mxu0 0.0
      %819 = vmatprep.subr.mxu0 0.0
      %820 = vmatpush1.msra.mxu0 0.0
      %821 = vmatprep.subr.mxu0 0.0
      %822 = vmatpush1.msra.mxu0 0.0
      %823 = vmatprep.mubr.f32.mxu0 0.0
      %824 = vmatmul.mubr.f32.gmra.mrb[0].mxu0 %v736
      %v825 = vpop.f32.mrb[0].mxu0
      %v826 = vadd.f32 %v697, %v825
      %v827 = vpop.f32.mrb[0].mxu0
      %828 = vmatprep.mubr.f32.mxu0 0.0
      %829 = vmatmul.mubr.f32.gmra.mrb[0].mxu0 %v739
      %v830 = vpop.f32.mrb[0].mxu0
      %v831 = vadd.f32 %v702, %v830
      %v832 = vpop.f32.mrb[0].mxu0
      %833 = vmatprep.mubr.f32.mxu0 0.0
      %834 = vmatmul.mubr.f32.gmra.mrb[0].mxu0 %v742
      %v835 = vpop.f32.mrb[0].mxu0
      %v836 = vadd.f32 %v707, %v835
      %v837 = vpop.f32.mrb[0].mxu0
      %838 = vmatprep.mubr.f32.mxu0 0.0
      %839 = vmatmul.mubr.f32.gmra.mrb[0].mxu0 %v745
      %v840 = vpop.f32.mrb[0].mxu0
      %v841 = vadd.f32 %v712, %v840
      %v842 = vpop.f32.mrb[0].mxu0
      %843 = vmatprep.mubr.f32.mxu0 0.0
      %844 = vmatmul.mubr.f32.gmra.mrb[0].mxu0 %v748
      %v845 = vpop.f32.mrb[0].mxu0
      %v846 = vadd.f32 %v717, %v845
      %v847 = vpop.f32.mrb[0].mxu0
      %848 = vmatprep.mubr.f32.mxu0 0.0
      %849 = vmatmul.mubr.f32.gmra.mrb[0].mxu0 %v751
      %v850 = vpop.f32.mrb[0].mxu0
      %v851 = vadd.f32 %v722, %v850
      %v852 = vpop.f32.mrb[0].mxu0
      %853 = vmatprep.mubr.f32.mxu0 0.0
      %854 = vmatmul.mubr.f32.gmra.mrb[0].mxu0 %v754
      %v855 = vpop.f32.mrb[0].mxu0
      %v856 = vadd.f32 %v727, %v855
      %v857 = vpop.f32.mrb[0].mxu0
      %858 = vmatprep.mubr.f32.mxu0 0.0
      %859 = vmatmul.mubr.f32.gmra.mrb[0].mxu0 %v757
      %v860 = vpop.f32.mrb[0].mxu0
      %v861 = vadd.f32 %v732, %v860
      %v862 = vpop.f32.mrb[0].mxu0
      %863 = vdwg.mxu0
      %v864 = vmax.f32 %v826, 0.0
      %v865 = vmax.f32 %v831, 0.0
      %v866 = vmax.f32 %v836, 0.0
      %v867 = vmax.f32 %v841, 0.0
      %v868 = vmax.f32 %v846, 0.0
      %v869 = vmax.f32 %v851, 0.0
      %v870 = vmax.f32 %v856, 0.0
      %v871 = vmax.f32 %v861, 0.0
      %s872 = scalar_lea.vmem %s526, 8
      %v873 = vld [vmem:[%s872] sm:$0xff]
      %874 = vmatprep.subr.mxu0 0.0
      %875 = vmatpush1.msra.mxu0 %v873
      %876 = vmatprep.subr.mxu0 0.0
      %877 = vmatpush1.msra.mxu0 0.0
      %878 = vmatprep.subr.mxu0 0.0
      %879 = vmatpush1.msra.mxu0 0.0
      %880 = vmatprep.subr.mxu0 0.0
      %881 = vmatpush1.msra.mxu0 0.0
      %882 = vmatprep.subr.mxu0 0.0
      %883 = vmatpush1.msra.mxu0 0.0
      %884 = vmatprep.subr.mxu0 0.0
      %885 = vmatpush1.msra.mxu0 0.0
      %886 = vmatprep.subr.mxu0 0.0
      %887 = vmatpush1.msra.mxu0 0.0
      %888 = vmatprep.subr.mxu0 0.0
      %889 = vmatpush1.msra.mxu0 0.0
      %890 = vmatprep.subr.mxu0 0.0
      %891 = vmatpush1.msra.mxu0 0.0
      %892 = vmatprep.subr.mxu0 0.0
      %893 = vmatpush1.msra.mxu0 0.0
      %894 = vmatprep.subr.mxu0 0.0
      %895 = vmatpush1.msra.mxu0 0.0
      %896 = vmatprep.subr.mxu0 0.0
      %897 = vmatpush1.msra.mxu0 0.0
      %898 = vmatprep.subr.mxu0 0.0
      %899 = vmatpush1.msra.mxu0 0.0
      %900 = vmatprep.subr.mxu0 0.0
      %901 = vmatpush1.msra.mxu0 0.0
      %902 = vmatprep.subr.mxu0 0.0
      %903 = vmatpush1.msra.mxu0 0.0
      %904 = vmatprep.subr.mxu0 0.0
      %905 = vmatpush1.msra.mxu0 0.0
      %906 = vmatprep.subr.mxu0 0.0
      %907 = vmatpush1.msra.mxu0 0.0
      %908 = vmatprep.subr.mxu0 0.0
      %909 = vmatpush1.msra.mxu0 0.0
      %910 = vmatprep.subr.mxu0 0.0
      %911 = vmatpush1.msra.mxu0 0.0
      %912 = vmatprep.subr.mxu0 0.0
      %913 = vmatpush1.msra.mxu0 0.0
      %914 = vmatprep.subr.mxu0 0.0
      %915 = vmatpush1.msra.mxu0 0.0
      %916 = vmatprep.subr.mxu0 0.0
      %917 = vmatpush1.msra.mxu0 0.0
      %918 = vmatprep.subr.mxu0 0.0
      %919 = vmatpush1.msra.mxu0 0.0
      %920 = vmatprep.subr.mxu0 0.0
      %921 = vmatpush1.msra.mxu0 0.0
      %922 = vmatprep.subr.mxu0 0.0
      %923 = vmatpush1.msra.mxu0 0.0
      %924 = vmatprep.subr.mxu0 0.0
      %925 = vmatpush1.msra.mxu0 0.0
      %926 = vmatprep.subr.mxu0 0.0
      %927 = vmatpush1.msra.mxu0 0.0
      %928 = vmatprep.subr.mxu0 0.0
      %929 = vmatpush1.msra.mxu0 0.0
      %930 = vmatprep.subr.mxu0 0.0
      %931 = vmatpush1.msra.mxu0 0.0
      %932 = vmatprep.subr.mxu0 0.0
      %933 = vmatpush1.msra.mxu0 0.0
      %934 = vmatprep.subr.mxu0 0.0
      %935 = vmatpush1.msra.mxu0 0.0
      %936 = vmatprep.subr.mxu0 0.0
      %937 = vmatpush1.msra.mxu0 0.0
      %938 = vmatprep.mubr.f32.mxu0 0.0
      %939 = vmatmul.mubr.f32.gmra.mrb[0].mxu0 %v578
      %v940 = vpop.f32.mrb[0].mxu0
      %v941 = vadd.f32 %v559, %v940
      %v942 = vpop.f32.mrb[0].mxu0
      %943 = vmatprep.mubr.f32.mxu0 0.0
      %944 = vmatmul.mubr.f32.gmra.mrb[0].mxu0 %v581
      %v945 = vpop.f32.mrb[0].mxu0
      %v946 = vadd.f32 %v564, %v945
      %v947 = vpop.f32.mrb[0].mxu0
      %948 = vmatprep.mubr.f32.mxu0 0.0
      %949 = vmatmul.mubr.f32.gmra.mrb[0].mxu0 %v584
      %v950 = vpop.f32.mrb[0].mxu0
      %v951 = vadd.f32 %v569, %v950
      %v952 = vpop.f32.mrb[0].mxu0
      %953 = vmatprep.mubr.f32.mxu0 0.0
      %954 = vmatmul.mubr.f32.gmra.mrb[0].mxu0 %v587
      %v955 = vpop.f32.mrb[0].mxu0
      %v956 = vadd.f32 %v574, %v955
      %v957 = vpop.f32.mrb[0].mxu0
      %958 = vdwg.mxu0
      %v959 = vmax.f32 %v941, 0.0
      %v960 = vmax.f32 %v946, 0.0
      %v961 = vmax.f32 %v951, 0.0
      %v962 = vmax.f32 %v956, 0.0
      %963 = vmatprep.subr.mxu0 0.0
      %964 = vmatpush1.msra.mxu0 %v959
      %965 = vmatprep.subr.mxu0 0.0
      %966 = vmatpush1.msra.mxu0 %v960
      %967 = vmatprep.subr.mxu0 0.0
      %968 = vmatpush1.msra.mxu0 %v961
      %969 = vmatprep.subr.mxu0 0.0
      %970 = vmatpush1.msra.mxu0 %v962
      %971 = vmatprep.subr.mxu0 0.0
      %972 = vmatpush1.msra.mxu0 0.0
      %973 = vmatprep.subr.mxu0 0.0
      %974 = vmatpush1.msra.mxu0 0.0
      %975 = vmatprep.subr.mxu0 0.0
      %976 = vmatpush1.msra.mxu0 0.0
      %977 = vmatprep.subr.mxu0 0.0
      %978 = vmatpush1.msra.mxu0 0.0
      %979 = vmatprep.subr.mxu0 0.0
      %980 = vmatpush1.msra.mxu0 0.0
      %981 = vmatprep.subr.mxu0 0.0
      %982 = vmatpush1.msra.mxu0 0.0
      %983 = vmatprep.subr.mxu0 0.0
      %984 = vmatpush1.msra.mxu0 0.0
      %985 = vmatprep.subr.mxu0 0.0
      %986 = vmatpush1.msra.mxu0 0.0
      %987 = vmatprep.subr.mxu0 0.0
      %988 = vmatpush1.msra.mxu0 0.0
      %989 = vmatprep.subr.mxu0 0.0
      %990 = vmatpush1.msra.mxu0 0.0
      %991 = vmatprep.subr.mxu0 0.0
      %992 = vmatpush1.msra.mxu0 0.0
      %993 = vmatprep.subr.mxu0 0.0
      %994 = vmatpush1.msra.mxu0 0.0
      %995 = vmatprep.subr.mxu0 0.0
      %996 = vmatpush1.msra.mxu0 0.0
      %997 = vmatprep.subr.mxu0 0.0
      %998 = vmatpush1.msra.mxu0 0.0
      %999 = vmatprep.subr.mxu0 0.0
      %1000 = vmatpush1.msra.mxu0 0.0
      %1001 = vmatprep.subr.mxu0 0.0
      %1002 = vmatpush1.msra.mxu0 0.0
      %1003 = vmatprep.subr.mxu0 0.0
      %1004 = vmatpush1.msra.mxu0 0.0
      %1005 = vmatprep.subr.mxu0 0.0
      %1006 = vmatpush1.msra.mxu0 0.0
      %1007 = vmatprep.subr.mxu0 0.0
      %1008 = vmatpush1.msra.mxu0 0.0
      %1009 = vmatprep.subr.mxu0 0.0
      %1010 = vmatpush1.msra.mxu0 0.0
      %1011 = vmatprep.subr.mxu0 0.0
      %1012 = vmatpush1.msra.mxu0 0.0
      %1013 = vmatprep.subr.mxu0 0.0
      %1014 = vmatpush1.msra.mxu0 0.0
      %1015 = vmatprep.subr.mxu0 0.0
      %1016 = vmatpush1.msra.mxu0 0.0
      %1017 = vmatprep.subr.mxu0 0.0
      %1018 = vmatpush1.msra.mxu0 0.0
      %1019 = vmatprep.subr.mxu0 0.0
      %1020 = vmatpush1.msra.mxu0 0.0
      %1021 = vmatprep.subr.mxu0 0.0
      %1022 = vmatpush1.msra.mxu0 0.0
      %1023 = vmatprep.subr.mxu0 0.0
      %1024 = vmatpush1.msra.mxu0 0.0
      %1025 = vmatprep.subr.mxu0 0.0
      %1026 = vmatpush1.msra.mxu0 0.0
      %1027 = vmatprep.mubr.f32.mxu0 0.0
      %1028 = vmatmul.mubr.f32.gmra.mrb[0].mxu0 %v736
      %v1029 = vpop.f32.mrb[0].mxu0
      %v1030 = vadd.f32 %v697, %v1029
      %v1031 = vpop.f32.mrb[0].mxu0
      %1032 = vmatprep.mubr.f32.mxu0 0.0
      %1033 = vmatmul.mubr.f32.gmra.mrb[0].mxu0 %v739
      %v1034 = vpop.f32.mrb[0].mxu0
      %v1035 = vadd.f32 %v702, %v1034
      %v1036 = vpop.f32.mrb[0].mxu0
      %1037 = vmatprep.mubr.f32.mxu0 0.0
      %1038 = vmatmul.mubr.f32.gmra.mrb[0].mxu0 %v742
      %v1039 = vpop.f32.mrb[0].mxu0
      %v1040 = vadd.f32 %v707, %v1039
      %v1041 = vpop.f32.mrb[0].mxu0
      %1042 = vmatprep.mubr.f32.mxu0 0.0
      %1043 = vmatmul.mubr.f32.gmra.mrb[0].mxu0 %v745
      %v1044 = vpop.f32.mrb[0].mxu0
      %v1045 = vadd.f32 %v712, %v1044
      %v1046 = vpop.f32.mrb[0].mxu0
      %1047 = vmatprep.mubr.f32.mxu0 0.0
      %1048 = vmatmul.mubr.f32.gmra.mrb[0].mxu0 %v748
      %v1049 = vpop.f32.mrb[0].mxu0
      %v1050 = vadd.f32 %v717, %v1049
      %v1051 = vpop.f32.mrb[0].mxu0
      %1052 = vmatprep.mubr.f32.mxu0 0.0
      %1053 = vmatmul.mubr.f32.gmra.mrb[0].mxu0 %v751
      %v1054 = vpop.f32.mrb[0].mxu0
      %v1055 = vadd.f32 %v722, %v1054
      %v1056 = vpop.f32.mrb[0].mxu0
      %1057 = vmatprep.mubr.f32.mxu0 0.0
      %1058 = vmatmul.mubr.f32.gmra.mrb[0].mxu0 %v754
      %v1059 = vpop.f32.mrb[0].mxu0
      %v1060 = vadd.f32 %v727, %v1059
      %v1061 = vpop.f32.mrb[0].mxu0
      %1062 = vmatprep.mubr.f32.mxu0 0.0
      %1063 = vmatmul.mubr.f32.gmra.mrb[0].mxu0 %v757
      %v1064 = vpop.f32.mrb[0].mxu0
      %v1065 = vadd.f32 %v732, %v1064
      %v1066 = vpop.f32.mrb[0].mxu0
      %1067 = vdwg.mxu0
      %v1068 = vmax.f32 %v1030, 0.0
      %v1069 = vmax.f32 %v1035, 0.0
      %v1070 = vmax.f32 %v1040, 0.0
      %v1071 = vmax.f32 %v1045, 0.0
      %v1072 = vmax.f32 %v1050, 0.0
      %v1073 = vmax.f32 %v1055, 0.0
      %v1074 = vmax.f32 %v1060, 0.0
      %v1075 = vmax.f32 %v1065, 0.0
      %v1076 = vmax.f32 %v864, %v1068
      %v1077 = vmax.f32 %v865, %v1069
      %v1078 = vmax.f32 %v866, %v1070
      %v1079 = vmax.f32 %v867, %v1071
      %v1080 = vmax.f32 %v868, %v1072
      %v1081 = vmax.f32 %v869, %v1073
      %v1082 = vmax.f32 %v870, %v1074
      %v1083 = vmax.f32 %v871, %v1075
      %s1084 = scalar_lea.vmem %s526, 16
      %v1085 = vld [vmem:[%s1084] sm:$0xff]
      %1086 = vmatprep.subr.mxu0 0.0
      %1087 = vmatpush1.msra.mxu0 %v1085
      %1088 = vmatprep.subr.mxu0 0.0
      %1089 = vmatpush1.msra.mxu0 0.0
      %1090 = vmatprep.subr.mxu0 0.0
      %1091 = vmatpush1.msra.mxu0 0.0
      %1092 = vmatprep.subr.mxu0 0.0
      %1093 = vmatpush1.msra.mxu0 0.0
      %1094 = vmatprep.subr.mxu0 0.0
      %1095 = vmatpush1.msra.mxu0 0.0
      %1096 = vmatprep.subr.mxu0 0.0
      %1097 = vmatpush1.msra.mxu0 0.0
      %1098 = vmatprep.subr.mxu0 0.0
      %1099 = vmatpush1.msra.mxu0 0.0
      %1100 = vmatprep.subr.mxu0 0.0
      %1101 = vmatpush1.msra.mxu0 0.0
      %1102 = vmatprep.subr.mxu0 0.0
      %1103 = vmatpush1.msra.mxu0 0.0
      %1104 = vmatprep.subr.mxu0 0.0
      %1105 = vmatpush1.msra.mxu0 0.0
      %1106 = vmatprep.subr.mxu0 0.0
      %1107 = vmatpush1.msra.mxu0 0.0
      %1108 = vmatprep.subr.mxu0 0.0
      %1109 = vmatpush1.msra.mxu0 0.0
      %1110 = vmatprep.subr.mxu0 0.0
      %1111 = vmatpush1.msra.mxu0 0.0
      %1112 = vmatprep.subr.mxu0 0.0
      %1113 = vmatpush1.msra.mxu0 0.0
      %1114 = vmatprep.subr.mxu0 0.0
      %1115 = vmatpush1.msra.mxu0 0.0
      %1116 = vmatprep.subr.mxu0 0.0
      %1117 = vmatpush1.msra.mxu0 0.0
      %1118 = vmatprep.subr.mxu0 0.0
      %1119 = vmatpush1.msra.mxu0 0.0
      %1120 = vmatprep.subr.mxu0 0.0
      %1121 = vmatpush1.msra.mxu0 0.0
      %1122 = vmatprep.subr.mxu0 0.0
      %1123 = vmatpush1.msra.mxu0 0.0
      %1124 = vmatprep.subr.mxu0 0.0
      %1125 = vmatpush1.msra.mxu0 0.0
      %1126 = vmatprep.subr.mxu0 0.0
      %1127 = vmatpush1.msra.mxu0 0.0
      %1128 = vmatprep.subr.mxu0 0.0
      %1129 = vmatpush1.msra.mxu0 0.0
      %1130 = vmatprep.subr.mxu0 0.0
      %1131 = vmatpush1.msra.mxu0 0.0
      %1132 = vmatprep.subr.mxu0 0.0
      %1133 = vmatpush1.msra.mxu0 0.0
      %1134 = vmatprep.subr.mxu0 0.0
      %1135 = vmatpush1.msra.mxu0 0.0
      %1136 = vmatprep.subr.mxu0 0.0
      %1137 = vmatpush1.msra.mxu0 0.0
      %1138 = vmatprep.subr.mxu0 0.0
      %1139 = vmatpush1.msra.mxu0 0.0
      %1140 = vmatprep.subr.mxu0 0.0
      %1141 = vmatpush1.msra.mxu0 0.0
      %1142 = vmatprep.subr.mxu0 0.0
      %1143 = vmatpush1.msra.mxu0 0.0
      %1144 = vmatprep.subr.mxu0 0.0
      %1145 = vmatpush1.msra.mxu0 0.0
      %1146 = vmatprep.subr.mxu0 0.0
      %1147 = vmatpush1.msra.mxu0 0.0
      %1148 = vmatprep.subr.mxu0 0.0
      %1149 = vmatpush1.msra.mxu0 0.0
      %1150 = vmatprep.mubr.f32.mxu0 0.0
      %1151 = vmatmul.mubr.f32.gmra.mrb[0].mxu0 %v578
      %v1152 = vpop.f32.mrb[0].mxu0
      %v1153 = vadd.f32 %v559, %v1152
      %v1154 = vpop.f32.mrb[0].mxu0
      %1155 = vmatprep.mubr.f32.mxu0 0.0
      %1156 = vmatmul.mubr.f32.gmra.mrb[0].mxu0 %v581
      %v1157 = vpop.f32.mrb[0].mxu0
      %v1158 = vadd.f32 %v564, %v1157
      %v1159 = vpop.f32.mrb[0].mxu0
      %1160 = vmatprep.mubr.f32.mxu0 0.0
      %1161 = vmatmul.mubr.f32.gmra.mrb[0].mxu0 %v584
      %v1162 = vpop.f32.mrb[0].mxu0
      %v1163 = vadd.f32 %v569, %v1162
      %v1164 = vpop.f32.mrb[0].mxu0
      %1165 = vmatprep.mubr.f32.mxu0 0.0
      %1166 = vmatmul.mubr.f32.gmra.mrb[0].mxu0 %v587
      %v1167 = vpop.f32.mrb[0].mxu0
      %v1168 = vadd.f32 %v574, %v1167
      %v1169 = vpop.f32.mrb[0].mxu0
      %1170 = vdwg.mxu0
      %v1171 = vmax.f32 %v1153, 0.0
      %v1172 = vmax.f32 %v1158, 0.0
      %v1173 = vmax.f32 %v1163, 0.0
      %v1174 = vmax.f32 %v1168, 0.0
      %1175 = vmatprep.subr.mxu0 0.0
      %1176 = vmatpush1.msra.mxu0 %v1171
      %1177 = vmatprep.subr.mxu0 0.0
      %1178 = vmatpush1.msra.mxu0 %v1172
      %1179 = vmatprep.subr.mxu0 0.0
      %1180 = vmatpush1.msra.mxu0 %v1173
      %1181 = vmatprep.subr.mxu0 0.0
      %1182 = vmatpush1.msra.mxu0 %v1174
      %1183 = vmatprep.subr.mxu0 0.0
      %1184 = vmatpush1.msra.mxu0 0.0
      %1185 = vmatprep.subr.mxu0 0.0
      %1186 = vmatpush1.msra.mxu0 0.0
      %1187 = vmatprep.subr.mxu0 0.0
      %1188 = vmatpush1.msra.mxu0 0.0
      %1189 = vmatprep.subr.mxu0 0.0
      %1190 = vmatpush1.msra.mxu0 0.0
      %1191 = vmatprep.subr.mxu0 0.0
      %1192 = vmatpush1.msra.mxu0 0.0
      %1193 = vmatprep.subr.mxu0 0.0
      %1194 = vmatpush1.msra.mxu0 0.0
      %1195 = vmatprep.subr.mxu0 0.0
      %1196 = vmatpush1.msra.mxu0 0.0
      %1197 = vmatprep.subr.mxu0 0.0
      %1198 = vmatpush1.msra.mxu0 0.0
      %1199 = vmatprep.subr.mxu0 0.0
      %1200 = vmatpush1.msra.mxu0 0.0
      %1201 = vmatprep.subr.mxu0 0.0
      %1202 = vmatpush1.msra.mxu0 0.0
      %1203 = vmatprep.subr.mxu0 0.0
      %1204 = vmatpush1.msra.mxu0 0.0
      %1205 = vmatprep.subr.mxu0 0.0
      %1206 = vmatpush1.msra.mxu0 0.0
      %1207 = vmatprep.subr.mxu0 0.0
      %1208 = vmatpush1.msra.mxu0 0.0
      %1209 = vmatprep.subr.mxu0 0.0
      %1210 = vmatpush1.msra.mxu0 0.0
      %1211 = vmatprep.subr.mxu0 0.0
      %1212 = vmatpush1.msra.mxu0 0.0
      %1213 = vmatprep.subr.mxu0 0.0
      %1214 = vmatpush1.msra.mxu0 0.0
      %1215 = vmatprep.subr.mxu0 0.0
      %1216 = vmatpush1.msra.mxu0 0.0
      %1217 = vmatprep.subr.mxu0 0.0
      %1218 = vmatpush1.msra.mxu0 0.0
      %1219 = vmatprep.subr.mxu0 0.0
      %1220 = vmatpush1.msra.mxu0 0.0
      %1221 = vmatprep.subr.mxu0 0.0
      %1222 = vmatpush1.msra.mxu0 0.0
      %1223 = vmatprep.subr.mxu0 0.0
      %1224 = vmatpush1.msra.mxu0 0.0
      %1225 = vmatprep.subr.mxu0 0.0
      %1226 = vmatpush1.msra.mxu0 0.0
      %1227 = vmatprep.subr.mxu0 0.0
      %1228 = vmatpush1.msra.mxu0 0.0
      %1229 = vmatprep.subr.mxu0 0.0
      %1230 = vmatpush1.msra.mxu0 0.0
      %1231 = vmatprep.subr.mxu0 0.0
      %1232 = vmatpush1.msra.mxu0 0.0
      %1233 = vmatprep.subr.mxu0 0.0
      %1234 = vmatpush1.msra.mxu0 0.0
      %1235 = vmatprep.subr.mxu0 0.0
      %1236 = vmatpush1.msra.mxu0 0.0
      %1237 = vmatprep.subr.mxu0 0.0
      %1238 = vmatpush1.msra.mxu0 0.0
      %1239 = vmatprep.mubr.f32.mxu0 0.0
      %1240 = vmatmul.mubr.f32.gmra.mrb[0].mxu0 %v736
      %v1241 = vpop.f32.mrb[0].mxu0
      %v1242 = vadd.f32 %v697, %v1241
      %v1243 = vpop.f32.mrb[0].mxu0
      %1244 = vmatprep.mubr.f32.mxu0 0.0
      %1245 = vmatmul.mubr.f32.gmra.mrb[0].mxu0 %v739
      %v1246 = vpop.f32.mrb[0].mxu0
      %v1247 = vadd.f32 %v702, %v1246
      %v1248 = vpop.f32.mrb[0].mxu0
      %1249 = vmatprep.mubr.f32.mxu0 0.0
      %1250 = vmatmul.mubr.f32.gmra.mrb[0].mxu0 %v742
      %v1251 = vpop.f32.mrb[0].mxu0
      %v1252 = vadd.f32 %v707, %v1251
      %v1253 = vpop.f32.mrb[0].mxu0
      %1254 = vmatprep.mubr.f32.mxu0 0.0
      %1255 = vmatmul.mubr.f32.gmra.mrb[0].mxu0 %v745
      %v1256 = vpop.f32.mrb[0].mxu0
      %v1257 = vadd.f32 %v712, %v1256
      %v1258 = vpop.f32.mrb[0].mxu0
      %1259 = vmatprep.mubr.f32.mxu0 0.0
      %1260 = vmatmul.mubr.f32.gmra.mrb[0].mxu0 %v748
      %v1261 = vpop.f32.mrb[0].mxu0
      %v1262 = vadd.f32 %v717, %v1261
      %v1263 = vpop.f32.mrb[0].mxu0
      %1264 = vmatprep.mubr.f32.mxu0 0.0
      %1265 = vmatmul.mubr.f32.gmra.mrb[0].mxu0 %v751
      %v1266 = vpop.f32.mrb[0].mxu0
      %v1267 = vadd.f32 %v722, %v1266
      %v1268 = vpop.f32.mrb[0].mxu0
      %1269 = vmatprep.mubr.f32.mxu0 0.0
      %1270 = vmatmul.mubr.f32.gmra.mrb[0].mxu0 %v754
      %v1271 = vpop.f32.mrb[0].mxu0
      %v1272 = vadd.f32 %v727, %v1271
      %v1273 = vpop.f32.mrb[0].mxu0
      %1274 = vmatprep.mubr.f32.mxu0 0.0
      %1275 = vmatmul.mubr.f32.gmra.mrb[0].mxu0 %v757
      %v1276 = vpop.f32.mrb[0].mxu0
      %v1277 = vadd.f32 %v732, %v1276
      %v1278 = vpop.f32.mrb[0].mxu0
      %1279 = vdwg.mxu0
      %v1280 = vmax.f32 %v1242, 0.0
      %v1281 = vmax.f32 %v1247, 0.0
      %v1282 = vmax.f32 %v1252, 0.0
      %v1283 = vmax.f32 %v1257, 0.0
      %v1284 = vmax.f32 %v1262, 0.0
      %v1285 = vmax.f32 %v1267, 0.0
      %v1286 = vmax.f32 %v1272, 0.0
      %v1287 = vmax.f32 %v1277, 0.0
      %v1288 = vmax.f32 %v1076, %v1280
      %v1289 = vmax.f32 %v1077, %v1281
      %v1290 = vmax.f32 %v1078, %v1282
      %v1291 = vmax.f32 %v1079, %v1283
      %v1292 = vmax.f32 %v1080, %v1284
      %v1293 = vmax.f32 %v1081, %v1285
      %v1294 = vmax.f32 %v1082, %v1286
      %v1295 = vmax.f32 %v1083, %v1287
      %s1296 = scalar_lea.vmem %s526, 24
      %v1297 = vld [vmem:[%s1296] sm:$0xff]
      %1298 = vmatprep.subr.mxu0 0.0
      %1299 = vmatpush1.msra.mxu0 %v1297
      %1300 = vmatprep.subr.mxu0 0.0
      %1301 = vmatpush1.msra.mxu0 0.0
      %1302 = vmatprep.subr.mxu0 0.0
      %1303 = vmatpush1.msra.mxu0 0.0
      %1304 = vmatprep.subr.mxu0 0.0
      %1305 = vmatpush1.msra.mxu0 0.0
      %1306 = vmatprep.subr.mxu0 0.0
      %1307 = vmatpush1.msra.mxu0 0.0
      %1308 = vmatprep.subr.mxu0 0.0
      %1309 = vmatpush1.msra.mxu0 0.0
      %1310 = vmatprep.subr.mxu0 0.0
      %1311 = vmatpush1.msra.mxu0 0.0
      %1312 = vmatprep.subr.mxu0 0.0
      %1313 = vmatpush1.msra.mxu0 0.0
      %1314 = vmatprep.subr.mxu0 0.0
      %1315 = vmatpush1.msra.mxu0 0.0
      %1316 = vmatprep.subr.mxu0 0.0
      %1317 = vmatpush1.msra.mxu0 0.0
      %1318 = vmatprep.subr.mxu0 0.0
      %1319 = vmatpush1.msra.mxu0 0.0
      %1320 = vmatprep.subr.mxu0 0.0
      %1321 = vmatpush1.msra.mxu0 0.0
      %1322 = vmatprep.subr.mxu0 0.0
      %1323 = vmatpush1.msra.mxu0 0.0
      %1324 = vmatprep.subr.mxu0 0.0
      %1325 = vmatpush1.msra.mxu0 0.0
      %1326 = vmatprep.subr.mxu0 0.0
      %1327 = vmatpush1.msra.mxu0 0.0
      %1328 = vmatprep.subr.mxu0 0.0
      %1329 = vmatpush1.msra.mxu0 0.0
      %1330 = vmatprep.subr.mxu0 0.0
      %1331 = vmatpush1.msra.mxu0 0.0
      %1332 = vmatprep.subr.mxu0 0.0
      %1333 = vmatpush1.msra.mxu0 0.0
      %1334 = vmatprep.subr.mxu0 0.0
      %1335 = vmatpush1.msra.mxu0 0.0
      %1336 = vmatprep.subr.mxu0 0.0
      %1337 = vmatpush1.msra.mxu0 0.0
      %1338 = vmatprep.subr.mxu0 0.0
      %1339 = vmatpush1.msra.mxu0 0.0
      %1340 = vmatprep.subr.mxu0 0.0
      %1341 = vmatpush1.msra.mxu0 0.0
      %1342 = vmatprep.subr.mxu0 0.0
      %1343 = vmatpush1.msra.mxu0 0.0
      %1344 = vmatprep.subr.mxu0 0.0
      %1345 = vmatpush1.msra.mxu0 0.0
      %1346 = vmatprep.subr.mxu0 0.0
      %1347 = vmatpush1.msra.mxu0 0.0
      %1348 = vmatprep.subr.mxu0 0.0
      %1349 = vmatpush1.msra.mxu0 0.0
      %1350 = vmatprep.subr.mxu0 0.0
      %1351 = vmatpush1.msra.mxu0 0.0
      %1352 = vmatprep.subr.mxu0 0.0
      %1353 = vmatpush1.msra.mxu0 0.0
      %1354 = vmatprep.subr.mxu0 0.0
      %1355 = vmatpush1.msra.mxu0 0.0
      %1356 = vmatprep.subr.mxu0 0.0
      %1357 = vmatpush1.msra.mxu0 0.0
      %1358 = vmatprep.subr.mxu0 0.0
      %1359 = vmatpush1.msra.mxu0 0.0
      %1360 = vmatprep.subr.mxu0 0.0
      %1361 = vmatpush1.msra.mxu0 0.0
      %1362 = vmatprep.mubr.f32.mxu0 0.0
      %1363 = vmatmul.mubr.f32.gmra.mrb[0].mxu0 %v578
      %v1364 = vpop.f32.mrb[0].mxu0
      %v1365 = vadd.f32 %v559, %v1364
      %v1366 = vpop.f32.mrb[0].mxu0
      %1367 = vmatprep.mubr.f32.mxu0 0.0
      %1368 = vmatmul.mubr.f32.gmra.mrb[0].mxu0 %v581
      %v1369 = vpop.f32.mrb[0].mxu0
      %v1370 = vadd.f32 %v564, %v1369
      %v1371 = vpop.f32.mrb[0].mxu0
      %1372 = vmatprep.mubr.f32.mxu0 0.0
      %1373 = vmatmul.mubr.f32.gmra.mrb[0].mxu0 %v584
      %v1374 = vpop.f32.mrb[0].mxu0
      %v1375 = vadd.f32 %v569, %v1374
      %v1376 = vpop.f32.mrb[0].mxu0
      %1377 = vmatprep.mubr.f32.mxu0 0.0
      %1378 = vmatmul.mubr.f32.gmra.mrb[0].mxu0 %v587
      %v1379 = vpop.f32.mrb[0].mxu0
      %v1380 = vadd.f32 %v574, %v1379
      %v1381 = vpop.f32.mrb[0].mxu0
      %1382 = vdwg.mxu0
      %v1383 = vmax.f32 %v1365, 0.0
      %v1384 = vmax.f32 %v1370, 0.0
      %v1385 = vmax.f32 %v1375, 0.0
      %v1386 = vmax.f32 %v1380, 0.0
      %1387 = vmatprep.subr.mxu0 0.0
      %1388 = vmatpush1.msra.mxu0 %v1383
      %1389 = vmatprep.subr.mxu0 0.0
      %1390 = vmatpush1.msra.mxu0 %v1384
      %1391 = vmatprep.subr.mxu0 0.0
      %1392 = vmatpush1.msra.mxu0 %v1385
      %1393 = vmatprep.subr.mxu0 0.0
      %1394 = vmatpush1.msra.mxu0 %v1386
      %1395 = vmatprep.subr.mxu0 0.0
      %1396 = vmatpush1.msra.mxu0 0.0
      %1397 = vmatprep.subr.mxu0 0.0
      %1398 = vmatpush1.msra.mxu0 0.0
      %1399 = vmatprep.subr.mxu0 0.0
      %1400 = vmatpush1.msra.mxu0 0.0
      %1401 = vmatprep.subr.mxu0 0.0
      %1402 = vmatpush1.msra.mxu0 0.0
      %1403 = vmatprep.subr.mxu0 0.0
      %1404 = vmatpush1.msra.mxu0 0.0
      %1405 = vmatprep.subr.mxu0 0.0
      %1406 = vmatpush1.msra.mxu0 0.0
      %1407 = vmatprep.subr.mxu0 0.0
      %1408 = vmatpush1.msra.mxu0 0.0
      %1409 = vmatprep.subr.mxu0 0.0
      %1410 = vmatpush1.msra.mxu0 0.0
      %1411 = vmatprep.subr.mxu0 0.0
      %1412 = vmatpush1.msra.mxu0 0.0
      %1413 = vmatprep.subr.mxu0 0.0
      %1414 = vmatpush1.msra.mxu0 0.0
      %1415 = vmatprep.subr.mxu0 0.0
      %1416 = vmatpush1.msra.mxu0 0.0
      %1417 = vmatprep.subr.mxu0 0.0
      %1418 = vmatpush1.msra.mxu0 0.0
      %1419 = vmatprep.subr.mxu0 0.0
      %1420 = vmatpush1.msra.mxu0 0.0
      %1421 = vmatprep.subr.mxu0 0.0
      %1422 = vmatpush1.msra.mxu0 0.0
      %1423 = vmatprep.subr.mxu0 0.0
      %1424 = vmatpush1.msra.mxu0 0.0
      %1425 = vmatprep.subr.mxu0 0.0
      %1426 = vmatpush1.msra.mxu0 0.0
      %1427 = vmatprep.subr.mxu0 0.0
      %1428 = vmatpush1.msra.mxu0 0.0
      %1429 = vmatprep.subr.mxu0 0.0
      %1430 = vmatpush1.msra.mxu0 0.0
      %1431 = vmatprep.subr.mxu0 0.0
      %1432 = vmatpush1.msra.mxu0 0.0
      %1433 = vmatprep.subr.mxu0 0.0
      %1434 = vmatpush1.msra.mxu0 0.0
      %1435 = vmatprep.subr.mxu0 0.0
      %1436 = vmatpush1.msra.mxu0 0.0
      %1437 = vmatprep.subr.mxu0 0.0
      %1438 = vmatpush1.msra.mxu0 0.0
      %1439 = vmatprep.subr.mxu0 0.0
      %1440 = vmatpush1.msra.mxu0 0.0
      %1441 = vmatprep.subr.mxu0 0.0
      %1442 = vmatpush1.msra.mxu0 0.0
      %1443 = vmatprep.subr.mxu0 0.0
      %1444 = vmatpush1.msra.mxu0 0.0
      %1445 = vmatprep.subr.mxu0 0.0
      %1446 = vmatpush1.msra.mxu0 0.0
      %1447 = vmatprep.subr.mxu0 0.0
      %1448 = vmatpush1.msra.mxu0 0.0
      %1449 = vmatprep.subr.mxu0 0.0
      %1450 = vmatpush1.msra.mxu0 0.0
      %1451 = vmatprep.mubr.f32.mxu0 0.0
      %1452 = vmatmul.mubr.f32.gmra.mrb[0].mxu0 %v736
      %v1453 = vpop.f32.mrb[0].mxu0
      %v1454 = vadd.f32 %v697, %v1453
      %v1455 = vpop.f32.mrb[0].mxu0
      %1456 = vmatprep.mubr.f32.mxu0 0.0
      %1457 = vmatmul.mubr.f32.gmra.mrb[0].mxu0 %v739
      %v1458 = vpop.f32.mrb[0].mxu0
      %v1459 = vadd.f32 %v702, %v1458
      %v1460 = vpop.f32.mrb[0].mxu0
      %1461 = vmatprep.mubr.f32.mxu0 0.0
      %1462 = vmatmul.mubr.f32.gmra.mrb[0].mxu0 %v742
      %v1463 = vpop.f32.mrb[0].mxu0
      %v1464 = vadd.f32 %v707, %v1463
      %v1465 = vpop.f32.mrb[0].mxu0
      %1466 = vmatprep.mubr.f32.mxu0 0.0
      %1467 = vmatmul.mubr.f32.gmra.mrb[0].mxu0 %v745
      %v1468 = vpop.f32.mrb[0].mxu0
      %v1469 = vadd.f32 %v712, %v1468
      %v1470 = vpop.f32.mrb[0].mxu0
      %1471 = vmatprep.mubr.f32.mxu0 0.0
      %1472 = vmatmul.mubr.f32.gmra.mrb[0].mxu0 %v748
      %v1473 = vpop.f32.mrb[0].mxu0
      %v1474 = vadd.f32 %v717, %v1473
      %v1475 = vpop.f32.mrb[0].mxu0
      %1476 = vmatprep.mubr.f32.mxu0 0.0
      %1477 = vmatmul.mubr.f32.gmra.mrb[0].mxu0 %v751
      %v1478 = vpop.f32.mrb[0].mxu0
      %v1479 = vadd.f32 %v722, %v1478
      %v1480 = vpop.f32.mrb[0].mxu0
      %1481 = vmatprep.mubr.f32.mxu0 0.0
      %1482 = vmatmul.mubr.f32.gmra.mrb[0].mxu0 %v754
      %v1483 = vpop.f32.mrb[0].mxu0
      %v1484 = vadd.f32 %v727, %v1483
      %v1485 = vpop.f32.mrb[0].mxu0
      %1486 = vmatprep.mubr.f32.mxu0 0.0
      %1487 = vmatmul.mubr.f32.gmra.mrb[0].mxu0 %v757
      %v1488 = vpop.f32.mrb[0].mxu0
      %v1489 = vadd.f32 %v732, %v1488
      %v1490 = vpop.f32.mrb[0].mxu0
      %1491 = vdwg.mxu0
      %v1492 = vmax.f32 %v1454, 0.0
      %v1493 = vmax.f32 %v1459, 0.0
      %v1494 = vmax.f32 %v1464, 0.0
      %v1495 = vmax.f32 %v1469, 0.0
      %v1496 = vmax.f32 %v1474, 0.0
      %v1497 = vmax.f32 %v1479, 0.0
      %v1498 = vmax.f32 %v1484, 0.0
      %v1499 = vmax.f32 %v1489, 0.0
      %v1500 = vmax.f32 %v1288, %v1492
      %v1501 = vmax.f32 %v1289, %v1493
      %v1502 = vmax.f32 %v1290, %v1494
      %v1503 = vmax.f32 %v1291, %v1495
      %v1504 = vmax.f32 %v1292, %v1496
      %v1505 = vmax.f32 %v1293, %v1497
      %v1506 = vmax.f32 %v1294, %v1498
      %v1507 = vmax.f32 %v1295, %v1499
      %s1508 = scalar_lea.vmem %s526, 32
      %v1509 = vld [vmem:[%s1508] sm:$0xff]
      %1510 = vmatprep.subr.mxu0 0.0
      %1511 = vmatpush1.msra.mxu0 %v1509
      %1512 = vmatprep.subr.mxu0 0.0
      %1513 = vmatpush1.msra.mxu0 0.0
      %1514 = vmatprep.subr.mxu0 0.0
      %1515 = vmatpush1.msra.mxu0 0.0
      %1516 = vmatprep.subr.mxu0 0.0
      %1517 = vmatpush1.msra.mxu0 0.0
      %1518 = vmatprep.subr.mxu0 0.0
      %1519 = vmatpush1.msra.mxu0 0.0
      %1520 = vmatprep.subr.mxu0 0.0
      %1521 = vmatpush1.msra.mxu0 0.0
      %1522 = vmatprep.subr.mxu0 0.0
      %1523 = vmatpush1.msra.mxu0 0.0
      %1524 = vmatprep.subr.mxu0 0.0
      %1525 = vmatpush1.msra.mxu0 0.0
      %1526 = vmatprep.subr.mxu0 0.0
      %1527 = vmatpush1.msra.mxu0 0.0
      %1528 = vmatprep.subr.mxu0 0.0
      %1529 = vmatpush1.msra.mxu0 0.0
      %1530 = vmatprep.subr.mxu0 0.0
      %1531 = vmatpush1.msra.mxu0 0.0
      %1532 = vmatprep.subr.mxu0 0.0
      %1533 = vmatpush1.msra.mxu0 0.0
      %1534 = vmatprep.subr.mxu0 0.0
      %1535 = vmatpush1.msra.mxu0 0.0
      %1536 = vmatprep.subr.mxu0 0.0
      %1537 = vmatpush1.msra.mxu0 0.0
      %1538 = vmatprep.subr.mxu0 0.0
      %1539 = vmatpush1.msra.mxu0 0.0
      %1540 = vmatprep.subr.mxu0 0.0
      %1541 = vmatpush1.msra.mxu0 0.0
      %1542 = vmatprep.subr.mxu0 0.0
      %1543 = vmatpush1.msra.mxu0 0.0
      %1544 = vmatprep.subr.mxu0 0.0
      %1545 = vmatpush1.msra.mxu0 0.0
      %1546 = vmatprep.subr.mxu0 0.0
      %1547 = vmatpush1.msra.mxu0 0.0
      %1548 = vmatprep.subr.mxu0 0.0
      %1549 = vmatpush1.msra.mxu0 0.0
      %1550 = vmatprep.subr.mxu0 0.0
      %1551 = vmatpush1.msra.mxu0 0.0
      %1552 = vmatprep.subr.mxu0 0.0
      %1553 = vmatpush1.msra.mxu0 0.0
      %1554 = vmatprep.subr.mxu0 0.0
      %1555 = vmatpush1.msra.mxu0 0.0
      %1556 = vmatprep.subr.mxu0 0.0
      %1557 = vmatpush1.msra.mxu0 0.0
      %1558 = vmatprep.subr.mxu0 0.0
      %1559 = vmatpush1.msra.mxu0 0.0
      %1560 = vmatprep.subr.mxu0 0.0
      %1561 = vmatpush1.msra.mxu0 0.0
      %1562 = vmatprep.subr.mxu0 0.0
      %1563 = vmatpush1.msra.mxu0 0.0
      %1564 = vmatprep.subr.mxu0 0.0
      %1565 = vmatpush1.msra.mxu0 0.0
      %1566 = vmatprep.subr.mxu0 0.0
      %1567 = vmatpush1.msra.mxu0 0.0
      %1568 = vmatprep.subr.mxu0 0.0
      %1569 = vmatpush1.msra.mxu0 0.0
      %1570 = vmatprep.subr.mxu0 0.0
      %1571 = vmatpush1.msra.mxu0 0.0
      %1572 = vmatprep.subr.mxu0 0.0
      %1573 = vmatpush1.msra.mxu0 0.0
      %1574 = vmatprep.mubr.f32.mxu0 0.0
      %1575 = vmatmul.mubr.f32.gmra.mrb[0].mxu0 %v578
      %v1576 = vpop.f32.mrb[0].mxu0
      %v1577 = vadd.f32 %v559, %v1576
      %v1578 = vpop.f32.mrb[0].mxu0
      %1579 = vmatprep.mubr.f32.mxu0 0.0
      %1580 = vmatmul.mubr.f32.gmra.mrb[0].mxu0 %v581
      %v1581 = vpop.f32.mrb[0].mxu0
      %v1582 = vadd.f32 %v564, %v1581
      %v1583 = vpop.f32.mrb[0].mxu0
      %1584 = vmatprep.mubr.f32.mxu0 0.0
      %1585 = vmatmul.mubr.f32.gmra.mrb[0].mxu0 %v584
      %v1586 = vpop.f32.mrb[0].mxu0
      %v1587 = vadd.f32 %v569, %v1586
      %v1588 = vpop.f32.mrb[0].mxu0
      %1589 = vmatprep.mubr.f32.mxu0 0.0
      %1590 = vmatmul.mubr.f32.gmra.mrb[0].mxu0 %v587
      %v1591 = vpop.f32.mrb[0].mxu0
      %v1592 = vadd.f32 %v574, %v1591
      %v1593 = vpop.f32.mrb[0].mxu0
      %1594 = vdwg.mxu0
      %v1595 = vmax.f32 %v1577, 0.0
      %v1596 = vmax.f32 %v1582, 0.0
      %v1597 = vmax.f32 %v1587, 0.0
      %v1598 = vmax.f32 %v1592, 0.0
      %1599 = vmatprep.subr.mxu0 0.0
      %1600 = vmatpush1.msra.mxu0 %v1595
      %1601 = vmatprep.subr.mxu0 0.0
      %1602 = vmatpush1.msra.mxu0 %v1596
      %1603 = vmatprep.subr.mxu0 0.0
      %1604 = vmatpush1.msra.mxu0 %v1597
      %1605 = vmatprep.subr.mxu0 0.0
      %1606 = vmatpush1.msra.mxu0 %v1598
      %1607 = vmatprep.subr.mxu0 0.0
      %1608 = vmatpush1.msra.mxu0 0.0
      %1609 = vmatprep.subr.mxu0 0.0
      %1610 = vmatpush1.msra.mxu0 0.0
      %1611 = vmatprep.subr.mxu0 0.0
      %1612 = vmatpush1.msra.mxu0 0.0
      %1613 = vmatprep.subr.mxu0 0.0
      %1614 = vmatpush1.msra.mxu0 0.0
      %1615 = vmatprep.subr.mxu0 0.0
      %1616 = vmatpush1.msra.mxu0 0.0
      %1617 = vmatprep.subr.mxu0 0.0
      %1618 = vmatpush1.msra.mxu0 0.0
      %1619 = vmatprep.subr.mxu0 0.0
      %1620 = vmatpush1.msra.mxu0 0.0
      %1621 = vmatprep.subr.mxu0 0.0
      %1622 = vmatpush1.msra.mxu0 0.0
      %1623 = vmatprep.subr.mxu0 0.0
      %1624 = vmatpush1.msra.mxu0 0.0
      %1625 = vmatprep.subr.mxu0 0.0
      %1626 = vmatpush1.msra.mxu0 0.0
      %1627 = vmatprep.subr.mxu0 0.0
      %1628 = vmatpush1.msra.mxu0 0.0
      %1629 = vmatprep.subr.mxu0 0.0
      %1630 = vmatpush1.msra.mxu0 0.0
      %1631 = vmatprep.subr.mxu0 0.0
      %1632 = vmatpush1.msra.mxu0 0.0
      %1633 = vmatprep.subr.mxu0 0.0
      %1634 = vmatpush1.msra.mxu0 0.0
      %1635 = vmatprep.subr.mxu0 0.0
      %1636 = vmatpush1.msra.mxu0 0.0
      %1637 = vmatprep.subr.mxu0 0.0
      %1638 = vmatpush1.msra.mxu0 0.0
      %1639 = vmatprep.subr.mxu0 0.0
      %1640 = vmatpush1.msra.mxu0 0.0
      %1641 = vmatprep.subr.mxu0 0.0
      %1642 = vmatpush1.msra.mxu0 0.0
      %1643 = vmatprep.subr.mxu0 0.0
      %1644 = vmatpush1.msra.mxu0 0.0
      %1645 = vmatprep.subr.mxu0 0.0
      %1646 = vmatpush1.msra.mxu0 0.0
      %1647 = vmatprep.subr.mxu0 0.0
      %1648 = vmatpush1.msra.mxu0 0.0
      %1649 = vmatprep.subr.mxu0 0.0
      %1650 = vmatpush1.msra.mxu0 0.0
      %1651 = vmatprep.subr.mxu0 0.0
      %1652 = vmatpush1.msra.mxu0 0.0
      %1653 = vmatprep.subr.mxu0 0.0
      %1654 = vmatpush1.msra.mxu0 0.0
      %1655 = vmatprep.subr.mxu0 0.0
      %1656 = vmatpush1.msra.mxu0 0.0
      %1657 = vmatprep.subr.mxu0 0.0
      %1658 = vmatpush1.msra.mxu0 0.0
      %1659 = vmatprep.subr.mxu0 0.0
      %1660 = vmatpush1.msra.mxu0 0.0
      %1661 = vmatprep.subr.mxu0 0.0
      %1662 = vmatpush1.msra.mxu0 0.0
      %1663 = vmatprep.mubr.f32.mxu0 0.0
      %1664 = vmatmul.mubr.f32.gmra.mrb[0].mxu0 %v736
      %v1665 = vpop.f32.mrb[0].mxu0
      %v1666 = vadd.f32 %v697, %v1665
      %v1667 = vpop.f32.mrb[0].mxu0
      %1668 = vmatprep.mubr.f32.mxu0 0.0
      %1669 = vmatmul.mubr.f32.gmra.mrb[0].mxu0 %v739
      %v1670 = vpop.f32.mrb[0].mxu0
      %v1671 = vadd.f32 %v702, %v1670
      %v1672 = vpop.f32.mrb[0].mxu0
      %1673 = vmatprep.mubr.f32.mxu0 0.0
      %1674 = vmatmul.mubr.f32.gmra.mrb[0].mxu0 %v742
      %v1675 = vpop.f32.mrb[0].mxu0
      %v1676 = vadd.f32 %v707, %v1675
      %v1677 = vpop.f32.mrb[0].mxu0
      %1678 = vmatprep.mubr.f32.mxu0 0.0
      %1679 = vmatmul.mubr.f32.gmra.mrb[0].mxu0 %v745
      %v1680 = vpop.f32.mrb[0].mxu0
      %v1681 = vadd.f32 %v712, %v1680
      %v1682 = vpop.f32.mrb[0].mxu0
      %1683 = vmatprep.mubr.f32.mxu0 0.0
      %1684 = vmatmul.mubr.f32.gmra.mrb[0].mxu0 %v748
      %v1685 = vpop.f32.mrb[0].mxu0
      %v1686 = vadd.f32 %v717, %v1685
      %v1687 = vpop.f32.mrb[0].mxu0
      %1688 = vmatprep.mubr.f32.mxu0 0.0
      %1689 = vmatmul.mubr.f32.gmra.mrb[0].mxu0 %v751
      %v1690 = vpop.f32.mrb[0].mxu0
      %v1691 = vadd.f32 %v722, %v1690
      %v1692 = vpop.f32.mrb[0].mxu0
      %1693 = vmatprep.mubr.f32.mxu0 0.0
      %1694 = vmatmul.mubr.f32.gmra.mrb[0].mxu0 %v754
      %v1695 = vpop.f32.mrb[0].mxu0
      %v1696 = vadd.f32 %v727, %v1695
      %v1697 = vpop.f32.mrb[0].mxu0
      %1698 = vmatprep.mubr.f32.mxu0 0.0
      %1699 = vmatmul.mubr.f32.gmra.mrb[0].mxu0 %v757
      %v1700 = vpop.f32.mrb[0].mxu0
      %v1701 = vadd.f32 %v732, %v1700
      %v1702 = vpop.f32.mrb[0].mxu0
      %1703 = vdwg.mxu0
      %v1704 = vmax.f32 %v1666, 0.0
      %v1705 = vmax.f32 %v1671, 0.0
      %v1706 = vmax.f32 %v1676, 0.0
      %v1707 = vmax.f32 %v1681, 0.0
      %v1708 = vmax.f32 %v1686, 0.0
      %v1709 = vmax.f32 %v1691, 0.0
      %v1710 = vmax.f32 %v1696, 0.0
      %v1711 = vmax.f32 %v1701, 0.0
      %v1712 = vmax.f32 %v1500, %v1704
      %v1713 = vmax.f32 %v1501, %v1705
      %v1714 = vmax.f32 %v1502, %v1706
      %v1715 = vmax.f32 %v1503, %v1707
      %v1716 = vmax.f32 %v1504, %v1708
      %v1717 = vmax.f32 %v1505, %v1709
      %v1718 = vmax.f32 %v1506, %v1710
      %v1719 = vmax.f32 %v1507, %v1711
      %s1720 = scalar_lea.vmem %s526, 40
      %v1721 = vld [vmem:[%s1720] sm:$0xff]
      %1722 = vmatprep.subr.mxu0 0.0
      %1723 = vmatpush1.msra.mxu0 %v1721
      %1724 = vmatprep.subr.mxu0 0.0
      %1725 = vmatpush1.msra.mxu0 0.0
      %1726 = vmatprep.subr.mxu0 0.0
      %1727 = vmatpush1.msra.mxu0 0.0
      %1728 = vmatprep.subr.mxu0 0.0
      %1729 = vmatpush1.msra.mxu0 0.0
      %1730 = vmatprep.subr.mxu0 0.0
      %1731 = vmatpush1.msra.mxu0 0.0
      %1732 = vmatprep.subr.mxu0 0.0
      %1733 = vmatpush1.msra.mxu0 0.0
      %1734 = vmatprep.subr.mxu0 0.0
      %1735 = vmatpush1.msra.mxu0 0.0
      %1736 = vmatprep.subr.mxu0 0.0
      %1737 = vmatpush1.msra.mxu0 0.0
      %1738 = vmatprep.subr.mxu0 0.0
      %1739 = vmatpush1.msra.mxu0 0.0
      %1740 = vmatprep.subr.mxu0 0.0
      %1741 = vmatpush1.msra.mxu0 0.0
      %1742 = vmatprep.subr.mxu0 0.0
      %1743 = vmatpush1.msra.mxu0 0.0
      %1744 = vmatprep.subr.mxu0 0.0
      %1745 = vmatpush1.msra.mxu0 0.0
      %1746 = vmatprep.subr.mxu0 0.0
      %1747 = vmatpush1.msra.mxu0 0.0
      %1748 = vmatprep.subr.mxu0 0.0
      %1749 = vmatpush1.msra.mxu0 0.0
      %1750 = vmatprep.subr.mxu0 0.0
      %1751 = vmatpush1.msra.mxu0 0.0
      %1752 = vmatprep.subr.mxu0 0.0
      %1753 = vmatpush1.msra.mxu0 0.0
      %1754 = vmatprep.subr.mxu0 0.0
      %1755 = vmatpush1.msra.mxu0 0.0
      %1756 = vmatprep.subr.mxu0 0.0
      %1757 = vmatpush1.msra.mxu0 0.0
      %1758 = vmatprep.subr.mxu0 0.0
      %1759 = vmatpush1.msra.mxu0 0.0
      %1760 = vmatprep.subr.mxu0 0.0
      %1761 = vmatpush1.msra.mxu0 0.0
      %1762 = vmatprep.subr.mxu0 0.0
      %1763 = vmatpush1.msra.mxu0 0.0
      %1764 = vmatprep.subr.mxu0 0.0
      %1765 = vmatpush1.msra.mxu0 0.0
      %1766 = vmatprep.subr.mxu0 0.0
      %1767 = vmatpush1.msra.mxu0 0.0
      %1768 = vmatprep.subr.mxu0 0.0
      %1769 = vmatpush1.msra.mxu0 0.0
      %1770 = vmatprep.subr.mxu0 0.0
      %1771 = vmatpush1.msra.mxu0 0.0
      %1772 = vmatprep.subr.mxu0 0.0
      %1773 = vmatpush1.msra.mxu0 0.0
      %1774 = vmatprep.subr.mxu0 0.0
      %1775 = vmatpush1.msra.mxu0 0.0
      %1776 = vmatprep.subr.mxu0 0.0
      %1777 = vmatpush1.msra.mxu0 0.0
      %1778 = vmatprep.subr.mxu0 0.0
      %1779 = vmatpush1.msra.mxu0 0.0
      %1780 = vmatprep.subr.mxu0 0.0
      %1781 = vmatpush1.msra.mxu0 0.0
      %1782 = vmatprep.subr.mxu0 0.0
      %1783 = vmatpush1.msra.mxu0 0.0
      %1784 = vmatprep.subr.mxu0 0.0
      %1785 = vmatpush1.msra.mxu0 0.0
      %1786 = vmatprep.mubr.f32.mxu0 0.0
      %1787 = vmatmul.mubr.f32.gmra.mrb[0].mxu0 %v578
      %v1788 = vpop.f32.mrb[0].mxu0
      %v1789 = vadd.f32 %v559, %v1788
      %v1790 = vpop.f32.mrb[0].mxu0
      %1791 = vmatprep.mubr.f32.mxu0 0.0
      %1792 = vmatmul.mubr.f32.gmra.mrb[0].mxu0 %v581
      %v1793 = vpop.f32.mrb[0].mxu0
      %v1794 = vadd.f32 %v564, %v1793
      %v1795 = vpop.f32.mrb[0].mxu0
      %1796 = vmatprep.mubr.f32.mxu0 0.0
      %1797 = vmatmul.mubr.f32.gmra.mrb[0].mxu0 %v584
      %v1798 = vpop.f32.mrb[0].mxu0
      %v1799 = vadd.f32 %v569, %v1798
      %v1800 = vpop.f32.mrb[0].mxu0
      %1801 = vmatprep.mubr.f32.mxu0 0.0
      %1802 = vmatmul.mubr.f32.gmra.mrb[0].mxu0 %v587
      %v1803 = vpop.f32.mrb[0].mxu0
      %v1804 = vadd.f32 %v574, %v1803
      %v1805 = vpop.f32.mrb[0].mxu0
      %1806 = vdwg.mxu0
      %v1807 = vmax.f32 %v1789, 0.0
      %v1808 = vmax.f32 %v1794, 0.0
      %v1809 = vmax.f32 %v1799, 0.0
      %v1810 = vmax.f32 %v1804, 0.0
      %1811 = vmatprep.subr.mxu0 0.0
      %1812 = vmatpush1.msra.mxu0 %v1807
      %1813 = vmatprep.subr.mxu0 0.0
      %1814 = vmatpush1.msra.mxu0 %v1808
      %1815 = vmatprep.subr.mxu0 0.0
      %1816 = vmatpush1.msra.mxu0 %v1809
      %1817 = vmatprep.subr.mxu0 0.0
      %1818 = vmatpush1.msra.mxu0 %v1810
      %1819 = vmatprep.subr.mxu0 0.0
      %1820 = vmatpush1.msra.mxu0 0.0
      %1821 = vmatprep.subr.mxu0 0.0
      %1822 = vmatpush1.msra.mxu0 0.0
      %1823 = vmatprep.subr.mxu0 0.0
      %1824 = vmatpush1.msra.mxu0 0.0
      %1825 = vmatprep.subr.mxu0 0.0
      %1826 = vmatpush1.msra.mxu0 0.0
      %1827 = vmatprep.subr.mxu0 0.0
      %1828 = vmatpush1.msra.mxu0 0.0
      %1829 = vmatprep.subr.mxu0 0.0
      %1830 = vmatpush1.msra.mxu0 0.0
      %1831 = vmatprep.subr.mxu0 0.0
      %1832 = vmatpush1.msra.mxu0 0.0
      %1833 = vmatprep.subr.mxu0 0.0
      %1834 = vmatpush1.msra.mxu0 0.0
      %1835 = vmatprep.subr.mxu0 0.0
      %1836 = vmatpush1.msra.mxu0 0.0
      %1837 = vmatprep.subr.mxu0 0.0
      %1838 = vmatpush1.msra.mxu0 0.0
      %1839 = vmatprep.subr.mxu0 0.0
      %1840 = vmatpush1.msra.mxu0 0.0
      %1841 = vmatprep.subr.mxu0 0.0
      %1842 = vmatpush1.msra.mxu0 0.0
      %1843 = vmatprep.subr.mxu0 0.0
      %1844 = vmatpush1.msra.mxu0 0.0
      %1845 = vmatprep.subr.mxu0 0.0
      %1846 = vmatpush1.msra.mxu0 0.0
      %1847 = vmatprep.subr.mxu0 0.0
      %1848 = vmatpush1.msra.mxu0 0.0
      %1849 = vmatprep.subr.mxu0 0.0
      %1850 = vmatpush1.msra.mxu0 0.0
      %1851 = vmatprep.subr.mxu0 0.0
      %1852 = vmatpush1.msra.mxu0 0.0
      %1853 = vmatprep.subr.mxu0 0.0
      %1854 = vmatpush1.msra.mxu0 0.0
      %1855 = vmatprep.subr.mxu0 0.0
      %1856 = vmatpush1.msra.mxu0 0.0
      %1857 = vmatprep.subr.mxu0 0.0
      %1858 = vmatpush1.msra.mxu0 0.0
      %1859 = vmatprep.subr.mxu0 0.0
      %1860 = vmatpush1.msra.mxu0 0.0
      %1861 = vmatprep.subr.mxu0 0.0
      %1862 = vmatpush1.msra.mxu0 0.0
      %1863 = vmatprep.subr.mxu0 0.0
      %1864 = vmatpush1.msra.mxu0 0.0
      %1865 = vmatprep.subr.mxu0 0.0
      %1866 = vmatpush1.msra.mxu0 0.0
      %1867 = vmatprep.subr.mxu0 0.0
      %1868 = vmatpush1.msra.mxu0 0.0
      %1869 = vmatprep.subr.mxu0 0.0
      %1870 = vmatpush1.msra.mxu0 0.0
      %1871 = vmatprep.subr.mxu0 0.0
      %1872 = vmatpush1.msra.mxu0 0.0
      %1873 = vmatprep.subr.mxu0 0.0
      %1874 = vmatpush1.msra.mxu0 0.0
      %1875 = vmatprep.mubr.f32.mxu0 0.0
      %1876 = vmatmul.mubr.f32.gmra.mrb[0].mxu0 %v736
      %v1877 = vpop.f32.mrb[0].mxu0
      %v1878 = vadd.f32 %v697, %v1877
      %v1879 = vpop.f32.mrb[0].mxu0
      %1880 = vmatprep.mubr.f32.mxu0 0.0
      %1881 = vmatmul.mubr.f32.gmra.mrb[0].mxu0 %v739
      %v1882 = vpop.f32.mrb[0].mxu0
      %v1883 = vadd.f32 %v702, %v1882
      %v1884 = vpop.f32.mrb[0].mxu0
      %1885 = vmatprep.mubr.f32.mxu0 0.0
      %1886 = vmatmul.mubr.f32.gmra.mrb[0].mxu0 %v742
      %v1887 = vpop.f32.mrb[0].mxu0
      %v1888 = vadd.f32 %v707, %v1887
      %v1889 = vpop.f32.mrb[0].mxu0
      %1890 = vmatprep.mubr.f32.mxu0 0.0
      %1891 = vmatmul.mubr.f32.gmra.mrb[0].mxu0 %v745
      %v1892 = vpop.f32.mrb[0].mxu0
      %v1893 = vadd.f32 %v712, %v1892
      %v1894 = vpop.f32.mrb[0].mxu0
      %1895 = vmatprep.mubr.f32.mxu0 0.0
      %1896 = vmatmul.mubr.f32.gmra.mrb[0].mxu0 %v748
      %v1897 = vpop.f32.mrb[0].mxu0
      %v1898 = vadd.f32 %v717, %v1897
      %v1899 = vpop.f32.mrb[0].mxu0
      %1900 = vmatprep.mubr.f32.mxu0 0.0
      %1901 = vmatmul.mubr.f32.gmra.mrb[0].mxu0 %v751
      %v1902 = vpop.f32.mrb[0].mxu0
      %v1903 = vadd.f32 %v722, %v1902
      %v1904 = vpop.f32.mrb[0].mxu0
      %1905 = vmatprep.mubr.f32.mxu0 0.0
      %1906 = vmatmul.mubr.f32.gmra.mrb[0].mxu0 %v754
      %v1907 = vpop.f32.mrb[0].mxu0
      %v1908 = vadd.f32 %v727, %v1907
      %v1909 = vpop.f32.mrb[0].mxu0
      %1910 = vmatprep.mubr.f32.mxu0 0.0
      %1911 = vmatmul.mubr.f32.gmra.mrb[0].mxu0 %v757
      %v1912 = vpop.f32.mrb[0].mxu0
      %v1913 = vadd.f32 %v732, %v1912
      %v1914 = vpop.f32.mrb[0].mxu0
      %1915 = vdwg.mxu0
      %v1916 = vmax.f32 %v1878, 0.0
      %v1917 = vmax.f32 %v1883, 0.0
      %v1918 = vmax.f32 %v1888, 0.0
      %v1919 = vmax.f32 %v1893, 0.0
      %v1920 = vmax.f32 %v1898, 0.0
      %v1921 = vmax.f32 %v1903, 0.0
      %v1922 = vmax.f32 %v1908, 0.0
      %v1923 = vmax.f32 %v1913, 0.0
      %v1924 = vmax.f32 %v1712, %v1916
      %v1925 = vmax.f32 %v1713, %v1917
      %v1926 = vmax.f32 %v1714, %v1918
      %v1927 = vmax.f32 %v1715, %v1919
      %v1928 = vmax.f32 %v1716, %v1920
      %v1929 = vmax.f32 %v1717, %v1921
      %v1930 = vmax.f32 %v1718, %v1922
      %v1931 = vmax.f32 %v1719, %v1923
      %s1932 = scalar_lea.vmem %s526, 48
      %v1933 = vld [vmem:[%s1932] sm:$0xff]
      %1934 = vmatprep.subr.mxu0 0.0
      %1935 = vmatpush1.msra.mxu0 %v1933
      %1936 = vmatprep.subr.mxu0 0.0
      %1937 = vmatpush1.msra.mxu0 0.0
      %1938 = vmatprep.subr.mxu0 0.0
      %1939 = vmatpush1.msra.mxu0 0.0
      %1940 = vmatprep.subr.mxu0 0.0
      %1941 = vmatpush1.msra.mxu0 0.0
      %1942 = vmatprep.subr.mxu0 0.0
      %1943 = vmatpush1.msra.mxu0 0.0
      %1944 = vmatprep.subr.mxu0 0.0
      %1945 = vmatpush1.msra.mxu0 0.0
      %1946 = vmatprep.subr.mxu0 0.0
      %1947 = vmatpush1.msra.mxu0 0.0
      %1948 = vmatprep.subr.mxu0 0.0
      %1949 = vmatpush1.msra.mxu0 0.0
      %1950 = vmatprep.subr.mxu0 0.0
      %1951 = vmatpush1.msra.mxu0 0.0
      %1952 = vmatprep.subr.mxu0 0.0
      %1953 = vmatpush1.msra.mxu0 0.0
      %1954 = vmatprep.subr.mxu0 0.0
      %1955 = vmatpush1.msra.mxu0 0.0
      %1956 = vmatprep.subr.mxu0 0.0
      %1957 = vmatpush1.msra.mxu0 0.0
      %1958 = vmatprep.subr.mxu0 0.0
      %1959 = vmatpush1.msra.mxu0 0.0
      %1960 = vmatprep.subr.mxu0 0.0
      %1961 = vmatpush1.msra.mxu0 0.0
      %1962 = vmatprep.subr.mxu0 0.0
      %1963 = vmatpush1.msra.mxu0 0.0
      %1964 = vmatprep.subr.mxu0 0.0
      %1965 = vmatpush1.msra.mxu0 0.0
      %1966 = vmatprep.subr.mxu0 0.0
      %1967 = vmatpush1.msra.mxu0 0.0
      %1968 = vmatprep.subr.mxu0 0.0
      %1969 = vmatpush1.msra.mxu0 0.0
      %1970 = vmatprep.subr.mxu0 0.0
      %1971 = vmatpush1.msra.mxu0 0.0
      %1972 = vmatprep.subr.mxu0 0.0
      %1973 = vmatpush1.msra.mxu0 0.0
      %1974 = vmatprep.subr.mxu0 0.0
      %1975 = vmatpush1.msra.mxu0 0.0
      %1976 = vmatprep.subr.mxu0 0.0
      %1977 = vmatpush1.msra.mxu0 0.0
      %1978 = vmatprep.subr.mxu0 0.0
      %1979 = vmatpush1.msra.mxu0 0.0
      %1980 = vmatprep.subr.mxu0 0.0
      %1981 = vmatpush1.msra.mxu0 0.0
      %1982 = vmatprep.subr.mxu0 0.0
      %1983 = vmatpush1.msra.mxu0 0.0
      %1984 = vmatprep.subr.mxu0 0.0
      %1985 = vmatpush1.msra.mxu0 0.0
      %1986 = vmatprep.subr.mxu0 0.0
      %1987 = vmatpush1.msra.mxu0 0.0
      %1988 = vmatprep.subr.mxu0 0.0
      %1989 = vmatpush1.msra.mxu0 0.0
      %1990 = vmatprep.subr.mxu0 0.0
      %1991 = vmatpush1.msra.mxu0 0.0
      %1992 = vmatprep.subr.mxu0 0.0
      %1993 = vmatpush1.msra.mxu0 0.0
      %1994 = vmatprep.subr.mxu0 0.0
      %1995 = vmatpush1.msra.mxu0 0.0
      %1996 = vmatprep.subr.mxu0 0.0
      %1997 = vmatpush1.msra.mxu0 0.0
      %1998 = vmatprep.mubr.f32.mxu0 0.0
      %1999 = vmatmul.mubr.f32.gmra.mrb[0].mxu0 %v578
      %v2000 = vpop.f32.mrb[0].mxu0
      %v2001 = vadd.f32 %v559, %v2000
      %v2002 = vpop.f32.mrb[0].mxu0
      %2003 = vmatprep.mubr.f32.mxu0 0.0
      %2004 = vmatmul.mubr.f32.gmra.mrb[0].mxu0 %v581
      %v2005 = vpop.f32.mrb[0].mxu0
      %v2006 = vadd.f32 %v564, %v2005
      %v2007 = vpop.f32.mrb[0].mxu0
      %2008 = vmatprep.mubr.f32.mxu0 0.0
      %2009 = vmatmul.mubr.f32.gmra.mrb[0].mxu0 %v584
      %v2010 = vpop.f32.mrb[0].mxu0
      %v2011 = vadd.f32 %v569, %v2010
      %v2012 = vpop.f32.mrb[0].mxu0
      %2013 = vmatprep.mubr.f32.mxu0 0.0
      %2014 = vmatmul.mubr.f32.gmra.mrb[0].mxu0 %v587
      %v2015 = vpop.f32.mrb[0].mxu0
      %v2016 = vadd.f32 %v574, %v2015
      %v2017 = vpop.f32.mrb[0].mxu0
      %2018 = vdwg.mxu0
      %v2019 = vmax.f32 %v2001, 0.0
      %v2020 = vmax.f32 %v2006, 0.0
      %v2021 = vmax.f32 %v2011, 0.0
      %v2022 = vmax.f32 %v2016, 0.0
      %2023 = vmatprep.subr.mxu0 0.0
      %2024 = vmatpush1.msra.mxu0 %v2019
      %2025 = vmatprep.subr.mxu0 0.0
      %2026 = vmatpush1.msra.mxu0 %v2020
      %2027 = vmatprep.subr.mxu0 0.0
      %2028 = vmatpush1.msra.mxu0 %v2021
      %2029 = vmatprep.subr.mxu0 0.0
      %2030 = vmatpush1.msra.mxu0 %v2022
      %2031 = vmatprep.subr.mxu0 0.0
      %2032 = vmatpush1.msra.mxu0 0.0
      %2033 = vmatprep.subr.mxu0 0.0
      %2034 = vmatpush1.msra.mxu0 0.0
      %2035 = vmatprep.subr.mxu0 0.0
      %2036 = vmatpush1.msra.mxu0 0.0
      %2037 = vmatprep.subr.mxu0 0.0
      %2038 = vmatpush1.msra.mxu0 0.0
      %2039 = vmatprep.subr.mxu0 0.0
      %2040 = vmatpush1.msra.mxu0 0.0
      %2041 = vmatprep.subr.mxu0 0.0
      %2042 = vmatpush1.msra.mxu0 0.0
      %2043 = vmatprep.subr.mxu0 0.0
      %2044 = vmatpush1.msra.mxu0 0.0
      %2045 = vmatprep.subr.mxu0 0.0
      %2046 = vmatpush1.msra.mxu0 0.0
      %2047 = vmatprep.subr.mxu0 0.0
      %2048 = vmatpush1.msra.mxu0 0.0
      %2049 = vmatprep.subr.mxu0 0.0
      %2050 = vmatpush1.msra.mxu0 0.0
      %2051 = vmatprep.subr.mxu0 0.0
      %2052 = vmatpush1.msra.mxu0 0.0
      %2053 = vmatprep.subr.mxu0 0.0
      %2054 = vmatpush1.msra.mxu0 0.0
      %2055 = vmatprep.subr.mxu0 0.0
      %2056 = vmatpush1.msra.mxu0 0.0
      %2057 = vmatprep.subr.mxu0 0.0
      %2058 = vmatpush1.msra.mxu0 0.0
      %2059 = vmatprep.subr.mxu0 0.0
      %2060 = vmatpush1.msra.mxu0 0.0
      %2061 = vmatprep.subr.mxu0 0.0
      %2062 = vmatpush1.msra.mxu0 0.0
      %2063 = vmatprep.subr.mxu0 0.0
      %2064 = vmatpush1.msra.mxu0 0.0
      %2065 = vmatprep.subr.mxu0 0.0
      %2066 = vmatpush1.msra.mxu0 0.0
      %2067 = vmatprep.subr.mxu0 0.0
      %2068 = vmatpush1.msra.mxu0 0.0
      %2069 = vmatprep.subr.mxu0 0.0
      %2070 = vmatpush1.msra.mxu0 0.0
      %2071 = vmatprep.subr.mxu0 0.0
      %2072 = vmatpush1.msra.mxu0 0.0
      %2073 = vmatprep.subr.mxu0 0.0
      %2074 = vmatpush1.msra.mxu0 0.0
      %2075 = vmatprep.subr.mxu0 0.0
      %2076 = vmatpush1.msra.mxu0 0.0
      %2077 = vmatprep.subr.mxu0 0.0
      %2078 = vmatpush1.msra.mxu0 0.0
      %2079 = vmatprep.subr.mxu0 0.0
      %2080 = vmatpush1.msra.mxu0 0.0
      %2081 = vmatprep.subr.mxu0 0.0
      %2082 = vmatpush1.msra.mxu0 0.0
      %2083 = vmatprep.subr.mxu0 0.0
      %2084 = vmatpush1.msra.mxu0 0.0
      %2085 = vmatprep.subr.mxu0 0.0
      %2086 = vmatpush1.msra.mxu0 0.0
      %2087 = vmatprep.mubr.f32.mxu0 0.0
      %2088 = vmatmul.mubr.f32.gmra.mrb[0].mxu0 %v736
      %v2089 = vpop.f32.mrb[0].mxu0
      %v2090 = vadd.f32 %v697, %v2089
      %v2091 = vpop.f32.mrb[0].mxu0
      %2092 = vmatprep.mubr.f32.mxu0 0.0
      %2093 = vmatmul.mubr.f32.gmra.mrb[0].mxu0 %v739
      %v2094 = vpop.f32.mrb[0].mxu0
      %v2095 = vadd.f32 %v702, %v2094
      %v2096 = vpop.f32.mrb[0].mxu0
      %2097 = vmatprep.mubr.f32.mxu0 0.0
      %2098 = vmatmul.mubr.f32.gmra.mrb[0].mxu0 %v742
      %v2099 = vpop.f32.mrb[0].mxu0
      %v2100 = vadd.f32 %v707, %v2099
      %v2101 = vpop.f32.mrb[0].mxu0
      %2102 = vmatprep.mubr.f32.mxu0 0.0
      %2103 = vmatmul.mubr.f32.gmra.mrb[0].mxu0 %v745
      %v2104 = vpop.f32.mrb[0].mxu0
      %v2105 = vadd.f32 %v712, %v2104
      %v2106 = vpop.f32.mrb[0].mxu0
      %2107 = vmatprep.mubr.f32.mxu0 0.0
      %2108 = vmatmul.mubr.f32.gmra.mrb[0].mxu0 %v748
      %v2109 = vpop.f32.mrb[0].mxu0
      %v2110 = vadd.f32 %v717, %v2109
      %v2111 = vpop.f32.mrb[0].mxu0
      %2112 = vmatprep.mubr.f32.mxu0 0.0
      %2113 = vmatmul.mubr.f32.gmra.mrb[0].mxu0 %v751
      %v2114 = vpop.f32.mrb[0].mxu0
      %v2115 = vadd.f32 %v722, %v2114
      %v2116 = vpop.f32.mrb[0].mxu0
      %2117 = vmatprep.mubr.f32.mxu0 0.0
      %2118 = vmatmul.mubr.f32.gmra.mrb[0].mxu0 %v754
      %v2119 = vpop.f32.mrb[0].mxu0
      %v2120 = vadd.f32 %v727, %v2119
      %v2121 = vpop.f32.mrb[0].mxu0
      %2122 = vmatprep.mubr.f32.mxu0 0.0
      %2123 = vmatmul.mubr.f32.gmra.mrb[0].mxu0 %v757
      %v2124 = vpop.f32.mrb[0].mxu0
      %v2125 = vadd.f32 %v732, %v2124
      %v2126 = vpop.f32.mrb[0].mxu0
      %2127 = vdwg.mxu0
      %v2128 = vmax.f32 %v2090, 0.0
      %v2129 = vmax.f32 %v2095, 0.0
      %v2130 = vmax.f32 %v2100, 0.0
      %v2131 = vmax.f32 %v2105, 0.0
      %v2132 = vmax.f32 %v2110, 0.0
      %v2133 = vmax.f32 %v2115, 0.0
      %v2134 = vmax.f32 %v2120, 0.0
      %v2135 = vmax.f32 %v2125, 0.0
      %v2136 = vmax.f32 %v1924, %v2128
      %v2137 = vmax.f32 %v1925, %v2129
      %v2138 = vmax.f32 %v1926, %v2130
      %v2139 = vmax.f32 %v1927, %v2131
      %v2140 = vmax.f32 %v1928, %v2132
      %v2141 = vmax.f32 %v1929, %v2133
      %v2142 = vmax.f32 %v1930, %v2134
      %v2143 = vmax.f32 %v1931, %v2135
      %s2144 = scalar_lea.vmem %s526, 56
      %v2145 = vld [vmem:[%s2144] sm:$0xff]
      %2146 = vmatprep.subr.mxu0 0.0
      %2147 = vmatpush1.msra.mxu0 %v2145
      %2148 = vmatprep.subr.mxu0 0.0
      %2149 = vmatpush1.msra.mxu0 0.0
      %2150 = vmatprep.subr.mxu0 0.0
      %2151 = vmatpush1.msra.mxu0 0.0
      %2152 = vmatprep.subr.mxu0 0.0
      %2153 = vmatpush1.msra.mxu0 0.0
      %2154 = vmatprep.subr.mxu0 0.0
      %2155 = vmatpush1.msra.mxu0 0.0
      %2156 = vmatprep.subr.mxu0 0.0
      %2157 = vmatpush1.msra.mxu0 0.0
      %2158 = vmatprep.subr.mxu0 0.0
      %2159 = vmatpush1.msra.mxu0 0.0
      %2160 = vmatprep.subr.mxu0 0.0
      %2161 = vmatpush1.msra.mxu0 0.0
      %2162 = vmatprep.subr.mxu0 0.0
      %2163 = vmatpush1.msra.mxu0 0.0
      %2164 = vmatprep.subr.mxu0 0.0
      %2165 = vmatpush1.msra.mxu0 0.0
      %2166 = vmatprep.subr.mxu0 0.0
      %2167 = vmatpush1.msra.mxu0 0.0
      %2168 = vmatprep.subr.mxu0 0.0
      %2169 = vmatpush1.msra.mxu0 0.0
      %2170 = vmatprep.subr.mxu0 0.0
      %2171 = vmatpush1.msra.mxu0 0.0
      %2172 = vmatprep.subr.mxu0 0.0
      %2173 = vmatpush1.msra.mxu0 0.0
      %2174 = vmatprep.subr.mxu0 0.0
      %2175 = vmatpush1.msra.mxu0 0.0
      %2176 = vmatprep.subr.mxu0 0.0
      %2177 = vmatpush1.msra.mxu0 0.0
      %2178 = vmatprep.subr.mxu0 0.0
      %2179 = vmatpush1.msra.mxu0 0.0
      %2180 = vmatprep.subr.mxu0 0.0
      %2181 = vmatpush1.msra.mxu0 0.0
      %2182 = vmatprep.subr.mxu0 0.0
      %2183 = vmatpush1.msra.mxu0 0.0
      %2184 = vmatprep.subr.mxu0 0.0
      %2185 = vmatpush1.msra.mxu0 0.0
      %2186 = vmatprep.subr.mxu0 0.0
      %2187 = vmatpush1.msra.mxu0 0.0
      %2188 = vmatprep.subr.mxu0 0.0
      %2189 = vmatpush1.msra.mxu0 0.0
      %2190 = vmatprep.subr.mxu0 0.0
      %2191 = vmatpush1.msra.mxu0 0.0
      %2192 = vmatprep.subr.mxu0 0.0
      %2193 = vmatpush1.msra.mxu0 0.0
      %2194 = vmatprep.subr.mxu0 0.0
      %2195 = vmatpush1.msra.mxu0 0.0
      %2196 = vmatprep.subr.mxu0 0.0
      %2197 = vmatpush1.msra.mxu0 0.0
      %2198 = vmatprep.subr.mxu0 0.0
      %2199 = vmatpush1.msra.mxu0 0.0
      %2200 = vmatprep.subr.mxu0 0.0
      %2201 = vmatpush1.msra.mxu0 0.0
      %2202 = vmatprep.subr.mxu0 0.0
      %2203 = vmatpush1.msra.mxu0 0.0
      %2204 = vmatprep.subr.mxu0 0.0
      %2205 = vmatpush1.msra.mxu0 0.0
      %2206 = vmatprep.subr.mxu0 0.0
      %2207 = vmatpush1.msra.mxu0 0.0
      %2208 = vmatprep.subr.mxu0 0.0
      %2209 = vmatpush1.msra.mxu0 0.0
      %2210 = vmatprep.mubr.f32.mxu0 0.0
      %2211 = vmatmul.mubr.f32.gmra.mrb[0].mxu0 %v578
      %v2212 = vpop.f32.mrb[0].mxu0
      %v2213 = vadd.f32 %v559, %v2212
      %v2214 = vpop.f32.mrb[0].mxu0
      %2215 = vmatprep.mubr.f32.mxu0 0.0
      %2216 = vmatmul.mubr.f32.gmra.mrb[0].mxu0 %v581
      %v2217 = vpop.f32.mrb[0].mxu0
      %v2218 = vadd.f32 %v564, %v2217
      %v2219 = vpop.f32.mrb[0].mxu0
      %2220 = vmatprep.mubr.f32.mxu0 0.0
      %2221 = vmatmul.mubr.f32.gmra.mrb[0].mxu0 %v584
      %v2222 = vpop.f32.mrb[0].mxu0
      %v2223 = vadd.f32 %v569, %v2222
      %v2224 = vpop.f32.mrb[0].mxu0
      %2225 = vmatprep.mubr.f32.mxu0 0.0
      %2226 = vmatmul.mubr.f32.gmra.mrb[0].mxu0 %v587
      %v2227 = vpop.f32.mrb[0].mxu0
      %v2228 = vadd.f32 %v574, %v2227
      %v2229 = vpop.f32.mrb[0].mxu0
      %2230 = vdwg.mxu0
      %v2231 = vmax.f32 %v2213, 0.0
      %v2232 = vmax.f32 %v2218, 0.0
      %v2233 = vmax.f32 %v2223, 0.0
      %v2234 = vmax.f32 %v2228, 0.0
      %2235 = vmatprep.subr.mxu0 0.0
      %2236 = vmatpush1.msra.mxu0 %v2231
      %2237 = vmatprep.subr.mxu0 0.0
      %2238 = vmatpush1.msra.mxu0 %v2232
      %2239 = vmatprep.subr.mxu0 0.0
      %2240 = vmatpush1.msra.mxu0 %v2233
      %2241 = vmatprep.subr.mxu0 0.0
      %2242 = vmatpush1.msra.mxu0 %v2234
      %2243 = vmatprep.subr.mxu0 0.0
      %2244 = vmatpush1.msra.mxu0 0.0
      %2245 = vmatprep.subr.mxu0 0.0
      %2246 = vmatpush1.msra.mxu0 0.0
      %2247 = vmatprep.subr.mxu0 0.0
      %2248 = vmatpush1.msra.mxu0 0.0
      %2249 = vmatprep.subr.mxu0 0.0
      %2250 = vmatpush1.msra.mxu0 0.0
      %2251 = vmatprep.subr.mxu0 0.0
      %2252 = vmatpush1.msra.mxu0 0.0
      %2253 = vmatprep.subr.mxu0 0.0
      %2254 = vmatpush1.msra.mxu0 0.0
      %2255 = vmatprep.subr.mxu0 0.0
      %2256 = vmatpush1.msra.mxu0 0.0
      %2257 = vmatprep.subr.mxu0 0.0
      %2258 = vmatpush1.msra.mxu0 0.0
      %2259 = vmatprep.subr.mxu0 0.0
      %2260 = vmatpush1.msra.mxu0 0.0
      %2261 = vmatprep.subr.mxu0 0.0
      %2262 = vmatpush1.msra.mxu0 0.0
      %2263 = vmatprep.subr.mxu0 0.0
      %2264 = vmatpush1.msra.mxu0 0.0
      %2265 = vmatprep.subr.mxu0 0.0
      %2266 = vmatpush1.msra.mxu0 0.0
      %2267 = vmatprep.subr.mxu0 0.0
      %2268 = vmatpush1.msra.mxu0 0.0
      %2269 = vmatprep.subr.mxu0 0.0
      %2270 = vmatpush1.msra.mxu0 0.0
      %2271 = vmatprep.subr.mxu0 0.0
      %2272 = vmatpush1.msra.mxu0 0.0
      %2273 = vmatprep.subr.mxu0 0.0
      %2274 = vmatpush1.msra.mxu0 0.0
      %2275 = vmatprep.subr.mxu0 0.0
      %2276 = vmatpush1.msra.mxu0 0.0
      %2277 = vmatprep.subr.mxu0 0.0
      %2278 = vmatpush1.msra.mxu0 0.0
      %2279 = vmatprep.subr.mxu0 0.0
      %2280 = vmatpush1.msra.mxu0 0.0
      %2281 = vmatprep.subr.mxu0 0.0
      %2282 = vmatpush1.msra.mxu0 0.0
      %2283 = vmatprep.subr.mxu0 0.0
      %2284 = vmatpush1.msra.mxu0 0.0
      %2285 = vmatprep.subr.mxu0 0.0
      %2286 = vmatpush1.msra.mxu0 0.0
      %2287 = vmatprep.subr.mxu0 0.0
      %2288 = vmatpush1.msra.mxu0 0.0
      %2289 = vmatprep.subr.mxu0 0.0
      %2290 = vmatpush1.msra.mxu0 0.0
      %2291 = vmatprep.subr.mxu0 0.0
      %2292 = vmatpush1.msra.mxu0 0.0
      %2293 = vmatprep.subr.mxu0 0.0
      %2294 = vmatpush1.msra.mxu0 0.0
      %2295 = vmatprep.subr.mxu0 0.0
      %2296 = vmatpush1.msra.mxu0 0.0
      %2297 = vmatprep.subr.mxu0 0.0
      %2298 = vmatpush1.msra.mxu0 0.0
      %2299 = vmatprep.mubr.f32.mxu0 0.0
      %2300 = vmatmul.mubr.f32.gmra.mrb[0].mxu0 %v736
      %v2301 = vpop.f32.mrb[0].mxu0
      %v2302 = vadd.f32 %v697, %v2301
      %v2303 = vpop.f32.mrb[0].mxu0
      %2304 = vmatprep.mubr.f32.mxu0 0.0
      %2305 = vmatmul.mubr.f32.gmra.mrb[0].mxu0 %v739
      %v2306 = vpop.f32.mrb[0].mxu0
      %v2307 = vadd.f32 %v702, %v2306
      %v2308 = vpop.f32.mrb[0].mxu0
      %2309 = vmatprep.mubr.f32.mxu0 0.0
      %2310 = vmatmul.mubr.f32.gmra.mrb[0].mxu0 %v742
      %v2311 = vpop.f32.mrb[0].mxu0
      %v2312 = vadd.f32 %v707, %v2311
      %v2313 = vpop.f32.mrb[0].mxu0
      %2314 = vmatprep.mubr.f32.mxu0 0.0
      %2315 = vmatmul.mubr.f32.gmra.mrb[0].mxu0 %v745
      %v2316 = vpop.f32.mrb[0].mxu0
      %v2317 = vadd.f32 %v712, %v2316
      %v2318 = vpop.f32.mrb[0].mxu0
      %2319 = vmatprep.mubr.f32.mxu0 0.0
      %2320 = vmatmul.mubr.f32.gmra.mrb[0].mxu0 %v748
      %v2321 = vpop.f32.mrb[0].mxu0
      %v2322 = vadd.f32 %v717, %v2321
      %v2323 = vpop.f32.mrb[0].mxu0
      %2324 = vmatprep.mubr.f32.mxu0 0.0
      %2325 = vmatmul.mubr.f32.gmra.mrb[0].mxu0 %v751
      %v2326 = vpop.f32.mrb[0].mxu0
      %v2327 = vadd.f32 %v722, %v2326
      %v2328 = vpop.f32.mrb[0].mxu0
      %2329 = vmatprep.mubr.f32.mxu0 0.0
      %2330 = vmatmul.mubr.f32.gmra.mrb[0].mxu0 %v754
      %v2331 = vpop.f32.mrb[0].mxu0
      %v2332 = vadd.f32 %v727, %v2331
      %v2333 = vpop.f32.mrb[0].mxu0
      %2334 = vmatprep.mubr.f32.mxu0 0.0
      %2335 = vmatmul.mubr.f32.gmra.mrb[0].mxu0 %v757
      %v2336 = vpop.f32.mrb[0].mxu0
      %v2337 = vadd.f32 %v732, %v2336
      %v2338 = vpop.f32.mrb[0].mxu0
      %2339 = vdwg.mxu0
      %v2340 = vmax.f32 %v2302, 0.0
      %v2341 = vmax.f32 %v2307, 0.0
      %v2342 = vmax.f32 %v2312, 0.0
      %v2343 = vmax.f32 %v2317, 0.0
      %v2344 = vmax.f32 %v2322, 0.0
      %v2345 = vmax.f32 %v2327, 0.0
      %v2346 = vmax.f32 %v2332, 0.0
      %v2347 = vmax.f32 %v2337, 0.0
      %v2348 = vmax.f32 %v2136, %v2340
      %v2349 = vmax.f32 %v2137, %v2341
      %v2350 = vmax.f32 %v2138, %v2342
      %v2351 = vmax.f32 %v2139, %v2343
      %v2352 = vmax.f32 %v2140, %v2344
      %v2353 = vmax.f32 %v2141, %v2345
      %v2354 = vmax.f32 %v2142, %v2346
      %v2355 = vmax.f32 %v2143, %v2347
      %s2356 = scalar_lea.vmem %s526, 64
      %v2357 = vld [vmem:[%s2356] sm:$0xff]
      %2358 = vmatprep.subr.mxu0 0.0
      %2359 = vmatpush1.msra.mxu0 %v2357
      %2360 = vmatprep.subr.mxu0 0.0
      %2361 = vmatpush1.msra.mxu0 0.0
      %2362 = vmatprep.subr.mxu0 0.0
      %2363 = vmatpush1.msra.mxu0 0.0
      %2364 = vmatprep.subr.mxu0 0.0
      %2365 = vmatpush1.msra.mxu0 0.0
      %2366 = vmatprep.subr.mxu0 0.0
      %2367 = vmatpush1.msra.mxu0 0.0
      %2368 = vmatprep.subr.mxu0 0.0
      %2369 = vmatpush1.msra.mxu0 0.0
      %2370 = vmatprep.subr.mxu0 0.0
      %2371 = vmatpush1.msra.mxu0 0.0
      %2372 = vmatprep.subr.mxu0 0.0
      %2373 = vmatpush1.msra.mxu0 0.0
      %2374 = vmatprep.subr.mxu0 0.0
      %2375 = vmatpush1.msra.mxu0 0.0
      %2376 = vmatprep.subr.mxu0 0.0
      %2377 = vmatpush1.msra.mxu0 0.0
      %2378 = vmatprep.subr.mxu0 0.0
      %2379 = vmatpush1.msra.mxu0 0.0
      %2380 = vmatprep.subr.mxu0 0.0
      %2381 = vmatpush1.msra.mxu0 0.0
      %2382 = vmatprep.subr.mxu0 0.0
      %2383 = vmatpush1.msra.mxu0 0.0
      %2384 = vmatprep.subr.mxu0 0.0
      %2385 = vmatpush1.msra.mxu0 0.0
      %2386 = vmatprep.subr.mxu0 0.0
      %2387 = vmatpush1.msra.mxu0 0.0
      %2388 = vmatprep.subr.mxu0 0.0
      %2389 = vmatpush1.msra.mxu0 0.0
      %2390 = vmatprep.subr.mxu0 0.0
      %2391 = vmatpush1.msra.mxu0 0.0
      %2392 = vmatprep.subr.mxu0 0.0
      %2393 = vmatpush1.msra.mxu0 0.0
      %2394 = vmatprep.subr.mxu0 0.0
      %2395 = vmatpush1.msra.mxu0 0.0
      %2396 = vmatprep.subr.mxu0 0.0
      %2397 = vmatpush1.msra.mxu0 0.0
      %2398 = vmatprep.subr.mxu0 0.0
      %2399 = vmatpush1.msra.mxu0 0.0
      %2400 = vmatprep.subr.mxu0 0.0
      %2401 = vmatpush1.msra.mxu0 0.0
      %2402 = vmatprep.subr.mxu0 0.0
      %2403 = vmatpush1.msra.mxu0 0.0
      %2404 = vmatprep.subr.mxu0 0.0
      %2405 = vmatpush1.msra.mxu0 0.0
      %2406 = vmatprep.subr.mxu0 0.0
      %2407 = vmatpush1.msra.mxu0 0.0
      %2408 = vmatprep.subr.mxu0 0.0
      %2409 = vmatpush1.msra.mxu0 0.0
      %2410 = vmatprep.subr.mxu0 0.0
      %2411 = vmatpush1.msra.mxu0 0.0
      %2412 = vmatprep.subr.mxu0 0.0
      %2413 = vmatpush1.msra.mxu0 0.0
      %2414 = vmatprep.subr.mxu0 0.0
      %2415 = vmatpush1.msra.mxu0 0.0
      %2416 = vmatprep.subr.mxu0 0.0
      %2417 = vmatpush1.msra.mxu0 0.0
      %2418 = vmatprep.subr.mxu0 0.0
      %2419 = vmatpush1.msra.mxu0 0.0
      %2420 = vmatprep.subr.mxu0 0.0
      %2421 = vmatpush1.msra.mxu0 0.0
      %2422 = vmatprep.mubr.f32.mxu0 0.0
      %2423 = vmatmul.mubr.f32.gmra.mrb[0].mxu0 %v578
      %v2424 = vpop.f32.mrb[0].mxu0
      %v2425 = vadd.f32 %v559, %v2424
      %v2426 = vpop.f32.mrb[0].mxu0
      %2427 = vmatprep.mubr.f32.mxu0 0.0
      %2428 = vmatmul.mubr.f32.gmra.mrb[0].mxu0 %v581
      %v2429 = vpop.f32.mrb[0].mxu0
      %v2430 = vadd.f32 %v564, %v2429
      %v2431 = vpop.f32.mrb[0].mxu0
      %2432 = vmatprep.mubr.f32.mxu0 0.0
      %2433 = vmatmul.mubr.f32.gmra.mrb[0].mxu0 %v584
      %v2434 = vpop.f32.mrb[0].mxu0
      %v2435 = vadd.f32 %v569, %v2434
      %v2436 = vpop.f32.mrb[0].mxu0
      %2437 = vmatprep.mubr.f32.mxu0 0.0
      %2438 = vmatmul.mubr.f32.gmra.mrb[0].mxu0 %v587
      %v2439 = vpop.f32.mrb[0].mxu0
      %v2440 = vadd.f32 %v574, %v2439
      %v2441 = vpop.f32.mrb[0].mxu0
      %2442 = vdwg.mxu0
      %v2443 = vmax.f32 %v2425, 0.0
      %v2444 = vmax.f32 %v2430, 0.0
      %v2445 = vmax.f32 %v2435, 0.0
      %v2446 = vmax.f32 %v2440, 0.0
      %2447 = vmatprep.subr.mxu0 0.0
      %2448 = vmatpush1.msra.mxu0 %v2443
      %2449 = vmatprep.subr.mxu0 0.0
      %2450 = vmatpush1.msra.mxu0 %v2444
      %2451 = vmatprep.subr.mxu0 0.0
      %2452 = vmatpush1.msra.mxu0 %v2445
      %2453 = vmatprep.subr.mxu0 0.0
      %2454 = vmatpush1.msra.mxu0 %v2446
      %2455 = vmatprep.subr.mxu0 0.0
      %2456 = vmatpush1.msra.mxu0 0.0
      %2457 = vmatprep.subr.mxu0 0.0
      %2458 = vmatpush1.msra.mxu0 0.0
      %2459 = vmatprep.subr.mxu0 0.0
      %2460 = vmatpush1.msra.mxu0 0.0
      %2461 = vmatprep.subr.mxu0 0.0
      %2462 = vmatpush1.msra.mxu0 0.0
      %2463 = vmatprep.subr.mxu0 0.0
      %2464 = vmatpush1.msra.mxu0 0.0
      %2465 = vmatprep.subr.mxu0 0.0
      %2466 = vmatpush1.msra.mxu0 0.0
      %2467 = vmatprep.subr.mxu0 0.0
      %2468 = vmatpush1.msra.mxu0 0.0
      %2469 = vmatprep.subr.mxu0 0.0
      %2470 = vmatpush1.msra.mxu0 0.0
      %2471 = vmatprep.subr.mxu0 0.0
      %2472 = vmatpush1.msra.mxu0 0.0
      %2473 = vmatprep.subr.mxu0 0.0
      %2474 = vmatpush1.msra.mxu0 0.0
      %2475 = vmatprep.subr.mxu0 0.0
      %2476 = vmatpush1.msra.mxu0 0.0
      %2477 = vmatprep.subr.mxu0 0.0
      %2478 = vmatpush1.msra.mxu0 0.0
      %2479 = vmatprep.subr.mxu0 0.0
      %2480 = vmatpush1.msra.mxu0 0.0
      %2481 = vmatprep.subr.mxu0 0.0
      %2482 = vmatpush1.msra.mxu0 0.0
      %2483 = vmatprep.subr.mxu0 0.0
      %2484 = vmatpush1.msra.mxu0 0.0
      %2485 = vmatprep.subr.mxu0 0.0
      %2486 = vmatpush1.msra.mxu0 0.0
      %2487 = vmatprep.subr.mxu0 0.0
      %2488 = vmatpush1.msra.mxu0 0.0
      %2489 = vmatprep.subr.mxu0 0.0
      %2490 = vmatpush1.msra.mxu0 0.0
      %2491 = vmatprep.subr.mxu0 0.0
      %2492 = vmatpush1.msra.mxu0 0.0
      %2493 = vmatprep.subr.mxu0 0.0
      %2494 = vmatpush1.msra.mxu0 0.0
      %2495 = vmatprep.subr.mxu0 0.0
      %2496 = vmatpush1.msra.mxu0 0.0
      %2497 = vmatprep.subr.mxu0 0.0
      %2498 = vmatpush1.msra.mxu0 0.0
      %2499 = vmatprep.subr.mxu0 0.0
      %2500 = vmatpush1.msra.mxu0 0.0
      %2501 = vmatprep.subr.mxu0 0.0
      %2502 = vmatpush1.msra.mxu0 0.0
      %2503 = vmatprep.subr.mxu0 0.0
      %2504 = vmatpush1.msra.mxu0 0.0
      %2505 = vmatprep.subr.mxu0 0.0
      %2506 = vmatpush1.msra.mxu0 0.0
      %2507 = vmatprep.subr.mxu0 0.0
      %2508 = vmatpush1.msra.mxu0 0.0
      %2509 = vmatprep.subr.mxu0 0.0
      %2510 = vmatpush1.msra.mxu0 0.0
      %2511 = vmatprep.mubr.f32.mxu0 0.0
      %2512 = vmatmul.mubr.f32.gmra.mrb[0].mxu0 %v736
      %v2513 = vpop.f32.mrb[0].mxu0
      %v2514 = vadd.f32 %v697, %v2513
      %v2515 = vpop.f32.mrb[0].mxu0
      %2516 = vmatprep.mubr.f32.mxu0 0.0
      %2517 = vmatmul.mubr.f32.gmra.mrb[0].mxu0 %v739
      %v2518 = vpop.f32.mrb[0].mxu0
      %v2519 = vadd.f32 %v702, %v2518
      %v2520 = vpop.f32.mrb[0].mxu0
      %2521 = vmatprep.mubr.f32.mxu0 0.0
      %2522 = vmatmul.mubr.f32.gmra.mrb[0].mxu0 %v742
      %v2523 = vpop.f32.mrb[0].mxu0
      %v2524 = vadd.f32 %v707, %v2523
      %v2525 = vpop.f32.mrb[0].mxu0
      %2526 = vmatprep.mubr.f32.mxu0 0.0
      %2527 = vmatmul.mubr.f32.gmra.mrb[0].mxu0 %v745
      %v2528 = vpop.f32.mrb[0].mxu0
      %v2529 = vadd.f32 %v712, %v2528
      %v2530 = vpop.f32.mrb[0].mxu0
      %2531 = vmatprep.mubr.f32.mxu0 0.0
      %2532 = vmatmul.mubr.f32.gmra.mrb[0].mxu0 %v748
      %v2533 = vpop.f32.mrb[0].mxu0
      %v2534 = vadd.f32 %v717, %v2533
      %v2535 = vpop.f32.mrb[0].mxu0
      %2536 = vmatprep.mubr.f32.mxu0 0.0
      %2537 = vmatmul.mubr.f32.gmra.mrb[0].mxu0 %v751
      %v2538 = vpop.f32.mrb[0].mxu0
      %v2539 = vadd.f32 %v722, %v2538
      %v2540 = vpop.f32.mrb[0].mxu0
      %2541 = vmatprep.mubr.f32.mxu0 0.0
      %2542 = vmatmul.mubr.f32.gmra.mrb[0].mxu0 %v754
      %v2543 = vpop.f32.mrb[0].mxu0
      %v2544 = vadd.f32 %v727, %v2543
      %v2545 = vpop.f32.mrb[0].mxu0
      %2546 = vmatprep.mubr.f32.mxu0 0.0
      %2547 = vmatmul.mubr.f32.gmra.mrb[0].mxu0 %v757
      %v2548 = vpop.f32.mrb[0].mxu0
      %v2549 = vadd.f32 %v732, %v2548
      %v2550 = vpop.f32.mrb[0].mxu0
      %2551 = vdwg.mxu0
      %v2552 = vmax.f32 %v2514, 0.0
      %v2553 = vmax.f32 %v2519, 0.0
      %v2554 = vmax.f32 %v2524, 0.0
      %v2555 = vmax.f32 %v2529, 0.0
      %v2556 = vmax.f32 %v2534, 0.0
      %v2557 = vmax.f32 %v2539, 0.0
      %v2558 = vmax.f32 %v2544, 0.0
      %v2559 = vmax.f32 %v2549, 0.0
      %v2560 = vmax.f32 %v2348, %v2552
      %v2561 = vmax.f32 %v2349, %v2553
      %v2562 = vmax.f32 %v2350, %v2554
      %v2563 = vmax.f32 %v2351, %v2555
      %v2564 = vmax.f32 %v2352, %v2556
      %v2565 = vmax.f32 %v2353, %v2557
      %v2566 = vmax.f32 %v2354, %v2558
      %v2567 = vmax.f32 %v2355, %v2559
      %s2568 = scalar_lea.vmem %s526, 72
      %v2569 = vld [vmem:[%s2568] sm:$0xff]
      %2570 = vmatprep.subr.mxu0 0.0
      %2571 = vmatpush1.msra.mxu0 %v2569
      %2572 = vmatprep.subr.mxu0 0.0
      %2573 = vmatpush1.msra.mxu0 0.0
      %2574 = vmatprep.subr.mxu0 0.0
      %2575 = vmatpush1.msra.mxu0 0.0
      %2576 = vmatprep.subr.mxu0 0.0
      %2577 = vmatpush1.msra.mxu0 0.0
      %2578 = vmatprep.subr.mxu0 0.0
      %2579 = vmatpush1.msra.mxu0 0.0
      %2580 = vmatprep.subr.mxu0 0.0
      %2581 = vmatpush1.msra.mxu0 0.0
      %2582 = vmatprep.subr.mxu0 0.0
      %2583 = vmatpush1.msra.mxu0 0.0
      %2584 = vmatprep.subr.mxu0 0.0
      %2585 = vmatpush1.msra.mxu0 0.0
      %2586 = vmatprep.subr.mxu0 0.0
      %2587 = vmatpush1.msra.mxu0 0.0
      %2588 = vmatprep.subr.mxu0 0.0
      %2589 = vmatpush1.msra.mxu0 0.0
      %2590 = vmatprep.subr.mxu0 0.0
      %2591 = vmatpush1.msra.mxu0 0.0
      %2592 = vmatprep.subr.mxu0 0.0
      %2593 = vmatpush1.msra.mxu0 0.0
      %2594 = vmatprep.subr.mxu0 0.0
      %2595 = vmatpush1.msra.mxu0 0.0
      %2596 = vmatprep.subr.mxu0 0.0
      %2597 = vmatpush1.msra.mxu0 0.0
      %2598 = vmatprep.subr.mxu0 0.0
      %2599 = vmatpush1.msra.mxu0 0.0
      %2600 = vmatprep.subr.mxu0 0.0
      %2601 = vmatpush1.msra.mxu0 0.0
      %2602 = vmatprep.subr.mxu0 0.0
      %2603 = vmatpush1.msra.mxu0 0.0
      %2604 = vmatprep.subr.mxu0 0.0
      %2605 = vmatpush1.msra.mxu0 0.0
      %2606 = vmatprep.subr.mxu0 0.0
      %2607 = vmatpush1.msra.mxu0 0.0
      %2608 = vmatprep.subr.mxu0 0.0
      %2609 = vmatpush1.msra.mxu0 0.0
      %2610 = vmatprep.subr.mxu0 0.0
      %2611 = vmatpush1.msra.mxu0 0.0
      %2612 = vmatprep.subr.mxu0 0.0
      %2613 = vmatpush1.msra.mxu0 0.0
      %2614 = vmatprep.subr.mxu0 0.0
      %2615 = vmatpush1.msra.mxu0 0.0
      %2616 = vmatprep.subr.mxu0 0.0
      %2617 = vmatpush1.msra.mxu0 0.0
      %2618 = vmatprep.subr.mxu0 0.0
      %2619 = vmatpush1.msra.mxu0 0.0
      %2620 = vmatprep.subr.mxu0 0.0
      %2621 = vmatpush1.msra.mxu0 0.0
      %2622 = vmatprep.subr.mxu0 0.0
      %2623 = vmatpush1.msra.mxu0 0.0
      %2624 = vmatprep.subr.mxu0 0.0
      %2625 = vmatpush1.msra.mxu0 0.0
      %2626 = vmatprep.subr.mxu0 0.0
      %2627 = vmatpush1.msra.mxu0 0.0
      %2628 = vmatprep.subr.mxu0 0.0
      %2629 = vmatpush1.msra.mxu0 0.0
      %2630 = vmatprep.subr.mxu0 0.0
      %2631 = vmatpush1.msra.mxu0 0.0
      %2632 = vmatprep.subr.mxu0 0.0
      %2633 = vmatpush1.msra.mxu0 0.0
      %2634 = vmatprep.mubr.f32.mxu0 0.0
      %2635 = vmatmul.mubr.f32.gmra.mrb[0].mxu0 %v578
      %v2636 = vpop.f32.mrb[0].mxu0
      %v2637 = vadd.f32 %v559, %v2636
      %v2638 = vpop.f32.mrb[0].mxu0
      %2639 = vmatprep.mubr.f32.mxu0 0.0
      %2640 = vmatmul.mubr.f32.gmra.mrb[0].mxu0 %v581
      %v2641 = vpop.f32.mrb[0].mxu0
      %v2642 = vadd.f32 %v564, %v2641
      %v2643 = vpop.f32.mrb[0].mxu0
      %2644 = vmatprep.mubr.f32.mxu0 0.0
      %2645 = vmatmul.mubr.f32.gmra.mrb[0].mxu0 %v584
      %v2646 = vpop.f32.mrb[0].mxu0
      %v2647 = vadd.f32 %v569, %v2646
      %v2648 = vpop.f32.mrb[0].mxu0
      %2649 = vmatprep.mubr.f32.mxu0 0.0
      %2650 = vmatmul.mubr.f32.gmra.mrb[0].mxu0 %v587
      %v2651 = vpop.f32.mrb[0].mxu0
      %v2652 = vadd.f32 %v574, %v2651
      %v2653 = vpop.f32.mrb[0].mxu0
      %2654 = vdwg.mxu0
      %v2655 = vmax.f32 %v2637, 0.0
      %v2656 = vmax.f32 %v2642, 0.0
      %v2657 = vmax.f32 %v2647, 0.0
      %v2658 = vmax.f32 %v2652, 0.0
      %2659 = vmatprep.subr.mxu0 0.0
      %2660 = vmatpush1.msra.mxu0 %v2655
      %2661 = vmatprep.subr.mxu0 0.0
      %2662 = vmatpush1.msra.mxu0 %v2656
      %2663 = vmatprep.subr.mxu0 0.0
      %2664 = vmatpush1.msra.mxu0 %v2657
      %2665 = vmatprep.subr.mxu0 0.0
      %2666 = vmatpush1.msra.mxu0 %v2658
      %2667 = vmatprep.subr.mxu0 0.0
      %2668 = vmatpush1.msra.mxu0 0.0
      %2669 = vmatprep.subr.mxu0 0.0
      %2670 = vmatpush1.msra.mxu0 0.0
      %2671 = vmatprep.subr.mxu0 0.0
      %2672 = vmatpush1.msra.mxu0 0.0
      %2673 = vmatprep.subr.mxu0 0.0
      %2674 = vmatpush1.msra.mxu0 0.0
      %2675 = vmatprep.subr.mxu0 0.0
      %2676 = vmatpush1.msra.mxu0 0.0
      %2677 = vmatprep.subr.mxu0 0.0
      %2678 = vmatpush1.msra.mxu0 0.0
      %2679 = vmatprep.subr.mxu0 0.0
      %2680 = vmatpush1.msra.mxu0 0.0
      %2681 = vmatprep.subr.mxu0 0.0
      %2682 = vmatpush1.msra.mxu0 0.0
      %2683 = vmatprep.subr.mxu0 0.0
      %2684 = vmatpush1.msra.mxu0 0.0
      %2685 = vmatprep.subr.mxu0 0.0
      %2686 = vmatpush1.msra.mxu0 0.0
      %2687 = vmatprep.subr.mxu0 0.0
      %2688 = vmatpush1.msra.mxu0 0.0
      %2689 = vmatprep.subr.mxu0 0.0
      %2690 = vmatpush1.msra.mxu0 0.0
      %2691 = vmatprep.subr.mxu0 0.0
      %2692 = vmatpush1.msra.mxu0 0.0
      %2693 = vmatprep.subr.mxu0 0.0
      %2694 = vmatpush1.msra.mxu0 0.0
      %2695 = vmatprep.subr.mxu0 0.0
      %2696 = vmatpush1.msra.mxu0 0.0
      %2697 = vmatprep.subr.mxu0 0.0
      %2698 = vmatpush1.msra.mxu0 0.0
      %2699 = vmatprep.subr.mxu0 0.0
      %2700 = vmatpush1.msra.mxu0 0.0
      %2701 = vmatprep.subr.mxu0 0.0
      %2702 = vmatpush1.msra.mxu0 0.0
      %2703 = vmatprep.subr.mxu0 0.0
      %2704 = vmatpush1.msra.mxu0 0.0
      %2705 = vmatprep.subr.mxu0 0.0
      %2706 = vmatpush1.msra.mxu0 0.0
      %2707 = vmatprep.subr.mxu0 0.0
      %2708 = vmatpush1.msra.mxu0 0.0
      %2709 = vmatprep.subr.mxu0 0.0
      %2710 = vmatpush1.msra.mxu0 0.0
      %2711 = vmatprep.subr.mxu0 0.0
      %2712 = vmatpush1.msra.mxu0 0.0
      %2713 = vmatprep.subr.mxu0 0.0
      %2714 = vmatpush1.msra.mxu0 0.0
      %2715 = vmatprep.subr.mxu0 0.0
      %2716 = vmatpush1.msra.mxu0 0.0
      %2717 = vmatprep.subr.mxu0 0.0
      %2718 = vmatpush1.msra.mxu0 0.0
      %2719 = vmatprep.subr.mxu0 0.0
      %2720 = vmatpush1.msra.mxu0 0.0
      %2721 = vmatprep.subr.mxu0 0.0
      %2722 = vmatpush1.msra.mxu0 0.0
      %2723 = vmatprep.mubr.f32.mxu0 0.0
      %2724 = vmatmul.mubr.f32.gmra.mrb[0].mxu0 %v736
      %v2725 = vpop.f32.mrb[0].mxu0
      %v2726 = vadd.f32 %v697, %v2725
      %v2727 = vpop.f32.mrb[0].mxu0
      %2728 = vmatprep.mubr.f32.mxu0 0.0
      %2729 = vmatmul.mubr.f32.gmra.mrb[0].mxu0 %v739
      %v2730 = vpop.f32.mrb[0].mxu0
      %v2731 = vadd.f32 %v702, %v2730
      %v2732 = vpop.f32.mrb[0].mxu0
      %2733 = vmatprep.mubr.f32.mxu0 0.0
      %2734 = vmatmul.mubr.f32.gmra.mrb[0].mxu0 %v742
      %v2735 = vpop.f32.mrb[0].mxu0
      %v2736 = vadd.f32 %v707, %v2735
      %v2737 = vpop.f32.mrb[0].mxu0
      %2738 = vmatprep.mubr.f32.mxu0 0.0
      %2739 = vmatmul.mubr.f32.gmra.mrb[0].mxu0 %v745
      %v2740 = vpop.f32.mrb[0].mxu0
      %v2741 = vadd.f32 %v712, %v2740
      %v2742 = vpop.f32.mrb[0].mxu0
      %2743 = vmatprep.mubr.f32.mxu0 0.0
      %2744 = vmatmul.mubr.f32.gmra.mrb[0].mxu0 %v748
      %v2745 = vpop.f32.mrb[0].mxu0
      %v2746 = vadd.f32 %v717, %v2745
      %v2747 = vpop.f32.mrb[0].mxu0
      %2748 = vmatprep.mubr.f32.mxu0 0.0
      %2749 = vmatmul.mubr.f32.gmra.mrb[0].mxu0 %v751
      %v2750 = vpop.f32.mrb[0].mxu0
      %v2751 = vadd.f32 %v722, %v2750
      %v2752 = vpop.f32.mrb[0].mxu0
      %2753 = vmatprep.mubr.f32.mxu0 0.0
      %2754 = vmatmul.mubr.f32.gmra.mrb[0].mxu0 %v754
      %v2755 = vpop.f32.mrb[0].mxu0
      %v2756 = vadd.f32 %v727, %v2755
      %v2757 = vpop.f32.mrb[0].mxu0
      %2758 = vmatprep.mubr.f32.mxu0 0.0
      %2759 = vmatmul.mubr.f32.gmra.mrb[0].mxu0 %v757
      %v2760 = vpop.f32.mrb[0].mxu0
      %v2761 = vadd.f32 %v732, %v2760
      %v2762 = vpop.f32.mrb[0].mxu0
      %2763 = vdwg.mxu0
      %v2764 = vmax.f32 %v2726, 0.0
      %v2765 = vmax.f32 %v2731, 0.0
      %v2766 = vmax.f32 %v2736, 0.0
      %v2767 = vmax.f32 %v2741, 0.0
      %v2768 = vmax.f32 %v2746, 0.0
      %v2769 = vmax.f32 %v2751, 0.0
      %v2770 = vmax.f32 %v2756, 0.0
      %v2771 = vmax.f32 %v2761, 0.0
      %v2772 = vmax.f32 %v2560, %v2764
      %v2773 = vmax.f32 %v2561, %v2765
      %v2774 = vmax.f32 %v2562, %v2766
      %v2775 = vmax.f32 %v2563, %v2767
      %v2776 = vmax.f32 %v2564, %v2768
      %v2777 = vmax.f32 %v2565, %v2769
      %v2778 = vmax.f32 %v2566, %v2770
      %v2779 = vmax.f32 %v2567, %v2771
      %s2780 = scalar_lea.vmem %s526, 80
      %v2781 = vld [vmem:[%s2780] sm:$0xff]
      %2782 = vmatprep.subr.mxu0 0.0
      %2783 = vmatpush1.msra.mxu0 %v2781
      %2784 = vmatprep.subr.mxu0 0.0
      %2785 = vmatpush1.msra.mxu0 0.0
      %2786 = vmatprep.subr.mxu0 0.0
      %2787 = vmatpush1.msra.mxu0 0.0
      %2788 = vmatprep.subr.mxu0 0.0
      %2789 = vmatpush1.msra.mxu0 0.0
      %2790 = vmatprep.subr.mxu0 0.0
      %2791 = vmatpush1.msra.mxu0 0.0
      %2792 = vmatprep.subr.mxu0 0.0
      %2793 = vmatpush1.msra.mxu0 0.0
      %2794 = vmatprep.subr.mxu0 0.0
      %2795 = vmatpush1.msra.mxu0 0.0
      %2796 = vmatprep.subr.mxu0 0.0
      %2797 = vmatpush1.msra.mxu0 0.0
      %2798 = vmatprep.subr.mxu0 0.0
      %2799 = vmatpush1.msra.mxu0 0.0
      %2800 = vmatprep.subr.mxu0 0.0
      %2801 = vmatpush1.msra.mxu0 0.0
      %2802 = vmatprep.subr.mxu0 0.0
      %2803 = vmatpush1.msra.mxu0 0.0
      %2804 = vmatprep.subr.mxu0 0.0
      %2805 = vmatpush1.msra.mxu0 0.0
      %2806 = vmatprep.subr.mxu0 0.0
      %2807 = vmatpush1.msra.mxu0 0.0
      %2808 = vmatprep.subr.mxu0 0.0
      %2809 = vmatpush1.msra.mxu0 0.0
      %2810 = vmatprep.subr.mxu0 0.0
      %2811 = vmatpush1.msra.mxu0 0.0
      %2812 = vmatprep.subr.mxu0 0.0
      %2813 = vmatpush1.msra.mxu0 0.0
      %2814 = vmatprep.subr.mxu0 0.0
      %2815 = vmatpush1.msra.mxu0 0.0
      %2816 = vmatprep.subr.mxu0 0.0
      %2817 = vmatpush1.msra.mxu0 0.0
      %2818 = vmatprep.subr.mxu0 0.0
      %2819 = vmatpush1.msra.mxu0 0.0
      %2820 = vmatprep.subr.mxu0 0.0
      %2821 = vmatpush1.msra.mxu0 0.0
      %2822 = vmatprep.subr.mxu0 0.0
      %2823 = vmatpush1.msra.mxu0 0.0
      %2824 = vmatprep.subr.mxu0 0.0
      %2825 = vmatpush1.msra.mxu0 0.0
      %2826 = vmatprep.subr.mxu0 0.0
      %2827 = vmatpush1.msra.mxu0 0.0
      %2828 = vmatprep.subr.mxu0 0.0
      %2829 = vmatpush1.msra.mxu0 0.0
      %2830 = vmatprep.subr.mxu0 0.0
      %2831 = vmatpush1.msra.mxu0 0.0
      %2832 = vmatprep.subr.mxu0 0.0
      %2833 = vmatpush1.msra.mxu0 0.0
      %2834 = vmatprep.subr.mxu0 0.0
      %2835 = vmatpush1.msra.mxu0 0.0
      %2836 = vmatprep.subr.mxu0 0.0
      %2837 = vmatpush1.msra.mxu0 0.0
      %2838 = vmatprep.subr.mxu0 0.0
      %2839 = vmatpush1.msra.mxu0 0.0
      %2840 = vmatprep.subr.mxu0 0.0
      %2841 = vmatpush1.msra.mxu0 0.0
      %2842 = vmatprep.subr.mxu0 0.0
      %2843 = vmatpush1.msra.mxu0 0.0
      %2844 = vmatprep.subr.mxu0 0.0
      %2845 = vmatpush1.msra.mxu0 0.0
      %2846 = vmatprep.mubr.f32.mxu0 0.0
      %2847 = vmatmul.mubr.f32.gmra.mrb[0].mxu0 %v578
      %v2848 = vpop.f32.mrb[0].mxu0
      %v2849 = vadd.f32 %v559, %v2848
      %v2850 = vpop.f32.mrb[0].mxu0
      %2851 = vmatprep.mubr.f32.mxu0 0.0
      %2852 = vmatmul.mubr.f32.gmra.mrb[0].mxu0 %v581
      %v2853 = vpop.f32.mrb[0].mxu0
      %v2854 = vadd.f32 %v564, %v2853
      %v2855 = vpop.f32.mrb[0].mxu0
      %2856 = vmatprep.mubr.f32.mxu0 0.0
      %2857 = vmatmul.mubr.f32.gmra.mrb[0].mxu0 %v584
      %v2858 = vpop.f32.mrb[0].mxu0
      %v2859 = vadd.f32 %v569, %v2858
      %v2860 = vpop.f32.mrb[0].mxu0
      %2861 = vmatprep.mubr.f32.mxu0 0.0
      %2862 = vmatmul.mubr.f32.gmra.mrb[0].mxu0 %v587
      %v2863 = vpop.f32.mrb[0].mxu0
      %v2864 = vadd.f32 %v574, %v2863
      %v2865 = vpop.f32.mrb[0].mxu0
      %2866 = vdwg.mxu0
      %v2867 = vmax.f32 %v2849, 0.0
      %v2868 = vmax.f32 %v2854, 0.0
      %v2869 = vmax.f32 %v2859, 0.0
      %v2870 = vmax.f32 %v2864, 0.0
      %2871 = vmatprep.subr.mxu0 0.0
      %2872 = vmatpush1.msra.mxu0 %v2867
      %2873 = vmatprep.subr.mxu0 0.0
      %2874 = vmatpush1.msra.mxu0 %v2868
      %2875 = vmatprep.subr.mxu0 0.0
      %2876 = vmatpush1.msra.mxu0 %v2869
      %2877 = vmatprep.subr.mxu0 0.0
      %2878 = vmatpush1.msra.mxu0 %v2870
      %2879 = vmatprep.subr.mxu0 0.0
      %2880 = vmatpush1.msra.mxu0 0.0
      %2881 = vmatprep.subr.mxu0 0.0
      %2882 = vmatpush1.msra.mxu0 0.0
      %2883 = vmatprep.subr.mxu0 0.0
      %2884 = vmatpush1.msra.mxu0 0.0
      %2885 = vmatprep.subr.mxu0 0.0
      %2886 = vmatpush1.msra.mxu0 0.0
      %2887 = vmatprep.subr.mxu0 0.0
      %2888 = vmatpush1.msra.mxu0 0.0
      %2889 = vmatprep.subr.mxu0 0.0
      %2890 = vmatpush1.msra.mxu0 0.0
      %2891 = vmatprep.subr.mxu0 0.0
      %2892 = vmatpush1.msra.mxu0 0.0
      %2893 = vmatprep.subr.mxu0 0.0
      %2894 = vmatpush1.msra.mxu0 0.0
      %2895 = vmatprep.subr.mxu0 0.0
      %2896 = vmatpush1.msra.mxu0 0.0
      %2897 = vmatprep.subr.mxu0 0.0
      %2898 = vmatpush1.msra.mxu0 0.0
      %2899 = vmatprep.subr.mxu0 0.0
      %2900 = vmatpush1.msra.mxu0 0.0
      %2901 = vmatprep.subr.mxu0 0.0
      %2902 = vmatpush1.msra.mxu0 0.0
      %2903 = vmatprep.subr.mxu0 0.0
      %2904 = vmatpush1.msra.mxu0 0.0
      %2905 = vmatprep.subr.mxu0 0.0
      %2906 = vmatpush1.msra.mxu0 0.0
      %2907 = vmatprep.subr.mxu0 0.0
      %2908 = vmatpush1.msra.mxu0 0.0
      %2909 = vmatprep.subr.mxu0 0.0
      %2910 = vmatpush1.msra.mxu0 0.0
      %2911 = vmatprep.subr.mxu0 0.0
      %2912 = vmatpush1.msra.mxu0 0.0
      %2913 = vmatprep.subr.mxu0 0.0
      %2914 = vmatpush1.msra.mxu0 0.0
      %2915 = vmatprep.subr.mxu0 0.0
      %2916 = vmatpush1.msra.mxu0 0.0
      %2917 = vmatprep.subr.mxu0 0.0
      %2918 = vmatpush1.msra.mxu0 0.0
      %2919 = vmatprep.subr.mxu0 0.0
      %2920 = vmatpush1.msra.mxu0 0.0
      %2921 = vmatprep.subr.mxu0 0.0
      %2922 = vmatpush1.msra.mxu0 0.0
      %2923 = vmatprep.subr.mxu0 0.0
      %2924 = vmatpush1.msra.mxu0 0.0
      %2925 = vmatprep.subr.mxu0 0.0
      %2926 = vmatpush1.msra.mxu0 0.0
      %2927 = vmatprep.subr.mxu0 0.0
      %2928 = vmatpush1.msra.mxu0 0.0
      %2929 = vmatprep.subr.mxu0 0.0
      %2930 = vmatpush1.msra.mxu0 0.0
      %2931 = vmatprep.subr.mxu0 0.0
      %2932 = vmatpush1.msra.mxu0 0.0
      %2933 = vmatprep.subr.mxu0 0.0
      %2934 = vmatpush1.msra.mxu0 0.0
      %2935 = vmatprep.mubr.f32.mxu0 0.0
      %2936 = vmatmul.mubr.f32.gmra.mrb[0].mxu0 %v736
      %v2937 = vpop.f32.mrb[0].mxu0
      %v2938 = vadd.f32 %v697, %v2937
      %v2939 = vpop.f32.mrb[0].mxu0
      %2940 = vmatprep.mubr.f32.mxu0 0.0
      %2941 = vmatmul.mubr.f32.gmra.mrb[0].mxu0 %v739
      %v2942 = vpop.f32.mrb[0].mxu0
      %v2943 = vadd.f32 %v702, %v2942
      %v2944 = vpop.f32.mrb[0].mxu0
      %2945 = vmatprep.mubr.f32.mxu0 0.0
      %2946 = vmatmul.mubr.f32.gmra.mrb[0].mxu0 %v742
      %v2947 = vpop.f32.mrb[0].mxu0
      %v2948 = vadd.f32 %v707, %v2947
      %v2949 = vpop.f32.mrb[0].mxu0
      %2950 = vmatprep.mubr.f32.mxu0 0.0
      %2951 = vmatmul.mubr.f32.gmra.mrb[0].mxu0 %v745
      %v2952 = vpop.f32.mrb[0].mxu0
      %v2953 = vadd.f32 %v712, %v2952
      %v2954 = vpop.f32.mrb[0].mxu0
      %2955 = vmatprep.mubr.f32.mxu0 0.0
      %2956 = vmatmul.mubr.f32.gmra.mrb[0].mxu0 %v748
      %v2957 = vpop.f32.mrb[0].mxu0
      %v2958 = vadd.f32 %v717, %v2957
      %v2959 = vpop.f32.mrb[0].mxu0
      %2960 = vmatprep.mubr.f32.mxu0 0.0
      %2961 = vmatmul.mubr.f32.gmra.mrb[0].mxu0 %v751
      %v2962 = vpop.f32.mrb[0].mxu0
      %v2963 = vadd.f32 %v722, %v2962
      %v2964 = vpop.f32.mrb[0].mxu0
      %2965 = vmatprep.mubr.f32.mxu0 0.0
      %2966 = vmatmul.mubr.f32.gmra.mrb[0].mxu0 %v754
      %v2967 = vpop.f32.mrb[0].mxu0
      %v2968 = vadd.f32 %v727, %v2967
      %v2969 = vpop.f32.mrb[0].mxu0
      %2970 = vmatprep.mubr.f32.mxu0 0.0
      %2971 = vmatmul.mubr.f32.gmra.mrb[0].mxu0 %v757
      %v2972 = vpop.f32.mrb[0].mxu0
      %v2973 = vadd.f32 %v732, %v2972
      %v2974 = vpop.f32.mrb[0].mxu0
      %2975 = vdwg.mxu0
      %v2976 = vmax.f32 %v2938, 0.0
      %v2977 = vmax.f32 %v2943, 0.0
      %v2978 = vmax.f32 %v2948, 0.0
      %v2979 = vmax.f32 %v2953, 0.0
      %v2980 = vmax.f32 %v2958, 0.0
      %v2981 = vmax.f32 %v2963, 0.0
      %v2982 = vmax.f32 %v2968, 0.0
      %v2983 = vmax.f32 %v2973, 0.0
      %v2984 = vmax.f32 %v2772, %v2976
      %v2985 = vmax.f32 %v2773, %v2977
      %v2986 = vmax.f32 %v2774, %v2978
      %v2987 = vmax.f32 %v2775, %v2979
      %v2988 = vmax.f32 %v2776, %v2980
      %v2989 = vmax.f32 %v2777, %v2981
      %v2990 = vmax.f32 %v2778, %v2982
      %v2991 = vmax.f32 %v2779, %v2983
      %s2992 = scalar_lea.vmem %s526, 88
      %v2993 = vld [vmem:[%s2992] sm:$0xff]
      %2994 = vmatprep.subr.mxu0 0.0
      %2995 = vmatpush1.msra.mxu0 %v2993
      %2996 = vmatprep.subr.mxu0 0.0
      %2997 = vmatpush1.msra.mxu0 0.0
      %2998 = vmatprep.subr.mxu0 0.0
      %2999 = vmatpush1.msra.mxu0 0.0
      %3000 = vmatprep.subr.mxu0 0.0
      %3001 = vmatpush1.msra.mxu0 0.0
      %3002 = vmatprep.subr.mxu0 0.0
      %3003 = vmatpush1.msra.mxu0 0.0
      %3004 = vmatprep.subr.mxu0 0.0
      %3005 = vmatpush1.msra.mxu0 0.0
      %3006 = vmatprep.subr.mxu0 0.0
      %3007 = vmatpush1.msra.mxu0 0.0
      %3008 = vmatprep.subr.mxu0 0.0
      %3009 = vmatpush1.msra.mxu0 0.0
      %3010 = vmatprep.subr.mxu0 0.0
      %3011 = vmatpush1.msra.mxu0 0.0
      %3012 = vmatprep.subr.mxu0 0.0
      %3013 = vmatpush1.msra.mxu0 0.0
      %3014 = vmatprep.subr.mxu0 0.0
      %3015 = vmatpush1.msra.mxu0 0.0
      %3016 = vmatprep.subr.mxu0 0.0
      %3017 = vmatpush1.msra.mxu0 0.0
      %3018 = vmatprep.subr.mxu0 0.0
      %3019 = vmatpush1.msra.mxu0 0.0
      %3020 = vmatprep.subr.mxu0 0.0
      %3021 = vmatpush1.msra.mxu0 0.0
      %3022 = vmatprep.subr.mxu0 0.0
      %3023 = vmatpush1.msra.mxu0 0.0
      %3024 = vmatprep.subr.mxu0 0.0
      %3025 = vmatpush1.msra.mxu0 0.0
      %3026 = vmatprep.subr.mxu0 0.0
      %3027 = vmatpush1.msra.mxu0 0.0
      %3028 = vmatprep.subr.mxu0 0.0
      %3029 = vmatpush1.msra.mxu0 0.0
      %3030 = vmatprep.subr.mxu0 0.0
      %3031 = vmatpush1.msra.mxu0 0.0
      %3032 = vmatprep.subr.mxu0 0.0
      %3033 = vmatpush1.msra.mxu0 0.0
      %3034 = vmatprep.subr.mxu0 0.0
      %3035 = vmatpush1.msra.mxu0 0.0
      %3036 = vmatprep.subr.mxu0 0.0
      %3037 = vmatpush1.msra.mxu0 0.0
      %3038 = vmatprep.subr.mxu0 0.0
      %3039 = vmatpush1.msra.mxu0 0.0
      %3040 = vmatprep.subr.mxu0 0.0
      %3041 = vmatpush1.msra.mxu0 0.0
      %3042 = vmatprep.subr.mxu0 0.0
      %3043 = vmatpush1.msra.mxu0 0.0
      %3044 = vmatprep.subr.mxu0 0.0
      %3045 = vmatpush1.msra.mxu0 0.0
      %3046 = vmatprep.subr.mxu0 0.0
      %3047 = vmatpush1.msra.mxu0 0.0
      %3048 = vmatprep.subr.mxu0 0.0
      %3049 = vmatpush1.msra.mxu0 0.0
      %3050 = vmatprep.subr.mxu0 0.0
      %3051 = vmatpush1.msra.mxu0 0.0
      %3052 = vmatprep.subr.mxu0 0.0
      %3053 = vmatpush1.msra.mxu0 0.0
      %3054 = vmatprep.subr.mxu0 0.0
      %3055 = vmatpush1.msra.mxu0 0.0
      %3056 = vmatprep.subr.mxu0 0.0
      %3057 = vmatpush1.msra.mxu0 0.0
      %3058 = vmatprep.mubr.f32.mxu0 0.0
      %3059 = vmatmul.mubr.f32.gmra.mrb[0].mxu0 %v578
      %v3060 = vpop.f32.mrb[0].mxu0
      %v3061 = vadd.f32 %v559, %v3060
      %v3062 = vpop.f32.mrb[0].mxu0
      %3063 = vmatprep.mubr.f32.mxu0 0.0
      %3064 = vmatmul.mubr.f32.gmra.mrb[0].mxu0 %v581
      %v3065 = vpop.f32.mrb[0].mxu0
      %v3066 = vadd.f32 %v564, %v3065
      %v3067 = vpop.f32.mrb[0].mxu0
      %3068 = vmatprep.mubr.f32.mxu0 0.0
      %3069 = vmatmul.mubr.f32.gmra.mrb[0].mxu0 %v584
      %v3070 = vpop.f32.mrb[0].mxu0
      %v3071 = vadd.f32 %v569, %v3070
      %v3072 = vpop.f32.mrb[0].mxu0
      %3073 = vmatprep.mubr.f32.mxu0 0.0
      %3074 = vmatmul.mubr.f32.gmra.mrb[0].mxu0 %v587
      %v3075 = vpop.f32.mrb[0].mxu0
      %v3076 = vadd.f32 %v574, %v3075
      %v3077 = vpop.f32.mrb[0].mxu0
      %3078 = vdwg.mxu0
      %v3079 = vmax.f32 %v3061, 0.0
      %v3080 = vmax.f32 %v3066, 0.0
      %v3081 = vmax.f32 %v3071, 0.0
      %v3082 = vmax.f32 %v3076, 0.0
      %3083 = vmatprep.subr.mxu0 0.0
      %3084 = vmatpush1.msra.mxu0 %v3079
      %3085 = vmatprep.subr.mxu0 0.0
      %3086 = vmatpush1.msra.mxu0 %v3080
      %3087 = vmatprep.subr.mxu0 0.0
      %3088 = vmatpush1.msra.mxu0 %v3081
      %3089 = vmatprep.subr.mxu0 0.0
      %3090 = vmatpush1.msra.mxu0 %v3082
      %3091 = vmatprep.subr.mxu0 0.0
      %3092 = vmatpush1.msra.mxu0 0.0
      %3093 = vmatprep.subr.mxu0 0.0
      %3094 = vmatpush1.msra.mxu0 0.0
      %3095 = vmatprep.subr.mxu0 0.0
      %3096 = vmatpush1.msra.mxu0 0.0
      %3097 = vmatprep.subr.mxu0 0.0
      %3098 = vmatpush1.msra.mxu0 0.0
      %3099 = vmatprep.subr.mxu0 0.0
      %3100 = vmatpush1.msra.mxu0 0.0
      %3101 = vmatprep.subr.mxu0 0.0
      %3102 = vmatpush1.msra.mxu0 0.0
      %3103 = vmatprep.subr.mxu0 0.0
      %3104 = vmatpush1.msra.mxu0 0.0
      %3105 = vmatprep.subr.mxu0 0.0
      %3106 = vmatpush1.msra.mxu0 0.0
      %3107 = vmatprep.subr.mxu0 0.0
      %3108 = vmatpush1.msra.mxu0 0.0
      %3109 = vmatprep.subr.mxu0 0.0
      %3110 = vmatpush1.msra.mxu0 0.0
      %3111 = vmatprep.subr.mxu0 0.0
      %3112 = vmatpush1.msra.mxu0 0.0
      %3113 = vmatprep.subr.mxu0 0.0
      %3114 = vmatpush1.msra.mxu0 0.0
      %3115 = vmatprep.subr.mxu0 0.0
      %3116 = vmatpush1.msra.mxu0 0.0
      %3117 = vmatprep.subr.mxu0 0.0
      %3118 = vmatpush1.msra.mxu0 0.0
      %3119 = vmatprep.subr.mxu0 0.0
      %3120 = vmatpush1.msra.mxu0 0.0
      %3121 = vmatprep.subr.mxu0 0.0
      %3122 = vmatpush1.msra.mxu0 0.0
      %3123 = vmatprep.subr.mxu0 0.0
      %3124 = vmatpush1.msra.mxu0 0.0
      %3125 = vmatprep.subr.mxu0 0.0
      %3126 = vmatpush1.msra.mxu0 0.0
      %3127 = vmatprep.subr.mxu0 0.0
      %3128 = vmatpush1.msra.mxu0 0.0
      %3129 = vmatprep.subr.mxu0 0.0
      %3130 = vmatpush1.msra.mxu0 0.0
      %3131 = vmatprep.subr.mxu0 0.0
      %3132 = vmatpush1.msra.mxu0 0.0
      %3133 = vmatprep.subr.mxu0 0.0
      %3134 = vmatpush1.msra.mxu0 0.0
      %3135 = vmatprep.subr.mxu0 0.0
      %3136 = vmatpush1.msra.mxu0 0.0
      %3137 = vmatprep.subr.mxu0 0.0
      %3138 = vmatpush1.msra.mxu0 0.0
      %3139 = vmatprep.subr.mxu0 0.0
      %3140 = vmatpush1.msra.mxu0 0.0
      %3141 = vmatprep.subr.mxu0 0.0
      %3142 = vmatpush1.msra.mxu0 0.0
      %3143 = vmatprep.subr.mxu0 0.0
      %3144 = vmatpush1.msra.mxu0 0.0
      %3145 = vmatprep.subr.mxu0 0.0
      %3146 = vmatpush1.msra.mxu0 0.0
      %3147 = vmatprep.mubr.f32.mxu0 0.0
      %3148 = vmatmul.mubr.f32.gmra.mrb[0].mxu0 %v736
      %v3149 = vpop.f32.mrb[0].mxu0
      %v3150 = vadd.f32 %v697, %v3149
      %v3151 = vpop.f32.mrb[0].mxu0
      %3152 = vmatprep.mubr.f32.mxu0 0.0
      %3153 = vmatmul.mubr.f32.gmra.mrb[0].mxu0 %v739
      %v3154 = vpop.f32.mrb[0].mxu0
      %v3155 = vadd.f32 %v702, %v3154
      %v3156 = vpop.f32.mrb[0].mxu0
      %3157 = vmatprep.mubr.f32.mxu0 0.0
      %3158 = vmatmul.mubr.f32.gmra.mrb[0].mxu0 %v742
      %v3159 = vpop.f32.mrb[0].mxu0
      %v3160 = vadd.f32 %v707, %v3159
      %v3161 = vpop.f32.mrb[0].mxu0
      %3162 = vmatprep.mubr.f32.mxu0 0.0
      %3163 = vmatmul.mubr.f32.gmra.mrb[0].mxu0 %v745
      %v3164 = vpop.f32.mrb[0].mxu0
      %v3165 = vadd.f32 %v712, %v3164
      %v3166 = vpop.f32.mrb[0].mxu0
      %3167 = vmatprep.mubr.f32.mxu0 0.0
      %3168 = vmatmul.mubr.f32.gmra.mrb[0].mxu0 %v748
      %v3169 = vpop.f32.mrb[0].mxu0
      %v3170 = vadd.f32 %v717, %v3169
      %v3171 = vpop.f32.mrb[0].mxu0
      %3172 = vmatprep.mubr.f32.mxu0 0.0
      %3173 = vmatmul.mubr.f32.gmra.mrb[0].mxu0 %v751
      %v3174 = vpop.f32.mrb[0].mxu0
      %v3175 = vadd.f32 %v722, %v3174
      %v3176 = vpop.f32.mrb[0].mxu0
      %3177 = vmatprep.mubr.f32.mxu0 0.0
      %3178 = vmatmul.mubr.f32.gmra.mrb[0].mxu0 %v754
      %v3179 = vpop.f32.mrb[0].mxu0
      %v3180 = vadd.f32 %v727, %v3179
      %v3181 = vpop.f32.mrb[0].mxu0
      %3182 = vmatprep.mubr.f32.mxu0 0.0
      %3183 = vmatmul.mubr.f32.gmra.mrb[0].mxu0 %v757
      %v3184 = vpop.f32.mrb[0].mxu0
      %v3185 = vadd.f32 %v732, %v3184
      %v3186 = vpop.f32.mrb[0].mxu0
      %3187 = vdwg.mxu0
      %v3188 = vmax.f32 %v3150, 0.0
      %v3189 = vmax.f32 %v3155, 0.0
      %v3190 = vmax.f32 %v3160, 0.0
      %v3191 = vmax.f32 %v3165, 0.0
      %v3192 = vmax.f32 %v3170, 0.0
      %v3193 = vmax.f32 %v3175, 0.0
      %v3194 = vmax.f32 %v3180, 0.0
      %v3195 = vmax.f32 %v3185, 0.0
      %v3196 = vmax.f32 %v2984, %v3188
      %v3197 = vmax.f32 %v2985, %v3189
      %v3198 = vmax.f32 %v2986, %v3190
      %v3199 = vmax.f32 %v2987, %v3191
      %v3200 = vmax.f32 %v2988, %v3192
      %v3201 = vmax.f32 %v2989, %v3193
      %v3202 = vmax.f32 %v2990, %v3194
      %v3203 = vmax.f32 %v2991, %v3195
      %s3204 = scalar_lea.vmem %s526, 96
      %v3205 = vld [vmem:[%s3204] sm:$0xff]
      %3206 = vmatprep.subr.mxu0 0.0
      %3207 = vmatpush1.msra.mxu0 %v3205
      %3208 = vmatprep.subr.mxu0 0.0
      %3209 = vmatpush1.msra.mxu0 0.0
      %3210 = vmatprep.subr.mxu0 0.0
      %3211 = vmatpush1.msra.mxu0 0.0
      %3212 = vmatprep.subr.mxu0 0.0
      %3213 = vmatpush1.msra.mxu0 0.0
      %3214 = vmatprep.subr.mxu0 0.0
      %3215 = vmatpush1.msra.mxu0 0.0
      %3216 = vmatprep.subr.mxu0 0.0
      %3217 = vmatpush1.msra.mxu0 0.0
      %3218 = vmatprep.subr.mxu0 0.0
      %3219 = vmatpush1.msra.mxu0 0.0
      %3220 = vmatprep.subr.mxu0 0.0
      %3221 = vmatpush1.msra.mxu0 0.0
      %3222 = vmatprep.subr.mxu0 0.0
      %3223 = vmatpush1.msra.mxu0 0.0
      %3224 = vmatprep.subr.mxu0 0.0
      %3225 = vmatpush1.msra.mxu0 0.0
      %3226 = vmatprep.subr.mxu0 0.0
      %3227 = vmatpush1.msra.mxu0 0.0
      %3228 = vmatprep.subr.mxu0 0.0
      %3229 = vmatpush1.msra.mxu0 0.0
      %3230 = vmatprep.subr.mxu0 0.0
      %3231 = vmatpush1.msra.mxu0 0.0
      %3232 = vmatprep.subr.mxu0 0.0
      %3233 = vmatpush1.msra.mxu0 0.0
      %3234 = vmatprep.subr.mxu0 0.0
      %3235 = vmatpush1.msra.mxu0 0.0
      %3236 = vmatprep.subr.mxu0 0.0
      %3237 = vmatpush1.msra.mxu0 0.0
      %3238 = vmatprep.subr.mxu0 0.0
      %3239 = vmatpush1.msra.mxu0 0.0
      %3240 = vmatprep.subr.mxu0 0.0
      %3241 = vmatpush1.msra.mxu0 0.0
      %3242 = vmatprep.subr.mxu0 0.0
      %3243 = vmatpush1.msra.mxu0 0.0
      %3244 = vmatprep.subr.mxu0 0.0
      %3245 = vmatpush1.msra.mxu0 0.0
      %3246 = vmatprep.subr.mxu0 0.0
      %3247 = vmatpush1.msra.mxu0 0.0
      %3248 = vmatprep.subr.mxu0 0.0
      %3249 = vmatpush1.msra.mxu0 0.0
      %3250 = vmatprep.subr.mxu0 0.0
      %3251 = vmatpush1.msra.mxu0 0.0
      %3252 = vmatprep.subr.mxu0 0.0
      %3253 = vmatpush1.msra.mxu0 0.0
      %3254 = vmatprep.subr.mxu0 0.0
      %3255 = vmatpush1.msra.mxu0 0.0
      %3256 = vmatprep.subr.mxu0 0.0
      %3257 = vmatpush1.msra.mxu0 0.0
      %3258 = vmatprep.subr.mxu0 0.0
      %3259 = vmatpush1.msra.mxu0 0.0
      %3260 = vmatprep.subr.mxu0 0.0
      %3261 = vmatpush1.msra.mxu0 0.0
      %3262 = vmatprep.subr.mxu0 0.0
      %3263 = vmatpush1.msra.mxu0 0.0
      %3264 = vmatprep.subr.mxu0 0.0
      %3265 = vmatpush1.msra.mxu0 0.0
      %3266 = vmatprep.subr.mxu0 0.0
      %3267 = vmatpush1.msra.mxu0 0.0
      %3268 = vmatprep.subr.mxu0 0.0
      %3269 = vmatpush1.msra.mxu0 0.0
      %3270 = vmatprep.mubr.f32.mxu0 0.0
      %3271 = vmatmul.mubr.f32.gmra.mrb[0].mxu0 %v578
      %v3272 = vpop.f32.mrb[0].mxu0
      %v3273 = vadd.f32 %v559, %v3272
      %v3274 = vpop.f32.mrb[0].mxu0
      %3275 = vmatprep.mubr.f32.mxu0 0.0
      %3276 = vmatmul.mubr.f32.gmra.mrb[0].mxu0 %v581
      %v3277 = vpop.f32.mrb[0].mxu0
      %v3278 = vadd.f32 %v564, %v3277
      %v3279 = vpop.f32.mrb[0].mxu0
      %3280 = vmatprep.mubr.f32.mxu0 0.0
      %3281 = vmatmul.mubr.f32.gmra.mrb[0].mxu0 %v584
      %v3282 = vpop.f32.mrb[0].mxu0
      %v3283 = vadd.f32 %v569, %v3282
      %v3284 = vpop.f32.mrb[0].mxu0
      %3285 = vmatprep.mubr.f32.mxu0 0.0
      %3286 = vmatmul.mubr.f32.gmra.mrb[0].mxu0 %v587
      %v3287 = vpop.f32.mrb[0].mxu0
      %v3288 = vadd.f32 %v574, %v3287
      %v3289 = vpop.f32.mrb[0].mxu0
      %3290 = vdwg.mxu0
      %v3291 = vmax.f32 %v3273, 0.0
      %v3292 = vmax.f32 %v3278, 0.0
      %v3293 = vmax.f32 %v3283, 0.0
      %v3294 = vmax.f32 %v3288, 0.0
      %3295 = vmatprep.subr.mxu0 0.0
      %3296 = vmatpush1.msra.mxu0 %v3291
      %3297 = vmatprep.subr.mxu0 0.0
      %3298 = vmatpush1.msra.mxu0 %v3292
      %3299 = vmatprep.subr.mxu0 0.0
      %3300 = vmatpush1.msra.mxu0 %v3293
      %3301 = vmatprep.subr.mxu0 0.0
      %3302 = vmatpush1.msra.mxu0 %v3294
      %3303 = vmatprep.subr.mxu0 0.0
      %3304 = vmatpush1.msra.mxu0 0.0
      %3305 = vmatprep.subr.mxu0 0.0
      %3306 = vmatpush1.msra.mxu0 0.0
      %3307 = vmatprep.subr.mxu0 0.0
      %3308 = vmatpush1.msra.mxu0 0.0
      %3309 = vmatprep.subr.mxu0 0.0
      %3310 = vmatpush1.msra.mxu0 0.0
      %3311 = vmatprep.subr.mxu0 0.0
      %3312 = vmatpush1.msra.mxu0 0.0
      %3313 = vmatprep.subr.mxu0 0.0
      %3314 = vmatpush1.msra.mxu0 0.0
      %3315 = vmatprep.subr.mxu0 0.0
      %3316 = vmatpush1.msra.mxu0 0.0
      %3317 = vmatprep.subr.mxu0 0.0
      %3318 = vmatpush1.msra.mxu0 0.0
      %3319 = vmatprep.subr.mxu0 0.0
      %3320 = vmatpush1.msra.mxu0 0.0
      %3321 = vmatprep.subr.mxu0 0.0
      %3322 = vmatpush1.msra.mxu0 0.0
      %3323 = vmatprep.subr.mxu0 0.0
      %3324 = vmatpush1.msra.mxu0 0.0
      %3325 = vmatprep.subr.mxu0 0.0
      %3326 = vmatpush1.msra.mxu0 0.0
      %3327 = vmatprep.subr.mxu0 0.0
      %3328 = vmatpush1.msra.mxu0 0.0
      %3329 = vmatprep.subr.mxu0 0.0
      %3330 = vmatpush1.msra.mxu0 0.0
      %3331 = vmatprep.subr.mxu0 0.0
      %3332 = vmatpush1.msra.mxu0 0.0
      %3333 = vmatprep.subr.mxu0 0.0
      %3334 = vmatpush1.msra.mxu0 0.0
      %3335 = vmatprep.subr.mxu0 0.0
      %3336 = vmatpush1.msra.mxu0 0.0
      %3337 = vmatprep.subr.mxu0 0.0
      %3338 = vmatpush1.msra.mxu0 0.0
      %3339 = vmatprep.subr.mxu0 0.0
      %3340 = vmatpush1.msra.mxu0 0.0
      %3341 = vmatprep.subr.mxu0 0.0
      %3342 = vmatpush1.msra.mxu0 0.0
      %3343 = vmatprep.subr.mxu0 0.0
      %3344 = vmatpush1.msra.mxu0 0.0
      %3345 = vmatprep.subr.mxu0 0.0
      %3346 = vmatpush1.msra.mxu0 0.0
      %3347 = vmatprep.subr.mxu0 0.0
      %3348 = vmatpush1.msra.mxu0 0.0
      %3349 = vmatprep.subr.mxu0 0.0
      %3350 = vmatpush1.msra.mxu0 0.0
      %3351 = vmatprep.subr.mxu0 0.0
      %3352 = vmatpush1.msra.mxu0 0.0
      %3353 = vmatprep.subr.mxu0 0.0
      %3354 = vmatpush1.msra.mxu0 0.0
      %3355 = vmatprep.subr.mxu0 0.0
      %3356 = vmatpush1.msra.mxu0 0.0
      %3357 = vmatprep.subr.mxu0 0.0
      %3358 = vmatpush1.msra.mxu0 0.0
      %3359 = vmatprep.mubr.f32.mxu0 0.0
      %3360 = vmatmul.mubr.f32.gmra.mrb[0].mxu0 %v736
      %v3361 = vpop.f32.mrb[0].mxu0
      %v3362 = vadd.f32 %v697, %v3361
      %v3363 = vpop.f32.mrb[0].mxu0
      %3364 = vmatprep.mubr.f32.mxu0 0.0
      %3365 = vmatmul.mubr.f32.gmra.mrb[0].mxu0 %v739
      %v3366 = vpop.f32.mrb[0].mxu0
      %v3367 = vadd.f32 %v702, %v3366
      %v3368 = vpop.f32.mrb[0].mxu0
      %3369 = vmatprep.mubr.f32.mxu0 0.0
      %3370 = vmatmul.mubr.f32.gmra.mrb[0].mxu0 %v742
      %v3371 = vpop.f32.mrb[0].mxu0
      %v3372 = vadd.f32 %v707, %v3371
      %v3373 = vpop.f32.mrb[0].mxu0
      %3374 = vmatprep.mubr.f32.mxu0 0.0
      %3375 = vmatmul.mubr.f32.gmra.mrb[0].mxu0 %v745
      %v3376 = vpop.f32.mrb[0].mxu0
      %v3377 = vadd.f32 %v712, %v3376
      %v3378 = vpop.f32.mrb[0].mxu0
      %3379 = vmatprep.mubr.f32.mxu0 0.0
      %3380 = vmatmul.mubr.f32.gmra.mrb[0].mxu0 %v748
      %v3381 = vpop.f32.mrb[0].mxu0
      %v3382 = vadd.f32 %v717, %v3381
      %v3383 = vpop.f32.mrb[0].mxu0
      %3384 = vmatprep.mubr.f32.mxu0 0.0
      %3385 = vmatmul.mubr.f32.gmra.mrb[0].mxu0 %v751
      %v3386 = vpop.f32.mrb[0].mxu0
      %v3387 = vadd.f32 %v722, %v3386
      %v3388 = vpop.f32.mrb[0].mxu0
      %3389 = vmatprep.mubr.f32.mxu0 0.0
      %3390 = vmatmul.mubr.f32.gmra.mrb[0].mxu0 %v754
      %v3391 = vpop.f32.mrb[0].mxu0
      %v3392 = vadd.f32 %v727, %v3391
      %v3393 = vpop.f32.mrb[0].mxu0
      %3394 = vmatprep.mubr.f32.mxu0 0.0
      %3395 = vmatmul.mubr.f32.gmra.mrb[0].mxu0 %v757
      %v3396 = vpop.f32.mrb[0].mxu0
      %v3397 = vadd.f32 %v732, %v3396
      %v3398 = vpop.f32.mrb[0].mxu0
      %3399 = vdwg.mxu0
      %v3400 = vmax.f32 %v3362, 0.0
      %v3401 = vmax.f32 %v3367, 0.0
      %v3402 = vmax.f32 %v3372, 0.0
      %v3403 = vmax.f32 %v3377, 0.0
      %v3404 = vmax.f32 %v3382, 0.0
      %v3405 = vmax.f32 %v3387, 0.0
      %v3406 = vmax.f32 %v3392, 0.0
      %v3407 = vmax.f32 %v3397, 0.0
      %v3408 = vmax.f32 %v3196, %v3400
      %v3409 = vmax.f32 %v3197, %v3401
      %v3410 = vmax.f32 %v3198, %v3402
      %v3411 = vmax.f32 %v3199, %v3403
      %v3412 = vmax.f32 %v3200, %v3404
      %v3413 = vmax.f32 %v3201, %v3405
      %v3414 = vmax.f32 %v3202, %v3406
      %v3415 = vmax.f32 %v3203, %v3407
      %s3416 = scalar_lea.vmem %s526, 104
      %v3417 = vld [vmem:[%s3416] sm:$0xff]
      %3418 = vmatprep.subr.mxu0 0.0
      %3419 = vmatpush1.msra.mxu0 %v3417
      %3420 = vmatprep.subr.mxu0 0.0
      %3421 = vmatpush1.msra.mxu0 0.0
      %3422 = vmatprep.subr.mxu0 0.0
      %3423 = vmatpush1.msra.mxu0 0.0
      %3424 = vmatprep.subr.mxu0 0.0
      %3425 = vmatpush1.msra.mxu0 0.0
      %3426 = vmatprep.subr.mxu0 0.0
      %3427 = vmatpush1.msra.mxu0 0.0
      %3428 = vmatprep.subr.mxu0 0.0
      %3429 = vmatpush1.msra.mxu0 0.0
      %3430 = vmatprep.subr.mxu0 0.0
      %3431 = vmatpush1.msra.mxu0 0.0
      %3432 = vmatprep.subr.mxu0 0.0
      %3433 = vmatpush1.msra.mxu0 0.0
      %3434 = vmatprep.subr.mxu0 0.0
      %3435 = vmatpush1.msra.mxu0 0.0
      %3436 = vmatprep.subr.mxu0 0.0
      %3437 = vmatpush1.msra.mxu0 0.0
      %3438 = vmatprep.subr.mxu0 0.0
      %3439 = vmatpush1.msra.mxu0 0.0
      %3440 = vmatprep.subr.mxu0 0.0
      %3441 = vmatpush1.msra.mxu0 0.0
      %3442 = vmatprep.subr.mxu0 0.0
      %3443 = vmatpush1.msra.mxu0 0.0
      %3444 = vmatprep.subr.mxu0 0.0
      %3445 = vmatpush1.msra.mxu0 0.0
      %3446 = vmatprep.subr.mxu0 0.0
      %3447 = vmatpush1.msra.mxu0 0.0
      %3448 = vmatprep.subr.mxu0 0.0
      %3449 = vmatpush1.msra.mxu0 0.0
      %3450 = vmatprep.subr.mxu0 0.0
      %3451 = vmatpush1.msra.mxu0 0.0
      %3452 = vmatprep.subr.mxu0 0.0
      %3453 = vmatpush1.msra.mxu0 0.0
      %3454 = vmatprep.subr.mxu0 0.0
      %3455 = vmatpush1.msra.mxu0 0.0
      %3456 = vmatprep.subr.mxu0 0.0
      %3457 = vmatpush1.msra.mxu0 0.0
      %3458 = vmatprep.subr.mxu0 0.0
      %3459 = vmatpush1.msra.mxu0 0.0
      %3460 = vmatprep.subr.mxu0 0.0
      %3461 = vmatpush1.msra.mxu0 0.0
      %3462 = vmatprep.subr.mxu0 0.0
      %3463 = vmatpush1.msra.mxu0 0.0
      %3464 = vmatprep.subr.mxu0 0.0
      %3465 = vmatpush1.msra.mxu0 0.0
      %3466 = vmatprep.subr.mxu0 0.0
      %3467 = vmatpush1.msra.mxu0 0.0
      %3468 = vmatprep.subr.mxu0 0.0
      %3469 = vmatpush1.msra.mxu0 0.0
      %3470 = vmatprep.subr.mxu0 0.0
      %3471 = vmatpush1.msra.mxu0 0.0
      %3472 = vmatprep.subr.mxu0 0.0
      %3473 = vmatpush1.msra.mxu0 0.0
      %3474 = vmatprep.subr.mxu0 0.0
      %3475 = vmatpush1.msra.mxu0 0.0
      %3476 = vmatprep.subr.mxu0 0.0
      %3477 = vmatpush1.msra.mxu0 0.0
      %3478 = vmatprep.subr.mxu0 0.0
      %3479 = vmatpush1.msra.mxu0 0.0
      %3480 = vmatprep.subr.mxu0 0.0
      %3481 = vmatpush1.msra.mxu0 0.0
      %3482 = vmatprep.mubr.f32.mxu0 0.0
      %3483 = vmatmul.mubr.f32.gmra.mrb[0].mxu0 %v578
      %v3484 = vpop.f32.mrb[0].mxu0
      %v3485 = vadd.f32 %v559, %v3484
      %v3486 = vpop.f32.mrb[0].mxu0
      %3487 = vmatprep.mubr.f32.mxu0 0.0
      %3488 = vmatmul.mubr.f32.gmra.mrb[0].mxu0 %v581
      %v3489 = vpop.f32.mrb[0].mxu0
      %v3490 = vadd.f32 %v564, %v3489
      %v3491 = vpop.f32.mrb[0].mxu0
      %3492 = vmatprep.mubr.f32.mxu0 0.0
      %3493 = vmatmul.mubr.f32.gmra.mrb[0].mxu0 %v584
      %v3494 = vpop.f32.mrb[0].mxu0
      %v3495 = vadd.f32 %v569, %v3494
      %v3496 = vpop.f32.mrb[0].mxu0
      %3497 = vmatprep.mubr.f32.mxu0 0.0
      %3498 = vmatmul.mubr.f32.gmra.mrb[0].mxu0 %v587
      %v3499 = vpop.f32.mrb[0].mxu0
      %v3500 = vadd.f32 %v574, %v3499
      %v3501 = vpop.f32.mrb[0].mxu0
      %3502 = vdwg.mxu0
      %v3503 = vmax.f32 %v3485, 0.0
      %v3504 = vmax.f32 %v3490, 0.0
      %v3505 = vmax.f32 %v3495, 0.0
      %v3506 = vmax.f32 %v3500, 0.0
      %3507 = vmatprep.subr.mxu0 0.0
      %3508 = vmatpush1.msra.mxu0 %v3503
      %3509 = vmatprep.subr.mxu0 0.0
      %3510 = vmatpush1.msra.mxu0 %v3504
      %3511 = vmatprep.subr.mxu0 0.0
      %3512 = vmatpush1.msra.mxu0 %v3505
      %3513 = vmatprep.subr.mxu0 0.0
      %3514 = vmatpush1.msra.mxu0 %v3506
      %3515 = vmatprep.subr.mxu0 0.0
      %3516 = vmatpush1.msra.mxu0 0.0
      %3517 = vmatprep.subr.mxu0 0.0
      %3518 = vmatpush1.msra.mxu0 0.0
      %3519 = vmatprep.subr.mxu0 0.0
      %3520 = vmatpush1.msra.mxu0 0.0
      %3521 = vmatprep.subr.mxu0 0.0
      %3522 = vmatpush1.msra.mxu0 0.0
      %3523 = vmatprep.subr.mxu0 0.0
      %3524 = vmatpush1.msra.mxu0 0.0
      %3525 = vmatprep.subr.mxu0 0.0
      %3526 = vmatpush1.msra.mxu0 0.0
      %3527 = vmatprep.subr.mxu0 0.0
      %3528 = vmatpush1.msra.mxu0 0.0
      %3529 = vmatprep.subr.mxu0 0.0
      %3530 = vmatpush1.msra.mxu0 0.0
      %3531 = vmatprep.subr.mxu0 0.0
      %3532 = vmatpush1.msra.mxu0 0.0
      %3533 = vmatprep.subr.mxu0 0.0
      %3534 = vmatpush1.msra.mxu0 0.0
      %3535 = vmatprep.subr.mxu0 0.0
      %3536 = vmatpush1.msra.mxu0 0.0
      %3537 = vmatprep.subr.mxu0 0.0
      %3538 = vmatpush1.msra.mxu0 0.0
      %3539 = vmatprep.subr.mxu0 0.0
      %3540 = vmatpush1.msra.mxu0 0.0
      %3541 = vmatprep.subr.mxu0 0.0
      %3542 = vmatpush1.msra.mxu0 0.0
      %3543 = vmatprep.subr.mxu0 0.0
      %3544 = vmatpush1.msra.mxu0 0.0
      %3545 = vmatprep.subr.mxu0 0.0
      %3546 = vmatpush1.msra.mxu0 0.0
      %3547 = vmatprep.subr.mxu0 0.0
      %3548 = vmatpush1.msra.mxu0 0.0
      %3549 = vmatprep.subr.mxu0 0.0
      %3550 = vmatpush1.msra.mxu0 0.0
      %3551 = vmatprep.subr.mxu0 0.0
      %3552 = vmatpush1.msra.mxu0 0.0
      %3553 = vmatprep.subr.mxu0 0.0
      %3554 = vmatpush1.msra.mxu0 0.0
      %3555 = vmatprep.subr.mxu0 0.0
      %3556 = vmatpush1.msra.mxu0 0.0
      %3557 = vmatprep.subr.mxu0 0.0
      %3558 = vmatpush1.msra.mxu0 0.0
      %3559 = vmatprep.subr.mxu0 0.0
      %3560 = vmatpush1.msra.mxu0 0.0
      %3561 = vmatprep.subr.mxu0 0.0
      %3562 = vmatpush1.msra.mxu0 0.0
      %3563 = vmatprep.subr.mxu0 0.0
      %3564 = vmatpush1.msra.mxu0 0.0
      %3565 = vmatprep.subr.mxu0 0.0
      %3566 = vmatpush1.msra.mxu0 0.0
      %3567 = vmatprep.subr.mxu0 0.0
      %3568 = vmatpush1.msra.mxu0 0.0
      %3569 = vmatprep.subr.mxu0 0.0
      %3570 = vmatpush1.msra.mxu0 0.0
      %3571 = vmatprep.mubr.f32.mxu0 0.0
      %3572 = vmatmul.mubr.f32.gmra.mrb[0].mxu0 %v736
      %v3573 = vpop.f32.mrb[0].mxu0
      %v3574 = vadd.f32 %v697, %v3573
      %v3575 = vpop.f32.mrb[0].mxu0
      %3576 = vmatprep.mubr.f32.mxu0 0.0
      %3577 = vmatmul.mubr.f32.gmra.mrb[0].mxu0 %v739
      %v3578 = vpop.f32.mrb[0].mxu0
      %v3579 = vadd.f32 %v702, %v3578
      %v3580 = vpop.f32.mrb[0].mxu0
      %3581 = vmatprep.mubr.f32.mxu0 0.0
      %3582 = vmatmul.mubr.f32.gmra.mrb[0].mxu0 %v742
      %v3583 = vpop.f32.mrb[0].mxu0
      %v3584 = vadd.f32 %v707, %v3583
      %v3585 = vpop.f32.mrb[0].mxu0
      %3586 = vmatprep.mubr.f32.mxu0 0.0
      %3587 = vmatmul.mubr.f32.gmra.mrb[0].mxu0 %v745
      %v3588 = vpop.f32.mrb[0].mxu0
      %v3589 = vadd.f32 %v712, %v3588
      %v3590 = vpop.f32.mrb[0].mxu0
      %3591 = vmatprep.mubr.f32.mxu0 0.0
      %3592 = vmatmul.mubr.f32.gmra.mrb[0].mxu0 %v748
      %v3593 = vpop.f32.mrb[0].mxu0
      %v3594 = vadd.f32 %v717, %v3593
      %v3595 = vpop.f32.mrb[0].mxu0
      %3596 = vmatprep.mubr.f32.mxu0 0.0
      %3597 = vmatmul.mubr.f32.gmra.mrb[0].mxu0 %v751
      %v3598 = vpop.f32.mrb[0].mxu0
      %v3599 = vadd.f32 %v722, %v3598
      %v3600 = vpop.f32.mrb[0].mxu0
      %3601 = vmatprep.mubr.f32.mxu0 0.0
      %3602 = vmatmul.mubr.f32.gmra.mrb[0].mxu0 %v754
      %v3603 = vpop.f32.mrb[0].mxu0
      %v3604 = vadd.f32 %v727, %v3603
      %v3605 = vpop.f32.mrb[0].mxu0
      %3606 = vmatprep.mubr.f32.mxu0 0.0
      %3607 = vmatmul.mubr.f32.gmra.mrb[0].mxu0 %v757
      %v3608 = vpop.f32.mrb[0].mxu0
      %v3609 = vadd.f32 %v732, %v3608
      %v3610 = vpop.f32.mrb[0].mxu0
      %3611 = vdwg.mxu0
      %v3612 = vmax.f32 %v3574, 0.0
      %v3613 = vmax.f32 %v3579, 0.0
      %v3614 = vmax.f32 %v3584, 0.0
      %v3615 = vmax.f32 %v3589, 0.0
      %v3616 = vmax.f32 %v3594, 0.0
      %v3617 = vmax.f32 %v3599, 0.0
      %v3618 = vmax.f32 %v3604, 0.0
      %v3619 = vmax.f32 %v3609, 0.0
      %v3620 = vmax.f32 %v3408, %v3612
      %v3621 = vmax.f32 %v3409, %v3613
      %v3622 = vmax.f32 %v3410, %v3614
      %v3623 = vmax.f32 %v3411, %v3615
      %v3624 = vmax.f32 %v3412, %v3616
      %v3625 = vmax.f32 %v3413, %v3617
      %v3626 = vmax.f32 %v3414, %v3618
      %v3627 = vmax.f32 %v3415, %v3619
      %s3628 = scalar_lea.vmem %s526, 112
      %v3629 = vld [vmem:[%s3628] sm:$0xff]
      %3630 = vmatprep.subr.mxu0 0.0
      %3631 = vmatpush1.msra.mxu0 %v3629
      %3632 = vmatprep.subr.mxu0 0.0
      %3633 = vmatpush1.msra.mxu0 0.0
      %3634 = vmatprep.subr.mxu0 0.0
      %3635 = vmatpush1.msra.mxu0 0.0
      %3636 = vmatprep.subr.mxu0 0.0
      %3637 = vmatpush1.msra.mxu0 0.0
      %3638 = vmatprep.subr.mxu0 0.0
      %3639 = vmatpush1.msra.mxu0 0.0
      %3640 = vmatprep.subr.mxu0 0.0
      %3641 = vmatpush1.msra.mxu0 0.0
      %3642 = vmatprep.subr.mxu0 0.0
      %3643 = vmatpush1.msra.mxu0 0.0
      %3644 = vmatprep.subr.mxu0 0.0
      %3645 = vmatpush1.msra.mxu0 0.0
      %3646 = vmatprep.subr.mxu0 0.0
      %3647 = vmatpush1.msra.mxu0 0.0
      %3648 = vmatprep.subr.mxu0 0.0
      %3649 = vmatpush1.msra.mxu0 0.0
      %3650 = vmatprep.subr.mxu0 0.0
      %3651 = vmatpush1.msra.mxu0 0.0
      %3652 = vmatprep.subr.mxu0 0.0
      %3653 = vmatpush1.msra.mxu0 0.0
      %3654 = vmatprep.subr.mxu0 0.0
      %3655 = vmatpush1.msra.mxu0 0.0
      %3656 = vmatprep.subr.mxu0 0.0
      %3657 = vmatpush1.msra.mxu0 0.0
      %3658 = vmatprep.subr.mxu0 0.0
      %3659 = vmatpush1.msra.mxu0 0.0
      %3660 = vmatprep.subr.mxu0 0.0
      %3661 = vmatpush1.msra.mxu0 0.0
      %3662 = vmatprep.subr.mxu0 0.0
      %3663 = vmatpush1.msra.mxu0 0.0
      %3664 = vmatprep.subr.mxu0 0.0
      %3665 = vmatpush1.msra.mxu0 0.0
      %3666 = vmatprep.subr.mxu0 0.0
      %3667 = vmatpush1.msra.mxu0 0.0
      %3668 = vmatprep.subr.mxu0 0.0
      %3669 = vmatpush1.msra.mxu0 0.0
      %3670 = vmatprep.subr.mxu0 0.0
      %3671 = vmatpush1.msra.mxu0 0.0
      %3672 = vmatprep.subr.mxu0 0.0
      %3673 = vmatpush1.msra.mxu0 0.0
      %3674 = vmatprep.subr.mxu0 0.0
      %3675 = vmatpush1.msra.mxu0 0.0
      %3676 = vmatprep.subr.mxu0 0.0
      %3677 = vmatpush1.msra.mxu0 0.0
      %3678 = vmatprep.subr.mxu0 0.0
      %3679 = vmatpush1.msra.mxu0 0.0
      %3680 = vmatprep.subr.mxu0 0.0
      %3681 = vmatpush1.msra.mxu0 0.0
      %3682 = vmatprep.subr.mxu0 0.0
      %3683 = vmatpush1.msra.mxu0 0.0
      %3684 = vmatprep.subr.mxu0 0.0
      %3685 = vmatpush1.msra.mxu0 0.0
      %3686 = vmatprep.subr.mxu0 0.0
      %3687 = vmatpush1.msra.mxu0 0.0
      %3688 = vmatprep.subr.mxu0 0.0
      %3689 = vmatpush1.msra.mxu0 0.0
      %3690 = vmatprep.subr.mxu0 0.0
      %3691 = vmatpush1.msra.mxu0 0.0
      %3692 = vmatprep.subr.mxu0 0.0
      %3693 = vmatpush1.msra.mxu0 0.0
      %3694 = vmatprep.mubr.f32.mxu0 0.0
      %3695 = vmatmul.mubr.f32.gmra.mrb[0].mxu0 %v578
      %v3696 = vpop.f32.mrb[0].mxu0
      %v3697 = vadd.f32 %v559, %v3696
      %v3698 = vpop.f32.mrb[0].mxu0
      %3699 = vmatprep.mubr.f32.mxu0 0.0
      %3700 = vmatmul.mubr.f32.gmra.mrb[0].mxu0 %v581
      %v3701 = vpop.f32.mrb[0].mxu0
      %v3702 = vadd.f32 %v564, %v3701
      %v3703 = vpop.f32.mrb[0].mxu0
      %3704 = vmatprep.mubr.f32.mxu0 0.0
      %3705 = vmatmul.mubr.f32.gmra.mrb[0].mxu0 %v584
      %v3706 = vpop.f32.mrb[0].mxu0
      %v3707 = vadd.f32 %v569, %v3706
      %v3708 = vpop.f32.mrb[0].mxu0
      %3709 = vmatprep.mubr.f32.mxu0 0.0
      %3710 = vmatmul.mubr.f32.gmra.mrb[0].mxu0 %v587
      %v3711 = vpop.f32.mrb[0].mxu0
      %v3712 = vadd.f32 %v574, %v3711
      %v3713 = vpop.f32.mrb[0].mxu0
      %3714 = vdwg.mxu0
      %v3715 = vmax.f32 %v3697, 0.0
      %v3716 = vmax.f32 %v3702, 0.0
      %v3717 = vmax.f32 %v3707, 0.0
      %v3718 = vmax.f32 %v3712, 0.0
      %3719 = vmatprep.subr.mxu0 0.0
      %3720 = vmatpush1.msra.mxu0 %v3715
      %3721 = vmatprep.subr.mxu0 0.0
      %3722 = vmatpush1.msra.mxu0 %v3716
      %3723 = vmatprep.subr.mxu0 0.0
      %3724 = vmatpush1.msra.mxu0 %v3717
      %3725 = vmatprep.subr.mxu0 0.0
      %3726 = vmatpush1.msra.mxu0 %v3718
      %3727 = vmatprep.subr.mxu0 0.0
      %3728 = vmatpush1.msra.mxu0 0.0
      %3729 = vmatprep.subr.mxu0 0.0
      %3730 = vmatpush1.msra.mxu0 0.0
      %3731 = vmatprep.subr.mxu0 0.0
      %3732 = vmatpush1.msra.mxu0 0.0
      %3733 = vmatprep.subr.mxu0 0.0
      %3734 = vmatpush1.msra.mxu0 0.0
      %3735 = vmatprep.subr.mxu0 0.0
      %3736 = vmatpush1.msra.mxu0 0.0
      %3737 = vmatprep.subr.mxu0 0.0
      %3738 = vmatpush1.msra.mxu0 0.0
      %3739 = vmatprep.subr.mxu0 0.0
      %3740 = vmatpush1.msra.mxu0 0.0
      %3741 = vmatprep.subr.mxu0 0.0
      %3742 = vmatpush1.msra.mxu0 0.0
      %3743 = vmatprep.subr.mxu0 0.0
      %3744 = vmatpush1.msra.mxu0 0.0
      %3745 = vmatprep.subr.mxu0 0.0
      %3746 = vmatpush1.msra.mxu0 0.0
      %3747 = vmatprep.subr.mxu0 0.0
      %3748 = vmatpush1.msra.mxu0 0.0
      %3749 = vmatprep.subr.mxu0 0.0
      %3750 = vmatpush1.msra.mxu0 0.0
      %3751 = vmatprep.subr.mxu0 0.0
      %3752 = vmatpush1.msra.mxu0 0.0
      %3753 = vmatprep.subr.mxu0 0.0
      %3754 = vmatpush1.msra.mxu0 0.0
      %3755 = vmatprep.subr.mxu0 0.0
      %3756 = vmatpush1.msra.mxu0 0.0
      %3757 = vmatprep.subr.mxu0 0.0
      %3758 = vmatpush1.msra.mxu0 0.0
      %3759 = vmatprep.subr.mxu0 0.0
      %3760 = vmatpush1.msra.mxu0 0.0
      %3761 = vmatprep.subr.mxu0 0.0
      %3762 = vmatpush1.msra.mxu0 0.0
      %3763 = vmatprep.subr.mxu0 0.0
      %3764 = vmatpush1.msra.mxu0 0.0
      %3765 = vmatprep.subr.mxu0 0.0
      %3766 = vmatpush1.msra.mxu0 0.0
      %3767 = vmatprep.subr.mxu0 0.0
      %3768 = vmatpush1.msra.mxu0 0.0
      %3769 = vmatprep.subr.mxu0 0.0
      %3770 = vmatpush1.msra.mxu0 0.0
      %3771 = vmatprep.subr.mxu0 0.0
      %3772 = vmatpush1.msra.mxu0 0.0
      %3773 = vmatprep.subr.mxu0 0.0
      %3774 = vmatpush1.msra.mxu0 0.0
      %3775 = vmatprep.subr.mxu0 0.0
      %3776 = vmatpush1.msra.mxu0 0.0
      %3777 = vmatprep.subr.mxu0 0.0
      %3778 = vmatpush1.msra.mxu0 0.0
      %3779 = vmatprep.subr.mxu0 0.0
      %3780 = vmatpush1.msra.mxu0 0.0
      %3781 = vmatprep.subr.mxu0 0.0
      %3782 = vmatpush1.msra.mxu0 0.0
      %3783 = vmatprep.mubr.f32.mxu0 0.0
      %3784 = vmatmul.mubr.f32.gmra.mrb[0].mxu0 %v736
      %v3785 = vpop.f32.mrb[0].mxu0
      %v3786 = vadd.f32 %v697, %v3785
      %v3787 = vpop.f32.mrb[0].mxu0
      %3788 = vmatprep.mubr.f32.mxu0 0.0
      %3789 = vmatmul.mubr.f32.gmra.mrb[0].mxu0 %v739
      %v3790 = vpop.f32.mrb[0].mxu0
      %v3791 = vadd.f32 %v702, %v3790
      %v3792 = vpop.f32.mrb[0].mxu0
      %3793 = vmatprep.mubr.f32.mxu0 0.0
      %3794 = vmatmul.mubr.f32.gmra.mrb[0].mxu0 %v742
      %v3795 = vpop.f32.mrb[0].mxu0
      %v3796 = vadd.f32 %v707, %v3795
      %v3797 = vpop.f32.mrb[0].mxu0
      %3798 = vmatprep.mubr.f32.mxu0 0.0
      %3799 = vmatmul.mubr.f32.gmra.mrb[0].mxu0 %v745
      %v3800 = vpop.f32.mrb[0].mxu0
      %v3801 = vadd.f32 %v712, %v3800
      %v3802 = vpop.f32.mrb[0].mxu0
      %3803 = vmatprep.mubr.f32.mxu0 0.0
      %3804 = vmatmul.mubr.f32.gmra.mrb[0].mxu0 %v748
      %v3805 = vpop.f32.mrb[0].mxu0
      %v3806 = vadd.f32 %v717, %v3805
      %v3807 = vpop.f32.mrb[0].mxu0
      %3808 = vmatprep.mubr.f32.mxu0 0.0
      %3809 = vmatmul.mubr.f32.gmra.mrb[0].mxu0 %v751
      %v3810 = vpop.f32.mrb[0].mxu0
      %v3811 = vadd.f32 %v722, %v3810
      %v3812 = vpop.f32.mrb[0].mxu0
      %3813 = vmatprep.mubr.f32.mxu0 0.0
      %3814 = vmatmul.mubr.f32.gmra.mrb[0].mxu0 %v754
      %v3815 = vpop.f32.mrb[0].mxu0
      %v3816 = vadd.f32 %v727, %v3815
      %v3817 = vpop.f32.mrb[0].mxu0
      %3818 = vmatprep.mubr.f32.mxu0 0.0
      %3819 = vmatmul.mubr.f32.gmra.mrb[0].mxu0 %v757
      %v3820 = vpop.f32.mrb[0].mxu0
      %v3821 = vadd.f32 %v732, %v3820
      %v3822 = vpop.f32.mrb[0].mxu0
      %3823 = vdwg.mxu0
      %v3824 = vmax.f32 %v3786, 0.0
      %v3825 = vmax.f32 %v3791, 0.0
      %v3826 = vmax.f32 %v3796, 0.0
      %v3827 = vmax.f32 %v3801, 0.0
      %v3828 = vmax.f32 %v3806, 0.0
      %v3829 = vmax.f32 %v3811, 0.0
      %v3830 = vmax.f32 %v3816, 0.0
      %v3831 = vmax.f32 %v3821, 0.0
      %v3832 = vmax.f32 %v3620, %v3824
      %v3833 = vmax.f32 %v3621, %v3825
      %v3834 = vmax.f32 %v3622, %v3826
      %v3835 = vmax.f32 %v3623, %v3827
      %v3836 = vmax.f32 %v3624, %v3828
      %v3837 = vmax.f32 %v3625, %v3829
      %v3838 = vmax.f32 %v3626, %v3830
      %v3839 = vmax.f32 %v3627, %v3831
      %s3840 = scalar_lea.vmem %s526, 120
      %v3841 = vld [vmem:[%s3840] sm:$0xff]
      %3842 = vmatprep.subr.mxu0 0.0
      %3843 = vmatpush1.msra.mxu0 %v3841
      %3844 = vmatprep.subr.mxu0 0.0
      %3845 = vmatpush1.msra.mxu0 0.0
      %3846 = vmatprep.subr.mxu0 0.0
      %3847 = vmatpush1.msra.mxu0 0.0
      %3848 = vmatprep.subr.mxu0 0.0
      %3849 = vmatpush1.msra.mxu0 0.0
      %3850 = vmatprep.subr.mxu0 0.0
      %3851 = vmatpush1.msra.mxu0 0.0
      %3852 = vmatprep.subr.mxu0 0.0
      %3853 = vmatpush1.msra.mxu0 0.0
      %3854 = vmatprep.subr.mxu0 0.0
      %3855 = vmatpush1.msra.mxu0 0.0
      %3856 = vmatprep.subr.mxu0 0.0
      %3857 = vmatpush1.msra.mxu0 0.0
      %3858 = vmatprep.subr.mxu0 0.0
      %3859 = vmatpush1.msra.mxu0 0.0
      %3860 = vmatprep.subr.mxu0 0.0
      %3861 = vmatpush1.msra.mxu0 0.0
      %3862 = vmatprep.subr.mxu0 0.0
      %3863 = vmatpush1.msra.mxu0 0.0
      %3864 = vmatprep.subr.mxu0 0.0
      %3865 = vmatpush1.msra.mxu0 0.0
      %3866 = vmatprep.subr.mxu0 0.0
      %3867 = vmatpush1.msra.mxu0 0.0
      %3868 = vmatprep.subr.mxu0 0.0
      %3869 = vmatpush1.msra.mxu0 0.0
      %3870 = vmatprep.subr.mxu0 0.0
      %3871 = vmatpush1.msra.mxu0 0.0
      %3872 = vmatprep.subr.mxu0 0.0
      %3873 = vmatpush1.msra.mxu0 0.0
      %3874 = vmatprep.subr.mxu0 0.0
      %3875 = vmatpush1.msra.mxu0 0.0
      %3876 = vmatprep.subr.mxu0 0.0
      %3877 = vmatpush1.msra.mxu0 0.0
      %3878 = vmatprep.subr.mxu0 0.0
      %3879 = vmatpush1.msra.mxu0 0.0
      %3880 = vmatprep.subr.mxu0 0.0
      %3881 = vmatpush1.msra.mxu0 0.0
      %3882 = vmatprep.subr.mxu0 0.0
      %3883 = vmatpush1.msra.mxu0 0.0
      %3884 = vmatprep.subr.mxu0 0.0
      %3885 = vmatpush1.msra.mxu0 0.0
      %3886 = vmatprep.subr.mxu0 0.0
      %3887 = vmatpush1.msra.mxu0 0.0
      %3888 = vmatprep.subr.mxu0 0.0
      %3889 = vmatpush1.msra.mxu0 0.0
      %3890 = vmatprep.subr.mxu0 0.0
      %3891 = vmatpush1.msra.mxu0 0.0
      %3892 = vmatprep.subr.mxu0 0.0
      %3893 = vmatpush1.msra.mxu0 0.0
      %3894 = vmatprep.subr.mxu0 0.0
      %3895 = vmatpush1.msra.mxu0 0.0
      %3896 = vmatprep.subr.mxu0 0.0
      %3897 = vmatpush1.msra.mxu0 0.0
      %3898 = vmatprep.subr.mxu0 0.0
      %3899 = vmatpush1.msra.mxu0 0.0
      %3900 = vmatprep.subr.mxu0 0.0
      %3901 = vmatpush1.msra.mxu0 0.0
      %3902 = vmatprep.subr.mxu0 0.0
      %3903 = vmatpush1.msra.mxu0 0.0
      %3904 = vmatprep.subr.mxu0 0.0
      %3905 = vmatpush1.msra.mxu0 0.0
      %3906 = vmatprep.mubr.f32.mxu0 0.0
      %3907 = vmatmul.mubr.f32.gmra.mrb[0].mxu0 %v578
      %v3908 = vpop.f32.mrb[0].mxu0
      %v3909 = vadd.f32 %v559, %v3908
      %v3910 = vpop.f32.mrb[0].mxu0
      %3911 = vmatprep.mubr.f32.mxu0 0.0
      %3912 = vmatmul.mubr.f32.gmra.mrb[0].mxu0 %v581
      %v3913 = vpop.f32.mrb[0].mxu0
      %v3914 = vadd.f32 %v564, %v3913
      %v3915 = vpop.f32.mrb[0].mxu0
      %3916 = vmatprep.mubr.f32.mxu0 0.0
      %3917 = vmatmul.mubr.f32.gmra.mrb[0].mxu0 %v584
      %v3918 = vpop.f32.mrb[0].mxu0
      %v3919 = vadd.f32 %v569, %v3918
      %v3920 = vpop.f32.mrb[0].mxu0
      %3921 = vmatprep.mubr.f32.mxu0 0.0
      %3922 = vmatmul.mubr.f32.gmra.mrb[0].mxu0 %v587
      %v3923 = vpop.f32.mrb[0].mxu0
      %v3924 = vadd.f32 %v574, %v3923
      %v3925 = vpop.f32.mrb[0].mxu0
      %3926 = vdwg.mxu0
      %v3927 = vmax.f32 %v3909, 0.0
      %v3928 = vmax.f32 %v3914, 0.0
      %v3929 = vmax.f32 %v3919, 0.0
      %v3930 = vmax.f32 %v3924, 0.0
      %3931 = vmatprep.subr.mxu0 0.0
      %3932 = vmatpush1.msra.mxu0 %v3927
      %3933 = vmatprep.subr.mxu0 0.0
      %3934 = vmatpush1.msra.mxu0 %v3928
      %3935 = vmatprep.subr.mxu0 0.0
      %3936 = vmatpush1.msra.mxu0 %v3929
      %3937 = vmatprep.subr.mxu0 0.0
      %3938 = vmatpush1.msra.mxu0 %v3930
      %3939 = vmatprep.subr.mxu0 0.0
      %3940 = vmatpush1.msra.mxu0 0.0
      %3941 = vmatprep.subr.mxu0 0.0
      %3942 = vmatpush1.msra.mxu0 0.0
      %3943 = vmatprep.subr.mxu0 0.0
      %3944 = vmatpush1.msra.mxu0 0.0
      %3945 = vmatprep.subr.mxu0 0.0
      %3946 = vmatpush1.msra.mxu0 0.0
      %3947 = vmatprep.subr.mxu0 0.0
      %3948 = vmatpush1.msra.mxu0 0.0
      %3949 = vmatprep.subr.mxu0 0.0
      %3950 = vmatpush1.msra.mxu0 0.0
      %3951 = vmatprep.subr.mxu0 0.0
      %3952 = vmatpush1.msra.mxu0 0.0
      %3953 = vmatprep.subr.mxu0 0.0
      %3954 = vmatpush1.msra.mxu0 0.0
      %3955 = vmatprep.subr.mxu0 0.0
      %3956 = vmatpush1.msra.mxu0 0.0
      %3957 = vmatprep.subr.mxu0 0.0
      %3958 = vmatpush1.msra.mxu0 0.0
      %3959 = vmatprep.subr.mxu0 0.0
      %3960 = vmatpush1.msra.mxu0 0.0
      %3961 = vmatprep.subr.mxu0 0.0
      %3962 = vmatpush1.msra.mxu0 0.0
      %3963 = vmatprep.subr.mxu0 0.0
      %3964 = vmatpush1.msra.mxu0 0.0
      %3965 = vmatprep.subr.mxu0 0.0
      %3966 = vmatpush1.msra.mxu0 0.0
      %3967 = vmatprep.subr.mxu0 0.0
      %3968 = vmatpush1.msra.mxu0 0.0
      %3969 = vmatprep.subr.mxu0 0.0
      %3970 = vmatpush1.msra.mxu0 0.0
      %3971 = vmatprep.subr.mxu0 0.0
      %3972 = vmatpush1.msra.mxu0 0.0
      %3973 = vmatprep.subr.mxu0 0.0
      %3974 = vmatpush1.msra.mxu0 0.0
      %3975 = vmatprep.subr.mxu0 0.0
      %3976 = vmatpush1.msra.mxu0 0.0
      %3977 = vmatprep.subr.mxu0 0.0
      %3978 = vmatpush1.msra.mxu0 0.0
      %3979 = vmatprep.subr.mxu0 0.0
      %3980 = vmatpush1.msra.mxu0 0.0
      %3981 = vmatprep.subr.mxu0 0.0
      %3982 = vmatpush1.msra.mxu0 0.0
      %3983 = vmatprep.subr.mxu0 0.0
      %3984 = vmatpush1.msra.mxu0 0.0
      %3985 = vmatprep.subr.mxu0 0.0
      %3986 = vmatpush1.msra.mxu0 0.0
      %3987 = vmatprep.subr.mxu0 0.0
      %3988 = vmatpush1.msra.mxu0 0.0
      %3989 = vmatprep.subr.mxu0 0.0
      %3990 = vmatpush1.msra.mxu0 0.0
      %3991 = vmatprep.subr.mxu0 0.0
      %3992 = vmatpush1.msra.mxu0 0.0
      %3993 = vmatprep.subr.mxu0 0.0
      %3994 = vmatpush1.msra.mxu0 0.0
      %3995 = vmatprep.mubr.f32.mxu0 0.0
      %3996 = vmatmul.mubr.f32.gmra.mrb[0].mxu0 %v736
      %v3997 = vpop.f32.mrb[0].mxu0
      %v3998 = vadd.f32 %v697, %v3997
      %v3999 = vpop.f32.mrb[0].mxu0
      %4000 = vmatprep.mubr.f32.mxu0 0.0
      %4001 = vmatmul.mubr.f32.gmra.mrb[0].mxu0 %v739
      %v4002 = vpop.f32.mrb[0].mxu0
      %v4003 = vadd.f32 %v702, %v4002
      %v4004 = vpop.f32.mrb[0].mxu0
      %4005 = vmatprep.mubr.f32.mxu0 0.0
      %4006 = vmatmul.mubr.f32.gmra.mrb[0].mxu0 %v742
      %v4007 = vpop.f32.mrb[0].mxu0
      %v4008 = vadd.f32 %v707, %v4007
      %v4009 = vpop.f32.mrb[0].mxu0
      %4010 = vmatprep.mubr.f32.mxu0 0.0
      %4011 = vmatmul.mubr.f32.gmra.mrb[0].mxu0 %v745
      %v4012 = vpop.f32.mrb[0].mxu0
      %v4013 = vadd.f32 %v712, %v4012
      %v4014 = vpop.f32.mrb[0].mxu0
      %4015 = vmatprep.mubr.f32.mxu0 0.0
      %4016 = vmatmul.mubr.f32.gmra.mrb[0].mxu0 %v748
      %v4017 = vpop.f32.mrb[0].mxu0
      %v4018 = vadd.f32 %v717, %v4017
      %v4019 = vpop.f32.mrb[0].mxu0
      %4020 = vmatprep.mubr.f32.mxu0 0.0
      %4021 = vmatmul.mubr.f32.gmra.mrb[0].mxu0 %v751
      %v4022 = vpop.f32.mrb[0].mxu0
      %v4023 = vadd.f32 %v722, %v4022
      %v4024 = vpop.f32.mrb[0].mxu0
      %4025 = vmatprep.mubr.f32.mxu0 0.0
      %4026 = vmatmul.mubr.f32.gmra.mrb[0].mxu0 %v754
      %v4027 = vpop.f32.mrb[0].mxu0
      %v4028 = vadd.f32 %v727, %v4027
      %v4029 = vpop.f32.mrb[0].mxu0
      %4030 = vmatprep.mubr.f32.mxu0 0.0
      %4031 = vmatmul.mubr.f32.gmra.mrb[0].mxu0 %v757
      %v4032 = vpop.f32.mrb[0].mxu0
      %v4033 = vadd.f32 %v732, %v4032
      %v4034 = vpop.f32.mrb[0].mxu0
      %4035 = vdwg.mxu0
      %v4036 = vmax.f32 %v3998, 0.0
      %v4037 = vmax.f32 %v4003, 0.0
      %v4038 = vmax.f32 %v4008, 0.0
      %v4039 = vmax.f32 %v4013, 0.0
      %v4040 = vmax.f32 %v4018, 0.0
      %v4041 = vmax.f32 %v4023, 0.0
      %v4042 = vmax.f32 %v4028, 0.0
      %v4043 = vmax.f32 %v4033, 0.0
      %v4044 = vmax.f32 %v3832, %v4036
      %v4045 = vmax.f32 %v3833, %v4037
      %v4046 = vmax.f32 %v3834, %v4038
      %v4047 = vmax.f32 %v3835, %v4039
      %v4048 = vmax.f32 %v3836, %v4040
      %v4049 = vmax.f32 %v3837, %v4041
      %v4050 = vmax.f32 %v3838, %v4042
      %v4051 = vmax.f32 %v3839, %v4043
      %v4052 = vld [vmem:[%s7] sm:$0xff]
      %v4053 = vld [vmem:[%s7 + $0x8] sm:$0xff]
      %v4054 = vld [vmem:[%s7 + $0x10] sm:$0xff]
      %v4055 = vld [vmem:[%s7 + $0x18] sm:$0xff]
      %v4056 = vld [vmem:[%s7 + $0x20] sm:$0xff]
      %v4057 = vld [vmem:[%s7 + $0x28] sm:$0xff]
      %v4058 = vld [vmem:[%s7 + $0x30] sm:$0xff]
      %v4059 = vld [vmem:[%s7 + $0x38] sm:$0xff]
      %v4060 = vld [vmem:[%s7 + $0x40] sm:$0xff]
      %v4061 = vld [vmem:[%s7 + $0x48] sm:$0xff]
      %v4062 = vld [vmem:[%s7 + $0x50] sm:$0xff]
      %v4063 = vld [vmem:[%s7 + $0x58] sm:$0xff]
      %v4064 = vld [vmem:[%s7 + $0x60] sm:$0xff]
      %v4065 = vld [vmem:[%s7 + $0x68] sm:$0xff]
      %v4066 = vld [vmem:[%s7 + $0x70] sm:$0xff]
      %v4067 = vld [vmem:[%s7 + $0x78] sm:$0xff]
      %v4068 = vld [vmem:[%s7 + $0x80] sm:$0xff]
      %v4069 = vld [vmem:[%s7 + $0x88] sm:$0xff]
      %v4070 = vld [vmem:[%s7 + $0x90] sm:$0xff]
      %v4071 = vld [vmem:[%s7 + $0x98] sm:$0xff]
      %v4072 = vld [vmem:[%s7 + $0xa0] sm:$0xff]
      %v4073 = vld [vmem:[%s7 + $0xa8] sm:$0xff]
      %v4074 = vld [vmem:[%s7 + $0xb0] sm:$0xff]
      %v4075 = vld [vmem:[%s7 + $0xb8] sm:$0xff]
      %v4076 = vld [vmem:[%s7 + $0xc0] sm:$0xff]
      %v4077 = vld [vmem:[%s7 + $0xc8] sm:$0xff]
      %v4078 = vld [vmem:[%s7 + $0xd0] sm:$0xff]
      %v4079 = vld [vmem:[%s7 + $0xd8] sm:$0xff]
      %v4080 = vld [vmem:[%s7 + $0xe0] sm:$0xff]
      %v4081 = vld [vmem:[%s7 + $0xe8] sm:$0xff]
      %v4082 = vld [vmem:[%s7 + $0xf0] sm:$0xff]
      %v4083 = vld [vmem:[%s7 + $0xf8] sm:$0xff]
      %v4084 = vld [vmem:[%s538] sm:$0xff]
      %v4085 = vld [vmem:[%s538 + $0x8] sm:$0xff]
      %v4086 = vld [vmem:[%s538 + $0x10] sm:$0xff]
      %v4087 = vld [vmem:[%s538 + $0x18] sm:$0xff]
      %v4088 = vld [vmem:[%s538 + $0x20] sm:$0xff]
      %v4089 = vld [vmem:[%s538 + $0x28] sm:$0xff]
      %v4090 = vld [vmem:[%s538 + $0x30] sm:$0xff]
      %v4091 = vld [vmem:[%s538 + $0x38] sm:$0xff]
      %v4092 = vld [vmem:[%s538 + $0x40] sm:$0xff]
      %v4093 = vld [vmem:[%s538 + $0x48] sm:$0xff]
      %v4094 = vld [vmem:[%s538 + $0x50] sm:$0xff]
      %v4095 = vld [vmem:[%s538 + $0x58] sm:$0xff]
      %v4096 = vld [vmem:[%s538 + $0x60] sm:$0xff]
      %v4097 = vld [vmem:[%s538 + $0x68] sm:$0xff]
      %v4098 = vld [vmem:[%s538 + $0x70] sm:$0xff]
      %v4099 = vld [vmem:[%s538 + $0x78] sm:$0xff]
      %v4100 = vld [vmem:[%s538 + $0x80] sm:$0xff]
      %v4101 = vld [vmem:[%s538 + $0x88] sm:$0xff]
      %v4102 = vld [vmem:[%s538 + $0x90] sm:$0xff]
      %v4103 = vld [vmem:[%s538 + $0x98] sm:$0xff]
      %v4104 = vld [vmem:[%s538 + $0xa0] sm:$0xff]
      %v4105 = vld [vmem:[%s538 + $0xa8] sm:$0xff]
      %v4106 = vld [vmem:[%s538 + $0xb0] sm:$0xff]
      %v4107 = vld [vmem:[%s538 + $0xb8] sm:$0xff]
      %v4108 = vld [vmem:[%s538 + $0xc0] sm:$0xff]
      %v4109 = vld [vmem:[%s538 + $0xc8] sm:$0xff]
      %v4110 = vld [vmem:[%s538 + $0xd0] sm:$0xff]
      %v4111 = vld [vmem:[%s538 + $0xd8] sm:$0xff]
      %v4112 = vld [vmem:[%s538 + $0xe0] sm:$0xff]
      %v4113 = vld [vmem:[%s538 + $0xe8] sm:$0xff]
      %v4114 = vld [vmem:[%s538 + $0xf0] sm:$0xff]
      %v4115 = vld [vmem:[%s538 + $0xf8] sm:$0xff]
      %4117 = vset.pattern.permute.xlu0 0
      %4118 = vperm.xlu0 %4117, %v4084
      %v4119 = vpop.permute.xlu0 %4118
      %4122 = vset.pattern.permute.xlu0 0
      %4123 = vperm.xlu0 %4122, %v4085
      %v4124 = vpop.permute.xlu0 %4123
      %4127 = vset.pattern.permute.xlu0 0
      %4128 = vperm.xlu0 %4127, %v4086
      %v4129 = vpop.permute.xlu0 %4128
      %4132 = vset.pattern.permute.xlu0 0
      %4133 = vperm.xlu0 %4132, %v4087
      %v4134 = vpop.permute.xlu0 %4133
      %4137 = vset.pattern.permute.xlu0 0
      %4138 = vperm.xlu0 %4137, %v4088
      %v4139 = vpop.permute.xlu0 %4138
      %4142 = vset.pattern.permute.xlu0 0
      %4143 = vperm.xlu0 %4142, %v4089
      %v4144 = vpop.permute.xlu0 %4143
      %4147 = vset.pattern.permute.xlu0 0
      %4148 = vperm.xlu0 %4147, %v4090
      %v4149 = vpop.permute.xlu0 %4148
      %4152 = vset.pattern.permute.xlu0 0
      %4153 = vperm.xlu0 %4152, %v4091
      %v4154 = vpop.permute.xlu0 %4153
      %4157 = vset.pattern.permute.xlu0 0
      %4158 = vperm.xlu0 %4157, %v4092
      %v4159 = vpop.permute.xlu0 %4158
      %4162 = vset.pattern.permute.xlu0 0
      %4163 = vperm.xlu0 %4162, %v4093
      %v4164 = vpop.permute.xlu0 %4163
      %4167 = vset.pattern.permute.xlu0 0
      %4168 = vperm.xlu0 %4167, %v4094
      %v4169 = vpop.permute.xlu0 %4168
      %4172 = vset.pattern.permute.xlu0 0
      %4173 = vperm.xlu0 %4172, %v4095
      %v4174 = vpop.permute.xlu0 %4173
      %4177 = vset.pattern.permute.xlu0 0
      %4178 = vperm.xlu0 %4177, %v4096
      %v4179 = vpop.permute.xlu0 %4178
      %4182 = vset.pattern.permute.xlu0 0
      %4183 = vperm.xlu0 %4182, %v4097
      %v4184 = vpop.permute.xlu0 %4183
      %4187 = vset.pattern.permute.xlu0 0
      %4188 = vperm.xlu0 %4187, %v4098
      %v4189 = vpop.permute.xlu0 %4188
      %4192 = vset.pattern.permute.xlu0 0
      %4193 = vperm.xlu0 %4192, %v4099
      %v4194 = vpop.permute.xlu0 %4193
      %4197 = vset.pattern.permute.xlu0 0
      %4198 = vperm.xlu0 %4197, %v4100
      %v4199 = vpop.permute.xlu0 %4198
      %4202 = vset.pattern.permute.xlu0 0
      %4203 = vperm.xlu0 %4202, %v4101
      %v4204 = vpop.permute.xlu0 %4203
      %4207 = vset.pattern.permute.xlu0 0
      %4208 = vperm.xlu0 %4207, %v4102
      %v4209 = vpop.permute.xlu0 %4208
      %4212 = vset.pattern.permute.xlu0 0
      %4213 = vperm.xlu0 %4212, %v4103
      %v4214 = vpop.permute.xlu0 %4213
      %4217 = vset.pattern.permute.xlu0 0
      %4218 = vperm.xlu0 %4217, %v4104
      %v4219 = vpop.permute.xlu0 %4218
      %4222 = vset.pattern.permute.xlu0 0
      %4223 = vperm.xlu0 %4222, %v4105
      %v4224 = vpop.permute.xlu0 %4223
      %4227 = vset.pattern.permute.xlu0 0
      %4228 = vperm.xlu0 %4227, %v4106
      %v4229 = vpop.permute.xlu0 %4228
      %4232 = vset.pattern.permute.xlu0 0
      %4233 = vperm.xlu0 %4232, %v4107
      %v4234 = vpop.permute.xlu0 %4233
      %4237 = vset.pattern.permute.xlu0 0
      %4238 = vperm.xlu0 %4237, %v4108
      %v4239 = vpop.permute.xlu0 %4238
      %4242 = vset.pattern.permute.xlu0 0
      %4243 = vperm.xlu0 %4242, %v4109
      %v4244 = vpop.permute.xlu0 %4243
      %4247 = vset.pattern.permute.xlu0 0
      %4248 = vperm.xlu0 %4247, %v4110
      %v4249 = vpop.permute.xlu0 %4248
      %4252 = vset.pattern.permute.xlu0 0
      %4253 = vperm.xlu0 %4252, %v4111
      %v4254 = vpop.permute.xlu0 %4253
      %4257 = vset.pattern.permute.xlu0 0
      %4258 = vperm.xlu0 %4257, %v4112
      %v4259 = vpop.permute.xlu0 %4258
      %4262 = vset.pattern.permute.xlu0 0
      %4263 = vperm.xlu0 %4262, %v4113
      %v4264 = vpop.permute.xlu0 %4263
      %4267 = vset.pattern.permute.xlu0 0
      %4268 = vperm.xlu0 %4267, %v4114
      %v4269 = vpop.permute.xlu0 %4268
      %4272 = vset.pattern.permute.xlu0 0
      %4273 = vperm.xlu0 %4272, %v4115
      %v4274 = vpop.permute.xlu0 %4273
      %vm4276 = vcmask 523264
      %v4278 = vsel %vm4276, %v4052, 0
      %v4281 = vsel %vm4276, %v4053, 0
      %v4284 = vsel %vm4276, %v4054, 0
      %v4287 = vsel %vm4276, %v4055, 0
      %v4290 = vsel %vm4276, %v4056, 0
      %v4293 = vsel %vm4276, %v4057, 0
      %v4296 = vsel %vm4276, %v4058, 0
      %v4299 = vsel %vm4276, %v4059, 0
      %v4302 = vsel %vm4276, %v4060, 0
      %v4305 = vsel %vm4276, %v4061, 0
      %v4308 = vsel %vm4276, %v4062, 0
      %v4311 = vsel %vm4276, %v4063, 0
      %v4314 = vsel %vm4276, %v4064, 0
      %v4317 = vsel %vm4276, %v4065, 0
      %v4320 = vsel %vm4276, %v4066, 0
      %v4323 = vsel %vm4276, %v4067, 0
      %v4326 = vsel %vm4276, %v4068, 0
      %v4329 = vsel %vm4276, %v4069, 0
      %v4332 = vsel %vm4276, %v4070, 0
      %v4335 = vsel %vm4276, %v4071, 0
      %v4338 = vsel %vm4276, %v4072, 0
      %v4341 = vsel %vm4276, %v4073, 0
      %v4344 = vsel %vm4276, %v4074, 0
      %v4347 = vsel %vm4276, %v4075, 0
      %v4350 = vsel %vm4276, %v4076, 0
      %v4353 = vsel %vm4276, %v4077, 0
      %v4356 = vsel %vm4276, %v4078, 0
      %v4359 = vsel %vm4276, %v4079, 0
      %v4362 = vsel %vm4276, %v4080, 0
      %v4365 = vsel %vm4276, %v4081, 0
      %v4368 = vsel %vm4276, %v4082, 0
      %v4371 = vsel %vm4276, %v4083, 0
      %4373 = vmatprep.subr.mxu0 0.0
      %4374 = vmatpush1.msra.mxu0 %v4044
      %4375 = vmatprep.subr.mxu0 0.0
      %4376 = vmatpush1.msra.mxu0 %v4045
      %4377 = vmatprep.subr.mxu0 0.0
      %4378 = vmatpush1.msra.mxu0 %v4046
      %4379 = vmatprep.subr.mxu0 0.0
      %4380 = vmatpush1.msra.mxu0 %v4047
      %4381 = vmatprep.subr.mxu0 0.0
      %4382 = vmatpush1.msra.mxu0 %v4048
      %4383 = vmatprep.subr.mxu0 0.0
      %4384 = vmatpush1.msra.mxu0 %v4049
      %4385 = vmatprep.subr.mxu0 0.0
      %4386 = vmatpush1.msra.mxu0 %v4050
      %4387 = vmatprep.subr.mxu0 0.0
      %4388 = vmatpush1.msra.mxu0 %v4051
      %4389 = vmatprep.subr.mxu0 0.0
      %4390 = vmatpush1.msra.mxu0 0.0
      %4391 = vmatprep.subr.mxu0 0.0
      %4392 = vmatpush1.msra.mxu0 0.0
      %4393 = vmatprep.subr.mxu0 0.0
      %4394 = vmatpush1.msra.mxu0 0.0
      %4395 = vmatprep.subr.mxu0 0.0
      %4396 = vmatpush1.msra.mxu0 0.0
      %4397 = vmatprep.subr.mxu0 0.0
      %4398 = vmatpush1.msra.mxu0 0.0
      %4399 = vmatprep.subr.mxu0 0.0
      %4400 = vmatpush1.msra.mxu0 0.0
      %4401 = vmatprep.subr.mxu0 0.0
      %4402 = vmatpush1.msra.mxu0 0.0
      %4403 = vmatprep.subr.mxu0 0.0
      %4404 = vmatpush1.msra.mxu0 0.0
      %4405 = vmatprep.subr.mxu0 0.0
      %4406 = vmatpush1.msra.mxu0 0.0
      %4407 = vmatprep.subr.mxu0 0.0
      %4408 = vmatpush1.msra.mxu0 0.0
      %4409 = vmatprep.subr.mxu0 0.0
      %4410 = vmatpush1.msra.mxu0 0.0
      %4411 = vmatprep.subr.mxu0 0.0
      %4412 = vmatpush1.msra.mxu0 0.0
      %4413 = vmatprep.subr.mxu0 0.0
      %4414 = vmatpush1.msra.mxu0 0.0
      %4415 = vmatprep.subr.mxu0 0.0
      %4416 = vmatpush1.msra.mxu0 0.0
      %4417 = vmatprep.subr.mxu0 0.0
      %4418 = vmatpush1.msra.mxu0 0.0
      %4419 = vmatprep.subr.mxu0 0.0
      %4420 = vmatpush1.msra.mxu0 0.0
      %4421 = vmatprep.subr.mxu0 0.0
      %4422 = vmatpush1.msra.mxu0 0.0
      %4423 = vmatprep.subr.mxu0 0.0
      %4424 = vmatpush1.msra.mxu0 0.0
      %4425 = vmatprep.subr.mxu0 0.0
      %4426 = vmatpush1.msra.mxu0 0.0
      %4427 = vmatprep.subr.mxu0 0.0
      %4428 = vmatpush1.msra.mxu0 0.0
      %4429 = vmatprep.subr.mxu0 0.0
      %4430 = vmatpush1.msra.mxu0 0.0
      %4431 = vmatprep.subr.mxu0 0.0
      %4432 = vmatpush1.msra.mxu0 0.0
      %4433 = vmatprep.subr.mxu0 0.0
      %4434 = vmatpush1.msra.mxu0 0.0
      %4435 = vmatprep.subr.mxu0 0.0
      %4436 = vmatpush1.msra.mxu0 0.0
      %4437 = vmatprep.mubr.f32.mxu0 0.0
      %4438 = vmatmul.mubr.f32.gmra.mrb[0].mxu0 %v4278
      %v4439 = vpop.f32.mrb[0].mxu0
      %v4440 = vadd.f32 %v4119, %v4439
      %v4441 = vpop.f32.mrb[0].mxu0
      %4442 = vmatprep.mubr.f32.mxu0 0.0
      %4443 = vmatmul.mubr.f32.gmra.mrb[0].mxu0 %v4281
      %v4444 = vpop.f32.mrb[0].mxu0
      %v4445 = vadd.f32 %v4124, %v4444
      %v4446 = vpop.f32.mrb[0].mxu0
      %4447 = vmatprep.mubr.f32.mxu0 0.0
      %4448 = vmatmul.mubr.f32.gmra.mrb[0].mxu0 %v4284
      %v4449 = vpop.f32.mrb[0].mxu0
      %v4450 = vadd.f32 %v4129, %v4449
      %v4451 = vpop.f32.mrb[0].mxu0
      %4452 = vmatprep.mubr.f32.mxu0 0.0
      %4453 = vmatmul.mubr.f32.gmra.mrb[0].mxu0 %v4287
      %v4454 = vpop.f32.mrb[0].mxu0
      %v4455 = vadd.f32 %v4134, %v4454
      %v4456 = vpop.f32.mrb[0].mxu0
      %4457 = vmatprep.mubr.f32.mxu0 0.0
      %4458 = vmatmul.mubr.f32.gmra.mrb[0].mxu0 %v4290
      %v4459 = vpop.f32.mrb[0].mxu0
      %v4460 = vadd.f32 %v4139, %v4459
      %v4461 = vpop.f32.mrb[0].mxu0
      %4462 = vmatprep.mubr.f32.mxu0 0.0
      %4463 = vmatmul.mubr.f32.gmra.mrb[0].mxu0 %v4293
      %v4464 = vpop.f32.mrb[0].mxu0
      %v4465 = vadd.f32 %v4144, %v4464
      %v4466 = vpop.f32.mrb[0].mxu0
      %4467 = vmatprep.mubr.f32.mxu0 0.0
      %4468 = vmatmul.mubr.f32.gmra.mrb[0].mxu0 %v4296
      %v4469 = vpop.f32.mrb[0].mxu0
      %v4470 = vadd.f32 %v4149, %v4469
      %v4471 = vpop.f32.mrb[0].mxu0
      %4472 = vmatprep.mubr.f32.mxu0 0.0
      %4473 = vmatmul.mubr.f32.gmra.mrb[0].mxu0 %v4299
      %v4474 = vpop.f32.mrb[0].mxu0
      %v4475 = vadd.f32 %v4154, %v4474
      %v4476 = vpop.f32.mrb[0].mxu0
      %4477 = vmatprep.mubr.f32.mxu0 0.0
      %4478 = vmatmul.mubr.f32.gmra.mrb[0].mxu0 %v4302
      %v4479 = vpop.f32.mrb[0].mxu0
      %v4480 = vadd.f32 %v4159, %v4479
      %v4481 = vpop.f32.mrb[0].mxu0
      %4482 = vmatprep.mubr.f32.mxu0 0.0
      %4483 = vmatmul.mubr.f32.gmra.mrb[0].mxu0 %v4305
      %v4484 = vpop.f32.mrb[0].mxu0
      %v4485 = vadd.f32 %v4164, %v4484
      %v4486 = vpop.f32.mrb[0].mxu0
      %4487 = vmatprep.mubr.f32.mxu0 0.0
      %4488 = vmatmul.mubr.f32.gmra.mrb[0].mxu0 %v4308
      %v4489 = vpop.f32.mrb[0].mxu0
      %v4490 = vadd.f32 %v4169, %v4489
      %v4491 = vpop.f32.mrb[0].mxu0
      %4492 = vmatprep.mubr.f32.mxu0 0.0
      %4493 = vmatmul.mubr.f32.gmra.mrb[0].mxu0 %v4311
      %v4494 = vpop.f32.mrb[0].mxu0
      %v4495 = vadd.f32 %v4174, %v4494
      %v4496 = vpop.f32.mrb[0].mxu0
      %4497 = vmatprep.mubr.f32.mxu0 0.0
      %4498 = vmatmul.mubr.f32.gmra.mrb[0].mxu0 %v4314
      %v4499 = vpop.f32.mrb[0].mxu0
      %v4500 = vadd.f32 %v4179, %v4499
      %v4501 = vpop.f32.mrb[0].mxu0
      %4502 = vmatprep.mubr.f32.mxu0 0.0
      %4503 = vmatmul.mubr.f32.gmra.mrb[0].mxu0 %v4317
      %v4504 = vpop.f32.mrb[0].mxu0
      %v4505 = vadd.f32 %v4184, %v4504
      %v4506 = vpop.f32.mrb[0].mxu0
      %4507 = vmatprep.mubr.f32.mxu0 0.0
      %4508 = vmatmul.mubr.f32.gmra.mrb[0].mxu0 %v4320
      %v4509 = vpop.f32.mrb[0].mxu0
      %v4510 = vadd.f32 %v4189, %v4509
      %v4511 = vpop.f32.mrb[0].mxu0
      %4512 = vmatprep.mubr.f32.mxu0 0.0
      %4513 = vmatmul.mubr.f32.gmra.mrb[0].mxu0 %v4323
      %v4514 = vpop.f32.mrb[0].mxu0
      %v4515 = vadd.f32 %v4194, %v4514
      %v4516 = vpop.f32.mrb[0].mxu0
      %4517 = vmatprep.mubr.f32.mxu0 0.0
      %4518 = vmatmul.mubr.f32.gmra.mrb[0].mxu0 %v4326
      %v4519 = vpop.f32.mrb[0].mxu0
      %v4520 = vadd.f32 %v4199, %v4519
      %v4521 = vpop.f32.mrb[0].mxu0
      %4522 = vmatprep.mubr.f32.mxu0 0.0
      %4523 = vmatmul.mubr.f32.gmra.mrb[0].mxu0 %v4329
      %v4524 = vpop.f32.mrb[0].mxu0
      %v4525 = vadd.f32 %v4204, %v4524
      %v4526 = vpop.f32.mrb[0].mxu0
      %4527 = vmatprep.mubr.f32.mxu0 0.0
      %4528 = vmatmul.mubr.f32.gmra.mrb[0].mxu0 %v4332
      %v4529 = vpop.f32.mrb[0].mxu0
      %v4530 = vadd.f32 %v4209, %v4529
      %v4531 = vpop.f32.mrb[0].mxu0
      %4532 = vmatprep.mubr.f32.mxu0 0.0
      %4533 = vmatmul.mubr.f32.gmra.mrb[0].mxu0 %v4335
      %v4534 = vpop.f32.mrb[0].mxu0
      %v4535 = vadd.f32 %v4214, %v4534
      %v4536 = vpop.f32.mrb[0].mxu0
      %4537 = vmatprep.mubr.f32.mxu0 0.0
      %4538 = vmatmul.mubr.f32.gmra.mrb[0].mxu0 %v4338
      %v4539 = vpop.f32.mrb[0].mxu0
      %v4540 = vadd.f32 %v4219, %v4539
      %v4541 = vpop.f32.mrb[0].mxu0
      %4542 = vmatprep.mubr.f32.mxu0 0.0
      %4543 = vmatmul.mubr.f32.gmra.mrb[0].mxu0 %v4341
      %v4544 = vpop.f32.mrb[0].mxu0
      %v4545 = vadd.f32 %v4224, %v4544
      %v4546 = vpop.f32.mrb[0].mxu0
      %4547 = vmatprep.mubr.f32.mxu0 0.0
      %4548 = vmatmul.mubr.f32.gmra.mrb[0].mxu0 %v4344
      %v4549 = vpop.f32.mrb[0].mxu0
      %v4550 = vadd.f32 %v4229, %v4549
      %v4551 = vpop.f32.mrb[0].mxu0
      %4552 = vmatprep.mubr.f32.mxu0 0.0
      %4553 = vmatmul.mubr.f32.gmra.mrb[0].mxu0 %v4347
      %v4554 = vpop.f32.mrb[0].mxu0
      %v4555 = vadd.f32 %v4234, %v4554
      %v4556 = vpop.f32.mrb[0].mxu0
      %4557 = vmatprep.mubr.f32.mxu0 0.0
      %4558 = vmatmul.mubr.f32.gmra.mrb[0].mxu0 %v4350
      %v4559 = vpop.f32.mrb[0].mxu0
      %v4560 = vadd.f32 %v4239, %v4559
      %v4561 = vpop.f32.mrb[0].mxu0
      %4562 = vmatprep.mubr.f32.mxu0 0.0
      %4563 = vmatmul.mubr.f32.gmra.mrb[0].mxu0 %v4353
      %v4564 = vpop.f32.mrb[0].mxu0
      %v4565 = vadd.f32 %v4244, %v4564
      %v4566 = vpop.f32.mrb[0].mxu0
      %4567 = vmatprep.mubr.f32.mxu0 0.0
      %4568 = vmatmul.mubr.f32.gmra.mrb[0].mxu0 %v4356
      %v4569 = vpop.f32.mrb[0].mxu0
      %v4570 = vadd.f32 %v4249, %v4569
      %v4571 = vpop.f32.mrb[0].mxu0
      %4572 = vmatprep.mubr.f32.mxu0 0.0
      %4573 = vmatmul.mubr.f32.gmra.mrb[0].mxu0 %v4359
      %v4574 = vpop.f32.mrb[0].mxu0
      %v4575 = vadd.f32 %v4254, %v4574
      %v4576 = vpop.f32.mrb[0].mxu0
      %4577 = vmatprep.mubr.f32.mxu0 0.0
      %4578 = vmatmul.mubr.f32.gmra.mrb[0].mxu0 %v4362
      %v4579 = vpop.f32.mrb[0].mxu0
      %v4580 = vadd.f32 %v4259, %v4579
      %v4581 = vpop.f32.mrb[0].mxu0
      %4582 = vmatprep.mubr.f32.mxu0 0.0
      %4583 = vmatmul.mubr.f32.gmra.mrb[0].mxu0 %v4365
      %v4584 = vpop.f32.mrb[0].mxu0
      %v4585 = vadd.f32 %v4264, %v4584
      %v4586 = vpop.f32.mrb[0].mxu0
      %4587 = vmatprep.mubr.f32.mxu0 0.0
      %4588 = vmatmul.mubr.f32.gmra.mrb[0].mxu0 %v4368
      %v4589 = vpop.f32.mrb[0].mxu0
      %v4590 = vadd.f32 %v4269, %v4589
      %v4591 = vpop.f32.mrb[0].mxu0
      %4592 = vmatprep.mubr.f32.mxu0 0.0
      %4593 = vmatmul.mubr.f32.gmra.mrb[0].mxu0 %v4371
      %v4594 = vpop.f32.mrb[0].mxu0
      %v4595 = vadd.f32 %v4274, %v4594
      %v4596 = vpop.f32.mrb[0].mxu0
      %4597 = vdwg.mxu0
      %v4598 = vmax.f32 %v4440, 0.0
      %v4599 = vmax.f32 %v4445, 0.0
      %v4600 = vmax.f32 %v4450, 0.0
      %v4601 = vmax.f32 %v4455, 0.0
      %v4602 = vmax.f32 %v4460, 0.0
      %v4603 = vmax.f32 %v4465, 0.0
      %v4604 = vmax.f32 %v4470, 0.0
      %v4605 = vmax.f32 %v4475, 0.0
      %v4606 = vmax.f32 %v4480, 0.0
      %v4607 = vmax.f32 %v4485, 0.0
      %v4608 = vmax.f32 %v4490, 0.0
      %v4609 = vmax.f32 %v4495, 0.0
      %v4610 = vmax.f32 %v4500, 0.0
      %v4611 = vmax.f32 %v4505, 0.0
      %v4612 = vmax.f32 %v4510, 0.0
      %v4613 = vmax.f32 %v4515, 0.0
      %v4614 = vmax.f32 %v4520, 0.0
      %v4615 = vmax.f32 %v4525, 0.0
      %v4616 = vmax.f32 %v4530, 0.0
      %v4617 = vmax.f32 %v4535, 0.0
      %v4618 = vmax.f32 %v4540, 0.0
      %v4619 = vmax.f32 %v4545, 0.0
      %v4620 = vmax.f32 %v4550, 0.0
      %v4621 = vmax.f32 %v4555, 0.0
      %v4622 = vmax.f32 %v4560, 0.0
      %v4623 = vmax.f32 %v4565, 0.0
      %v4624 = vmax.f32 %v4570, 0.0
      %v4625 = vmax.f32 %v4575, 0.0
      %v4626 = vmax.f32 %v4580, 0.0
      %v4627 = vmax.f32 %v4585, 0.0
      %v4628 = vmax.f32 %v4590, 0.0
      %v4629 = vmax.f32 %v4595, 0.0
      %v4630 = vld [vmem:[%s8] sm:$0xff]
      %v4631 = vld [vmem:[%s8 + $0x8] sm:$0xff]
      %v4632 = vld [vmem:[%s8 + $0x10] sm:$0xff]
      %v4633 = vld [vmem:[%s8 + $0x18] sm:$0xff]
      %v4634 = vld [vmem:[%s8 + $0x20] sm:$0xff]
      %v4635 = vld [vmem:[%s8 + $0x28] sm:$0xff]
      %v4636 = vld [vmem:[%s8 + $0x30] sm:$0xff]
      %v4637 = vld [vmem:[%s8 + $0x38] sm:$0xff]
      %v4638 = vld [vmem:[%s8 + $0x40] sm:$0xff]
      %v4639 = vld [vmem:[%s8 + $0x48] sm:$0xff]
      %v4640 = vld [vmem:[%s8 + $0x50] sm:$0xff]
      %v4641 = vld [vmem:[%s8 + $0x58] sm:$0xff]
      %v4642 = vld [vmem:[%s8 + $0x60] sm:$0xff]
      %v4643 = vld [vmem:[%s8 + $0x68] sm:$0xff]
      %v4644 = vld [vmem:[%s8 + $0x70] sm:$0xff]
      %v4645 = vld [vmem:[%s8 + $0x78] sm:$0xff]
      %v4646 = vld [vmem:[%s8 + $0x80] sm:$0xff]
      %v4647 = vld [vmem:[%s8 + $0x88] sm:$0xff]
      %v4648 = vld [vmem:[%s8 + $0x90] sm:$0xff]
      %v4649 = vld [vmem:[%s8 + $0x98] sm:$0xff]
      %v4650 = vld [vmem:[%s8 + $0xa0] sm:$0xff]
      %v4651 = vld [vmem:[%s8 + $0xa8] sm:$0xff]
      %v4652 = vld [vmem:[%s8 + $0xb0] sm:$0xff]
      %v4653 = vld [vmem:[%s8 + $0xb8] sm:$0xff]
      %v4654 = vld [vmem:[%s8 + $0xc0] sm:$0xff]
      %v4655 = vld [vmem:[%s8 + $0xc8] sm:$0xff]
      %v4656 = vld [vmem:[%s8 + $0xd0] sm:$0xff]
      %v4657 = vld [vmem:[%s8 + $0xd8] sm:$0xff]
      %v4658 = vld [vmem:[%s8 + $0xe0] sm:$0xff]
      %v4659 = vld [vmem:[%s8 + $0xe8] sm:$0xff]
      %v4660 = vld [vmem:[%s8 + $0xf0] sm:$0xff]
      %v4661 = vld [vmem:[%s8 + $0xf8] sm:$0xff]
      %v4662 = vld [vmem:[%s9] sm:$0xff]
      %v4663 = vld [vmem:[%s9 + $0x8] sm:$0xff]
      %v4664 = vld [vmem:[%s9 + $0x10] sm:$0xff]
      %v4665 = vld [vmem:[%s9 + $0x18] sm:$0xff]
      %v4666 = vld [vmem:[%s9 + $0x20] sm:$0xff]
      %v4667 = vld [vmem:[%s9 + $0x28] sm:$0xff]
      %v4668 = vld [vmem:[%s9 + $0x30] sm:$0xff]
      %v4669 = vld [vmem:[%s9 + $0x38] sm:$0xff]
      %v4670 = vld [vmem:[%s9 + $0x40] sm:$0xff]
      %v4671 = vld [vmem:[%s9 + $0x48] sm:$0xff]
      %v4672 = vld [vmem:[%s9 + $0x50] sm:$0xff]
      %v4673 = vld [vmem:[%s9 + $0x58] sm:$0xff]
      %v4674 = vld [vmem:[%s9 + $0x60] sm:$0xff]
      %v4675 = vld [vmem:[%s9 + $0x68] sm:$0xff]
      %v4676 = vld [vmem:[%s9 + $0x70] sm:$0xff]
      %v4677 = vld [vmem:[%s9 + $0x78] sm:$0xff]
      %4679 = vset.pattern.permute.xlu0 0
      %4680 = vperm.xlu0 %4679, %v4662
      %v4681 = vpop.permute.xlu0 %4680
      %4684 = vset.pattern.permute.xlu0 0
      %4685 = vperm.xlu0 %4684, %v4663
      %v4686 = vpop.permute.xlu0 %4685
      %4689 = vset.pattern.permute.xlu0 0
      %4690 = vperm.xlu0 %4689, %v4664
      %v4691 = vpop.permute.xlu0 %4690
      %4694 = vset.pattern.permute.xlu0 0
      %4695 = vperm.xlu0 %4694, %v4665
      %v4696 = vpop.permute.xlu0 %4695
      %4699 = vset.pattern.permute.xlu0 0
      %4700 = vperm.xlu0 %4699, %v4666
      %v4701 = vpop.permute.xlu0 %4700
      %4704 = vset.pattern.permute.xlu0 0
      %4705 = vperm.xlu0 %4704, %v4667
      %v4706 = vpop.permute.xlu0 %4705
      %4709 = vset.pattern.permute.xlu0 0
      %4710 = vperm.xlu0 %4709, %v4668
      %v4711 = vpop.permute.xlu0 %4710
      %4714 = vset.pattern.permute.xlu0 0
      %4715 = vperm.xlu0 %4714, %v4669
      %v4716 = vpop.permute.xlu0 %4715
      %4719 = vset.pattern.permute.xlu0 0
      %4720 = vperm.xlu0 %4719, %v4670
      %v4721 = vpop.permute.xlu0 %4720
      %4724 = vset.pattern.permute.xlu0 0
      %4725 = vperm.xlu0 %4724, %v4671
      %v4726 = vpop.permute.xlu0 %4725
      %4729 = vset.pattern.permute.xlu0 0
      %4730 = vperm.xlu0 %4729, %v4672
      %v4731 = vpop.permute.xlu0 %4730
      %4734 = vset.pattern.permute.xlu0 0
      %4735 = vperm.xlu0 %4734, %v4673
      %v4736 = vpop.permute.xlu0 %4735
      %4739 = vset.pattern.permute.xlu0 0
      %4740 = vperm.xlu0 %4739, %v4674
      %v4741 = vpop.permute.xlu0 %4740
      %4744 = vset.pattern.permute.xlu0 0
      %4745 = vperm.xlu0 %4744, %v4675
      %v4746 = vpop.permute.xlu0 %4745
      %4749 = vset.pattern.permute.xlu0 0
      %4750 = vperm.xlu0 %4749, %v4676
      %v4751 = vpop.permute.xlu0 %4750
      %4754 = vset.pattern.permute.xlu0 0
      %4755 = vperm.xlu0 %4754, %v4677
      %v4756 = vpop.permute.xlu0 %4755
      %4758 = vmatprep.subr.mxu0 0.0
      %4759 = vmatpush1.msra.mxu0 %v4598
      %4760 = vmatprep.subr.mxu0 0.0
      %4761 = vmatpush1.msra.mxu0 %v4599
      %4762 = vmatprep.subr.mxu0 0.0
      %4763 = vmatpush1.msra.mxu0 %v4600
      %4764 = vmatprep.subr.mxu0 0.0
      %4765 = vmatpush1.msra.mxu0 %v4601
      %4766 = vmatprep.subr.mxu0 0.0
      %4767 = vmatpush1.msra.mxu0 %v4602
      %4768 = vmatprep.subr.mxu0 0.0
      %4769 = vmatpush1.msra.mxu0 %v4603
      %4770 = vmatprep.subr.mxu0 0.0
      %4771 = vmatpush1.msra.mxu0 %v4604
      %4772 = vmatprep.subr.mxu0 0.0
      %4773 = vmatpush1.msra.mxu0 %v4605
      %4774 = vmatprep.subr.mxu0 0.0
      %4775 = vmatpush1.msra.mxu0 %v4606
      %4776 = vmatprep.subr.mxu0 0.0
      %4777 = vmatpush1.msra.mxu0 %v4607
      %4778 = vmatprep.subr.mxu0 0.0
      %4779 = vmatpush1.msra.mxu0 %v4608
      %4780 = vmatprep.subr.mxu0 0.0
      %4781 = vmatpush1.msra.mxu0 %v4609
      %4782 = vmatprep.subr.mxu0 0.0
      %4783 = vmatpush1.msra.mxu0 %v4610
      %4784 = vmatprep.subr.mxu0 0.0
      %4785 = vmatpush1.msra.mxu0 %v4611
      %4786 = vmatprep.subr.mxu0 0.0
      %4787 = vmatpush1.msra.mxu0 %v4612
      %4788 = vmatprep.subr.mxu0 0.0
      %4789 = vmatpush1.msra.mxu0 %v4613
      %4790 = vmatprep.subr.mxu0 0.0
      %4791 = vmatpush1.msra.mxu0 %v4614
      %4792 = vmatprep.subr.mxu0 0.0
      %4793 = vmatpush1.msra.mxu0 %v4615
      %4794 = vmatprep.subr.mxu0 0.0
      %4795 = vmatpush1.msra.mxu0 %v4616
      %4796 = vmatprep.subr.mxu0 0.0
      %4797 = vmatpush1.msra.mxu0 %v4617
      %4798 = vmatprep.subr.mxu0 0.0
      %4799 = vmatpush1.msra.mxu0 %v4618
      %4800 = vmatprep.subr.mxu0 0.0
      %4801 = vmatpush1.msra.mxu0 %v4619
      %4802 = vmatprep.subr.mxu0 0.0
      %4803 = vmatpush1.msra.mxu0 %v4620
      %4804 = vmatprep.subr.mxu0 0.0
      %4805 = vmatpush1.msra.mxu0 %v4621
      %4806 = vmatprep.subr.mxu0 0.0
      %4807 = vmatpush1.msra.mxu0 %v4622
      %4808 = vmatprep.subr.mxu0 0.0
      %4809 = vmatpush1.msra.mxu0 %v4623
      %4810 = vmatprep.subr.mxu0 0.0
      %4811 = vmatpush1.msra.mxu0 %v4624
      %4812 = vmatprep.subr.mxu0 0.0
      %4813 = vmatpush1.msra.mxu0 %v4625
      %4814 = vmatprep.subr.mxu0 0.0
      %4815 = vmatpush1.msra.mxu0 %v4626
      %4816 = vmatprep.subr.mxu0 0.0
      %4817 = vmatpush1.msra.mxu0 %v4627
      %4818 = vmatprep.subr.mxu0 0.0
      %4819 = vmatpush1.msra.mxu0 %v4628
      %4820 = vmatprep.subr.mxu0 0.0
      %4821 = vmatpush1.msra.mxu0 %v4629
      %4822 = vmatprep.mubr.f32.mxu0 %v4631
      %4823 = vmatmul.mubr.f32.gmra.mrb[0].mxu0 %v4630
      %v4824 = vpop.f32.mrb[0].mxu0
      %v4825 = vadd.f32 %v4681, %v4824
      %v4826 = vpop.f32.mrb[0].mxu0
      %4827 = vmatprep.mubr.f32.mxu0 %v4633
      %4828 = vmatmul.mubr.f32.gmra.mrb[0].mxu0 %v4632
      %v4829 = vpop.f32.mrb[0].mxu0
      %v4830 = vadd.f32 %v4686, %v4829
      %v4831 = vpop.f32.mrb[0].mxu0
      %4832 = vmatprep.mubr.f32.mxu0 %v4635
      %4833 = vmatmul.mubr.f32.gmra.mrb[0].mxu0 %v4634
      %v4834 = vpop.f32.mrb[0].mxu0
      %v4835 = vadd.f32 %v4691, %v4834
      %v4836 = vpop.f32.mrb[0].mxu0
      %4837 = vmatprep.mubr.f32.mxu0 %v4637
      %4838 = vmatmul.mubr.f32.gmra.mrb[0].mxu0 %v4636
      %v4839 = vpop.f32.mrb[0].mxu0
      %v4840 = vadd.f32 %v4696, %v4839
      %v4841 = vpop.f32.mrb[0].mxu0
      %4842 = vmatprep.mubr.f32.mxu0 %v4639
      %4843 = vmatmul.mubr.f32.gmra.mrb[0].mxu0 %v4638
      %v4844 = vpop.f32.mrb[0].mxu0
      %v4845 = vadd.f32 %v4701, %v4844
      %v4846 = vpop.f32.mrb[0].mxu0
      %4847 = vmatprep.mubr.f32.mxu0 %v4641
      %4848 = vmatmul.mubr.f32.gmra.mrb[0].mxu0 %v4640
      %v4849 = vpop.f32.mrb[0].mxu0
      %v4850 = vadd.f32 %v4706, %v4849
      %v4851 = vpop.f32.mrb[0].mxu0
      %4852 = vmatprep.mubr.f32.mxu0 %v4643
      %4853 = vmatmul.mubr.f32.gmra.mrb[0].mxu0 %v4642
      %v4854 = vpop.f32.mrb[0].mxu0
      %v4855 = vadd.f32 %v4711, %v4854
      %v4856 = vpop.f32.mrb[0].mxu0
      %4857 = vmatprep.mubr.f32.mxu0 %v4645
      %4858 = vmatmul.mubr.f32.gmra.mrb[0].mxu0 %v4644
      %v4859 = vpop.f32.mrb[0].mxu0
      %v4860 = vadd.f32 %v4716, %v4859
      %v4861 = vpop.f32.mrb[0].mxu0
      %4862 = vmatprep.mubr.f32.mxu0 %v4647
      %4863 = vmatmul.mubr.f32.gmra.mrb[0].mxu0 %v4646
      %v4864 = vpop.f32.mrb[0].mxu0
      %v4865 = vadd.f32 %v4721, %v4864
      %v4866 = vpop.f32.mrb[0].mxu0
      %4867 = vmatprep.mubr.f32.mxu0 %v4649
      %4868 = vmatmul.mubr.f32.gmra.mrb[0].mxu0 %v4648
      %v4869 = vpop.f32.mrb[0].mxu0
      %v4870 = vadd.f32 %v4726, %v4869
      %v4871 = vpop.f32.mrb[0].mxu0
      %4872 = vmatprep.mubr.f32.mxu0 %v4651
      %4873 = vmatmul.mubr.f32.gmra.mrb[0].mxu0 %v4650
      %v4874 = vpop.f32.mrb[0].mxu0
      %v4875 = vadd.f32 %v4731, %v4874
      %v4876 = vpop.f32.mrb[0].mxu0
      %4877 = vmatprep.mubr.f32.mxu0 %v4653
      %4878 = vmatmul.mubr.f32.gmra.mrb[0].mxu0 %v4652
      %v4879 = vpop.f32.mrb[0].mxu0
      %v4880 = vadd.f32 %v4736, %v4879
      %v4881 = vpop.f32.mrb[0].mxu0
      %4882 = vmatprep.mubr.f32.mxu0 %v4655
      %4883 = vmatmul.mubr.f32.gmra.mrb[0].mxu0 %v4654
      %v4884 = vpop.f32.mrb[0].mxu0
      %v4885 = vadd.f32 %v4741, %v4884
      %v4886 = vpop.f32.mrb[0].mxu0
      %4887 = vmatprep.mubr.f32.mxu0 %v4657
      %4888 = vmatmul.mubr.f32.gmra.mrb[0].mxu0 %v4656
      %v4889 = vpop.f32.mrb[0].mxu0
      %v4890 = vadd.f32 %v4746, %v4889
      %v4891 = vpop.f32.mrb[0].mxu0
      %4892 = vmatprep.mubr.f32.mxu0 %v4659
      %4893 = vmatmul.mubr.f32.gmra.mrb[0].mxu0 %v4658
      %v4894 = vpop.f32.mrb[0].mxu0
      %v4895 = vadd.f32 %v4751, %v4894
      %v4896 = vpop.f32.mrb[0].mxu0
      %4897 = vmatprep.mubr.f32.mxu0 %v4661
      %4898 = vmatmul.mubr.f32.gmra.mrb[0].mxu0 %v4660
      %v4899 = vpop.f32.mrb[0].mxu0
      %v4900 = vadd.f32 %v4756, %v4899
      %v4901 = vpop.f32.mrb[0].mxu0
      %4902 = vdwg.mxu0
      %v4903 = vld [vmem:[%s10] sm:$0xff]
      %v4904 = vld [vmem:[%s10 + $0x8] sm:$0xff]
      %v4905 = vld [vmem:[%s10 + $0x10] sm:$0xff]
      %v4906 = vld [vmem:[%s10 + $0x18] sm:$0xff]
      %v4907 = vld [vmem:[%s10 + $0x20] sm:$0xff]
      %v4908 = vld [vmem:[%s10 + $0x28] sm:$0xff]
      %v4909 = vld [vmem:[%s10 + $0x30] sm:$0xff]
      %v4910 = vld [vmem:[%s10 + $0x38] sm:$0xff]
      %v4911 = vld [vmem:[%s10 + $0x40] sm:$0xff]
      %v4912 = vld [vmem:[%s10 + $0x48] sm:$0xff]
      %v4913 = vld [vmem:[%s10 + $0x50] sm:$0xff]
      %v4914 = vld [vmem:[%s10 + $0x58] sm:$0xff]
      %v4915 = vld [vmem:[%s10 + $0x60] sm:$0xff]
      %v4916 = vld [vmem:[%s10 + $0x68] sm:$0xff]
      %v4917 = vld [vmem:[%s10 + $0x70] sm:$0xff]
      %v4918 = vld [vmem:[%s10 + $0x78] sm:$0xff]
      %v4919 = vld [vmem:[%s10 + $0x80] sm:$0xff]
      %v4920 = vld [vmem:[%s10 + $0x88] sm:$0xff]
      %v4921 = vld [vmem:[%s10 + $0x90] sm:$0xff]
      %v4922 = vld [vmem:[%s10 + $0x98] sm:$0xff]
      %v4923 = vld [vmem:[%s10 + $0xa0] sm:$0xff]
      %v4924 = vld [vmem:[%s10 + $0xa8] sm:$0xff]
      %v4925 = vld [vmem:[%s10 + $0xb0] sm:$0xff]
      %v4926 = vld [vmem:[%s10 + $0xb8] sm:$0xff]
      %v4927 = vld [vmem:[%s10 + $0xc0] sm:$0xff]
      %v4928 = vld [vmem:[%s10 + $0xc8] sm:$0xff]
      %v4929 = vld [vmem:[%s10 + $0xd0] sm:$0xff]
      %v4930 = vld [vmem:[%s10 + $0xd8] sm:$0xff]
      %v4931 = vld [vmem:[%s10 + $0xe0] sm:$0xff]
      %v4932 = vld [vmem:[%s10 + $0xe8] sm:$0xff]
      %v4933 = vld [vmem:[%s10 + $0xf0] sm:$0xff]
      %v4934 = vld [vmem:[%s10 + $0xf8] sm:$0xff]
      %v4935 = vld [vmem:[%s11] sm:$0xff]
      %v4936 = vld [vmem:[%s11 + $0x8] sm:$0xff]
      %v4937 = vld [vmem:[%s11 + $0x10] sm:$0xff]
      %v4938 = vld [vmem:[%s11 + $0x18] sm:$0xff]
      %v4939 = vld [vmem:[%s11 + $0x20] sm:$0xff]
      %v4940 = vld [vmem:[%s11 + $0x28] sm:$0xff]
      %v4941 = vld [vmem:[%s11 + $0x30] sm:$0xff]
      %v4942 = vld [vmem:[%s11 + $0x38] sm:$0xff]
      %v4943 = vld [vmem:[%s11 + $0x40] sm:$0xff]
      %v4944 = vld [vmem:[%s11 + $0x48] sm:$0xff]
      %v4945 = vld [vmem:[%s11 + $0x50] sm:$0xff]
      %v4946 = vld [vmem:[%s11 + $0x58] sm:$0xff]
      %v4947 = vld [vmem:[%s11 + $0x60] sm:$0xff]
      %v4948 = vld [vmem:[%s11 + $0x68] sm:$0xff]
      %v4949 = vld [vmem:[%s11 + $0x70] sm:$0xff]
      %v4950 = vld [vmem:[%s11 + $0x78] sm:$0xff]
      %v4951 = vld [vmem:[%s11 + $0x80] sm:$0xff]
      %v4952 = vld [vmem:[%s11 + $0x88] sm:$0xff]
      %v4953 = vld [vmem:[%s11 + $0x90] sm:$0xff]
      %v4954 = vld [vmem:[%s11 + $0x98] sm:$0xff]
      %v4955 = vld [vmem:[%s11 + $0xa0] sm:$0xff]
      %v4956 = vld [vmem:[%s11 + $0xa8] sm:$0xff]
      %v4957 = vld [vmem:[%s11 + $0xb0] sm:$0xff]
      %v4958 = vld [vmem:[%s11 + $0xb8] sm:$0xff]
      %v4959 = vld [vmem:[%s11 + $0xc0] sm:$0xff]
      %v4960 = vld [vmem:[%s11 + $0xc8] sm:$0xff]
      %v4961 = vld [vmem:[%s11 + $0xd0] sm:$0xff]
      %v4962 = vld [vmem:[%s11 + $0xd8] sm:$0xff]
      %v4963 = vld [vmem:[%s11 + $0xe0] sm:$0xff]
      %v4964 = vld [vmem:[%s11 + $0xe8] sm:$0xff]
      %v4965 = vld [vmem:[%s11 + $0xf0] sm:$0xff]
      %v4966 = vld [vmem:[%s11 + $0xf8] sm:$0xff]
      %4968 = vset.pattern.permute.xlu0 0
      %4969 = vperm.xlu0 %4968, %v4935
      %v4970 = vpop.permute.xlu0 %4969
      %4973 = vset.pattern.permute.xlu0 0
      %4974 = vperm.xlu0 %4973, %v4936
      %v4975 = vpop.permute.xlu0 %4974
      %4978 = vset.pattern.permute.xlu0 0
      %4979 = vperm.xlu0 %4978, %v4937
      %v4980 = vpop.permute.xlu0 %4979
      %4983 = vset.pattern.permute.xlu0 0
      %4984 = vperm.xlu0 %4983, %v4938
      %v4985 = vpop.permute.xlu0 %4984
      %4988 = vset.pattern.permute.xlu0 0
      %4989 = vperm.xlu0 %4988, %v4939
      %v4990 = vpop.permute.xlu0 %4989
      %4993 = vset.pattern.permute.xlu0 0
      %4994 = vperm.xlu0 %4993, %v4940
      %v4995 = vpop.permute.xlu0 %4994
      %4998 = vset.pattern.permute.xlu0 0
      %4999 = vperm.xlu0 %4998, %v4941
      %v5000 = vpop.permute.xlu0 %4999
      %5003 = vset.pattern.permute.xlu0 0
      %5004 = vperm.xlu0 %5003, %v4942
      %v5005 = vpop.permute.xlu0 %5004
      %5008 = vset.pattern.permute.xlu0 0
      %5009 = vperm.xlu0 %5008, %v4943
      %v5010 = vpop.permute.xlu0 %5009
      %5013 = vset.pattern.permute.xlu0 0
      %5014 = vperm.xlu0 %5013, %v4944
      %v5015 = vpop.permute.xlu0 %5014
      %5018 = vset.pattern.permute.xlu0 0
      %5019 = vperm.xlu0 %5018, %v4945
      %v5020 = vpop.permute.xlu0 %5019
      %5023 = vset.pattern.permute.xlu0 0
      %5024 = vperm.xlu0 %5023, %v4946
      %v5025 = vpop.permute.xlu0 %5024
      %5028 = vset.pattern.permute.xlu0 0
      %5029 = vperm.xlu0 %5028, %v4947
      %v5030 = vpop.permute.xlu0 %5029
      %5033 = vset.pattern.permute.xlu0 0
      %5034 = vperm.xlu0 %5033, %v4948
      %v5035 = vpop.permute.xlu0 %5034
      %5038 = vset.pattern.permute.xlu0 0
      %5039 = vperm.xlu0 %5038, %v4949
      %v5040 = vpop.permute.xlu0 %5039
      %5043 = vset.pattern.permute.xlu0 0
      %5044 = vperm.xlu0 %5043, %v4950
      %v5045 = vpop.permute.xlu0 %5044
      %5048 = vset.pattern.permute.xlu0 0
      %5049 = vperm.xlu0 %5048, %v4951
      %v5050 = vpop.permute.xlu0 %5049
      %5053 = vset.pattern.permute.xlu0 0
      %5054 = vperm.xlu0 %5053, %v4952
      %v5055 = vpop.permute.xlu0 %5054
      %5058 = vset.pattern.permute.xlu0 0
      %5059 = vperm.xlu0 %5058, %v4953
      %v5060 = vpop.permute.xlu0 %5059
      %5063 = vset.pattern.permute.xlu0 0
      %5064 = vperm.xlu0 %5063, %v4954
      %v5065 = vpop.permute.xlu0 %5064
      %5068 = vset.pattern.permute.xlu0 0
      %5069 = vperm.xlu0 %5068, %v4955
      %v5070 = vpop.permute.xlu0 %5069
      %5073 = vset.pattern.permute.xlu0 0
      %5074 = vperm.xlu0 %5073, %v4956
      %v5075 = vpop.permute.xlu0 %5074
      %5078 = vset.pattern.permute.xlu0 0
      %5079 = vperm.xlu0 %5078, %v4957
      %v5080 = vpop.permute.xlu0 %5079
      %5083 = vset.pattern.permute.xlu0 0
      %5084 = vperm.xlu0 %5083, %v4958
      %v5085 = vpop.permute.xlu0 %5084
      %5088 = vset.pattern.permute.xlu0 0
      %5089 = vperm.xlu0 %5088, %v4959
      %v5090 = vpop.permute.xlu0 %5089
      %5093 = vset.pattern.permute.xlu0 0
      %5094 = vperm.xlu0 %5093, %v4960
      %v5095 = vpop.permute.xlu0 %5094
      %5098 = vset.pattern.permute.xlu0 0
      %5099 = vperm.xlu0 %5098, %v4961
      %v5100 = vpop.permute.xlu0 %5099
      %5103 = vset.pattern.permute.xlu0 0
      %5104 = vperm.xlu0 %5103, %v4962
      %v5105 = vpop.permute.xlu0 %5104
      %5108 = vset.pattern.permute.xlu0 0
      %5109 = vperm.xlu0 %5108, %v4963
      %v5110 = vpop.permute.xlu0 %5109
      %5113 = vset.pattern.permute.xlu0 0
      %5114 = vperm.xlu0 %5113, %v4964
      %v5115 = vpop.permute.xlu0 %5114
      %5118 = vset.pattern.permute.xlu0 0
      %5119 = vperm.xlu0 %5118, %v4965
      %v5120 = vpop.permute.xlu0 %5119
      %5123 = vset.pattern.permute.xlu0 0
      %5124 = vperm.xlu0 %5123, %v4966
      %v5125 = vpop.permute.xlu0 %5124
      %5127 = vmatprep.subr.mxu0 0.0
      %5128 = vmatpush1.msra.mxu0 %v4825
      %5129 = vmatprep.subr.mxu0 0.0
      %5130 = vmatpush1.msra.mxu0 %v4830
      %5131 = vmatprep.subr.mxu0 0.0
      %5132 = vmatpush1.msra.mxu0 %v4835
      %5133 = vmatprep.subr.mxu0 0.0
      %5134 = vmatpush1.msra.mxu0 %v4840
      %5135 = vmatprep.subr.mxu0 0.0
      %5136 = vmatpush1.msra.mxu0 %v4845
      %5137 = vmatprep.subr.mxu0 0.0
      %5138 = vmatpush1.msra.mxu0 %v4850
      %5139 = vmatprep.subr.mxu0 0.0
      %5140 = vmatpush1.msra.mxu0 %v4855
      %5141 = vmatprep.subr.mxu0 0.0
      %5142 = vmatpush1.msra.mxu0 %v4860
      %5143 = vmatprep.subr.mxu0 0.0
      %5144 = vmatpush1.msra.mxu0 %v4865
      %5145 = vmatprep.subr.mxu0 0.0
      %5146 = vmatpush1.msra.mxu0 %v4870
      %5147 = vmatprep.subr.mxu0 0.0
      %5148 = vmatpush1.msra.mxu0 %v4875
      %5149 = vmatprep.subr.mxu0 0.0
      %5150 = vmatpush1.msra.mxu0 %v4880
      %5151 = vmatprep.subr.mxu0 0.0
      %5152 = vmatpush1.msra.mxu0 %v4885
      %5153 = vmatprep.subr.mxu0 0.0
      %5154 = vmatpush1.msra.mxu0 %v4890
      %5155 = vmatprep.subr.mxu0 0.0
      %5156 = vmatpush1.msra.mxu0 %v4895
      %5157 = vmatprep.subr.mxu0 0.0
      %5158 = vmatpush1.msra.mxu0 %v4900
      %5159 = vmatprep.subr.mxu0 0.0
      %5160 = vmatpush1.msra.mxu0 0.0
      %5161 = vmatprep.subr.mxu0 0.0
      %5162 = vmatpush1.msra.mxu0 0.0
      %5163 = vmatprep.subr.mxu0 0.0
      %5164 = vmatpush1.msra.mxu0 0.0
      %5165 = vmatprep.subr.mxu0 0.0
      %5166 = vmatpush1.msra.mxu0 0.0
      %5167 = vmatprep.subr.mxu0 0.0
      %5168 = vmatpush1.msra.mxu0 0.0
      %5169 = vmatprep.subr.mxu0 0.0
      %5170 = vmatpush1.msra.mxu0 0.0
      %5171 = vmatprep.subr.mxu0 0.0
      %5172 = vmatpush1.msra.mxu0 0.0
      %5173 = vmatprep.subr.mxu0 0.0
      %5174 = vmatpush1.msra.mxu0 0.0
      %5175 = vmatprep.subr.mxu0 0.0
      %5176 = vmatpush1.msra.mxu0 0.0
      %5177 = vmatprep.subr.mxu0 0.0
      %5178 = vmatpush1.msra.mxu0 0.0
      %5179 = vmatprep.subr.mxu0 0.0
      %5180 = vmatpush1.msra.mxu0 0.0
      %5181 = vmatprep.subr.mxu0 0.0
      %5182 = vmatpush1.msra.mxu0 0.0
      %5183 = vmatprep.subr.mxu0 0.0
      %5184 = vmatpush1.msra.mxu0 0.0
      %5185 = vmatprep.subr.mxu0 0.0
      %5186 = vmatpush1.msra.mxu0 0.0
      %5187 = vmatprep.subr.mxu0 0.0
      %5188 = vmatpush1.msra.mxu0 0.0
      %5189 = vmatprep.subr.mxu0 0.0
      %5190 = vmatpush1.msra.mxu0 0.0
      %5191 = vmatprep.mubr.f32.mxu0 0.0
      %5192 = vmatmul.mubr.f32.gmra.mrb[0].mxu0 %v4903
      %v5193 = vpop.f32.mrb[0].mxu0
      %v5194 = vadd.f32 %v4970, %v5193
      %v5195 = vpop.f32.mrb[0].mxu0
      %5196 = vmatprep.mubr.f32.mxu0 0.0
      %5197 = vmatmul.mubr.f32.gmra.mrb[0].mxu0 %v4904
      %v5198 = vpop.f32.mrb[0].mxu0
      %v5199 = vadd.f32 %v4975, %v5198
      %v5200 = vpop.f32.mrb[0].mxu0
      %5201 = vmatprep.mubr.f32.mxu0 0.0
      %5202 = vmatmul.mubr.f32.gmra.mrb[0].mxu0 %v4905
      %v5203 = vpop.f32.mrb[0].mxu0
      %v5204 = vadd.f32 %v4980, %v5203
      %v5205 = vpop.f32.mrb[0].mxu0
      %5206 = vmatprep.mubr.f32.mxu0 0.0
      %5207 = vmatmul.mubr.f32.gmra.mrb[0].mxu0 %v4906
      %v5208 = vpop.f32.mrb[0].mxu0
      %v5209 = vadd.f32 %v4985, %v5208
      %v5210 = vpop.f32.mrb[0].mxu0
      %5211 = vmatprep.mubr.f32.mxu0 0.0
      %5212 = vmatmul.mubr.f32.gmra.mrb[0].mxu0 %v4907
      %v5213 = vpop.f32.mrb[0].mxu0
      %v5214 = vadd.f32 %v4990, %v5213
      %v5215 = vpop.f32.mrb[0].mxu0
      %5216 = vmatprep.mubr.f32.mxu0 0.0
      %5217 = vmatmul.mubr.f32.gmra.mrb[0].mxu0 %v4908
      %v5218 = vpop.f32.mrb[0].mxu0
      %v5219 = vadd.f32 %v4995, %v5218
      %v5220 = vpop.f32.mrb[0].mxu0
      %5221 = vmatprep.mubr.f32.mxu0 0.0
      %5222 = vmatmul.mubr.f32.gmra.mrb[0].mxu0 %v4909
      %v5223 = vpop.f32.mrb[0].mxu0
      %v5224 = vadd.f32 %v5000, %v5223
      %v5225 = vpop.f32.mrb[0].mxu0
      %5226 = vmatprep.mubr.f32.mxu0 0.0
      %5227 = vmatmul.mubr.f32.gmra.mrb[0].mxu0 %v4910
      %v5228 = vpop.f32.mrb[0].mxu0
      %v5229 = vadd.f32 %v5005, %v5228
      %v5230 = vpop.f32.mrb[0].mxu0
      %5231 = vmatprep.mubr.f32.mxu0 0.0
      %5232 = vmatmul.mubr.f32.gmra.mrb[0].mxu0 %v4911
      %v5233 = vpop.f32.mrb[0].mxu0
      %v5234 = vadd.f32 %v5010, %v5233
      %v5235 = vpop.f32.mrb[0].mxu0
      %5236 = vmatprep.mubr.f32.mxu0 0.0
      %5237 = vmatmul.mubr.f32.gmra.mrb[0].mxu0 %v4912
      %v5238 = vpop.f32.mrb[0].mxu0
      %v5239 = vadd.f32 %v5015, %v5238
      %v5240 = vpop.f32.mrb[0].mxu0
      %5241 = vmatprep.mubr.f32.mxu0 0.0
      %5242 = vmatmul.mubr.f32.gmra.mrb[0].mxu0 %v4913
      %v5243 = vpop.f32.mrb[0].mxu0
      %v5244 = vadd.f32 %v5020, %v5243
      %v5245 = vpop.f32.mrb[0].mxu0
      %5246 = vmatprep.mubr.f32.mxu0 0.0
      %5247 = vmatmul.mubr.f32.gmra.mrb[0].mxu0 %v4914
      %v5248 = vpop.f32.mrb[0].mxu0
      %v5249 = vadd.f32 %v5025, %v5248
      %v5250 = vpop.f32.mrb[0].mxu0
      %5251 = vmatprep.mubr.f32.mxu0 0.0
      %5252 = vmatmul.mubr.f32.gmra.mrb[0].mxu0 %v4915
      %v5253 = vpop.f32.mrb[0].mxu0
      %v5254 = vadd.f32 %v5030, %v5253
      %v5255 = vpop.f32.mrb[0].mxu0
      %5256 = vmatprep.mubr.f32.mxu0 0.0
      %5257 = vmatmul.mubr.f32.gmra.mrb[0].mxu0 %v4916
      %v5258 = vpop.f32.mrb[0].mxu0
      %v5259 = vadd.f32 %v5035, %v5258
      %v5260 = vpop.f32.mrb[0].mxu0
      %5261 = vmatprep.mubr.f32.mxu0 0.0
      %5262 = vmatmul.mubr.f32.gmra.mrb[0].mxu0 %v4917
      %v5263 = vpop.f32.mrb[0].mxu0
      %v5264 = vadd.f32 %v5040, %v5263
      %v5265 = vpop.f32.mrb[0].mxu0
      %5266 = vmatprep.mubr.f32.mxu0 0.0
      %5267 = vmatmul.mubr.f32.gmra.mrb[0].mxu0 %v4918
      %v5268 = vpop.f32.mrb[0].mxu0
      %v5269 = vadd.f32 %v5045, %v5268
      %v5270 = vpop.f32.mrb[0].mxu0
      %5271 = vmatprep.mubr.f32.mxu0 0.0
      %5272 = vmatmul.mubr.f32.gmra.mrb[0].mxu0 %v4919
      %v5273 = vpop.f32.mrb[0].mxu0
      %v5274 = vadd.f32 %v5050, %v5273
      %v5275 = vpop.f32.mrb[0].mxu0
      %5276 = vmatprep.mubr.f32.mxu0 0.0
      %5277 = vmatmul.mubr.f32.gmra.mrb[0].mxu0 %v4920
      %v5278 = vpop.f32.mrb[0].mxu0
      %v5279 = vadd.f32 %v5055, %v5278
      %v5280 = vpop.f32.mrb[0].mxu0
      %5281 = vmatprep.mubr.f32.mxu0 0.0
      %5282 = vmatmul.mubr.f32.gmra.mrb[0].mxu0 %v4921
      %v5283 = vpop.f32.mrb[0].mxu0
      %v5284 = vadd.f32 %v5060, %v5283
      %v5285 = vpop.f32.mrb[0].mxu0
      %5286 = vmatprep.mubr.f32.mxu0 0.0
      %5287 = vmatmul.mubr.f32.gmra.mrb[0].mxu0 %v4922
      %v5288 = vpop.f32.mrb[0].mxu0
      %v5289 = vadd.f32 %v5065, %v5288
      %v5290 = vpop.f32.mrb[0].mxu0
      %5291 = vmatprep.mubr.f32.mxu0 0.0
      %5292 = vmatmul.mubr.f32.gmra.mrb[0].mxu0 %v4923
      %v5293 = vpop.f32.mrb[0].mxu0
      %v5294 = vadd.f32 %v5070, %v5293
      %v5295 = vpop.f32.mrb[0].mxu0
      %5296 = vmatprep.mubr.f32.mxu0 0.0
      %5297 = vmatmul.mubr.f32.gmra.mrb[0].mxu0 %v4924
      %v5298 = vpop.f32.mrb[0].mxu0
      %v5299 = vadd.f32 %v5075, %v5298
      %v5300 = vpop.f32.mrb[0].mxu0
      %5301 = vmatprep.mubr.f32.mxu0 0.0
      %5302 = vmatmul.mubr.f32.gmra.mrb[0].mxu0 %v4925
      %v5303 = vpop.f32.mrb[0].mxu0
      %v5304 = vadd.f32 %v5080, %v5303
      %v5305 = vpop.f32.mrb[0].mxu0
      %5306 = vmatprep.mubr.f32.mxu0 0.0
      %5307 = vmatmul.mubr.f32.gmra.mrb[0].mxu0 %v4926
      %v5308 = vpop.f32.mrb[0].mxu0
      %v5309 = vadd.f32 %v5085, %v5308
      %v5310 = vpop.f32.mrb[0].mxu0
      %5311 = vmatprep.mubr.f32.mxu0 0.0
      %5312 = vmatmul.mubr.f32.gmra.mrb[0].mxu0 %v4927
      %v5313 = vpop.f32.mrb[0].mxu0
      %v5314 = vadd.f32 %v5090, %v5313
      %v5315 = vpop.f32.mrb[0].mxu0
      %5316 = vmatprep.mubr.f32.mxu0 0.0
      %5317 = vmatmul.mubr.f32.gmra.mrb[0].mxu0 %v4928
      %v5318 = vpop.f32.mrb[0].mxu0
      %v5319 = vadd.f32 %v5095, %v5318
      %v5320 = vpop.f32.mrb[0].mxu0
      %5321 = vmatprep.mubr.f32.mxu0 0.0
      %5322 = vmatmul.mubr.f32.gmra.mrb[0].mxu0 %v4929
      %v5323 = vpop.f32.mrb[0].mxu0
      %v5324 = vadd.f32 %v5100, %v5323
      %v5325 = vpop.f32.mrb[0].mxu0
      %5326 = vmatprep.mubr.f32.mxu0 0.0
      %5327 = vmatmul.mubr.f32.gmra.mrb[0].mxu0 %v4930
      %v5328 = vpop.f32.mrb[0].mxu0
      %v5329 = vadd.f32 %v5105, %v5328
      %v5330 = vpop.f32.mrb[0].mxu0
      %5331 = vmatprep.mubr.f32.mxu0 0.0
      %5332 = vmatmul.mubr.f32.gmra.mrb[0].mxu0 %v4931
      %v5333 = vpop.f32.mrb[0].mxu0
      %v5334 = vadd.f32 %v5110, %v5333
      %v5335 = vpop.f32.mrb[0].mxu0
      %5336 = vmatprep.mubr.f32.mxu0 0.0
      %5337 = vmatmul.mubr.f32.gmra.mrb[0].mxu0 %v4932
      %v5338 = vpop.f32.mrb[0].mxu0
      %v5339 = vadd.f32 %v5115, %v5338
      %v5340 = vpop.f32.mrb[0].mxu0
      %5341 = vmatprep.mubr.f32.mxu0 0.0
      %5342 = vmatmul.mubr.f32.gmra.mrb[0].mxu0 %v4933
      %v5343 = vpop.f32.mrb[0].mxu0
      %v5344 = vadd.f32 %v5120, %v5343
      %v5345 = vpop.f32.mrb[0].mxu0
      %5346 = vmatprep.mubr.f32.mxu0 0.0
      %5347 = vmatmul.mubr.f32.gmra.mrb[0].mxu0 %v4934
      %v5348 = vpop.f32.mrb[0].mxu0
      %v5349 = vadd.f32 %v5125, %v5348
      %v5350 = vpop.f32.mrb[0].mxu0
      %5351 = vdwg.mxu0
      %v5352 = vmax.f32 %v5194, 0.0
      %v5353 = vmax.f32 %v5199, 0.0
      %v5354 = vmax.f32 %v5204, 0.0
      %v5355 = vmax.f32 %v5209, 0.0
      %v5356 = vmax.f32 %v5214, 0.0
      %v5357 = vmax.f32 %v5219, 0.0
      %v5358 = vmax.f32 %v5224, 0.0
      %v5359 = vmax.f32 %v5229, 0.0
      %v5360 = vmax.f32 %v5234, 0.0
      %v5361 = vmax.f32 %v5239, 0.0
      %v5362 = vmax.f32 %v5244, 0.0
      %v5363 = vmax.f32 %v5249, 0.0
      %v5364 = vmax.f32 %v5254, 0.0
      %v5365 = vmax.f32 %v5259, 0.0
      %v5366 = vmax.f32 %v5264, 0.0
      %v5367 = vmax.f32 %v5269, 0.0
      %v5368 = vmax.f32 %v5274, 0.0
      %v5369 = vmax.f32 %v5279, 0.0
      %v5370 = vmax.f32 %v5284, 0.0
      %v5371 = vmax.f32 %v5289, 0.0
      %v5372 = vmax.f32 %v5294, 0.0
      %v5373 = vmax.f32 %v5299, 0.0
      %v5374 = vmax.f32 %v5304, 0.0
      %v5375 = vmax.f32 %v5309, 0.0
      %v5376 = vmax.f32 %v5314, 0.0
      %v5377 = vmax.f32 %v5319, 0.0
      %v5378 = vmax.f32 %v5324, 0.0
      %v5379 = vmax.f32 %v5329, 0.0
      %v5380 = vmax.f32 %v5334, 0.0
      %v5381 = vmax.f32 %v5339, 0.0
      %v5382 = vmax.f32 %v5344, 0.0
      %v5383 = vmax.f32 %v5349, 0.0
      %v5384 = vld [vmem:[%s12] sm:$0xff]
      %v5385 = vld [vmem:[%s12 + $0x8] sm:$0xff]
      %v5386 = vld [vmem:[%s12 + $0x10] sm:$0xf]
      %v5387 = vld [vmem:[%s12 + $0x18] sm:$0xf]
      %v5388 = vld [vmem:[%s13] sm:$0xff]
      %v5389 = vld [vmem:[%s13 + $0x8] sm:$0xf]
      %5391 = vset.pattern.permute.xlu0 0
      %5392 = vperm.xlu0 %5391, %v5388
      %v5393 = vpop.permute.xlu0 %5392
      %5396 = vset.pattern.permute.xlu0 0
      %5397 = vperm.xlu0 %5396, %v5389
      %v5398 = vpop.permute.xlu0 %5397
      %5400 = vmatprep.subr.mxu0 0.0
      %5401 = vmatpush1.msra.mxu0 %v5352
      %5402 = vmatprep.subr.mxu0 0.0
      %5403 = vmatpush1.msra.mxu0 %v5353
      %5404 = vmatprep.subr.mxu0 0.0
      %5405 = vmatpush1.msra.mxu0 %v5354
      %5406 = vmatprep.subr.mxu0 0.0
      %5407 = vmatpush1.msra.mxu0 %v5355
      %5408 = vmatprep.subr.mxu0 0.0
      %5409 = vmatpush1.msra.mxu0 %v5356
      %5410 = vmatprep.subr.mxu0 0.0
      %5411 = vmatpush1.msra.mxu0 %v5357
      %5412 = vmatprep.subr.mxu0 0.0
      %5413 = vmatpush1.msra.mxu0 %v5358
      %5414 = vmatprep.subr.mxu0 0.0
      %5415 = vmatpush1.msra.mxu0 %v5359
      %5416 = vmatprep.subr.mxu0 0.0
      %5417 = vmatpush1.msra.mxu0 %v5360
      %5418 = vmatprep.subr.mxu0 0.0
      %5419 = vmatpush1.msra.mxu0 %v5361
      %5420 = vmatprep.subr.mxu0 0.0
      %5421 = vmatpush1.msra.mxu0 %v5362
      %5422 = vmatprep.subr.mxu0 0.0
      %5423 = vmatpush1.msra.mxu0 %v5363
      %5424 = vmatprep.subr.mxu0 0.0
      %5425 = vmatpush1.msra.mxu0 %v5364
      %5426 = vmatprep.subr.mxu0 0.0
      %5427 = vmatpush1.msra.mxu0 %v5365
      %5428 = vmatprep.subr.mxu0 0.0
      %5429 = vmatpush1.msra.mxu0 %v5366
      %5430 = vmatprep.subr.mxu0 0.0
      %5431 = vmatpush1.msra.mxu0 %v5367
      %5432 = vmatprep.subr.mxu0 0.0
      %5433 = vmatpush1.msra.mxu0 %v5368
      %5434 = vmatprep.subr.mxu0 0.0
      %5435 = vmatpush1.msra.mxu0 %v5369
      %5436 = vmatprep.subr.mxu0 0.0
      %5437 = vmatpush1.msra.mxu0 %v5370
      %5438 = vmatprep.subr.mxu0 0.0
      %5439 = vmatpush1.msra.mxu0 %v5371
      %5440 = vmatprep.subr.mxu0 0.0
      %5441 = vmatpush1.msra.mxu0 %v5372
      %5442 = vmatprep.subr.mxu0 0.0
      %5443 = vmatpush1.msra.mxu0 %v5373
      %5444 = vmatprep.subr.mxu0 0.0
      %5445 = vmatpush1.msra.mxu0 %v5374
      %5446 = vmatprep.subr.mxu0 0.0
      %5447 = vmatpush1.msra.mxu0 %v5375
      %5448 = vmatprep.subr.mxu0 0.0
      %5449 = vmatpush1.msra.mxu0 %v5376
      %5450 = vmatprep.subr.mxu0 0.0
      %5451 = vmatpush1.msra.mxu0 %v5377
      %5452 = vmatprep.subr.mxu0 0.0
      %5453 = vmatpush1.msra.mxu0 %v5378
      %5454 = vmatprep.subr.mxu0 0.0
      %5455 = vmatpush1.msra.mxu0 %v5379
      %5456 = vmatprep.subr.mxu0 0.0
      %5457 = vmatpush1.msra.mxu0 %v5380
      %5458 = vmatprep.subr.mxu0 0.0
      %5459 = vmatpush1.msra.mxu0 %v5381
      %5460 = vmatprep.subr.mxu0 0.0
      %5461 = vmatpush1.msra.mxu0 %v5382
      %5462 = vmatprep.subr.mxu0 0.0
      %5463 = vmatpush1.msra.mxu0 %v5383
      %5464 = vmatprep.mubr.f32.mxu0 %v5385
      %5465 = vmatmul.mubr.f32.gmra.mrb[0].mxu0 %v5384
      %v5466 = vpop.f32.mrb[0].mxu0
      %v5467 = vadd.f32 %v5393, %v5466
      %v5468 = vpop.f32.mrb[0].mxu0
      %5469 = vmatprep.mubr.f32.mxu0 %v5387
      %5470 = vmatmul.mubr.f32.gmra.mrb[0].mxu0 %v5386
      %v5471 = vpop.f32.mrb[0].mxu0
      %v5472 = vadd.f32 %v5398, %v5471
      %v5473 = vpop.f32.mrb[0].mxu0
      %5474 = vdwg.mxu0
      %v5475 = vld [vmem:[%s533] sm:$0x7]
      %v5477 = vrot.slane %v5475, 5
      %v5479 = vrot.slane %v5475, 2
      %v5481 = vrot.slane %v5475, 7
      %vm5483 = vcmask 1042432
      %v5484 = vsel %vm5483, %v5475, %v5477
      %vm5485 = vcmask 1045504
      %v5486 = vsel %vm5485, %v5484, %v5479
      %vm5487 = vcmask 1040384
      %v5488 = vsel %vm5487, %v5479, %v5481
      %v5489 = vadd.f32 %v5467, %v5486
      %v5490 = vadd.f32 %v5472, %v5488
      %5491 = vst [vmem:[%s546] sm:$0xff] %v5489
      %5492 = vst [vmem:[%s546 + $0x8] sm:$0xf] %v5490
      %p5493 = scmp.lt.s32.totalorder %s29, 1
      %s5494 = scalar_select %p5493, %s29, 1
      %p5495 = scmp.lt.s32.totalorder %s30, 0
      %s5496 = scalar_select %p5495, %s30, 0
      %s5497 = smul.addr %s5494, 2
      %s5498 = sadd.s32 %s5496, %s5497
      %s5499 = smul.addr %s5498, 8
      %s5500 = scalar_lea.vmem %s14, %s5499
      // Predicated region
      $region77: #{point_decoder_forward.1} parent=75 // pred_check
        %p5501 = pneg %p370
      $region78: #{point_decoder_forward.1} parent=75 // pred_check_branch
        %5503 = sbr.rel (%p5501) target = $region80
      $region79: #{point_decoder_forward.1} parent=75 // pred_region
        _
      $region80: #{point_decoder_forward.1} parent=75 // pred_fallthru
        _
    $region76: #{point_decoder_forward.1} parent=5 // pred_fallthru
      _
    %p5504 = scmp.le.s32.totalorder 2, %s20
    // Predicated region
    $region81: #{point_decoder_forward.1} parent=5 // pred_check
      %p5505 = pneg %p5504
    $region82: #{point_decoder_forward.1} parent=5 // pred_check_branch
      %5507 = sbr.rel (%p5505) target = $region84
    $region83: #{point_decoder_forward.1} parent=5 // pred_region
      %s5508 = ssub.s32 %s20, 2
      // Predicated region
      $region85: #{point_decoder_forward.1} parent=83 // pred_check
        %p5509 = pneg %p376
      $region86: #{point_decoder_forward.1} parent=83 // pred_check_branch
        %5511 = sbr.rel (%p5509) target = $region88
      $region87: #{point_decoder_forward.1} parent=83 // pred_region
        %p5512 = scmp.lt.s32.totalorder %s31, 1
        %s5513 = scalar_select %p5512, %s31, 1
        %p5514 = scmp.lt.s32.totalorder %s32, 0
        %s5515 = scalar_select %p5514, %s32, 0
        %s5516 = smul.addr %s5513, 2
        %s5517 = sadd.s32 %s5515, %s5516
        %s5518 = smul.addr %s5517, 8
        %s5519 = scalar_lea.vmem %s14, %s5518
      $region88: #{point_decoder_forward.1} parent=83 // pred_fallthru
        _
    $region84: #{point_decoder_forward.1} parent=5 // pred_fallthru
      _
  $region6: #{point_decoder_forward.1} parent=0 // loop_footer
    %s24 = sadd.s32 1, %s20
  $region7: #{point_decoder_forward.1} parent=0 // loop_footer_branch
    %19 = sbr.rel target = $region3
  $region8: #{point_decoder_forward.1} parent=0 // loop_exit
    _

</llo_original>
